<compile_context>
chip_gen: v7x
topology: tpu7x:2x2x1
jax: 0.10.0
libtpu: 0.0.40
codegen_flags: <defaults>
</compile_context>

<pallas_src>
from functools import partial
from types import SimpleNamespace

import jax
import jax.numpy as jnp
from jax.experimental import pallas as pl
from jax.experimental.pallas import tpu as pltpu

_BN_EPS = 1e-3  # ERFNet uses nn.BatchNorm2d(..., eps=1e-3)


def _round_up(x, m):
    return ((x + m - 1) // m) * m


# ----------------------------------------------------------------------------
# Pallas kernels
# ----------------------------------------------------------------------------
def _mm_fused_kernel(a_ref, w_ref, scale_ref, off_ref, o_ref, acc_ref, *, relu):
    # (tm, tk) @ (tk, tn) accumulated over the K grid axis in a f32 scratch;
    # scale/offset (folded bias + BN) and ReLU fused in the epilogue.
    @pl.when(pl.program_id(2) == 0)
    def _():
        acc_ref[...] = jnp.zeros_like(acc_ref)

    acc_ref[...] += jnp.dot(a_ref[...], w_ref[...],
                            preferred_element_type=jnp.float32)

    @pl.when(pl.program_id(2) == pl.num_programs(2) - 1)
    def _():
        y = acc_ref[...] * scale_ref[...] + off_ref[...]
        if relu:
            y = jnp.maximum(y, 0.0)
        o_ref[...] = y.astype(o_ref.dtype)


def _mm_fused_res_kernel(a_ref, w_ref, scale_ref, off_ref, res_ref, o_ref,
                         acc_ref, *, relu):
    @pl.when(pl.program_id(2) == 0)
    def _():
        acc_ref[...] = jnp.zeros_like(acc_ref)

    acc_ref[...] += jnp.dot(a_ref[...], w_ref[...],
                            preferred_element_type=jnp.float32)

    @pl.when(pl.program_id(2) == pl.num_programs(2) - 1)
    def _():
        y = acc_ref[...] * scale_ref[...] + off_ref[...] + res_ref[...]
        if relu:
            y = jnp.maximum(y, 0.0)
        o_ref[...] = y.astype(o_ref.dtype)


def _pool_bn_relu_kernel(a_ref, b_ref, c_ref, d_ref, scale_ref, shift_ref, o_ref):
    # 2x2 max-pool (4 pre-sliced phases) + folded BN + ReLU, fused.
    m = jnp.maximum(jnp.maximum(a_ref[...], b_ref[...]),
                    jnp.maximum(c_ref[...], d_ref[...]))
    o_ref[...] = jnp.maximum(m * scale_ref[...] + shift_ref[...], 0.0)


# ----------------------------------------------------------------------------
# Tiled fused matmul wrapper
# ----------------------------------------------------------------------------
def _matmul_fused(a, wmat, scale, offset, *, relu, residual=None):
    """(M, K) @ (K, Cout) * scale + offset [+ residual] [+ relu] -> f32 (M, Cout)."""
    M, K = a.shape
    _, Cout = wmat.shape

    # Tile selection: conservative blocks that fit v7x's 64 MiB VMEM (and the
    # 32 MiB default scoped limit) with double buffering, while keeping large
    # M tiles for HBM-roofline efficiency on v5e/v6e.
    if M <= 512:
        tm = _round_up(M, 16)
        Mp = tm
    else:
        tm = 512
        Mp = _round_up(M, tm)
    if K <= 512:
        tk = K          # full-K block (legal: equals full array dim)
        Kp = K
    else:
        tk = 256
        Kp = _round_up(K, tk)
    tn = 128
    Np = _round_up(Cout, tn)   # lane-dense output stores

    a_p = jnp.pad(a.astype(jnp.bfloat16), ((0, Mp - M), (0, Kp - K)))
    w_p = jnp.pad(wmat.astype(jnp.bfloat16), ((0, Kp - K), (0, Np - Cout)))
    scale_p = jnp.pad(scale.reshape(1, Cout).astype(jnp.float32),
                      ((0, 0), (0, Np - Cout)))
    off_p = jnp.pad(offset.reshape(1, Cout).astype(jnp.float32),
                    ((0, 0), (0, Np - Cout)))

    grid = (Mp // tm, Np // tn, Kp // tk)
    a_spec = pl.BlockSpec((tm, tk), lambda i, j, k: (i, k))
    w_spec = pl.BlockSpec((tk, tn), lambda i, j, k: (k, j))
    v_spec = pl.BlockSpec((1, tn), lambda i, j, k: (0, j))
    o_spec = pl.BlockSpec((tm, tn), lambda i, j, k: (i, j))

    in_specs = [a_spec, w_spec, v_spec, v_spec]
    operands = [a_p, w_p, scale_p, off_p]
    bytes_accessed = a_p.size * 2 + w_p.size * 2 + Mp * Np * 4 + 2 * Np * 4
    if residual is None:
        kern = partial(_mm_fused_kernel, relu=relu)
    else:
        res_p = jnp.pad(residual.astype(jnp.float32),
                        ((0, Mp - M), (0, Np - Cout)))
        in_specs.append(pl.BlockSpec((tm, tn), lambda i, j, k: (i, j)))
        operands.append(res_p)
        bytes_accessed += res_p.size * 4
        kern = partial(_mm_fused_res_kernel, relu=relu)

    out = pl.pallas_call(
        kern,
        out_shape=jax.ShapeDtypeStruct((Mp, Np), jnp.float32),
        grid_spec=pltpu.PrefetchScalarGridSpec(
            num_scalar_prefetch=0,
            grid=grid,
            in_specs=in_specs,
            out_specs=o_spec,
            scratch_shapes=[pltpu.VMEM((tm, tn), jnp.float32)],
        ),
        compiler_params=pltpu.CompilerParams(
            dimension_semantics=("parallel", "parallel", "arbitrary")),
        cost_estimate=pl.CostEstimate(
            flops=2 * Mp * Kp * Np,
            transcendentals=0,
            bytes_accessed=int(bytes_accessed)),
    )(*operands)
    return out[:M, :Cout]


# ----------------------------------------------------------------------------
# Fused 2x2 maxpool + BN + ReLU
# ----------------------------------------------------------------------------
def _maxpool2x2_bn_relu(x_nhwc, scale, shift):
    # TODO(synk): the 4 pooling phases are still gathered by XLA strided slices
    # outside the kernel instead of loading contiguous 2x2 windows in-kernel.
    N, H, W, C = x_nhwc.shape
    Ho, Wo = H // 2, W // 2
    R = N * Ho * Wo
    slc = lambda r, c: x_nhwc[:, r::2, c::2, :].reshape(R, C)
    a, b, cc, d = slc(0, 0), slc(0, 1), slc(1, 0), slc(1, 1)

    if R <= 512:
        tr = _round_up(R, 8)
        Rp = tr
    else:
        tr = 512
        Rp = _round_up(R, tr)
    pad = Rp - R
    if pad:
        padr = lambda v: jnp.pad(v, ((0, pad), (0, 0)))
        a, b, cc, d = padr(a), padr(b), padr(cc), padr(d)

    scale2 = scale.reshape(1, C).astype(jnp.float32)
    shift2 = shift.reshape(1, C).astype(jnp.float32)
    row_spec = pl.BlockSpec((tr, C), lambda i: (i, 0))
    vec_spec = pl.BlockSpec((1, C), lambda i: (0, 0))

    out = pl.pallas_call(
        _pool_bn_relu_kernel,
        out_shape=jax.ShapeDtypeStruct((Rp, C), jnp.float32),
        grid=(Rp // tr,),
        in_specs=[row_spec, row_spec, row_spec, row_spec, vec_spec, vec_spec],
        out_specs=row_spec,
        compiler_params=pltpu.CompilerParams(dimension_semantics=("parallel",)),
    )(a, b, cc, d, scale2, shift2)
    return out[:R].reshape(N, Ho, Wo, C)


# ----------------------------------------------------------------------------
# Conv helpers (im2col glue in plain JAX, matmul hot-path in Pallas)
# ----------------------------------------------------------------------------
def _im2col(x, kh, kw, stride, padding, dilation):
    # TODO(synk): im2col is still materialized in HBM (bf16 halves the bytes);
    # folding the kh*kw tap loop into the kernel's K grid axis is future work.
    N, H, W, C = x.shape
    sh, sw = stride
    ph, pw = padding
    dh, dw = dilation
    xp = jnp.pad(x, ((0, 0), (ph, ph), (pw, pw), (0, 0)))
    Ho = (H + 2 * ph - dh * (kh - 1) - 1) // sh + 1
    Wo = (W + 2 * pw - dw * (kw - 1) - 1) // sw + 1
    cols = []
    for ki in range(kh):
        for kj in range(kw):
            sl = xp[:, ki * dh: ki * dh + (Ho - 1) * sh + 1: sh,
                       kj * dw: kj * dw + (Wo - 1) * sw + 1: sw, :]
            cols.append(sl)
    patches = jnp.stack(cols, axis=3)                 # (N, Ho, Wo, kh*kw, C)
    return patches.reshape(N * Ho * Wo, kh * kw * C), Ho, Wo


def _fold_bn(bias, bn, cout, eps=_BN_EPS):
    if bn is None:
        return jnp.ones((cout,), jnp.float32), bias.astype(jnp.float32)
    s = bn["gamma"] / jnp.sqrt(bn["var"] + eps)
    return s, s * bias + bn["beta"] - bn["mean"] * s


def conv2d(x, w, b, *, stride=(1, 1), padding=(0, 0), dilation=(1, 1),
           bn=None, relu=False, residual=None):
    """x: NHWC (f32), w: PyTorch layout (Cout, Cin, kh, kw)."""
    N, H, W, Cin = x.shape
    Cout, _, kh, kw = w.shape
    xb = x.astype(jnp.bfloat16)                        # bf16 MXU operands
    patches, Ho, Wo = _im2col(xb, kh, kw, stride, padding, dilation)
    wmat = jnp.transpose(w, (2, 3, 1, 0)).reshape(kh * kw * Cin, Cout)
    scale, offset = _fold_bn(b, bn, Cout)
    res = None
    if residual is not None:
        res = residual.reshape(N * Ho * Wo, Cout).astype(jnp.float32)
    out = _matmul_fused(patches, wmat, scale, offset, relu=relu, residual=res)
    return out.reshape(N, Ho, Wo, Cout)


def _phase_taps(k, s, p):
    """Per-output-phase taps for a transposed conv: out[s*i+r] += w_t[kt]*x[i+d]."""
    pt = k - 1 - p
    per_phase = []
    for r in range(s):
        taps = []
        for a in range(k):
            q = r + a - pt
            if q % s == 0:
                taps.append((q // s, k - 1 - a))
        per_phase.append(taps)
    return per_phase


def conv_transpose2d(x, w_t, b, *, stride, padding, output_padding,
                     bn=None, relu=False):
    """Phase-decomposed ConvTranspose2d (no zero-insertion).

    x: NHWC, w_t: PyTorch ConvTranspose2d layout (Cin, Cout, kh, kw).
    One matmul to (N, H, W, s*s*Cout) + depth-to-space.
    """
    N, H, W, Cin = x.shape
    _, Cout, kh, kw = w_t.shape
    s = stride
    Ho = (H - 1) * s - 2 * padding + kh + output_padding
    Wo = (W - 1) * s - 2 * padding + kw + output_padding
    assert Ho == s * H and Wo == s * W, "phase decomposition expects Ho == s*H"

    ph_h = _phase_taps(kh, s, padding)
    ph_w = _phase_taps(kw, s, padding)
    all_dh = [d for taps in ph_h for d, _ in taps] + [0]
    all_dw = [d for taps in ph_w for d, _ in taps] + [0]
    dh0, dh1 = min(all_dh), max(all_dh)
    dw0, dw1 = min(all_dw), max(all_dw)
    nth, ntw = dh1 - dh0 + 1, dw1 - dw0 + 1

    xb = x.astype(jnp.bfloat16)
    xp = jnp.pad(xb, ((0, 0), (-dh0, dh1), (-dw0, dw1), (0, 0)))
    cols = []
    for di in range(nth):
        for dj in range(ntw):
            cols.append(xp[:, di:di + H, dj:dj + W, :])
    patches = jnp.stack(cols, axis=3).reshape(N * H * W, nth * ntw * Cin)

    # Build the (taps*Cin, s*s*Cout) phase weight matrix (constant-folded by XLA).
    wmat = jnp.zeros((nth, ntw, Cin, s, s, Cout), jnp.float32)
    for r in range(s):
        for (dh, kth) in ph_h[r]:
            for c in range(s):
                for (dw, ktw) in ph_w[c]:
                    wmat = wmat.at[dh - dh0, dw - dw0, :, r, c, :].set(
                        w_t[:, :, kth, ktw])
    wmat = wmat.reshape(nth * ntw * Cin, s * s * Cout)

    scale, offset = _fold_bn(b, bn, Cout)
    scale_t = jnp.tile(scale, (s * s,))
    offset_t = jnp.tile(offset, (s * s,))

    out = _matmul_fused(patches, wmat, scale_t, offset_t, relu=relu)
    out = out.reshape(N, H, W, s, s, Cout)
    out = jnp.transpose(out, (0, 1, 3, 2, 4, 5)).reshape(N, s * H, s * W, Cout)
    return out


# ----------------------------------------------------------------------------
# ERFNet blocks
# ----------------------------------------------------------------------------
def downsampler_block(x, p):
    # concat([conv(x), pool(x)]) -> BN -> ReLU, with BN+ReLU folded into each
    # branch (per-channel BN commutes with the channel concat, ReLU is pointwise).
    w, b = p["conv"]["w"], p["conv"]["b"]
    Cc = w.shape[0]
    bn = p["bn"]
    bn_conv = {k: v[:Cc] for k, v in bn.items()}
    gamma_p, beta_p = bn["gamma"][Cc:], bn["beta"][Cc:]
    mean_p, var_p = bn["mean"][Cc:], bn["var"][Cc:]
    s_pool = gamma_p / jnp.sqrt(var_p + _BN_EPS)
    sh_pool = beta_p - mean_p * s_pool

    conv_out = conv2d(x, w, b, stride=(2, 2), padding=(1, 1),
                      bn=bn_conv, relu=True)
    pool_out = _maxpool2x2_bn_relu(x, s_pool, sh_pool)
    return jnp.concatenate([conv_out, pool_out], axis=-1)


def non_bottleneck_1d(x, p, dilated):
    # TODO(synk): nn.Dropout2d is identity in inference; training-mode dropout
    # (stochastic channel masking) is not implemented.
    # TODO(synk): the 3x1/1x3 conv pairs are separate pallas_calls; keeping the
    # intermediate in VMEM would require in-kernel halo handling.
    o = conv2d(x, p["c31_1"]["w"], p["c31_1"]["b"],
               padding=(1, 0), relu=True)
    o = conv2d(o, p["c13_1"]["w"], p["c13_1"]["b"],
               padding=(0, 1), bn=p["bn1"], relu=True)
    o = conv2d(o, p["c31_2"]["w"], p["c31_2"]["b"],
               padding=(dilated, 0), dilation=(dilated, 1), relu=True)
    o = conv2d(o, p["c13_2"]["w"], p["c13_2"]["b"],
               padding=(0, dilated), dilation=(1, dilated),
               bn=p["bn2"], relu=True, residual=x)
    return o


def upsampler_block(x, p):
    return conv_transpose2d(x, p["conv"]["w"], p["conv"]["b"],
                            stride=2, padding=1, output_padding=1,
                            bn=p["bn"], relu=True)


def erf_forward(params, x_nchw):
    x = jnp.transpose(x_nchw, (0, 2, 3, 1))          # NCHW -> NHWC
    o = downsampler_block(x, params["initial"])
    for kind, p, extra in params["encoder"]:
        o = downsampler_block(o, p) if kind == "down" else non_bottleneck_1d(o, p, extra)
    for kind, p, extra in params["decoder"]:
        o = upsampler_block(o, p) if kind == "up" else non_bottleneck_1d(o, p, extra)
    oc = params["output_conv"]
    o = conv_transpose2d(o, oc["w"], oc["b"], stride=2, padding=0,
                         output_padding=0, bn=None, relu=False)
    return jnp.transpose(o, (0, 3, 1, 2))            # NHWC -> NCHW


# ----------------------------------------------------------------------------
# Deterministic parameter construction (synthetic weights)
# ----------------------------------------------------------------------------
def _conv_init(key, cout, cin, kh, kw):
    kw_, kb = jax.random.split(key)
    w = jax.random.normal(kw_, (cout, cin, kh, kw), jnp.float32) / jnp.sqrt(cin * kh * kw)
    b = 0.01 * jax.random.normal(kb, (cout,), jnp.float32)
    return {"w": w, "b": b}


def _convT_init(key, cin, cout, kh, kw):
    kw_, kb = jax.random.split(key)
    w = jax.random.normal(kw_, (cin, cout, kh, kw), jnp.float32) / jnp.sqrt(cin * kh * kw)
    b = 0.01 * jax.random.normal(kb, (cout,), jnp.float32)
    return {"w": w, "b": b}


def _bn_init(c):
    return {"gamma": jnp.ones((c,), jnp.float32),
            "beta": jnp.zeros((c,), jnp.float32),
            "mean": jnp.zeros((c,), jnp.float32),
            "var": jnp.ones((c,), jnp.float32)}


def _nb_init(key, c):
    k1, k2, k3, k4 = jax.random.split(key, 4)
    return {"c31_1": _conv_init(k1, c, c, 3, 1),
            "c13_1": _conv_init(k2, c, c, 1, 3),
            "bn1": _bn_init(c),
            "c31_2": _conv_init(k3, c, c, 3, 1),
            "c13_2": _conv_init(k4, c, c, 1, 3),
            "bn2": _bn_init(c)}


def build_params(key, input_channels, num_classes):
    keys = list(jax.random.split(key, 32))
    it = iter(keys)

    params = {}
    params["initial"] = {"conv": _conv_init(next(it), 16 - input_channels, input_channels, 3, 3),
                         "bn": _bn_init(16)}

    enc = []
    enc.append(("down", {"conv": _conv_init(next(it), 64 - 16, 16, 3, 3), "bn": _bn_init(64)}, None))
    for _ in range(5):
        enc.append(("nb", _nb_init(next(it), 64), 1))
    enc.append(("down", {"conv": _conv_init(next(it), 128 - 64, 64, 3, 3), "bn": _bn_init(128)}, None))
    for d in (2, 4, 8, 16, 2, 4, 8, 16):
        enc.append(("nb", _nb_init(next(it), 128), d))
    params["encoder"] = enc

    dec = []
    dec.append(("up", {"conv": _convT_init(next(it), 128, 64, 3, 3), "bn": _bn_init(64)}, None))
    dec.append(("nb", _nb_init(next(it), 64), 1))
    dec.append(("nb", _nb_init(next(it), 64), 1))
    dec.append(("up", {"conv": _convT_init(next(it), 64, 16, 3, 3), "bn": _bn_init(16)}, None))
    dec.append(("nb", _nb_init(next(it), 16), 1))
    dec.append(("nb", _nb_init(next(it), 16), 1))
    params["decoder"] = dec

    params["output_conv"] = _convT_init(next(it), 16, num_classes, 2, 2)
    return params


# ----------------------------------------------------------------------------
if __name__ == "__main__":
    cfg = SimpleNamespace(input_channels=4, num_classes=5)

    key = jax.random.PRNGKey(0)
    pkey, xkey = jax.random.split(key)
    params = build_params(pkey, cfg.input_channels, cfg.num_classes)

    x = jax.random.normal(xkey, (2, cfg.input_channels, 16, 16), jnp.float32)

    fwd = jax.jit(lambda inp: erf_forward(params, inp))
    out = jax.block_until_ready(fwd(x))

    assert out.shape == (2, cfg.num_classes, 16, 16), out.shape
    assert bool(jnp.all(jnp.isfinite(out)))
    print("KERNEL_OK")
</pallas_src>

<mosaic_0001>
module attributes {stable_mosaic.version = 11 : i64} {
  func.func @_mm_fused_kernel(%arg0: i32, %arg1: i32, %arg2: i32, %arg3: memref<128x36xbf16, #tpu.memory_space<vmem>>, %arg4: memref<36x128xbf16, #tpu.memory_space<vmem>>, %arg5: memref<1x128xf32, #tpu.memory_space<vmem>>, %arg6: memref<1x128xf32, #tpu.memory_space<vmem>>, %arg7: memref<128x128xf32, #tpu.memory_space<vmem>>, %arg8: memref<128x128xf32, #tpu.memory_space<vmem>>) attributes {dimension_semantics = [#tpu.dimension_semantics<parallel>, #tpu.dimension_semantics<parallel>, #tpu.dimension_semantics<arbitrary>], iteration_bounds = array<i64: 1, 1, 1>, scalar_prefetch = 0 : i64, scratch_operands = 1 : i64, tpu.core_type = #tpu.core_type<tc>, window_params = [{transform_indices = @transform_0, window_bounds = array<i64: 128, 36>}, {transform_indices = @transform_1, window_bounds = array<i64: 36, 128>}, {transform_indices = @transform_2, window_bounds = array<i64: 1, 128>}, {transform_indices = @transform_3, window_bounds = array<i64: 1, 128>}, {transform_indices = @transform_4, window_bounds = array<i64: 128, 128>}]} {
    %c0_i32 = arith.constant 0 : i32
    %0 = arith.cmpi eq, %arg2, %c0_i32 : i32
    %1 = arith.extui %0 : i1 to i32
    %c0_i32_0 = arith.constant 0 : i32
    %2 = arith.cmpi ne, %1, %c0_i32_0 : i32
    scf.if %2 {
      %cst_10 = arith.constant 0.000000e+00 : f32
      %12 = vector.broadcast %cst_10 : f32 to vector<128x128xf32>
      %c0_11 = arith.constant 0 : index
      %c0_12 = arith.constant 0 : index
      %13 = vector.load %arg8[%c0_11, %c0_12] : memref<128x128xf32, #tpu.memory_space<vmem>>, vector<128x128xf32>
      tpu.vector_store %arg8[%c0_11, %c0_12], %12 {strides = array<i32>} : memref<128x128xf32, #tpu.memory_space<vmem>>, vector<128x128xf32>,
    } else {
    }
    %c0 = arith.constant 0 : index
    %c0_1 = arith.constant 0 : index
    %3 = vector.load %arg8[%c0, %c0_1] : memref<128x128xf32, #tpu.memory_space<vmem>>, vector<128x128xf32>
    %c0_2 = arith.constant 0 : index
    %c0_3 = arith.constant 0 : index
    %4 = vector.load %arg3[%c0_2, %c0_3] : memref<128x36xbf16, #tpu.memory_space<vmem>>, vector<128x36xbf16>
    %c0_4 = arith.constant 0 : index
    %c0_5 = arith.constant 0 : index
    %5 = vector.load %arg4[%c0_4, %c0_5] : memref<36x128xbf16, #tpu.memory_space<vmem>>, vector<36x128xbf16>
    %cst = arith.constant dense<0.000000e+00> : vector<128x128xf32>
    %6 = tpu.matmul %4, %5, %cst {dimension_numbers = #tpu.dot_dimension_numbers<[1], [0], [0], [1], [0, 0, 1, 1], [], []>} : vector<128x36xbf16>, vector<36x128xbf16>, vector<128x128xf32> -> vector<128x128xf32>
    %7 = arith.addf %3, %6 : vector<128x128xf32>
    %c0_6 = arith.constant 0 : index
    %c0_7 = arith.constant 0 : index
    %8 = vector.load %arg8[%c0_6, %c0_7] : memref<128x128xf32, #tpu.memory_space<vmem>>, vector<128x128xf32>
    tpu.vector_store %arg8[%c0_6, %c0_7], %7 {strides = array<i32>} : memref<128x128xf32, #tpu.memory_space<vmem>>, vector<128x128xf32>,
    %c0_i32_8 = arith.constant 0 : i32
    %9 = arith.cmpi eq, %arg2, %c0_i32_8 : i32
    %10 = arith.extui %9 : i1 to i32
    %c0_i32_9 = arith.constant 0 : i32
    %11 = arith.cmpi ne, %10, %c0_i32_9 : i32
    scf.if %11 {
      %c0_10 = arith.constant 0 : index
      %c0_11 = arith.constant 0 : index
      %12 = vector.load %arg8[%c0_10, %c0_11] : memref<128x128xf32, #tpu.memory_space<vmem>>, vector<128x128xf32>
      %c0_12 = arith.constant 0 : index
      %c0_13 = arith.constant 0 : index
      %13 = vector.load %arg5[%c0_12, %c0_13] : memref<1x128xf32, #tpu.memory_space<vmem>>, vector<1x128xf32>
      %14 = vector.broadcast %13 : vector<1x128xf32> to vector<128x128xf32>
      %15 = arith.mulf %12, %14 : vector<128x128xf32>
      %c0_14 = arith.constant 0 : index
      %c0_15 = arith.constant 0 : index
      %16 = vector.load %arg6[%c0_14, %c0_15] : memref<1x128xf32, #tpu.memory_space<vmem>>, vector<1x128xf32>
      %17 = vector.broadcast %16 : vector<1x128xf32> to vector<128x128xf32>
      %18 = arith.addf %15, %17 : vector<128x128xf32>
      %cst_16 = arith.constant 0.000000e+00 : f32
      %19 = vector.broadcast %cst_16 : f32 to vector<128x128xf32>
      %20 = arith.maximumf %18, %19 : vector<128x128xf32>
      %c0_17 = arith.constant 0 : index
      %c0_18 = arith.constant 0 : index
      %21 = vector.load %arg7[%c0_17, %c0_18] : memref<128x128xf32, #tpu.memory_space<vmem>>, vector<128x128xf32>
      tpu.vector_store %arg7[%c0_17, %c0_18], %20 {strides = array<i32>} : memref<128x128xf32, #tpu.memory_space<vmem>>, vector<128x128xf32>,
    } else {
    }
    return
  }
  func.func @transform_0(%arg0: i32, %arg1: i32, %arg2: i32) -> (i32, i32) {
    %c0_i32 = arith.constant 0 : i32
    return %arg0, %arg2 : i32, i32
  }
  func.func @transform_1(%arg0: i32, %arg1: i32, %arg2: i32) -> (i32, i32) {
    %c0_i32 = arith.constant 0 : i32
    return %arg2, %arg1 : i32, i32
  }
  func.func @transform_2(%arg0: i32, %arg1: i32, %arg2: i32) -> (i32, i32) {
    %c0_i32 = arith.constant 0 : i32
    %c0_i32_0 = arith.constant 0 : i32
    return %c0_i32, %arg1 : i32, i32
  }
  func.func @transform_3(%arg0: i32, %arg1: i32, %arg2: i32) -> (i32, i32) {
    %c0_i32 = arith.constant 0 : i32
    %c0_i32_0 = arith.constant 0 : i32
    return %c0_i32, %arg1 : i32, i32
  }
  func.func @transform_4(%arg0: i32, %arg1: i32, %arg2: i32) -> (i32, i32) {
    %c0_i32 = arith.constant 0 : i32
    return %arg0, %arg1 : i32, i32
  }
}

module attributes {stable_mosaic.version = 11 : i64} {
  func.func @_pool_bn_relu_kernel(%arg0: i32, %arg1: memref<128x4xf32, #tpu.memory_space<vmem>>, %arg2: memref<128x4xf32, #tpu.memory_space<vmem>>, %arg3: memref<128x4xf32, #tpu.memory_space<vmem>>, %arg4: memref<128x4xf32, #tpu.memory_space<vmem>>, %arg5: memref<1x4xf32, #tpu.memory_space<vmem>>, %arg6: memref<1x4xf32, #tpu.memory_space<vmem>>, %arg7: memref<128x4xf32, #tpu.memory_space<vmem>>) attributes {dimension_semantics = [#tpu.dimension_semantics<parallel>], iteration_bounds = array<i64: 1>, scalar_prefetch = 0 : i64, scratch_operands = 0 : i64, tpu.core_type = #tpu.core_type<tc>, window_params = [{transform_indices = @transform_0, window_bounds = array<i64: 128, 4>}, {transform_indices = @transform_1, window_bounds = array<i64: 128, 4>}, {transform_indices = @transform_2, window_bounds = array<i64: 128, 4>}, {transform_indices = @transform_3, window_bounds = array<i64: 128, 4>}, {pipeline_mode = #tpu.pipeline_mode<synchronous>, transform_indices = @transform_4, window_bounds = array<i64: 1, 4>}, {pipeline_mode = #tpu.pipeline_mode<synchronous>, transform_indices = @transform_5, window_bounds = array<i64: 1, 4>}, {transform_indices = @transform_6, window_bounds = array<i64: 128, 4>}]} {
    %c0 = arith.constant 0 : index
    %c0_0 = arith.constant 0 : index
    %0 = vector.load %arg1[%c0, %c0_0] : memref<128x4xf32, #tpu.memory_space<vmem>>, vector<128x4xf32>
    %c0_1 = arith.constant 0 : index
    %c0_2 = arith.constant 0 : index
    %1 = vector.load %arg2[%c0_1, %c0_2] : memref<128x4xf32, #tpu.memory_space<vmem>>, vector<128x4xf32>
    %2 = arith.maximumf %0, %1 : vector<128x4xf32>
    %c0_3 = arith.constant 0 : index
    %c0_4 = arith.constant 0 : index
    %3 = vector.load %arg3[%c0_3, %c0_4] : memref<128x4xf32, #tpu.memory_space<vmem>>, vector<128x4xf32>
    %c0_5 = arith.constant 0 : index
    %c0_6 = arith.constant 0 : index
    %4 = vector.load %arg4[%c0_5, %c0_6] : memref<128x4xf32, #tpu.memory_space<vmem>>, vector<128x4xf32>
    %5 = arith.maximumf %3, %4 : vector<128x4xf32>
    %6 = arith.maximumf %2, %5 : vector<128x4xf32>
    %c0_7 = arith.constant 0 : index
    %c0_8 = arith.constant 0 : index
    %7 = vector.load %arg5[%c0_7, %c0_8] : memref<1x4xf32, #tpu.memory_space<vmem>>, vector<1x4xf32>
    %8 = vector.broadcast %7 : vector<1x4xf32> to vector<128x4xf32>
    %9 = arith.mulf %6, %8 : vector<128x4xf32>
    %c0_9 = arith.constant 0 : index
    %c0_10 = arith.constant 0 : index
    %10 = vector.load %arg6[%c0_9, %c0_10] : memref<1x4xf32, #tpu.memory_space<vmem>>, vector<1x4xf32>
    %11 = vector.broadcast %10 : vector<1x4xf32> to vector<128x4xf32>
    %12 = arith.addf %9, %11 : vector<128x4xf32>
    %cst = arith.constant 0.000000e+00 : f32
    %13 = vector.broadcast %cst : f32 to vector<128x4xf32>
    %14 = arith.maximumf %12, %13 : vector<128x4xf32>
    %c0_11 = arith.constant 0 : index
    %c0_12 = arith.constant 0 : index
    %15 = vector.load %arg7[%c0_11, %c0_12] : memref<128x4xf32, #tpu.memory_space<vmem>>, vector<128x4xf32>
    tpu.vector_store %arg7[%c0_11, %c0_12], %14 {strides = array<i32>} : memref<128x4xf32, #tpu.memory_space<vmem>>, vector<128x4xf32>,
    return
  }
  func.func @transform_0(%arg0: i32) -> (i32, i32) {
    %c0_i32 = arith.constant 0 : i32
    %c0_i32_0 = arith.constant 0 : i32
    return %arg0, %c0_i32 : i32, i32
  }
  func.func @transform_1(%arg0: i32) -> (i32, i32) {
    %c0_i32 = arith.constant 0 : i32
    %c0_i32_0 = arith.constant 0 : i32
    return %arg0, %c0_i32 : i32, i32
  }
  func.func @transform_2(%arg0: i32) -> (i32, i32) {
    %c0_i32 = arith.constant 0 : i32
    %c0_i32_0 = arith.constant 0 : i32
    return %arg0, %c0_i32 : i32, i32
  }
  func.func @transform_3(%arg0: i32) -> (i32, i32) {
    %c0_i32 = arith.constant 0 : i32
    %c0_i32_0 = arith.constant 0 : i32
    return %arg0, %c0_i32 : i32, i32
  }
  func.func @transform_4(%arg0: i32) -> (i32, i32) {
    %c0_i32 = arith.constant 0 : i32
    %c0_i32_0 = arith.constant 0 : i32
    %c0_i32_1 = arith.constant 0 : i32
    return %c0_i32, %c0_i32_0 : i32, i32
  }
  func.func @transform_5(%arg0: i32) -> (i32, i32) {
    %c0_i32 = arith.constant 0 : i32
    %c0_i32_0 = arith.constant 0 : i32
    %c0_i32_1 = arith.constant 0 : i32
    return %c0_i32, %c0_i32_0 : i32, i32
  }
  func.func @transform_6(%arg0: i32) -> (i32, i32) {
    %c0_i32 = arith.constant 0 : i32
    %c0_i32_0 = arith.constant 0 : i32
    return %arg0, %c0_i32 : i32, i32
  }
}

module attributes {stable_mosaic.version = 11 : i64} {
  func.func @_mm_fused_kernel(%arg0: i32, %arg1: i32, %arg2: i32, %arg3: memref<32x144xbf16, #tpu.memory_space<vmem>>, %arg4: memref<144x128xbf16, #tpu.memory_space<vmem>>, %arg5: memref<1x128xf32, #tpu.memory_space<vmem>>, %arg6: memref<1x128xf32, #tpu.memory_space<vmem>>, %arg7: memref<32x128xf32, #tpu.memory_space<vmem>>, %arg8: memref<32x128xf32, #tpu.memory_space<vmem>>) attributes {dimension_semantics = [#tpu.dimension_semantics<parallel>, #tpu.dimension_semantics<parallel>, #tpu.dimension_semantics<arbitrary>], iteration_bounds = array<i64: 1, 1, 1>, scalar_prefetch = 0 : i64, scratch_operands = 1 : i64, tpu.core_type = #tpu.core_type<tc>, window_params = [{transform_indices = @transform_0, window_bounds = array<i64: 32, 144>}, {transform_indices = @transform_1, window_bounds = array<i64: 144, 128>}, {transform_indices = @transform_2, window_bounds = array<i64: 1, 128>}, {transform_indices = @transform_3, window_bounds = array<i64: 1, 128>}, {transform_indices = @transform_4, window_bounds = array<i64: 32, 128>}]} {
    %c0_i32 = arith.constant 0 : i32
    %0 = arith.cmpi eq, %arg2, %c0_i32 : i32
    %1 = arith.extui %0 : i1 to i32
    %c0_i32_0 = arith.constant 0 : i32
    %2 = arith.cmpi ne, %1, %c0_i32_0 : i32
    scf.if %2 {
      %cst_10 = arith.constant 0.000000e+00 : f32
      %12 = vector.broadcast %cst_10 : f32 to vector<32x128xf32>
      %c0_11 = arith.constant 0 : index
      %c0_12 = arith.constant 0 : index
      %13 = vector.load %arg8[%c0_11, %c0_12] : memref<32x128xf32, #tpu.memory_space<vmem>>, vector<32x128xf32>
      tpu.vector_store %arg8[%c0_11, %c0_12], %12 {strides = array<i32>} : memref<32x128xf32, #tpu.memory_space<vmem>>, vector<32x128xf32>,
    } else {
    }
    %c0 = arith.constant 0 : index
    %c0_1 = arith.constant 0 : index
    %3 = vector.load %arg8[%c0, %c0_1] : memref<32x128xf32, #tpu.memory_space<vmem>>, vector<32x128xf32>
    %c0_2 = arith.constant 0 : index
    %c0_3 = arith.constant 0 : index
    %4 = vector.load %arg3[%c0_2, %c0_3] : memref<32x144xbf16, #tpu.memory_space<vmem>>, vector<32x144xbf16>
    %c0_4 = arith.constant 0 : index
    %c0_5 = arith.constant 0 : index
    %5 = vector.load %arg4[%c0_4, %c0_5] : memref<144x128xbf16, #tpu.memory_space<vmem>>, vector<144x128xbf16>
    %cst = arith.constant dense<0.000000e+00> : vector<32x128xf32>
    %6 = tpu.matmul %4, %5, %cst {dimension_numbers = #tpu.dot_dimension_numbers<[1], [0], [0], [1], [0, 0, 1, 1], [], []>} : vector<32x144xbf16>, vector<144x128xbf16>, vector<32x128xf32> -> vector<32x128xf32>
    %7 = arith.addf %3, %6 : vector<32x128xf32>
    %c0_6 = arith.constant 0 : index
    %c0_7 = arith.constant 0 : index
    %8 = vector.load %arg8[%c0_6, %c0_7] : memref<32x128xf32, #tpu.memory_space<vmem>>, vector<32x128xf32>
    tpu.vector_store %arg8[%c0_6, %c0_7], %7 {strides = array<i32>} : memref<32x128xf32, #tpu.memory_space<vmem>>, vector<32x128xf32>,
    %c0_i32_8 = arith.constant 0 : i32
    %9 = arith.cmpi eq, %arg2, %c0_i32_8 : i32
    %10 = arith.extui %9 : i1 to i32
    %c0_i32_9 = arith.constant 0 : i32
    %11 = arith.cmpi ne, %10, %c0_i32_9 : i32
    scf.if %11 {
      %c0_10 = arith.constant 0 : index
      %c0_11 = arith.constant 0 : index
      %12 = vector.load %arg8[%c0_10, %c0_11] : memref<32x128xf32, #tpu.memory_space<vmem>>, vector<32x128xf32>
      %c0_12 = arith.constant 0 : index
      %c0_13 = arith.constant 0 : index
      %13 = vector.load %arg5[%c0_12, %c0_13] : memref<1x128xf32, #tpu.memory_space<vmem>>, vector<1x128xf32>
      %14 = vector.broadcast %13 : vector<1x128xf32> to vector<32x128xf32>
      %15 = arith.mulf %12, %14 : vector<32x128xf32>
      %c0_14 = arith.constant 0 : index
      %c0_15 = arith.constant 0 : index
      %16 = vector.load %arg6[%c0_14, %c0_15] : memref<1x128xf32, #tpu.memory_space<vmem>>, vector<1x128xf32>
      %17 = vector.broadcast %16 : vector<1x128xf32> to vector<32x128xf32>
      %18 = arith.addf %15, %17 : vector<32x128xf32>
      %cst_16 = arith.constant 0.000000e+00 : f32
      %19 = vector.broadcast %cst_16 : f32 to vector<32x128xf32>
      %20 = arith.maximumf %18, %19 : vector<32x128xf32>
      %c0_17 = arith.constant 0 : index
      %c0_18 = arith.constant 0 : index
      %21 = vector.load %arg7[%c0_17, %c0_18] : memref<32x128xf32, #tpu.memory_space<vmem>>, vector<32x128xf32>
      tpu.vector_store %arg7[%c0_17, %c0_18], %20 {strides = array<i32>} : memref<32x128xf32, #tpu.memory_space<vmem>>, vector<32x128xf32>,
    } else {
    }
    return
  }
  func.func @transform_0(%arg0: i32, %arg1: i32, %arg2: i32) -> (i32, i32) {
    %c0_i32 = arith.constant 0 : i32
    return %arg0, %arg2 : i32, i32
  }
  func.func @transform_1(%arg0: i32, %arg1: i32, %arg2: i32) -> (i32, i32) {
    %c0_i32 = arith.constant 0 : i32
    return %arg2, %arg1 : i32, i32
  }
  func.func @transform_2(%arg0: i32, %arg1: i32, %arg2: i32) -> (i32, i32) {
    %c0_i32 = arith.constant 0 : i32
    %c0_i32_0 = arith.constant 0 : i32
    return %c0_i32, %arg1 : i32, i32
  }
  func.func @transform_3(%arg0: i32, %arg1: i32, %arg2: i32) -> (i32, i32) {
    %c0_i32 = arith.constant 0 : i32
    %c0_i32_0 = arith.constant 0 : i32
    return %c0_i32, %arg1 : i32, i32
  }
  func.func @transform_4(%arg0: i32, %arg1: i32, %arg2: i32) -> (i32, i32) {
    %c0_i32 = arith.constant 0 : i32
    return %arg0, %arg1 : i32, i32
  }
}

module attributes {stable_mosaic.version = 11 : i64} {
  func.func @_pool_bn_relu_kernel(%arg0: i32, %arg1: memref<32x16xf32, #tpu.memory_space<vmem>>, %arg2: memref<32x16xf32, #tpu.memory_space<vmem>>, %arg3: memref<32x16xf32, #tpu.memory_space<vmem>>, %arg4: memref<32x16xf32, #tpu.memory_space<vmem>>, %arg5: memref<1x16xf32, #tpu.memory_space<vmem>>, %arg6: memref<1x16xf32, #tpu.memory_space<vmem>>, %arg7: memref<32x16xf32, #tpu.memory_space<vmem>>) attributes {dimension_semantics = [#tpu.dimension_semantics<parallel>], iteration_bounds = array<i64: 1>, scalar_prefetch = 0 : i64, scratch_operands = 0 : i64, tpu.core_type = #tpu.core_type<tc>, window_params = [{transform_indices = @transform_0, window_bounds = array<i64: 32, 16>}, {transform_indices = @transform_1, window_bounds = array<i64: 32, 16>}, {transform_indices = @transform_2, window_bounds = array<i64: 32, 16>}, {transform_indices = @transform_3, window_bounds = array<i64: 32, 16>}, {pipeline_mode = #tpu.pipeline_mode<synchronous>, transform_indices = @transform_4, window_bounds = array<i64: 1, 16>}, {pipeline_mode = #tpu.pipeline_mode<synchronous>, transform_indices = @transform_5, window_bounds = array<i64: 1, 16>}, {transform_indices = @transform_6, window_bounds = array<i64: 32, 16>}]} {
    %c0 = arith.constant 0 : index
    %c0_0 = arith.constant 0 : index
    %0 = vector.load %arg1[%c0, %c0_0] : memref<32x16xf32, #tpu.memory_space<vmem>>, vector<32x16xf32>
    %c0_1 = arith.constant 0 : index
    %c0_2 = arith.constant 0 : index
    %1 = vector.load %arg2[%c0_1, %c0_2] : memref<32x16xf32, #tpu.memory_space<vmem>>, vector<32x16xf32>
    %2 = arith.maximumf %0, %1 : vector<32x16xf32>
    %c0_3 = arith.constant 0 : index
    %c0_4 = arith.constant 0 : index
    %3 = vector.load %arg3[%c0_3, %c0_4] : memref<32x16xf32, #tpu.memory_space<vmem>>, vector<32x16xf32>
    %c0_5 = arith.constant 0 : index
    %c0_6 = arith.constant 0 : index
    %4 = vector.load %arg4[%c0_5, %c0_6] : memref<32x16xf32, #tpu.memory_space<vmem>>, vector<32x16xf32>
    %5 = arith.maximumf %3, %4 : vector<32x16xf32>
    %6 = arith.maximumf %2, %5 : vector<32x16xf32>
    %c0_7 = arith.constant 0 : index
    %c0_8 = arith.constant 0 : index
    %7 = vector.load %arg5[%c0_7, %c0_8] : memref<1x16xf32, #tpu.memory_space<vmem>>, vector<1x16xf32>
    %8 = vector.broadcast %7 : vector<1x16xf32> to vector<32x16xf32>
    %9 = arith.mulf %6, %8 : vector<32x16xf32>
    %c0_9 = arith.constant 0 : index
    %c0_10 = arith.constant 0 : index
    %10 = vector.load %arg6[%c0_9, %c0_10] : memref<1x16xf32, #tpu.memory_space<vmem>>, vector<1x16xf32>
    %11 = vector.broadcast %10 : vector<1x16xf32> to vector<32x16xf32>
    %12 = arith.addf %9, %11 : vector<32x16xf32>
    %cst = arith.constant 0.000000e+00 : f32
    %13 = vector.broadcast %cst : f32 to vector<32x16xf32>
    %14 = arith.maximumf %12, %13 : vector<32x16xf32>
    %c0_11 = arith.constant 0 : index
    %c0_12 = arith.constant 0 : index
    %15 = vector.load %arg7[%c0_11, %c0_12] : memref<32x16xf32, #tpu.memory_space<vmem>>, vector<32x16xf32>
    tpu.vector_store %arg7[%c0_11, %c0_12], %14 {strides = array<i32>} : memref<32x16xf32, #tpu.memory_space<vmem>>, vector<32x16xf32>,
    return
  }
  func.func @transform_0(%arg0: i32) -> (i32, i32) {
    %c0_i32 = arith.constant 0 : i32
    %c0_i32_0 = arith.constant 0 : i32
    return %arg0, %c0_i32 : i32, i32
  }
  func.func @transform_1(%arg0: i32) -> (i32, i32) {
    %c0_i32 = arith.constant 0 : i32
    %c0_i32_0 = arith.constant 0 : i32
    return %arg0, %c0_i32 : i32, i32
  }
  func.func @transform_2(%arg0: i32) -> (i32, i32) {
    %c0_i32 = arith.constant 0 : i32
    %c0_i32_0 = arith.constant 0 : i32
    return %arg0, %c0_i32 : i32, i32
  }
  func.func @transform_3(%arg0: i32) -> (i32, i32) {
    %c0_i32 = arith.constant 0 : i32
    %c0_i32_0 = arith.constant 0 : i32
    return %arg0, %c0_i32 : i32, i32
  }
  func.func @transform_4(%arg0: i32) -> (i32, i32) {
    %c0_i32 = arith.constant 0 : i32
    %c0_i32_0 = arith.constant 0 : i32
    %c0_i32_1 = arith.constant 0 : i32
    return %c0_i32, %c0_i32_0 : i32, i32
  }
  func.func @transform_5(%arg0: i32) -> (i32, i32) {
    %c0_i32 = arith.constant 0 : i32
    %c0_i32_0 = arith.constant 0 : i32
    %c0_i32_1 = arith.constant 0 : i32
    return %c0_i32, %c0_i32_0 : i32, i32
  }
  func.func @transform_6(%arg0: i32) -> (i32, i32) {
    %c0_i32 = arith.constant 0 : i32
    %c0_i32_0 = arith.constant 0 : i32
    return %arg0, %c0_i32 : i32, i32
  }
}

module attributes {stable_mosaic.version = 11 : i64} {
  func.func @_mm_fused_res_kernel(%arg0: i32, %arg1: i32, %arg2: i32, %arg3: memref<32x192xbf16, #tpu.memory_space<vmem>>, %arg4: memref<192x128xbf16, #tpu.memory_space<vmem>>, %arg5: memref<1x128xf32, #tpu.memory_space<vmem>>, %arg6: memref<1x128xf32, #tpu.memory_space<vmem>>, %arg7: memref<32x128xf32, #tpu.memory_space<vmem>>, %arg8: memref<32x128xf32, #tpu.memory_space<vmem>>, %arg9: memref<32x128xf32, #tpu.memory_space<vmem>>) attributes {dimension_semantics = [#tpu.dimension_semantics<parallel>, #tpu.dimension_semantics<parallel>, #tpu.dimension_semantics<arbitrary>], iteration_bounds = array<i64: 1, 1, 1>, scalar_prefetch = 0 : i64, scratch_operands = 1 : i64, tpu.core_type = #tpu.core_type<tc>, window_params = [{transform_indices = @transform_0, window_bounds = array<i64: 32, 192>}, {transform_indices = @transform_1, window_bounds = array<i64: 192, 128>}, {transform_indices = @transform_2, window_bounds = array<i64: 1, 128>}, {transform_indices = @transform_3, window_bounds = array<i64: 1, 128>}, {transform_indices = @transform_4, window_bounds = array<i64: 32, 128>}, {transform_indices = @transform_5, window_bounds = array<i64: 32, 128>}]} {
    %c0_i32 = arith.constant 0 : i32
    %0 = arith.cmpi eq, %arg2, %c0_i32 : i32
    %1 = arith.extui %0 : i1 to i32
    %c0_i32_0 = arith.constant 0 : i32
    %2 = arith.cmpi ne, %1, %c0_i32_0 : i32
    scf.if %2 {
      %cst_10 = arith.constant 0.000000e+00 : f32
      %12 = vector.broadcast %cst_10 : f32 to vector<32x128xf32>
      %c0_11 = arith.constant 0 : index
      %c0_12 = arith.constant 0 : index
      %13 = vector.load %arg9[%c0_11, %c0_12] : memref<32x128xf32, #tpu.memory_space<vmem>>, vector<32x128xf32>
      tpu.vector_store %arg9[%c0_11, %c0_12], %12 {strides = array<i32>} : memref<32x128xf32, #tpu.memory_space<vmem>>, vector<32x128xf32>,
    } else {
    }
    %c0 = arith.constant 0 : index
    %c0_1 = arith.constant 0 : index
    %3 = vector.load %arg9[%c0, %c0_1] : memref<32x128xf32, #tpu.memory_space<vmem>>, vector<32x128xf32>
    %c0_2 = arith.constant 0 : index
    %c0_3 = arith.constant 0 : index
    %4 = vector.load %arg3[%c0_2, %c0_3] : memref<32x192xbf16, #tpu.memory_space<vmem>>, vector<32x192xbf16>
    %c0_4 = arith.constant 0 : index
    %c0_5 = arith.constant 0 : index
    %5 = vector.load %arg4[%c0_4, %c0_5] : memref<192x128xbf16, #tpu.memory_space<vmem>>, vector<192x128xbf16>
    %cst = arith.constant dense<0.000000e+00> : vector<32x128xf32>
    %6 = tpu.matmul %4, %5, %cst {dimension_numbers = #tpu.dot_dimension_numbers<[1], [0], [0], [1], [0, 0, 1, 1], [], []>} : vector<32x192xbf16>, vector<192x128xbf16>, vector<32x128xf32> -> vector<32x128xf32>
    %7 = arith.addf %3, %6 : vector<32x128xf32>
    %c0_6 = arith.constant 0 : index
    %c0_7 = arith.constant 0 : index
    %8 = vector.load %arg9[%c0_6, %c0_7] : memref<32x128xf32, #tpu.memory_space<vmem>>, vector<32x128xf32>
    tpu.vector_store %arg9[%c0_6, %c0_7], %7 {strides = array<i32>} : memref<32x128xf32, #tpu.memory_space<vmem>>, vector<32x128xf32>,
    %c0_i32_8 = arith.constant 0 : i32
    %9 = arith.cmpi eq, %arg2, %c0_i32_8 : i32
    %10 = arith.extui %9 : i1 to i32
    %c0_i32_9 = arith.constant 0 : i32
    %11 = arith.cmpi ne, %10, %c0_i32_9 : i32
    scf.if %11 {
      %c0_10 = arith.constant 0 : index
      %c0_11 = arith.constant 0 : index
      %12 = vector.load %arg9[%c0_10, %c0_11] : memref<32x128xf32, #tpu.memory_space<vmem>>, vector<32x128xf32>
      %c0_12 = arith.constant 0 : index
      %c0_13 = arith.constant 0 : index
      %13 = vector.load %arg5[%c0_12, %c0_13] : memref<1x128xf32, #tpu.memory_space<vmem>>, vector<1x128xf32>
      %14 = vector.broadcast %13 : vector<1x128xf32> to vector<32x128xf32>
      %15 = arith.mulf %12, %14 : vector<32x128xf32>
      %c0_14 = arith.constant 0 : index
      %c0_15 = arith.constant 0 : index
      %16 = vector.load %arg6[%c0_14, %c0_15] : memref<1x128xf32, #tpu.memory_space<vmem>>, vector<1x128xf32>
      %17 = vector.broadcast %16 : vector<1x128xf32> to vector<32x128xf32>
      %18 = arith.addf %15, %17 : vector<32x128xf32>
      %c0_16 = arith.constant 0 : index
      %c0_17 = arith.constant 0 : index
      %19 = vector.load %arg7[%c0_16, %c0_17] : memref<32x128xf32, #tpu.memory_space<vmem>>, vector<32x128xf32>
      %20 = arith.addf %18, %19 : vector<32x128xf32>
      %cst_18 = arith.constant 0.000000e+00 : f32
      %21 = vector.broadcast %cst_18 : f32 to vector<32x128xf32>
      %22 = arith.maximumf %20, %21 : vector<32x128xf32>
      %c0_19 = arith.constant 0 : index
      %c0_20 = arith.constant 0 : index
      %23 = vector.load %arg8[%c0_19, %c0_20] : memref<32x128xf32, #tpu.memory_space<vmem>>, vector<32x128xf32>
      tpu.vector_store %arg8[%c0_19, %c0_20], %22 {strides = array<i32>} : memref<32x128xf32, #tpu.memory_space<vmem>>, vector<32x128xf32>,
    } else {
    }
    return
  }
  func.func @transform_0(%arg0: i32, %arg1: i32, %arg2: i32) -> (i32, i32) {
    %c0_i32 = arith.constant 0 : i32
    return %arg0, %arg2 : i32, i32
  }
  func.func @transform_1(%arg0: i32, %arg1: i32, %arg2: i32) -> (i32, i32) {
    %c0_i32 = arith.constant 0 : i32
    return %arg2, %arg1 : i32, i32
  }
  func.func @transform_2(%arg0: i32, %arg1: i32, %arg2: i32) -> (i32, i32) {
    %c0_i32 = arith.constant 0 : i32
    %c0_i32_0 = arith.constant 0 : i32
    return %c0_i32, %arg1 : i32, i32
  }
  func.func @transform_3(%arg0: i32, %arg1: i32, %arg2: i32) -> (i32, i32) {
    %c0_i32 = arith.constant 0 : i32
    %c0_i32_0 = arith.constant 0 : i32
    return %c0_i32, %arg1 : i32, i32
  }
  func.func @transform_4(%arg0: i32, %arg1: i32, %arg2: i32) -> (i32, i32) {
    %c0_i32 = arith.constant 0 : i32
    return %arg0, %arg1 : i32, i32
  }
  func.func @transform_5(%arg0: i32, %arg1: i32, %arg2: i32) -> (i32, i32) {
    %c0_i32 = arith.constant 0 : i32
    return %arg0, %arg1 : i32, i32
  }
}

module attributes {stable_mosaic.version = 11 : i64} {
  func.func @_mm_fused_kernel(%arg0: i32, %arg1: i32, %arg2: i32, %arg3: memref<32x192xbf16, #tpu.memory_space<vmem>>, %arg4: memref<192x128xbf16, #tpu.memory_space<vmem>>, %arg5: memref<1x128xf32, #tpu.memory_space<vmem>>, %arg6: memref<1x128xf32, #tpu.memory_space<vmem>>, %arg7: memref<32x128xf32, #tpu.memory_space<vmem>>, %arg8: memref<32x128xf32, #tpu.memory_space<vmem>>) attributes {dimension_semantics = [#tpu.dimension_semantics<parallel>, #tpu.dimension_semantics<parallel>, #tpu.dimension_semantics<arbitrary>], iteration_bounds = array<i64: 1, 1, 1>, scalar_prefetch = 0 : i64, scratch_operands = 1 : i64, tpu.core_type = #tpu.core_type<tc>, window_params = [{transform_indices = @transform_0, window_bounds = array<i64: 32, 192>}, {transform_indices = @transform_1, window_bounds = array<i64: 192, 128>}, {transform_indices = @transform_2, window_bounds = array<i64: 1, 128>}, {transform_indices = @transform_3, window_bounds = array<i64: 1, 128>}, {transform_indices = @transform_4, window_bounds = array<i64: 32, 128>}]} {
    %c0_i32 = arith.constant 0 : i32
    %0 = arith.cmpi eq, %arg2, %c0_i32 : i32
    %1 = arith.extui %0 : i1 to i32
    %c0_i32_0 = arith.constant 0 : i32
    %2 = arith.cmpi ne, %1, %c0_i32_0 : i32
    scf.if %2 {
      %cst_10 = arith.constant 0.000000e+00 : f32
      %12 = vector.broadcast %cst_10 : f32 to vector<32x128xf32>
      %c0_11 = arith.constant 0 : index
      %c0_12 = arith.constant 0 : index
      %13 = vector.load %arg8[%c0_11, %c0_12] : memref<32x128xf32, #tpu.memory_space<vmem>>, vector<32x128xf32>
      tpu.vector_store %arg8[%c0_11, %c0_12], %12 {strides = array<i32>} : memref<32x128xf32, #tpu.memory_space<vmem>>, vector<32x128xf32>,
    } else {
    }
    %c0 = arith.constant 0 : index
    %c0_1 = arith.constant 0 : index
    %3 = vector.load %arg8[%c0, %c0_1] : memref<32x128xf32, #tpu.memory_space<vmem>>, vector<32x128xf32>
    %c0_2 = arith.constant 0 : index
    %c0_3 = arith.constant 0 : index
    %4 = vector.load %arg3[%c0_2, %c0_3] : memref<32x192xbf16, #tpu.memory_space<vmem>>, vector<32x192xbf16>
    %c0_4 = arith.constant 0 : index
    %c0_5 = arith.constant 0 : index
    %5 = vector.load %arg4[%c0_4, %c0_5] : memref<192x128xbf16, #tpu.memory_space<vmem>>, vector<192x128xbf16>
    %cst = arith.constant dense<0.000000e+00> : vector<32x128xf32>
    %6 = tpu.matmul %4, %5, %cst {dimension_numbers = #tpu.dot_dimension_numbers<[1], [0], [0], [1], [0, 0, 1, 1], [], []>} : vector<32x192xbf16>, vector<192x128xbf16>, vector<32x128xf32> -> vector<32x128xf32>
    %7 = arith.addf %3, %6 : vector<32x128xf32>
    %c0_6 = arith.constant 0 : index
    %c0_7 = arith.constant 0 : index
    %8 = vector.load %arg8[%c0_6, %c0_7] : memref<32x128xf32, #tpu.memory_space<vmem>>, vector<32x128xf32>
    tpu.vector_store %arg8[%c0_6, %c0_7], %7 {strides = array<i32>} : memref<32x128xf32, #tpu.memory_space<vmem>>, vector<32x128xf32>,
    %c0_i32_8 = arith.constant 0 : i32
    %9 = arith.cmpi eq, %arg2, %c0_i32_8 : i32
    %10 = arith.extui %9 : i1 to i32
    %c0_i32_9 = arith.constant 0 : i32
    %11 = arith.cmpi ne, %10, %c0_i32_9 : i32
    scf.if %11 {
      %c0_10 = arith.constant 0 : index
      %c0_11 = arith.constant 0 : index
      %12 = vector.load %arg8[%c0_10, %c0_11] : memref<32x128xf32, #tpu.memory_space<vmem>>, vector<32x128xf32>
      %c0_12 = arith.constant 0 : index
      %c0_13 = arith.constant 0 : index
      %13 = vector.load %arg5[%c0_12, %c0_13] : memref<1x128xf32, #tpu.memory_space<vmem>>, vector<1x128xf32>
      %14 = vector.broadcast %13 : vector<1x128xf32> to vector<32x128xf32>
      %15 = arith.mulf %12, %14 : vector<32x128xf32>
      %c0_14 = arith.constant 0 : index
      %c0_15 = arith.constant 0 : index
      %16 = vector.load %arg6[%c0_14, %c0_15] : memref<1x128xf32, #tpu.memory_space<vmem>>, vector<1x128xf32>
      %17 = vector.broadcast %16 : vector<1x128xf32> to vector<32x128xf32>
      %18 = arith.addf %15, %17 : vector<32x128xf32>
      %cst_16 = arith.constant 0.000000e+00 : f32
      %19 = vector.broadcast %cst_16 : f32 to vector<32x128xf32>
      %20 = arith.maximumf %18, %19 : vector<32x128xf32>
      %c0_17 = arith.constant 0 : index
      %c0_18 = arith.constant 0 : index
      %21 = vector.load %arg7[%c0_17, %c0_18] : memref<32x128xf32, #tpu.memory_space<vmem>>, vector<32x128xf32>
      tpu.vector_store %arg7[%c0_17, %c0_18], %20 {strides = array<i32>} : memref<32x128xf32, #tpu.memory_space<vmem>>, vector<32x128xf32>,
    } else {
    }
    return
  }
  func.func @transform_0(%arg0: i32, %arg1: i32, %arg2: i32) -> (i32, i32) {
    %c0_i32 = arith.constant 0 : i32
    return %arg0, %arg2 : i32, i32
  }
  func.func @transform_1(%arg0: i32, %arg1: i32, %arg2: i32) -> (i32, i32) {
    %c0_i32 = arith.constant 0 : i32
    return %arg2, %arg1 : i32, i32
  }
  func.func @transform_2(%arg0: i32, %arg1: i32, %arg2: i32) -> (i32, i32) {
    %c0_i32 = arith.constant 0 : i32
    %c0_i32_0 = arith.constant 0 : i32
    return %c0_i32, %arg1 : i32, i32
  }
  func.func @transform_3(%arg0: i32, %arg1: i32, %arg2: i32) -> (i32, i32) {
    %c0_i32 = arith.constant 0 : i32
    %c0_i32_0 = arith.constant 0 : i32
    return %c0_i32, %arg1 : i32, i32
  }
  func.func @transform_4(%arg0: i32, %arg1: i32, %arg2: i32) -> (i32, i32) {
    %c0_i32 = arith.constant 0 : i32
    return %arg0, %arg1 : i32, i32
  }
}

module attributes {stable_mosaic.version = 11 : i64} {
  func.func @_mm_fused_kernel(%arg0: i32, %arg1: i32, %arg2: i32, %arg3: memref<16x256xbf16, #tpu.memory_space<vmem>>, %arg4: memref<256x128xbf16, #tpu.memory_space<vmem>>, %arg5: memref<1x128xf32, #tpu.memory_space<vmem>>, %arg6: memref<1x128xf32, #tpu.memory_space<vmem>>, %arg7: memref<16x128xf32, #tpu.memory_space<vmem>>, %arg8: memref<16x128xf32, #tpu.memory_space<vmem>>) attributes {dimension_semantics = [#tpu.dimension_semantics<parallel>, #tpu.dimension_semantics<parallel>, #tpu.dimension_semantics<arbitrary>], iteration_bounds = array<i64: 1, 1, 3>, scalar_prefetch = 0 : i64, scratch_operands = 1 : i64, tpu.core_type = #tpu.core_type<tc>, window_params = [{transform_indices = @transform_0, window_bounds = array<i64: 16, 256>}, {transform_indices = @transform_1, window_bounds = array<i64: 256, 128>}, {transform_indices = @transform_2, window_bounds = array<i64: 1, 128>}, {transform_indices = @transform_3, window_bounds = array<i64: 1, 128>}, {transform_indices = @transform_4, window_bounds = array<i64: 16, 128>}]} {
    %c0_i32 = arith.constant 0 : i32
    %0 = arith.cmpi eq, %arg2, %c0_i32 : i32
    %1 = arith.extui %0 : i1 to i32
    %c0_i32_0 = arith.constant 0 : i32
    %2 = arith.cmpi ne, %1, %c0_i32_0 : i32
    scf.if %2 {
      %cst_9 = arith.constant 0.000000e+00 : f32
      %12 = vector.broadcast %cst_9 : f32 to vector<16x128xf32>
      %c0_10 = arith.constant 0 : index
      %c0_11 = arith.constant 0 : index
      %13 = vector.load %arg8[%c0_10, %c0_11] : memref<16x128xf32, #tpu.memory_space<vmem>>, vector<16x128xf32>
      tpu.vector_store %arg8[%c0_10, %c0_11], %12 {strides = array<i32>} : memref<16x128xf32, #tpu.memory_space<vmem>>, vector<16x128xf32>,
    } else {
    }
    %c0 = arith.constant 0 : index
    %c0_1 = arith.constant 0 : index
    %3 = vector.load %arg8[%c0, %c0_1] : memref<16x128xf32, #tpu.memory_space<vmem>>, vector<16x128xf32>
    %c0_2 = arith.constant 0 : index
    %c0_3 = arith.constant 0 : index
    %4 = vector.load %arg3[%c0_2, %c0_3] : memref<16x256xbf16, #tpu.memory_space<vmem>>, vector<16x256xbf16>
    %c0_4 = arith.constant 0 : index
    %c0_5 = arith.constant 0 : index
    %5 = vector.load %arg4[%c0_4, %c0_5] : memref<256x128xbf16, #tpu.memory_space<vmem>>, vector<256x128xbf16>
    %cst = arith.constant dense<0.000000e+00> : vector<16x128xf32>
    %6 = tpu.matmul %4, %5, %cst {dimension_numbers = #tpu.dot_dimension_numbers<[1], [0], [0], [1], [0, 0, 1, 1], [], []>} : vector<16x256xbf16>, vector<256x128xbf16>, vector<16x128xf32> -> vector<16x128xf32>
    %7 = arith.addf %3, %6 : vector<16x128xf32>
    %c0_6 = arith.constant 0 : index
    %c0_7 = arith.constant 0 : index
    %8 = vector.load %arg8[%c0_6, %c0_7] : memref<16x128xf32, #tpu.memory_space<vmem>>, vector<16x128xf32>
    tpu.vector_store %arg8[%c0_6, %c0_7], %7 {strides = array<i32>} : memref<16x128xf32, #tpu.memory_space<vmem>>, vector<16x128xf32>,
    %c2_i32 = arith.constant 2 : i32
    %9 = arith.cmpi eq, %arg2, %c2_i32 : i32
    %10 = arith.extui %9 : i1 to i32
    %c0_i32_8 = arith.constant 0 : i32
    %11 = arith.cmpi ne, %10, %c0_i32_8 : i32
    scf.if %11 {
      %c0_9 = arith.constant 0 : index
      %c0_10 = arith.constant 0 : index
      %12 = vector.load %arg8[%c0_9, %c0_10] : memref<16x128xf32, #tpu.memory_space<vmem>>, vector<16x128xf32>
      %c0_11 = arith.constant 0 : index
      %c0_12 = arith.constant 0 : index
      %13 = vector.load %arg5[%c0_11, %c0_12] : memref<1x128xf32, #tpu.memory_space<vmem>>, vector<1x128xf32>
      %14 = vector.broadcast %13 : vector<1x128xf32> to vector<16x128xf32>
      %15 = arith.mulf %12, %14 : vector<16x128xf32>
      %c0_13 = arith.constant 0 : index
      %c0_14 = arith.constant 0 : index
      %16 = vector.load %arg6[%c0_13, %c0_14] : memref<1x128xf32, #tpu.memory_space<vmem>>, vector<1x128xf32>
      %17 = vector.broadcast %16 : vector<1x128xf32> to vector<16x128xf32>
      %18 = arith.addf %15, %17 : vector<16x128xf32>
      %cst_15 = arith.constant 0.000000e+00 : f32
      %19 = vector.broadcast %cst_15 : f32 to vector<16x128xf32>
      %20 = arith.maximumf %18, %19 : vector<16x128xf32>
      %c0_16 = arith.constant 0 : index
      %c0_17 = arith.constant 0 : index
      %21 = vector.load %arg7[%c0_16, %c0_17] : memref<16x128xf32, #tpu.memory_space<vmem>>, vector<16x128xf32>
      tpu.vector_store %arg7[%c0_16, %c0_17], %20 {strides = array<i32>} : memref<16x128xf32, #tpu.memory_space<vmem>>, vector<16x128xf32>,
    } else {
    }
    return
  }
  func.func @transform_0(%arg0: i32, %arg1: i32, %arg2: i32) -> (i32, i32) {
    %c0_i32 = arith.constant 0 : i32
    return %arg0, %arg2 : i32, i32
  }
  func.func @transform_1(%arg0: i32, %arg1: i32, %arg2: i32) -> (i32, i32) {
    %c0_i32 = arith.constant 0 : i32
    return %arg2, %arg1 : i32, i32
  }
  func.func @transform_2(%arg0: i32, %arg1: i32, %arg2: i32) -> (i32, i32) {
    %c0_i32 = arith.constant 0 : i32
    %c0_i32_0 = arith.constant 0 : i32
    return %c0_i32, %arg1 : i32, i32
  }
  func.func @transform_3(%arg0: i32, %arg1: i32, %arg2: i32) -> (i32, i32) {
    %c0_i32 = arith.constant 0 : i32
    %c0_i32_0 = arith.constant 0 : i32
    return %c0_i32, %arg1 : i32, i32
  }
  func.func @transform_4(%arg0: i32, %arg1: i32, %arg2: i32) -> (i32, i32) {
    %c0_i32 = arith.constant 0 : i32
    return %arg0, %arg1 : i32, i32
  }
}

module attributes {stable_mosaic.version = 11 : i64} {
  func.func @_pool_bn_relu_kernel(%arg0: i32, %arg1: memref<8x64xf32, #tpu.memory_space<vmem>>, %arg2: memref<8x64xf32, #tpu.memory_space<vmem>>, %arg3: memref<8x64xf32, #tpu.memory_space<vmem>>, %arg4: memref<8x64xf32, #tpu.memory_space<vmem>>, %arg5: memref<1x64xf32, #tpu.memory_space<vmem>>, %arg6: memref<1x64xf32, #tpu.memory_space<vmem>>, %arg7: memref<8x64xf32, #tpu.memory_space<vmem>>) attributes {dimension_semantics = [#tpu.dimension_semantics<parallel>], iteration_bounds = array<i64: 1>, scalar_prefetch = 0 : i64, scratch_operands = 0 : i64, tpu.core_type = #tpu.core_type<tc>, window_params = [{transform_indices = @transform_0, window_bounds = array<i64: 8, 64>}, {transform_indices = @transform_1, window_bounds = array<i64: 8, 64>}, {transform_indices = @transform_2, window_bounds = array<i64: 8, 64>}, {transform_indices = @transform_3, window_bounds = array<i64: 8, 64>}, {pipeline_mode = #tpu.pipeline_mode<synchronous>, transform_indices = @transform_4, window_bounds = array<i64: 1, 64>}, {pipeline_mode = #tpu.pipeline_mode<synchronous>, transform_indices = @transform_5, window_bounds = array<i64: 1, 64>}, {transform_indices = @transform_6, window_bounds = array<i64: 8, 64>}]} {
    %c0 = arith.constant 0 : index
    %c0_0 = arith.constant 0 : index
    %0 = vector.load %arg1[%c0, %c0_0] : memref<8x64xf32, #tpu.memory_space<vmem>>, vector<8x64xf32>
    %c0_1 = arith.constant 0 : index
    %c0_2 = arith.constant 0 : index
    %1 = vector.load %arg2[%c0_1, %c0_2] : memref<8x64xf32, #tpu.memory_space<vmem>>, vector<8x64xf32>
    %2 = arith.maximumf %0, %1 : vector<8x64xf32>
    %c0_3 = arith.constant 0 : index
    %c0_4 = arith.constant 0 : index
    %3 = vector.load %arg3[%c0_3, %c0_4] : memref<8x64xf32, #tpu.memory_space<vmem>>, vector<8x64xf32>
    %c0_5 = arith.constant 0 : index
    %c0_6 = arith.constant 0 : index
    %4 = vector.load %arg4[%c0_5, %c0_6] : memref<8x64xf32, #tpu.memory_space<vmem>>, vector<8x64xf32>
    %5 = arith.maximumf %3, %4 : vector<8x64xf32>
    %6 = arith.maximumf %2, %5 : vector<8x64xf32>
    %c0_7 = arith.constant 0 : index
    %c0_8 = arith.constant 0 : index
    %7 = vector.load %arg5[%c0_7, %c0_8] : memref<1x64xf32, #tpu.memory_space<vmem>>, vector<1x64xf32>
    %8 = vector.broadcast %7 : vector<1x64xf32> to vector<8x64xf32>
    %9 = arith.mulf %6, %8 : vector<8x64xf32>
    %c0_9 = arith.constant 0 : index
    %c0_10 = arith.constant 0 : index
    %10 = vector.load %arg6[%c0_9, %c0_10] : memref<1x64xf32, #tpu.memory_space<vmem>>, vector<1x64xf32>
    %11 = vector.broadcast %10 : vector<1x64xf32> to vector<8x64xf32>
    %12 = arith.addf %9, %11 : vector<8x64xf32>
    %cst = arith.constant 0.000000e+00 : f32
    %13 = vector.broadcast %cst : f32 to vector<8x64xf32>
    %14 = arith.maximumf %12, %13 : vector<8x64xf32>
    %c0_11 = arith.constant 0 : index
    %c0_12 = arith.constant 0 : index
    %15 = vector.load %arg7[%c0_11, %c0_12] : memref<8x64xf32, #tpu.memory_space<vmem>>, vector<8x64xf32>
    tpu.vector_store %arg7[%c0_11, %c0_12], %14 {strides = array<i32>} : memref<8x64xf32, #tpu.memory_space<vmem>>, vector<8x64xf32>,
    return
  }
  func.func @transform_0(%arg0: i32) -> (i32, i32) {
    %c0_i32 = arith.constant 0 : i32
    %c0_i32_0 = arith.constant 0 : i32
    return %arg0, %c0_i32 : i32, i32
  }
  func.func @transform_1(%arg0: i32) -> (i32, i32) {
    %c0_i32 = arith.constant 0 : i32
    %c0_i32_0 = arith.constant 0 : i32
    return %arg0, %c0_i32 : i32, i32
  }
  func.func @transform_2(%arg0: i32) -> (i32, i32) {
    %c0_i32 = arith.constant 0 : i32
    %c0_i32_0 = arith.constant 0 : i32
    return %arg0, %c0_i32 : i32, i32
  }
  func.func @transform_3(%arg0: i32) -> (i32, i32) {
    %c0_i32 = arith.constant 0 : i32
    %c0_i32_0 = arith.constant 0 : i32
    return %arg0, %c0_i32 : i32, i32
  }
  func.func @transform_4(%arg0: i32) -> (i32, i32) {
    %c0_i32 = arith.constant 0 : i32
    %c0_i32_0 = arith.constant 0 : i32
    %c0_i32_1 = arith.constant 0 : i32
    return %c0_i32, %c0_i32_0 : i32, i32
  }
  func.func @transform_5(%arg0: i32) -> (i32, i32) {
    %c0_i32 = arith.constant 0 : i32
    %c0_i32_0 = arith.constant 0 : i32
    %c0_i32_1 = arith.constant 0 : i32
    return %c0_i32, %c0_i32_0 : i32, i32
  }
  func.func @transform_6(%arg0: i32) -> (i32, i32) {
    %c0_i32 = arith.constant 0 : i32
    %c0_i32_0 = arith.constant 0 : i32
    return %arg0, %c0_i32 : i32, i32
  }
}

module attributes {stable_mosaic.version = 11 : i64} {
  func.func @_mm_fused_kernel(%arg0: i32, %arg1: i32, %arg2: i32, %arg3: memref<16x384xbf16, #tpu.memory_space<vmem>>, %arg4: memref<384x128xbf16, #tpu.memory_space<vmem>>, %arg5: memref<1x128xf32, #tpu.memory_space<vmem>>, %arg6: memref<1x128xf32, #tpu.memory_space<vmem>>, %arg7: memref<16x128xf32, #tpu.memory_space<vmem>>, %arg8: memref<16x128xf32, #tpu.memory_space<vmem>>) attributes {dimension_semantics = [#tpu.dimension_semantics<parallel>, #tpu.dimension_semantics<parallel>, #tpu.dimension_semantics<arbitrary>], iteration_bounds = array<i64: 1, 1, 1>, scalar_prefetch = 0 : i64, scratch_operands = 1 : i64, tpu.core_type = #tpu.core_type<tc>, window_params = [{transform_indices = @transform_0, window_bounds = array<i64: 16, 384>}, {transform_indices = @transform_1, window_bounds = array<i64: 384, 128>}, {transform_indices = @transform_2, window_bounds = array<i64: 1, 128>}, {transform_indices = @transform_3, window_bounds = array<i64: 1, 128>}, {transform_indices = @transform_4, window_bounds = array<i64: 16, 128>}]} {
    %c0_i32 = arith.constant 0 : i32
    %0 = arith.cmpi eq, %arg2, %c0_i32 : i32
    %1 = arith.extui %0 : i1 to i32
    %c0_i32_0 = arith.constant 0 : i32
    %2 = arith.cmpi ne, %1, %c0_i32_0 : i32
    scf.if %2 {
      %cst_10 = arith.constant 0.000000e+00 : f32
      %12 = vector.broadcast %cst_10 : f32 to vector<16x128xf32>
      %c0_11 = arith.constant 0 : index
      %c0_12 = arith.constant 0 : index
      %13 = vector.load %arg8[%c0_11, %c0_12] : memref<16x128xf32, #tpu.memory_space<vmem>>, vector<16x128xf32>
      tpu.vector_store %arg8[%c0_11, %c0_12], %12 {strides = array<i32>} : memref<16x128xf32, #tpu.memory_space<vmem>>, vector<16x128xf32>,
    } else {
    }
    %c0 = arith.constant 0 : index
    %c0_1 = arith.constant 0 : index
    %3 = vector.load %arg8[%c0, %c0_1] : memref<16x128xf32, #tpu.memory_space<vmem>>, vector<16x128xf32>
    %c0_2 = arith.constant 0 : index
    %c0_3 = arith.constant 0 : index
    %4 = vector.load %arg3[%c0_2, %c0_3] : memref<16x384xbf16, #tpu.memory_space<vmem>>, vector<16x384xbf16>
    %c0_4 = arith.constant 0 : index
    %c0_5 = arith.constant 0 : index
    %5 = vector.load %arg4[%c0_4, %c0_5] : memref<384x128xbf16, #tpu.memory_space<vmem>>, vector<384x128xbf16>
    %cst = arith.constant dense<0.000000e+00> : vector<16x128xf32>
    %6 = tpu.matmul %4, %5, %cst {dimension_numbers = #tpu.dot_dimension_numbers<[1], [0], [0], [1], [0, 0, 1, 1], [], []>} : vector<16x384xbf16>, vector<384x128xbf16>, vector<16x128xf32> -> vector<16x128xf32>
    %7 = arith.addf %3, %6 : vector<16x128xf32>
    %c0_6 = arith.constant 0 : index
    %c0_7 = arith.constant 0 : index
    %8 = vector.load %arg8[%c0_6, %c0_7] : memref<16x128xf32, #tpu.memory_space<vmem>>, vector<16x128xf32>
    tpu.vector_store %arg8[%c0_6, %c0_7], %7 {strides = array<i32>} : memref<16x128xf32, #tpu.memory_space<vmem>>, vector<16x128xf32>,
    %c0_i32_8 = arith.constant 0 : i32
    %9 = arith.cmpi eq, %arg2, %c0_i32_8 : i32
    %10 = arith.extui %9 : i1 to i32
    %c0_i32_9 = arith.constant 0 : i32
    %11 = arith.cmpi ne, %10, %c0_i32_9 : i32
    scf.if %11 {
      %c0_10 = arith.constant 0 : index
      %c0_11 = arith.constant 0 : index
      %12 = vector.load %arg8[%c0_10, %c0_11] : memref<16x128xf32, #tpu.memory_space<vmem>>, vector<16x128xf32>
      %c0_12 = arith.constant 0 : index
      %c0_13 = arith.constant 0 : index
      %13 = vector.load %arg5[%c0_12, %c0_13] : memref<1x128xf32, #tpu.memory_space<vmem>>, vector<1x128xf32>
      %14 = vector.broadcast %13 : vector<1x128xf32> to vector<16x128xf32>
      %15 = arith.mulf %12, %14 : vector<16x128xf32>
      %c0_14 = arith.constant 0 : index
      %c0_15 = arith.constant 0 : index
      %16 = vector.load %arg6[%c0_14, %c0_15] : memref<1x128xf32, #tpu.memory_space<vmem>>, vector<1x128xf32>
      %17 = vector.broadcast %16 : vector<1x128xf32> to vector<16x128xf32>
      %18 = arith.addf %15, %17 : vector<16x128xf32>
      %cst_16 = arith.constant 0.000000e+00 : f32
      %19 = vector.broadcast %cst_16 : f32 to vector<16x128xf32>
      %20 = arith.maximumf %18, %19 : vector<16x128xf32>
      %c0_17 = arith.constant 0 : index
      %c0_18 = arith.constant 0 : index
      %21 = vector.load %arg7[%c0_17, %c0_18] : memref<16x128xf32, #tpu.memory_space<vmem>>, vector<16x128xf32>
      tpu.vector_store %arg7[%c0_17, %c0_18], %20 {strides = array<i32>} : memref<16x128xf32, #tpu.memory_space<vmem>>, vector<16x128xf32>,
    } else {
    }
    return
  }
  func.func @transform_0(%arg0: i32, %arg1: i32, %arg2: i32) -> (i32, i32) {
    %c0_i32 = arith.constant 0 : i32
    return %arg0, %arg2 : i32, i32
  }
  func.func @transform_1(%arg0: i32, %arg1: i32, %arg2: i32) -> (i32, i32) {
    %c0_i32 = arith.constant 0 : i32
    return %arg2, %arg1 : i32, i32
  }
  func.func @transform_2(%arg0: i32, %arg1: i32, %arg2: i32) -> (i32, i32) {
    %c0_i32 = arith.constant 0 : i32
    %c0_i32_0 = arith.constant 0 : i32
    return %c0_i32, %arg1 : i32, i32
  }
  func.func @transform_3(%arg0: i32, %arg1: i32, %arg2: i32) -> (i32, i32) {
    %c0_i32 = arith.constant 0 : i32
    %c0_i32_0 = arith.constant 0 : i32
    return %c0_i32, %arg1 : i32, i32
  }
  func.func @transform_4(%arg0: i32, %arg1: i32, %arg2: i32) -> (i32, i32) {
    %c0_i32 = arith.constant 0 : i32
    return %arg0, %arg1 : i32, i32
  }
}

module attributes {stable_mosaic.version = 11 : i64} {
  func.func @_mm_fused_res_kernel(%arg0: i32, %arg1: i32, %arg2: i32, %arg3: memref<16x384xbf16, #tpu.memory_space<vmem>>, %arg4: memref<384x128xbf16, #tpu.memory_space<vmem>>, %arg5: memref<1x128xf32, #tpu.memory_space<vmem>>, %arg6: memref<1x128xf32, #tpu.memory_space<vmem>>, %arg7: memref<16x128xf32, #tpu.memory_space<vmem>>, %arg8: memref<16x128xf32, #tpu.memory_space<vmem>>, %arg9: memref<16x128xf32, #tpu.memory_space<vmem>>) attributes {dimension_semantics = [#tpu.dimension_semantics<parallel>, #tpu.dimension_semantics<parallel>, #tpu.dimension_semantics<arbitrary>], iteration_bounds = array<i64: 1, 1, 1>, scalar_prefetch = 0 : i64, scratch_operands = 1 : i64, tpu.core_type = #tpu.core_type<tc>, window_params = [{transform_indices = @transform_0, window_bounds = array<i64: 16, 384>}, {transform_indices = @transform_1, window_bounds = array<i64: 384, 128>}, {transform_indices = @transform_2, window_bounds = array<i64: 1, 128>}, {transform_indices = @transform_3, window_bounds = array<i64: 1, 128>}, {transform_indices = @transform_4, window_bounds = array<i64: 16, 128>}, {transform_indices = @transform_5, window_bounds = array<i64: 16, 128>}]} {
    %c0_i32 = arith.constant 0 : i32
    %0 = arith.cmpi eq, %arg2, %c0_i32 : i32
    %1 = arith.extui %0 : i1 to i32
    %c0_i32_0 = arith.constant 0 : i32
    %2 = arith.cmpi ne, %1, %c0_i32_0 : i32
    scf.if %2 {
      %cst_10 = arith.constant 0.000000e+00 : f32
      %12 = vector.broadcast %cst_10 : f32 to vector<16x128xf32>
      %c0_11 = arith.constant 0 : index
      %c0_12 = arith.constant 0 : index
      %13 = vector.load %arg9[%c0_11, %c0_12] : memref<16x128xf32, #tpu.memory_space<vmem>>, vector<16x128xf32>
      tpu.vector_store %arg9[%c0_11, %c0_12], %12 {strides = array<i32>} : memref<16x128xf32, #tpu.memory_space<vmem>>, vector<16x128xf32>,
    } else {
    }
    %c0 = arith.constant 0 : index
    %c0_1 = arith.constant 0 : index
    %3 = vector.load %arg9[%c0, %c0_1] : memref<16x128xf32, #tpu.memory_space<vmem>>, vector<16x128xf32>
    %c0_2 = arith.constant 0 : index
    %c0_3 = arith.constant 0 : index
    %4 = vector.load %arg3[%c0_2, %c0_3] : memref<16x384xbf16, #tpu.memory_space<vmem>>, vector<16x384xbf16>
    %c0_4 = arith.constant 0 : index
    %c0_5 = arith.constant 0 : index
    %5 = vector.load %arg4[%c0_4, %c0_5] : memref<384x128xbf16, #tpu.memory_space<vmem>>, vector<384x128xbf16>
    %cst = arith.constant dense<0.000000e+00> : vector<16x128xf32>
    %6 = tpu.matmul %4, %5, %cst {dimension_numbers = #tpu.dot_dimension_numbers<[1], [0], [0], [1], [0, 0, 1, 1], [], []>} : vector<16x384xbf16>, vector<384x128xbf16>, vector<16x128xf32> -> vector<16x128xf32>
    %7 = arith.addf %3, %6 : vector<16x128xf32>
    %c0_6 = arith.constant 0 : index
    %c0_7 = arith.constant 0 : index
    %8 = vector.load %arg9[%c0_6, %c0_7] : memref<16x128xf32, #tpu.memory_space<vmem>>, vector<16x128xf32>
    tpu.vector_store %arg9[%c0_6, %c0_7], %7 {strides = array<i32>} : memref<16x128xf32, #tpu.memory_space<vmem>>, vector<16x128xf32>,
    %c0_i32_8 = arith.constant 0 : i32
    %9 = arith.cmpi eq, %arg2, %c0_i32_8 : i32
    %10 = arith.extui %9 : i1 to i32
    %c0_i32_9 = arith.constant 0 : i32
    %11 = arith.cmpi ne, %10, %c0_i32_9 : i32
    scf.if %11 {
      %c0_10 = arith.constant 0 : index
      %c0_11 = arith.constant 0 : index
      %12 = vector.load %arg9[%c0_10, %c0_11] : memref<16x128xf32, #tpu.memory_space<vmem>>, vector<16x128xf32>
      %c0_12 = arith.constant 0 : index
      %c0_13 = arith.constant 0 : index
      %13 = vector.load %arg5[%c0_12, %c0_13] : memref<1x128xf32, #tpu.memory_space<vmem>>, vector<1x128xf32>
      %14 = vector.broadcast %13 : vector<1x128xf32> to vector<16x128xf32>
      %15 = arith.mulf %12, %14 : vector<16x128xf32>
      %c0_14 = arith.constant 0 : index
      %c0_15 = arith.constant 0 : index
      %16 = vector.load %arg6[%c0_14, %c0_15] : memref<1x128xf32, #tpu.memory_space<vmem>>, vector<1x128xf32>
      %17 = vector.broadcast %16 : vector<1x128xf32> to vector<16x128xf32>
      %18 = arith.addf %15, %17 : vector<16x128xf32>
      %c0_16 = arith.constant 0 : index
      %c0_17 = arith.constant 0 : index
      %19 = vector.load %arg7[%c0_16, %c0_17] : memref<16x128xf32, #tpu.memory_space<vmem>>, vector<16x128xf32>
      %20 = arith.addf %18, %19 : vector<16x128xf32>
      %cst_18 = arith.constant 0.000000e+00 : f32
      %21 = vector.broadcast %cst_18 : f32 to vector<16x128xf32>
      %22 = arith.maximumf %20, %21 : vector<16x128xf32>
      %c0_19 = arith.constant 0 : index
      %c0_20 = arith.constant 0 : index
      %23 = vector.load %arg8[%c0_19, %c0_20] : memref<16x128xf32, #tpu.memory_space<vmem>>, vector<16x128xf32>
      tpu.vector_store %arg8[%c0_19, %c0_20], %22 {strides = array<i32>} : memref<16x128xf32, #tpu.memory_space<vmem>>, vector<16x128xf32>,
    } else {
    }
    return
  }
  func.func @transform_0(%arg0: i32, %arg1: i32, %arg2: i32) -> (i32, i32) {
    %c0_i32 = arith.constant 0 : i32
    return %arg0, %arg2 : i32, i32
  }
  func.func @transform_1(%arg0: i32, %arg1: i32, %arg2: i32) -> (i32, i32) {
    %c0_i32 = arith.constant 0 : i32
    return %arg2, %arg1 : i32, i32
  }
  func.func @transform_2(%arg0: i32, %arg1: i32, %arg2: i32) -> (i32, i32) {
    %c0_i32 = arith.constant 0 : i32
    %c0_i32_0 = arith.constant 0 : i32
    return %c0_i32, %arg1 : i32, i32
  }
  func.func @transform_3(%arg0: i32, %arg1: i32, %arg2: i32) -> (i32, i32) {
    %c0_i32 = arith.constant 0 : i32
    %c0_i32_0 = arith.constant 0 : i32
    return %c0_i32, %arg1 : i32, i32
  }
  func.func @transform_4(%arg0: i32, %arg1: i32, %arg2: i32) -> (i32, i32) {
    %c0_i32 = arith.constant 0 : i32
    return %arg0, %arg1 : i32, i32
  }
  func.func @transform_5(%arg0: i32, %arg1: i32, %arg2: i32) -> (i32, i32) {
    %c0_i32 = arith.constant 0 : i32
    return %arg0, %arg1 : i32, i32
  }
}

module attributes {stable_mosaic.version = 11 : i64} {
  func.func @_mm_fused_kernel(%arg0: i32, %arg1: i32, %arg2: i32, %arg3: memref<16x512xbf16, #tpu.memory_space<vmem>>, %arg4: memref<512x128xbf16, #tpu.memory_space<vmem>>, %arg5: memref<1x128xf32, #tpu.memory_space<vmem>>, %arg6: memref<1x128xf32, #tpu.memory_space<vmem>>, %arg7: memref<16x128xf32, #tpu.memory_space<vmem>>, %arg8: memref<16x128xf32, #tpu.memory_space<vmem>>) attributes {dimension_semantics = [#tpu.dimension_semantics<parallel>, #tpu.dimension_semantics<parallel>, #tpu.dimension_semantics<arbitrary>], iteration_bounds = array<i64: 1, 2, 1>, scalar_prefetch = 0 : i64, scratch_operands = 1 : i64, tpu.core_type = #tpu.core_type<tc>, window_params = [{transform_indices = @transform_0, window_bounds = array<i64: 16, 512>}, {transform_indices = @transform_1, window_bounds = array<i64: 512, 128>}, {transform_indices = @transform_2, window_bounds = array<i64: 1, 128>}, {transform_indices = @transform_3, window_bounds = array<i64: 1, 128>}, {transform_indices = @transform_4, window_bounds = array<i64: 16, 128>}]} {
    %c0_i32 = arith.constant 0 : i32
    %0 = arith.cmpi eq, %arg2, %c0_i32 : i32
    %1 = arith.extui %0 : i1 to i32
    %c0_i32_0 = arith.constant 0 : i32
    %2 = arith.cmpi ne, %1, %c0_i32_0 : i32
    scf.if %2 {
      %cst_10 = arith.constant 0.000000e+00 : f32
      %12 = vector.broadcast %cst_10 : f32 to vector<16x128xf32>
      %c0_11 = arith.constant 0 : index
      %c0_12 = arith.constant 0 : index
      %13 = vector.load %arg8[%c0_11, %c0_12] : memref<16x128xf32, #tpu.memory_space<vmem>>, vector<16x128xf32>
      tpu.vector_store %arg8[%c0_11, %c0_12], %12 {strides = array<i32>} : memref<16x128xf32, #tpu.memory_space<vmem>>, vector<16x128xf32>,
    } else {
    }
    %c0 = arith.constant 0 : index
    %c0_1 = arith.constant 0 : index
    %3 = vector.load %arg8[%c0, %c0_1] : memref<16x128xf32, #tpu.memory_space<vmem>>, vector<16x128xf32>
    %c0_2 = arith.constant 0 : index
    %c0_3 = arith.constant 0 : index
    %4 = vector.load %arg3[%c0_2, %c0_3] : memref<16x512xbf16, #tpu.memory_space<vmem>>, vector<16x512xbf16>
    %c0_4 = arith.constant 0 : index
    %c0_5 = arith.constant 0 : index
    %5 = vector.load %arg4[%c0_4, %c0_5] : memref<512x128xbf16, #tpu.memory_space<vmem>>, vector<512x128xbf16>
    %cst = arith.constant dense<0.000000e+00> : vector<16x128xf32>
    %6 = tpu.matmul %4, %5, %cst {dimension_numbers = #tpu.dot_dimension_numbers<[1], [0], [0], [1], [0, 0, 1, 1], [], []>} : vector<16x512xbf16>, vector<512x128xbf16>, vector<16x128xf32> -> vector<16x128xf32>
    %7 = arith.addf %3, %6 : vector<16x128xf32>
    %c0_6 = arith.constant 0 : index
    %c0_7 = arith.constant 0 : index
    %8 = vector.load %arg8[%c0_6, %c0_7] : memref<16x128xf32, #tpu.memory_space<vmem>>, vector<16x128xf32>
    tpu.vector_store %arg8[%c0_6, %c0_7], %7 {strides = array<i32>} : memref<16x128xf32, #tpu.memory_space<vmem>>, vector<16x128xf32>,
    %c0_i32_8 = arith.constant 0 : i32
    %9 = arith.cmpi eq, %arg2, %c0_i32_8 : i32
    %10 = arith.extui %9 : i1 to i32
    %c0_i32_9 = arith.constant 0 : i32
    %11 = arith.cmpi ne, %10, %c0_i32_9 : i32
    scf.if %11 {
      %c0_10 = arith.constant 0 : index
      %c0_11 = arith.constant 0 : index
      %12 = vector.load %arg8[%c0_10, %c0_11] : memref<16x128xf32, #tpu.memory_space<vmem>>, vector<16x128xf32>
      %c0_12 = arith.constant 0 : index
      %c0_13 = arith.constant 0 : index
      %13 = vector.load %arg5[%c0_12, %c0_13] : memref<1x128xf32, #tpu.memory_space<vmem>>, vector<1x128xf32>
      %14 = vector.broadcast %13 : vector<1x128xf32> to vector<16x128xf32>
      %15 = arith.mulf %12, %14 : vector<16x128xf32>
      %c0_14 = arith.constant 0 : index
      %c0_15 = arith.constant 0 : index
      %16 = vector.load %arg6[%c0_14, %c0_15] : memref<1x128xf32, #tpu.memory_space<vmem>>, vector<1x128xf32>
      %17 = vector.broadcast %16 : vector<1x128xf32> to vector<16x128xf32>
      %18 = arith.addf %15, %17 : vector<16x128xf32>
      %cst_16 = arith.constant 0.000000e+00 : f32
      %19 = vector.broadcast %cst_16 : f32 to vector<16x128xf32>
      %20 = arith.maximumf %18, %19 : vector<16x128xf32>
      %c0_17 = arith.constant 0 : index
      %c0_18 = arith.constant 0 : index
      %21 = vector.load %arg7[%c0_17, %c0_18] : memref<16x128xf32, #tpu.memory_space<vmem>>, vector<16x128xf32>
      tpu.vector_store %arg7[%c0_17, %c0_18], %20 {strides = array<i32>} : memref<16x128xf32, #tpu.memory_space<vmem>>, vector<16x128xf32>,
    } else {
    }
    return
  }
  func.func @transform_0(%arg0: i32, %arg1: i32, %arg2: i32) -> (i32, i32) {
    %c0_i32 = arith.constant 0 : i32
    return %arg0, %arg2 : i32, i32
  }
  func.func @transform_1(%arg0: i32, %arg1: i32, %arg2: i32) -> (i32, i32) {
    %c0_i32 = arith.constant 0 : i32
    return %arg2, %arg1 : i32, i32
  }
  func.func @transform_2(%arg0: i32, %arg1: i32, %arg2: i32) -> (i32, i32) {
    %c0_i32 = arith.constant 0 : i32
    %c0_i32_0 = arith.constant 0 : i32
    return %c0_i32, %arg1 : i32, i32
  }
  func.func @transform_3(%arg0: i32, %arg1: i32, %arg2: i32) -> (i32, i32) {
    %c0_i32 = arith.constant 0 : i32
    %c0_i32_0 = arith.constant 0 : i32
    return %c0_i32, %arg1 : i32, i32
  }
  func.func @transform_4(%arg0: i32, %arg1: i32, %arg2: i32) -> (i32, i32) {
    %c0_i32 = arith.constant 0 : i32
    return %arg0, %arg1 : i32, i32
  }
}

module attributes {stable_mosaic.version = 11 : i64} {
  func.func @_mm_fused_kernel(%arg0: i32, %arg1: i32, %arg2: i32, %arg3: memref<32x256xbf16, #tpu.memory_space<vmem>>, %arg4: memref<256x128xbf16, #tpu.memory_space<vmem>>, %arg5: memref<1x128xf32, #tpu.memory_space<vmem>>, %arg6: memref<1x128xf32, #tpu.memory_space<vmem>>, %arg7: memref<32x128xf32, #tpu.memory_space<vmem>>, %arg8: memref<32x128xf32, #tpu.memory_space<vmem>>) attributes {dimension_semantics = [#tpu.dimension_semantics<parallel>, #tpu.dimension_semantics<parallel>, #tpu.dimension_semantics<arbitrary>], iteration_bounds = array<i64: 1, 1, 1>, scalar_prefetch = 0 : i64, scratch_operands = 1 : i64, tpu.core_type = #tpu.core_type<tc>, window_params = [{transform_indices = @transform_0, window_bounds = array<i64: 32, 256>}, {transform_indices = @transform_1, window_bounds = array<i64: 256, 128>}, {transform_indices = @transform_2, window_bounds = array<i64: 1, 128>}, {transform_indices = @transform_3, window_bounds = array<i64: 1, 128>}, {transform_indices = @transform_4, window_bounds = array<i64: 32, 128>}]} {
    %c0_i32 = arith.constant 0 : i32
    %0 = arith.cmpi eq, %arg2, %c0_i32 : i32
    %1 = arith.extui %0 : i1 to i32
    %c0_i32_0 = arith.constant 0 : i32
    %2 = arith.cmpi ne, %1, %c0_i32_0 : i32
    scf.if %2 {
      %cst_10 = arith.constant 0.000000e+00 : f32
      %12 = vector.broadcast %cst_10 : f32 to vector<32x128xf32>
      %c0_11 = arith.constant 0 : index
      %c0_12 = arith.constant 0 : index
      %13 = vector.load %arg8[%c0_11, %c0_12] : memref<32x128xf32, #tpu.memory_space<vmem>>, vector<32x128xf32>
      tpu.vector_store %arg8[%c0_11, %c0_12], %12 {strides = array<i32>} : memref<32x128xf32, #tpu.memory_space<vmem>>, vector<32x128xf32>,
    } else {
    }
    %c0 = arith.constant 0 : index
    %c0_1 = arith.constant 0 : index
    %3 = vector.load %arg8[%c0, %c0_1] : memref<32x128xf32, #tpu.memory_space<vmem>>, vector<32x128xf32>
    %c0_2 = arith.constant 0 : index
    %c0_3 = arith.constant 0 : index
    %4 = vector.load %arg3[%c0_2, %c0_3] : memref<32x256xbf16, #tpu.memory_space<vmem>>, vector<32x256xbf16>
    %c0_4 = arith.constant 0 : index
    %c0_5 = arith.constant 0 : index
    %5 = vector.load %arg4[%c0_4, %c0_5] : memref<256x128xbf16, #tpu.memory_space<vmem>>, vector<256x128xbf16>
    %cst = arith.constant dense<0.000000e+00> : vector<32x128xf32>
    %6 = tpu.matmul %4, %5, %cst {dimension_numbers = #tpu.dot_dimension_numbers<[1], [0], [0], [1], [0, 0, 1, 1], [], []>} : vector<32x256xbf16>, vector<256x128xbf16>, vector<32x128xf32> -> vector<32x128xf32>
    %7 = arith.addf %3, %6 : vector<32x128xf32>
    %c0_6 = arith.constant 0 : index
    %c0_7 = arith.constant 0 : index
    %8 = vector.load %arg8[%c0_6, %c0_7] : memref<32x128xf32, #tpu.memory_space<vmem>>, vector<32x128xf32>
    tpu.vector_store %arg8[%c0_6, %c0_7], %7 {strides = array<i32>} : memref<32x128xf32, #tpu.memory_space<vmem>>, vector<32x128xf32>,
    %c0_i32_8 = arith.constant 0 : i32
    %9 = arith.cmpi eq, %arg2, %c0_i32_8 : i32
    %10 = arith.extui %9 : i1 to i32
    %c0_i32_9 = arith.constant 0 : i32
    %11 = arith.cmpi ne, %10, %c0_i32_9 : i32
    scf.if %11 {
      %c0_10 = arith.constant 0 : index
      %c0_11 = arith.constant 0 : index
      %12 = vector.load %arg8[%c0_10, %c0_11] : memref<32x128xf32, #tpu.memory_space<vmem>>, vector<32x128xf32>
      %c0_12 = arith.constant 0 : index
      %c0_13 = arith.constant 0 : index
      %13 = vector.load %arg5[%c0_12, %c0_13] : memref<1x128xf32, #tpu.memory_space<vmem>>, vector<1x128xf32>
      %14 = vector.broadcast %13 : vector<1x128xf32> to vector<32x128xf32>
      %15 = arith.mulf %12, %14 : vector<32x128xf32>
      %c0_14 = arith.constant 0 : index
      %c0_15 = arith.constant 0 : index
      %16 = vector.load %arg6[%c0_14, %c0_15] : memref<1x128xf32, #tpu.memory_space<vmem>>, vector<1x128xf32>
      %17 = vector.broadcast %16 : vector<1x128xf32> to vector<32x128xf32>
      %18 = arith.addf %15, %17 : vector<32x128xf32>
      %cst_16 = arith.constant 0.000000e+00 : f32
      %19 = vector.broadcast %cst_16 : f32 to vector<32x128xf32>
      %20 = arith.maximumf %18, %19 : vector<32x128xf32>
      %c0_17 = arith.constant 0 : index
      %c0_18 = arith.constant 0 : index
      %21 = vector.load %arg7[%c0_17, %c0_18] : memref<32x128xf32, #tpu.memory_space<vmem>>, vector<32x128xf32>
      tpu.vector_store %arg7[%c0_17, %c0_18], %20 {strides = array<i32>} : memref<32x128xf32, #tpu.memory_space<vmem>>, vector<32x128xf32>,
    } else {
    }
    return
  }
  func.func @transform_0(%arg0: i32, %arg1: i32, %arg2: i32) -> (i32, i32) {
    %c0_i32 = arith.constant 0 : i32
    return %arg0, %arg2 : i32, i32
  }
  func.func @transform_1(%arg0: i32, %arg1: i32, %arg2: i32) -> (i32, i32) {
    %c0_i32 = arith.constant 0 : i32
    return %arg2, %arg1 : i32, i32
  }
  func.func @transform_2(%arg0: i32, %arg1: i32, %arg2: i32) -> (i32, i32) {
    %c0_i32 = arith.constant 0 : i32
    %c0_i32_0 = arith.constant 0 : i32
    return %c0_i32, %arg1 : i32, i32
  }
  func.func @transform_3(%arg0: i32, %arg1: i32, %arg2: i32) -> (i32, i32) {
    %c0_i32 = arith.constant 0 : i32
    %c0_i32_0 = arith.constant 0 : i32
    return %c0_i32, %arg1 : i32, i32
  }
  func.func @transform_4(%arg0: i32, %arg1: i32, %arg2: i32) -> (i32, i32) {
    %c0_i32 = arith.constant 0 : i32
    return %arg0, %arg1 : i32, i32
  }
}

module attributes {stable_mosaic.version = 11 : i64} {
  func.func @_mm_fused_kernel(%arg0: i32, %arg1: i32, %arg2: i32, %arg3: memref<128x48xbf16, #tpu.memory_space<vmem>>, %arg4: memref<48x128xbf16, #tpu.memory_space<vmem>>, %arg5: memref<1x128xf32, #tpu.memory_space<vmem>>, %arg6: memref<1x128xf32, #tpu.memory_space<vmem>>, %arg7: memref<128x128xf32, #tpu.memory_space<vmem>>, %arg8: memref<128x128xf32, #tpu.memory_space<vmem>>) attributes {dimension_semantics = [#tpu.dimension_semantics<parallel>, #tpu.dimension_semantics<parallel>, #tpu.dimension_semantics<arbitrary>], iteration_bounds = array<i64: 1, 1, 1>, scalar_prefetch = 0 : i64, scratch_operands = 1 : i64, tpu.core_type = #tpu.core_type<tc>, window_params = [{transform_indices = @transform_0, window_bounds = array<i64: 128, 48>}, {transform_indices = @transform_1, window_bounds = array<i64: 48, 128>}, {transform_indices = @transform_2, window_bounds = array<i64: 1, 128>}, {transform_indices = @transform_3, window_bounds = array<i64: 1, 128>}, {transform_indices = @transform_4, window_bounds = array<i64: 128, 128>}]} {
    %c0_i32 = arith.constant 0 : i32
    %0 = arith.cmpi eq, %arg2, %c0_i32 : i32
    %1 = arith.extui %0 : i1 to i32
    %c0_i32_0 = arith.constant 0 : i32
    %2 = arith.cmpi ne, %1, %c0_i32_0 : i32
    scf.if %2 {
      %cst_10 = arith.constant 0.000000e+00 : f32
      %12 = vector.broadcast %cst_10 : f32 to vector<128x128xf32>
      %c0_11 = arith.constant 0 : index
      %c0_12 = arith.constant 0 : index
      %13 = vector.load %arg8[%c0_11, %c0_12] : memref<128x128xf32, #tpu.memory_space<vmem>>, vector<128x128xf32>
      tpu.vector_store %arg8[%c0_11, %c0_12], %12 {strides = array<i32>} : memref<128x128xf32, #tpu.memory_space<vmem>>, vector<128x128xf32>,
    } else {
    }
    %c0 = arith.constant 0 : index
    %c0_1 = arith.constant 0 : index
    %3 = vector.load %arg8[%c0, %c0_1] : memref<128x128xf32, #tpu.memory_space<vmem>>, vector<128x128xf32>
    %c0_2 = arith.constant 0 : index
    %c0_3 = arith.constant 0 : index
    %4 = vector.load %arg3[%c0_2, %c0_3] : memref<128x48xbf16, #tpu.memory_space<vmem>>, vector<128x48xbf16>
    %c0_4 = arith.constant 0 : index
    %c0_5 = arith.constant 0 : index
    %5 = vector.load %arg4[%c0_4, %c0_5] : memref<48x128xbf16, #tpu.memory_space<vmem>>, vector<48x128xbf16>
    %cst = arith.constant dense<0.000000e+00> : vector<128x128xf32>
    %6 = tpu.matmul %4, %5, %cst {dimension_numbers = #tpu.dot_dimension_numbers<[1], [0], [0], [1], [0, 0, 1, 1], [], []>} : vector<128x48xbf16>, vector<48x128xbf16>, vector<128x128xf32> -> vector<128x128xf32>
    %7 = arith.addf %3, %6 : vector<128x128xf32>
    %c0_6 = arith.constant 0 : index
    %c0_7 = arith.constant 0 : index
    %8 = vector.load %arg8[%c0_6, %c0_7] : memref<128x128xf32, #tpu.memory_space<vmem>>, vector<128x128xf32>
    tpu.vector_store %arg8[%c0_6, %c0_7], %7 {strides = array<i32>} : memref<128x128xf32, #tpu.memory_space<vmem>>, vector<128x128xf32>,
    %c0_i32_8 = arith.constant 0 : i32
    %9 = arith.cmpi eq, %arg2, %c0_i32_8 : i32
    %10 = arith.extui %9 : i1 to i32
    %c0_i32_9 = arith.constant 0 : i32
    %11 = arith.cmpi ne, %10, %c0_i32_9 : i32
    scf.if %11 {
      %c0_10 = arith.constant 0 : index
      %c0_11 = arith.constant 0 : index
      %12 = vector.load %arg8[%c0_10, %c0_11] : memref<128x128xf32, #tpu.memory_space<vmem>>, vector<128x128xf32>
      %c0_12 = arith.constant 0 : index
      %c0_13 = arith.constant 0 : index
      %13 = vector.load %arg5[%c0_12, %c0_13] : memref<1x128xf32, #tpu.memory_space<vmem>>, vector<1x128xf32>
      %14 = vector.broadcast %13 : vector<1x128xf32> to vector<128x128xf32>
      %15 = arith.mulf %12, %14 : vector<128x128xf32>
      %c0_14 = arith.constant 0 : index
      %c0_15 = arith.constant 0 : index
      %16 = vector.load %arg6[%c0_14, %c0_15] : memref<1x128xf32, #tpu.memory_space<vmem>>, vector<1x128xf32>
      %17 = vector.broadcast %16 : vector<1x128xf32> to vector<128x128xf32>
      %18 = arith.addf %15, %17 : vector<128x128xf32>
      %cst_16 = arith.constant 0.000000e+00 : f32
      %19 = vector.broadcast %cst_16 : f32 to vector<128x128xf32>
      %20 = arith.maximumf %18, %19 : vector<128x128xf32>
      %c0_17 = arith.constant 0 : index
      %c0_18 = arith.constant 0 : index
      %21 = vector.load %arg7[%c0_17, %c0_18] : memref<128x128xf32, #tpu.memory_space<vmem>>, vector<128x128xf32>
      tpu.vector_store %arg7[%c0_17, %c0_18], %20 {strides = array<i32>} : memref<128x128xf32, #tpu.memory_space<vmem>>, vector<128x128xf32>,
    } else {
    }
    return
  }
  func.func @transform_0(%arg0: i32, %arg1: i32, %arg2: i32) -> (i32, i32) {
    %c0_i32 = arith.constant 0 : i32
    return %arg0, %arg2 : i32, i32
  }
  func.func @transform_1(%arg0: i32, %arg1: i32, %arg2: i32) -> (i32, i32) {
    %c0_i32 = arith.constant 0 : i32
    return %arg2, %arg1 : i32, i32
  }
  func.func @transform_2(%arg0: i32, %arg1: i32, %arg2: i32) -> (i32, i32) {
    %c0_i32 = arith.constant 0 : i32
    %c0_i32_0 = arith.constant 0 : i32
    return %c0_i32, %arg1 : i32, i32
  }
  func.func @transform_3(%arg0: i32, %arg1: i32, %arg2: i32) -> (i32, i32) {
    %c0_i32 = arith.constant 0 : i32
    %c0_i32_0 = arith.constant 0 : i32
    return %c0_i32, %arg1 : i32, i32
  }
  func.func @transform_4(%arg0: i32, %arg1: i32, %arg2: i32) -> (i32, i32) {
    %c0_i32 = arith.constant 0 : i32
    return %arg0, %arg1 : i32, i32
  }
}

module attributes {stable_mosaic.version = 11 : i64} {
  func.func @_mm_fused_res_kernel(%arg0: i32, %arg1: i32, %arg2: i32, %arg3: memref<128x48xbf16, #tpu.memory_space<vmem>>, %arg4: memref<48x128xbf16, #tpu.memory_space<vmem>>, %arg5: memref<1x128xf32, #tpu.memory_space<vmem>>, %arg6: memref<1x128xf32, #tpu.memory_space<vmem>>, %arg7: memref<128x128xf32, #tpu.memory_space<vmem>>, %arg8: memref<128x128xf32, #tpu.memory_space<vmem>>, %arg9: memref<128x128xf32, #tpu.memory_space<vmem>>) attributes {dimension_semantics = [#tpu.dimension_semantics<parallel>, #tpu.dimension_semantics<parallel>, #tpu.dimension_semantics<arbitrary>], iteration_bounds = array<i64: 1, 1, 1>, scalar_prefetch = 0 : i64, scratch_operands = 1 : i64, tpu.core_type = #tpu.core_type<tc>, window_params = [{transform_indices = @transform_0, window_bounds = array<i64: 128, 48>}, {transform_indices = @transform_1, window_bounds = array<i64: 48, 128>}, {transform_indices = @transform_2, window_bounds = array<i64: 1, 128>}, {transform_indices = @transform_3, window_bounds = array<i64: 1, 128>}, {transform_indices = @transform_4, window_bounds = array<i64: 128, 128>}, {transform_indices = @transform_5, window_bounds = array<i64: 128, 128>}]} {
    %c0_i32 = arith.constant 0 : i32
    %0 = arith.cmpi eq, %arg2, %c0_i32 : i32
    %1 = arith.extui %0 : i1 to i32
    %c0_i32_0 = arith.constant 0 : i32
    %2 = arith.cmpi ne, %1, %c0_i32_0 : i32
    scf.if %2 {
      %cst_10 = arith.constant 0.000000e+00 : f32
      %12 = vector.broadcast %cst_10 : f32 to vector<128x128xf32>
      %c0_11 = arith.constant 0 : index
      %c0_12 = arith.constant 0 : index
      %13 = vector.load %arg9[%c0_11, %c0_12] : memref<128x128xf32, #tpu.memory_space<vmem>>, vector<128x128xf32>
      tpu.vector_store %arg9[%c0_11, %c0_12], %12 {strides = array<i32>} : memref<128x128xf32, #tpu.memory_space<vmem>>, vector<128x128xf32>,
    } else {
    }
    %c0 = arith.constant 0 : index
    %c0_1 = arith.constant 0 : index
    %3 = vector.load %arg9[%c0, %c0_1] : memref<128x128xf32, #tpu.memory_space<vmem>>, vector<128x128xf32>
    %c0_2 = arith.constant 0 : index
    %c0_3 = arith.constant 0 : index
    %4 = vector.load %arg3[%c0_2, %c0_3] : memref<128x48xbf16, #tpu.memory_space<vmem>>, vector<128x48xbf16>
    %c0_4 = arith.constant 0 : index
    %c0_5 = arith.constant 0 : index
    %5 = vector.load %arg4[%c0_4, %c0_5] : memref<48x128xbf16, #tpu.memory_space<vmem>>, vector<48x128xbf16>
    %cst = arith.constant dense<0.000000e+00> : vector<128x128xf32>
    %6 = tpu.matmul %4, %5, %cst {dimension_numbers = #tpu.dot_dimension_numbers<[1], [0], [0], [1], [0, 0, 1, 1], [], []>} : vector<128x48xbf16>, vector<48x128xbf16>, vector<128x128xf32> -> vector<128x128xf32>
    %7 = arith.addf %3, %6 : vector<128x128xf32>
    %c0_6 = arith.constant 0 : index
    %c0_7 = arith.constant 0 : index
    %8 = vector.load %arg9[%c0_6, %c0_7] : memref<128x128xf32, #tpu.memory_space<vmem>>, vector<128x128xf32>
    tpu.vector_store %arg9[%c0_6, %c0_7], %7 {strides = array<i32>} : memref<128x128xf32, #tpu.memory_space<vmem>>, vector<128x128xf32>,
    %c0_i32_8 = arith.constant 0 : i32
    %9 = arith.cmpi eq, %arg2, %c0_i32_8 : i32
    %10 = arith.extui %9 : i1 to i32
    %c0_i32_9 = arith.constant 0 : i32
    %11 = arith.cmpi ne, %10, %c0_i32_9 : i32
    scf.if %11 {
      %c0_10 = arith.constant 0 : index
      %c0_11 = arith.constant 0 : index
      %12 = vector.load %arg9[%c0_10, %c0_11] : memref<128x128xf32, #tpu.memory_space<vmem>>, vector<128x128xf32>
      %c0_12 = arith.constant 0 : index
      %c0_13 = arith.constant 0 : index
      %13 = vector.load %arg5[%c0_12, %c0_13] : memref<1x128xf32, #tpu.memory_space<vmem>>, vector<1x128xf32>
      %14 = vector.broadcast %13 : vector<1x128xf32> to vector<128x128xf32>
      %15 = arith.mulf %12, %14 : vector<128x128xf32>
      %c0_14 = arith.constant 0 : index
      %c0_15 = arith.constant 0 : index
      %16 = vector.load %arg6[%c0_14, %c0_15] : memref<1x128xf32, #tpu.memory_space<vmem>>, vector<1x128xf32>
      %17 = vector.broadcast %16 : vector<1x128xf32> to vector<128x128xf32>
      %18 = arith.addf %15, %17 : vector<128x128xf32>
      %c0_16 = arith.constant 0 : index
      %c0_17 = arith.constant 0 : index
      %19 = vector.load %arg7[%c0_16, %c0_17] : memref<128x128xf32, #tpu.memory_space<vmem>>, vector<128x128xf32>
      %20 = arith.addf %18, %19 : vector<128x128xf32>
      %cst_18 = arith.constant 0.000000e+00 : f32
      %21 = vector.broadcast %cst_18 : f32 to vector<128x128xf32>
      %22 = arith.maximumf %20, %21 : vector<128x128xf32>
      %c0_19 = arith.constant 0 : index
      %c0_20 = arith.constant 0 : index
      %23 = vector.load %arg8[%c0_19, %c0_20] : memref<128x128xf32, #tpu.memory_space<vmem>>, vector<128x128xf32>
      tpu.vector_store %arg8[%c0_19, %c0_20], %22 {strides = array<i32>} : memref<128x128xf32, #tpu.memory_space<vmem>>, vector<128x128xf32>,
    } else {
    }
    return
  }
  func.func @transform_0(%arg0: i32, %arg1: i32, %arg2: i32) -> (i32, i32) {
    %c0_i32 = arith.constant 0 : i32
    return %arg0, %arg2 : i32, i32
  }
  func.func @transform_1(%arg0: i32, %arg1: i32, %arg2: i32) -> (i32, i32) {
    %c0_i32 = arith.constant 0 : i32
    return %arg2, %arg1 : i32, i32
  }
  func.func @transform_2(%arg0: i32, %arg1: i32, %arg2: i32) -> (i32, i32) {
    %c0_i32 = arith.constant 0 : i32
    %c0_i32_0 = arith.constant 0 : i32
    return %c0_i32, %arg1 : i32, i32
  }
  func.func @transform_3(%arg0: i32, %arg1: i32, %arg2: i32) -> (i32, i32) {
    %c0_i32 = arith.constant 0 : i32
    %c0_i32_0 = arith.constant 0 : i32
    return %c0_i32, %arg1 : i32, i32
  }
  func.func @transform_4(%arg0: i32, %arg1: i32, %arg2: i32) -> (i32, i32) {
    %c0_i32 = arith.constant 0 : i32
    return %arg0, %arg1 : i32, i32
  }
  func.func @transform_5(%arg0: i32, %arg1: i32, %arg2: i32) -> (i32, i32) {
    %c0_i32 = arith.constant 0 : i32
    return %arg0, %arg1 : i32, i32
  }
}

module attributes {stable_mosaic.version = 11 : i64} {
  func.func @_mm_fused_kernel(%arg0: i32, %arg1: i32, %arg2: i32, %arg3: memref<128x16xbf16, #tpu.memory_space<vmem>>, %arg4: memref<16x128xbf16, #tpu.memory_space<vmem>>, %arg5: memref<1x128xf32, #tpu.memory_space<vmem>>, %arg6: memref<1x128xf32, #tpu.memory_space<vmem>>, %arg7: memref<128x128xf32, #tpu.memory_space<vmem>>, %arg8: memref<128x128xf32, #tpu.memory_space<vmem>>) attributes {dimension_semantics = [#tpu.dimension_semantics<parallel>, #tpu.dimension_semantics<parallel>, #tpu.dimension_semantics<arbitrary>], iteration_bounds = array<i64: 1, 1, 1>, scalar_prefetch = 0 : i64, scratch_operands = 1 : i64, tpu.core_type = #tpu.core_type<tc>, window_params = [{transform_indices = @transform_0, window_bounds = array<i64: 128, 16>}, {transform_indices = @transform_1, window_bounds = array<i64: 16, 128>}, {transform_indices = @transform_2, window_bounds = array<i64: 1, 128>}, {transform_indices = @transform_3, window_bounds = array<i64: 1, 128>}, {transform_indices = @transform_4, window_bounds = array<i64: 128, 128>}]} {
    %c0_i32 = arith.constant 0 : i32
    %0 = arith.cmpi eq, %arg2, %c0_i32 : i32
    %1 = arith.extui %0 : i1 to i32
    %c0_i32_0 = arith.constant 0 : i32
    %2 = arith.cmpi ne, %1, %c0_i32_0 : i32
    scf.if %2 {
      %cst_10 = arith.constant 0.000000e+00 : f32
      %12 = vector.broadcast %cst_10 : f32 to vector<128x128xf32>
      %c0_11 = arith.constant 0 : index
      %c0_12 = arith.constant 0 : index
      %13 = vector.load %arg8[%c0_11, %c0_12] : memref<128x128xf32, #tpu.memory_space<vmem>>, vector<128x128xf32>
      tpu.vector_store %arg8[%c0_11, %c0_12], %12 {strides = array<i32>} : memref<128x128xf32, #tpu.memory_space<vmem>>, vector<128x128xf32>,
    } else {
    }
    %c0 = arith.constant 0 : index
    %c0_1 = arith.constant 0 : index
    %3 = vector.load %arg8[%c0, %c0_1] : memref<128x128xf32, #tpu.memory_space<vmem>>, vector<128x128xf32>
    %c0_2 = arith.constant 0 : index
    %c0_3 = arith.constant 0 : index
    %4 = vector.load %arg3[%c0_2, %c0_3] : memref<128x16xbf16, #tpu.memory_space<vmem>>, vector<128x16xbf16>
    %c0_4 = arith.constant 0 : index
    %c0_5 = arith.constant 0 : index
    %5 = vector.load %arg4[%c0_4, %c0_5] : memref<16x128xbf16, #tpu.memory_space<vmem>>, vector<16x128xbf16>
    %cst = arith.constant dense<0.000000e+00> : vector<128x128xf32>
    %6 = tpu.matmul %4, %5, %cst {dimension_numbers = #tpu.dot_dimension_numbers<[1], [0], [0], [1], [0, 0, 1, 1], [], []>} : vector<128x16xbf16>, vector<16x128xbf16>, vector<128x128xf32> -> vector<128x128xf32>
    %7 = arith.addf %3, %6 : vector<128x128xf32>
    %c0_6 = arith.constant 0 : index
    %c0_7 = arith.constant 0 : index
    %8 = vector.load %arg8[%c0_6, %c0_7] : memref<128x128xf32, #tpu.memory_space<vmem>>, vector<128x128xf32>
    tpu.vector_store %arg8[%c0_6, %c0_7], %7 {strides = array<i32>} : memref<128x128xf32, #tpu.memory_space<vmem>>, vector<128x128xf32>,
    %c0_i32_8 = arith.constant 0 : i32
    %9 = arith.cmpi eq, %arg2, %c0_i32_8 : i32
    %10 = arith.extui %9 : i1 to i32
    %c0_i32_9 = arith.constant 0 : i32
    %11 = arith.cmpi ne, %10, %c0_i32_9 : i32
    scf.if %11 {
      %c0_10 = arith.constant 0 : index
      %c0_11 = arith.constant 0 : index
      %12 = vector.load %arg8[%c0_10, %c0_11] : memref<128x128xf32, #tpu.memory_space<vmem>>, vector<128x128xf32>
      %c0_12 = arith.constant 0 : index
      %c0_13 = arith.constant 0 : index
      %13 = vector.load %arg5[%c0_12, %c0_13] : memref<1x128xf32, #tpu.memory_space<vmem>>, vector<1x128xf32>
      %14 = vector.broadcast %13 : vector<1x128xf32> to vector<128x128xf32>
      %15 = arith.mulf %12, %14 : vector<128x128xf32>
      %c0_14 = arith.constant 0 : index
      %c0_15 = arith.constant 0 : index
      %16 = vector.load %arg6[%c0_14, %c0_15] : memref<1x128xf32, #tpu.memory_space<vmem>>, vector<1x128xf32>
      %17 = vector.broadcast %16 : vector<1x128xf32> to vector<128x128xf32>
      %18 = arith.addf %15, %17 : vector<128x128xf32>
      %c0_16 = arith.constant 0 : index
      %c0_17 = arith.constant 0 : index
      %19 = vector.load %arg7[%c0_16, %c0_17] : memref<128x128xf32, #tpu.memory_space<vmem>>, vector<128x128xf32>
      tpu.vector_store %arg7[%c0_16, %c0_17], %18 {strides = array<i32>} : memref<128x128xf32, #tpu.memory_space<vmem>>, vector<128x128xf32>,
    } else {
    }
    return
  }
  func.func @transform_0(%arg0: i32, %arg1: i32, %arg2: i32) -> (i32, i32) {
    %c0_i32 = arith.constant 0 : i32
    return %arg0, %arg2 : i32, i32
  }
  func.func @transform_1(%arg0: i32, %arg1: i32, %arg2: i32) -> (i32, i32) {
    %c0_i32 = arith.constant 0 : i32
    return %arg2, %arg1 : i32, i32
  }
  func.func @transform_2(%arg0: i32, %arg1: i32, %arg2: i32) -> (i32, i32) {
    %c0_i32 = arith.constant 0 : i32
    %c0_i32_0 = arith.constant 0 : i32
    return %c0_i32, %arg1 : i32, i32
  }
  func.func @transform_3(%arg0: i32, %arg1: i32, %arg2: i32) -> (i32, i32) {
    %c0_i32 = arith.constant 0 : i32
    %c0_i32_0 = arith.constant 0 : i32
    return %c0_i32, %arg1 : i32, i32
  }
  func.func @transform_4(%arg0: i32, %arg1: i32, %arg2: i32) -> (i32, i32) {
    %c0_i32 = arith.constant 0 : i32
    return %arg0, %arg1 : i32, i32
  }
}

</mosaic_0001>

<llo_original>
// kernel: _lambda_.77
$region0: #{_lambda_.77}
  #allocation0 [shape = 'u32[]', space=smem, size = 0x4, offset = 0x4, fixed_abs, tag = 'smem constant byte address 0x4 - core index']
  #allocation1 [shape = 'u32[144,128]{1,0:T(1,128)}', space=vmem, size = 0x12000, scoped, tag = 'internal scratch']
  #allocation2 [shape = 'f32[128,128]{1,0:T(8,128)}', space=vmem, size = 0x10000, scoped, tag = 'scratch operand']
  %s0 = inlined_call_operand.vmem [shape: bf16[128,36], index: 0, kind: input, shape index: {}]
  %s1 = inlined_call_operand.vmem [shape: bf16[36,128], index: 1, kind: input, shape index: {}]
  %s2 = inlined_call_operand.vmem [shape: f32[1,128], index: 2, kind: input, shape index: {}]
  %s3 = inlined_call_operand.vmem [shape: f32[1,128], index: 3, kind: input, shape index: {}]
  %s4 = inlined_call_operand.vmem [shape: f32[128,128], index: 4, kind: output, shape index: {}]
  %s5 = sld [smem:[#allocation0]]
  $region34: #{_lambda_.77} parent=0
    _
  %s7 = ssub.s32 1, %s5
  %s8 = scalar_select 0, %s7, %s5
  // Predicated region
  $region2: #{_lambda_.77} parent=0 // pred_check
    _
  $region3: #{_lambda_.77} parent=0 // pred_check_branch
    %10 = sbr.rel (0) target = $region5
  $region4: #{_lambda_.77} parent=0 // pred_region
    _
  $region5: #{_lambda_.77} parent=0 // pred_fallthru
    _
  // Predicated region
  $region6: #{_lambda_.77} parent=0 // pred_check
    _
  $region7: #{_lambda_.77} parent=0 // pred_check_branch
    %12 = sbr.rel (0) target = $region9
  $region8: #{_lambda_.77} parent=0 // pred_region
    _
  $region9: #{_lambda_.77} parent=0 // pred_fallthru
    _
  // Predicated region
  $region10: #{_lambda_.77} parent=0 // pred_check
    _
  $region11: #{_lambda_.77} parent=0 // pred_check_branch
    %14 = sbr.rel (0) target = $region13
  $region12: #{_lambda_.77} parent=0 // pred_region
    _
  $region13: #{_lambda_.77} parent=0 // pred_fallthru
    _
  // Predicated region
  $region14: #{_lambda_.77} parent=0 // pred_check
    _
  $region15: #{_lambda_.77} parent=0 // pred_check_branch
    %16 = sbr.rel (0) target = $region17
  $region16: #{_lambda_.77} parent=0 // pred_region
    _
  $region17: #{_lambda_.77} parent=0 // pred_fallthru
    _
  %p18 = scmp.eq.s32.totalorder 0, 0
  // Predicated region
  $region18: #{_lambda_.77} parent=0 // pred_check
    %p19 = pneg %p18
  $region19: #{_lambda_.77} parent=0 // pred_check_branch
    %21 = sbr.rel (%p19) target = $region21
  $region20: #{_lambda_.77} parent=0 // pred_region
    %22 = vst [vmem:[#allocation2] sm:$0xff] 0.0
    %23 = vst [vmem:[#allocation2 + $0x8] sm:$0xff] 0.0
    %24 = vst [vmem:[#allocation2 + $0x10] sm:$0xff] 0.0
    %25 = vst [vmem:[#allocation2 + $0x18] sm:$0xff] 0.0
    %26 = vst [vmem:[#allocation2 + $0x20] sm:$0xff] 0.0
    %27 = vst [vmem:[#allocation2 + $0x28] sm:$0xff] 0.0
    %28 = vst [vmem:[#allocation2 + $0x30] sm:$0xff] 0.0
    %29 = vst [vmem:[#allocation2 + $0x38] sm:$0xff] 0.0
    %30 = vst [vmem:[#allocation2 + $0x40] sm:$0xff] 0.0
    %31 = vst [vmem:[#allocation2 + $0x48] sm:$0xff] 0.0
    %32 = vst [vmem:[#allocation2 + $0x50] sm:$0xff] 0.0
    %33 = vst [vmem:[#allocation2 + $0x58] sm:$0xff] 0.0
    %34 = vst [vmem:[#allocation2 + $0x60] sm:$0xff] 0.0
    %35 = vst [vmem:[#allocation2 + $0x68] sm:$0xff] 0.0
    %36 = vst [vmem:[#allocation2 + $0x70] sm:$0xff] 0.0
    %37 = vst [vmem:[#allocation2 + $0x78] sm:$0xff] 0.0
  $region21: #{_lambda_.77} parent=0 // pred_fallthru
    _
  %v38 = vld [vmem:[#allocation2] sm:$0xff]
  %v39 = vld [vmem:[#allocation2 + $0x8] sm:$0xff]
  %v40 = vld [vmem:[#allocation2 + $0x10] sm:$0xff]
  %v41 = vld [vmem:[#allocation2 + $0x18] sm:$0xff]
  %v42 = vld [vmem:[#allocation2 + $0x20] sm:$0xff]
  %v43 = vld [vmem:[#allocation2 + $0x28] sm:$0xff]
  %v44 = vld [vmem:[#allocation2 + $0x30] sm:$0xff]
  %v45 = vld [vmem:[#allocation2 + $0x38] sm:$0xff]
  %v46 = vld [vmem:[#allocation2 + $0x40] sm:$0xff]
  %v47 = vld [vmem:[#allocation2 + $0x48] sm:$0xff]
  %v48 = vld [vmem:[#allocation2 + $0x50] sm:$0xff]
  %v49 = vld [vmem:[#allocation2 + $0x58] sm:$0xff]
  %v50 = vld [vmem:[#allocation2 + $0x60] sm:$0xff]
  %v51 = vld [vmem:[#allocation2 + $0x68] sm:$0xff]
  %v52 = vld [vmem:[#allocation2 + $0x70] sm:$0xff]
  %v53 = vld [vmem:[#allocation2 + $0x78] sm:$0xff]
  %v54 = vld [vmem:[%s0] sm:$0xf]
  %v55 = vld [vmem:[%s0 + $0x4] sm:$0xf]
  %v56 = vld [vmem:[%s0 + $0x8] sm:$0xf]
  %v57 = vld [vmem:[%s0 + $0xc] sm:$0xf]
  %v58 = vld [vmem:[%s0 + $0x10] sm:$0xf]
  %v59 = vld [vmem:[%s0 + $0x14] sm:$0xf]
  %v60 = vld [vmem:[%s0 + $0x18] sm:$0xf]
  %v61 = vld [vmem:[%s0 + $0x1c] sm:$0xf]
  %v62 = vld [vmem:[%s0 + $0x20] sm:$0xf]
  %v63 = vld [vmem:[%s0 + $0x24] sm:$0xf]
  %v64 = vld [vmem:[%s0 + $0x28] sm:$0xf]
  %v65 = vld [vmem:[%s0 + $0x2c] sm:$0xf]
  %v66 = vld [vmem:[%s0 + $0x30] sm:$0xf]
  %v67 = vld [vmem:[%s0 + $0x34] sm:$0xf]
  %v68 = vld [vmem:[%s0 + $0x38] sm:$0xf]
  %v69 = vld [vmem:[%s0 + $0x3c] sm:$0xf]
  %v70 = vld [vmem:[%s1] sm:$0xf]
  %v71 = vld [vmem:[%s1 + $0x4] sm:$0xf]
  %v72 = vld [vmem:[%s1 + $0x8] sm:$0xf]
  %v73 = vld [vmem:[%s1 + $0xc] sm:$0xf]
  %v74 = vld [vmem:[%s1 + $0x10] sm:$0x3]
  %v91 = vunpack.c.l.b16 %v54
  %v92 = vunpack.c.l.b16 %v55
  %v93 = vunpack.c.l.b16 %v56
  %v94 = vunpack.c.l.b16 %v57
  %v95 = vunpack.c.l.b16 %v58
  %v96 = vunpack.c.l.b16 %v59
  %v97 = vunpack.c.l.b16 %v60
  %v98 = vunpack.c.l.b16 %v61
  %v99 = vunpack.c.l.b16 %v62
  %v100 = vunpack.c.l.b16 %v63
  %v101 = vunpack.c.l.b16 %v64
  %v102 = vunpack.c.l.b16 %v65
  %v103 = vunpack.c.l.b16 %v66
  %v104 = vunpack.c.l.b16 %v67
  %v105 = vunpack.c.l.b16 %v68
  %v106 = vunpack.c.l.b16 %v69
  %v107 = vpack.c.b16 %v92, %v91
  %v108 = vpack.c.b16 %v94, %v93
  %v109 = vpack.c.b16 %v96, %v95
  %v110 = vpack.c.b16 %v98, %v97
  %v111 = vpack.c.b16 %v100, %v99
  %v112 = vpack.c.b16 %v102, %v101
  %v113 = vpack.c.b16 %v104, %v103
  %v114 = vpack.c.b16 %v106, %v105
  %v120 = vunpack.c.l.b16 %v70
  %v121 = vunpack.c.l.b16 %v71
  %v122 = vunpack.c.l.b16 %v72
  %v123 = vunpack.c.l.b16 %v73
  %v124 = vunpack.c.l.b16 %v74
  %v125 = vpack.c.b16 %v121, %v120
  %v126 = vpack.c.b16 %v123, %v122
  %v127 = vpack.c.b16 %v124, %v124
  %vm130 = vcmask 293888
  %v132 = vsel %vm130, %v107, 0
  %v135 = vsel %vm130, %v108, 0
  %v138 = vsel %vm130, %v109, 0
  %v141 = vsel %vm130, %v110, 0
  %v144 = vsel %vm130, %v111, 0
  %v147 = vsel %vm130, %v112, 0
  %v150 = vsel %vm130, %v113, 0
  %v153 = vsel %vm130, %v114, 0
  %vm155 = vcmask 1041408
  %v157 = vsel %vm155, %v127, 0
  %159 = vmatprep.subr.bf16.mxu0 0
  %160 = vmatpush1.bf16.msra.mxu0 %v125
  %161 = vmatprep.subr.bf16.mxu0 0
  %162 = vmatpush1.bf16.msra.mxu0 %v126
  %163 = vmatprep.subr.bf16.mxu0 0
  %164 = vmatpush1.bf16.msra.mxu0 %v157
  %165 = vmatprep.subr.bf16.mxu0 0
  %166 = vmatpush1.bf16.msra.mxu0 0
  %167 = vmatprep.subr.bf16.mxu0 0
  %168 = vmatpush1.bf16.msra.mxu0 0
  %169 = vmatprep.subr.bf16.mxu0 0
  %170 = vmatpush1.bf16.msra.mxu0 0
  %171 = vmatprep.subr.bf16.mxu0 0
  %172 = vmatpush1.bf16.msra.mxu0 0
  %173 = vmatprep.subr.bf16.mxu0 0
  %174 = vmatpush1.bf16.msra.mxu0 0
  %175 = vmatprep.subr.bf16.mxu0 0
  %176 = vmatpush1.bf16.msra.mxu0 0
  %177 = vmatprep.subr.bf16.mxu0 0
  %178 = vmatpush1.bf16.msra.mxu0 0
  %179 = vmatprep.subr.bf16.mxu0 0
  %180 = vmatpush1.bf16.msra.mxu0 0
  %181 = vmatprep.subr.bf16.mxu0 0
  %182 = vmatpush1.bf16.msra.mxu0 0
  %183 = vmatprep.subr.bf16.mxu0 0
  %184 = vmatpush1.bf16.msra.mxu0 0
  %185 = vmatprep.subr.bf16.mxu0 0
  %186 = vmatpush1.bf16.msra.mxu0 0
  %187 = vmatprep.subr.bf16.mxu0 0
  %188 = vmatpush1.bf16.msra.mxu0 0
  %189 = vmatprep.subr.bf16.mxu0 0
  %190 = vmatpush1.bf16.msra.mxu0 0
  %191 = vmatprep.mubr.bf16.mxu0 0
  %192 = vmatmul.mubr.bf16.gmra.mrb[0].mxu0 %v132
  %v193 = vpop.f32.mrb[0].mxu0
  %v194 = vadd.f32 0.0, %v193
  %v195 = vpop.f32.mrb[0].mxu0
  %v196 = vpop.f32.mrb[0].mxu0
  %v197 = vadd.f32 0.0, %v196
  %v198 = vpop.f32.mrb[0].mxu0
  %199 = vmatprep.mubr.bf16.mxu0 0
  %200 = vmatmul.mubr.bf16.gmra.mrb[0].mxu0 %v135
  %v201 = vpop.f32.mrb[0].mxu0
  %v202 = vadd.f32 0.0, %v201
  %v203 = vpop.f32.mrb[0].mxu0
  %v204 = vpop.f32.mrb[0].mxu0
  %v205 = vadd.f32 0.0, %v204
  %v206 = vpop.f32.mrb[0].mxu0
  %207 = vmatprep.mubr.bf16.mxu0 0
  %208 = vmatmul.mubr.bf16.gmra.mrb[0].mxu0 %v138
  %v209 = vpop.f32.mrb[0].mxu0
  %v210 = vadd.f32 0.0, %v209
  %v211 = vpop.f32.mrb[0].mxu0
  %v212 = vpop.f32.mrb[0].mxu0
  %v213 = vadd.f32 0.0, %v212
  %v214 = vpop.f32.mrb[0].mxu0
  %215 = vmatprep.mubr.bf16.mxu0 0
  %216 = vmatmul.mubr.bf16.gmra.mrb[0].mxu0 %v141
  %v217 = vpop.f32.mrb[0].mxu0
  %v218 = vadd.f32 0.0, %v217
  %v219 = vpop.f32.mrb[0].mxu0
  %v220 = vpop.f32.mrb[0].mxu0
  %v221 = vadd.f32 0.0, %v220
  %v222 = vpop.f32.mrb[0].mxu0
  %223 = vmatprep.mubr.bf16.mxu0 0
  %224 = vmatmul.mubr.bf16.gmra.mrb[0].mxu0 %v144
  %v225 = vpop.f32.mrb[0].mxu0
  %v226 = vadd.f32 0.0, %v225
  %v227 = vpop.f32.mrb[0].mxu0
  %v228 = vpop.f32.mrb[0].mxu0
  %v229 = vadd.f32 0.0, %v228
  %v230 = vpop.f32.mrb[0].mxu0
  %231 = vmatprep.mubr.bf16.mxu0 0
  %232 = vmatmul.mubr.bf16.gmra.mrb[0].mxu0 %v147
  %v233 = vpop.f32.mrb[0].mxu0
  %v234 = vadd.f32 0.0, %v233
  %v235 = vpop.f32.mrb[0].mxu0
  %v236 = vpop.f32.mrb[0].mxu0
  %v237 = vadd.f32 0.0, %v236
  %v238 = vpop.f32.mrb[0].mxu0
  %239 = vmatprep.mubr.bf16.mxu0 0
  %240 = vmatmul.mubr.bf16.gmra.mrb[0].mxu0 %v150
  %v241 = vpop.f32.mrb[0].mxu0
  %v242 = vadd.f32 0.0, %v241
  %v243 = vpop.f32.mrb[0].mxu0
  %v244 = vpop.f32.mrb[0].mxu0
  %v245 = vadd.f32 0.0, %v244
  %v246 = vpop.f32.mrb[0].mxu0
  %247 = vmatprep.mubr.bf16.mxu0 0
  %248 = vmatmul.mubr.bf16.gmra.mrb[0].mxu0 %v153
  %v249 = vpop.f32.mrb[0].mxu0
  %v250 = vadd.f32 0.0, %v249
  %v251 = vpop.f32.mrb[0].mxu0
  %v252 = vpop.f32.mrb[0].mxu0
  %v253 = vadd.f32 0.0, %v252
  %v254 = vpop.f32.mrb[0].mxu0
  %255 = vdwg.mxu0
  %v256 = vadd.f32 %v38, %v194
  %v257 = vadd.f32 %v39, %v197
  %v258 = vadd.f32 %v40, %v202
  %v259 = vadd.f32 %v41, %v205
  %v260 = vadd.f32 %v42, %v210
  %v261 = vadd.f32 %v43, %v213
  %v262 = vadd.f32 %v44, %v218
  %v263 = vadd.f32 %v45, %v221
  %v264 = vadd.f32 %v46, %v226
  %v265 = vadd.f32 %v47, %v229
  %v266 = vadd.f32 %v48, %v234
  %v267 = vadd.f32 %v49, %v237
  %v268 = vadd.f32 %v50, %v242
  %v269 = vadd.f32 %v51, %v245
  %v270 = vadd.f32 %v52, %v250
  %v271 = vadd.f32 %v53, %v253
  %272 = vst [vmem:[#allocation2] sm:$0xff] %v256
  %273 = vst [vmem:[#allocation2 + $0x8] sm:$0xff] %v257
  %274 = vst [vmem:[#allocation2 + $0x10] sm:$0xff] %v258
  %275 = vst [vmem:[#allocation2 + $0x18] sm:$0xff] %v259
  %276 = vst [vmem:[#allocation2 + $0x20] sm:$0xff] %v260
  %277 = vst [vmem:[#allocation2 + $0x28] sm:$0xff] %v261
  %278 = vst [vmem:[#allocation2 + $0x30] sm:$0xff] %v262
  %279 = vst [vmem:[#allocation2 + $0x38] sm:$0xff] %v263
  %280 = vst [vmem:[#allocation2 + $0x40] sm:$0xff] %v264
  %281 = vst [vmem:[#allocation2 + $0x48] sm:$0xff] %v265
  %282 = vst [vmem:[#allocation2 + $0x50] sm:$0xff] %v266
  %283 = vst [vmem:[#allocation2 + $0x58] sm:$0xff] %v267
  %284 = vst [vmem:[#allocation2 + $0x60] sm:$0xff] %v268
  %285 = vst [vmem:[#allocation2 + $0x68] sm:$0xff] %v269
  %286 = vst [vmem:[#allocation2 + $0x70] sm:$0xff] %v270
  %287 = vst [vmem:[#allocation2 + $0x78] sm:$0xff] %v271
  // Predicated region
  $region22: #{_lambda_.77} parent=0 // pred_check
    %p288 = pneg %p18
  $region23: #{_lambda_.77} parent=0 // pred_check_branch
    %290 = sbr.rel (%p288) target = $region25
  $region24: #{_lambda_.77} parent=0 // pred_region
    %v291 = vld [vmem:[#allocation2] sm:$0xff]
    %v292 = vld [vmem:[#allocation2 + $0x8] sm:$0xff]
    %v293 = vld [vmem:[#allocation2 + $0x10] sm:$0xff]
    %v294 = vld [vmem:[#allocation2 + $0x18] sm:$0xff]
    %v295 = vld [vmem:[#allocation2 + $0x20] sm:$0xff]
    %v296 = vld [vmem:[#allocation2 + $0x28] sm:$0xff]
    %v297 = vld [vmem:[#allocation2 + $0x30] sm:$0xff]
    %v298 = vld [vmem:[#allocation2 + $0x38] sm:$0xff]
    %v299 = vld [vmem:[#allocation2 + $0x40] sm:$0xff]
    %v300 = vld [vmem:[#allocation2 + $0x48] sm:$0xff]
    %v301 = vld [vmem:[#allocation2 + $0x50] sm:$0xff]
    %v302 = vld [vmem:[#allocation2 + $0x58] sm:$0xff]
    %v303 = vld [vmem:[#allocation2 + $0x60] sm:$0xff]
    %v304 = vld [vmem:[#allocation2 + $0x68] sm:$0xff]
    %v305 = vld [vmem:[#allocation2 + $0x70] sm:$0xff]
    %v306 = vld [vmem:[#allocation2 + $0x78] sm:$0xff]
    %v307 = vld [vmem:[%s2] sm:$0x1]
    %v309 = vlaneseq
    %v310 = vshrl.u32 %v309, 7
    %v311 = vsub.s32 0, %v310
    %v312 = vrot.slane %v307, %v311
    %v314 = vmul.f32 %v291, %v312
    %v315 = vmul.f32 %v292, %v312
    %v316 = vmul.f32 %v293, %v312
    %v317 = vmul.f32 %v294, %v312
    %v318 = vmul.f32 %v295, %v312
    %v319 = vmul.f32 %v296, %v312
    %v320 = vmul.f32 %v297, %v312
    %v321 = vmul.f32 %v298, %v312
    %v322 = vmul.f32 %v299, %v312
    %v323 = vmul.f32 %v300, %v312
    %v324 = vmul.f32 %v301, %v312
    %v325 = vmul.f32 %v302, %v312
    %v326 = vmul.f32 %v303, %v312
    %v327 = vmul.f32 %v304, %v312
    %v328 = vmul.f32 %v305, %v312
    %v329 = vmul.f32 %v306, %v312
    %v330 = vld [vmem:[%s3] sm:$0x1]
    %v332 = vlaneseq
    %v333 = vshrl.u32 %v332, 7
    %v334 = vsub.s32 0, %v333
    %v335 = vrot.slane %v330, %v334
    %v337 = vadd.f32 %v314, %v335
    %v338 = vadd.f32 %v315, %v335
    %v339 = vadd.f32 %v316, %v335
    %v340 = vadd.f32 %v317, %v335
    %v341 = vadd.f32 %v318, %v335
    %v342 = vadd.f32 %v319, %v335
    %v343 = vadd.f32 %v320, %v335
    %v344 = vadd.f32 %v321, %v335
    %v345 = vadd.f32 %v322, %v335
    %v346 = vadd.f32 %v323, %v335
    %v347 = vadd.f32 %v324, %v335
    %v348 = vadd.f32 %v325, %v335
    %v349 = vadd.f32 %v326, %v335
    %v350 = vadd.f32 %v327, %v335
    %v351 = vadd.f32 %v328, %v335
    %v352 = vadd.f32 %v329, %v335
    %v353 = vmax.f32 %v337, 0.0
    %v354 = vmax.f32 %v338, 0.0
    %v355 = vmax.f32 %v339, 0.0
    %v356 = vmax.f32 %v340, 0.0
    %v357 = vmax.f32 %v341, 0.0
    %v358 = vmax.f32 %v342, 0.0
    %v359 = vmax.f32 %v343, 0.0
    %v360 = vmax.f32 %v344, 0.0
    %v361 = vmax.f32 %v345, 0.0
    %v362 = vmax.f32 %v346, 0.0
    %v363 = vmax.f32 %v347, 0.0
    %v364 = vmax.f32 %v348, 0.0
    %v365 = vmax.f32 %v349, 0.0
    %v366 = vmax.f32 %v350, 0.0
    %v367 = vmax.f32 %v351, 0.0
    %v368 = vmax.f32 %v352, 0.0
    %369 = vst [vmem:[%s4] sm:$0xff] %v353
    %370 = vst [vmem:[%s4 + $0x8] sm:$0xff] %v354
    %371 = vst [vmem:[%s4 + $0x10] sm:$0xff] %v355
    %372 = vst [vmem:[%s4 + $0x18] sm:$0xff] %v356
    %373 = vst [vmem:[%s4 + $0x20] sm:$0xff] %v357
    %374 = vst [vmem:[%s4 + $0x28] sm:$0xff] %v358
    %375 = vst [vmem:[%s4 + $0x30] sm:$0xff] %v359
    %376 = vst [vmem:[%s4 + $0x38] sm:$0xff] %v360
    %377 = vst [vmem:[%s4 + $0x40] sm:$0xff] %v361
    %378 = vst [vmem:[%s4 + $0x48] sm:$0xff] %v362
    %379 = vst [vmem:[%s4 + $0x50] sm:$0xff] %v363
    %380 = vst [vmem:[%s4 + $0x58] sm:$0xff] %v364
    %381 = vst [vmem:[%s4 + $0x60] sm:$0xff] %v365
    %382 = vst [vmem:[%s4 + $0x68] sm:$0xff] %v366
    %383 = vst [vmem:[%s4 + $0x70] sm:$0xff] %v367
    %384 = vst [vmem:[%s4 + $0x78] sm:$0xff] %v368
  $region25: #{_lambda_.77} parent=0 // pred_fallthru
    _
  // Predicated region
  $region26: #{_lambda_.77} parent=0 // pred_check
    _
  $region27: #{_lambda_.77} parent=0 // pred_check_branch
    %386 = sbr.rel (0) target = $region29
  $region28: #{_lambda_.77} parent=0 // pred_region
    _
  $region29: #{_lambda_.77} parent=0 // pred_fallthru
    _
  // Predicated region
  $region30: #{_lambda_.77} parent=0 // pred_check
    _
  $region31: #{_lambda_.77} parent=0 // pred_check_branch
    %388 = sbr.rel (0) target = $region33
  $region32: #{_lambda_.77} parent=0 // pred_region
    _
  $region33: #{_lambda_.77} parent=0 // pred_fallthru
    _

// kernel: _lambda_.78
$region0: #{_lambda_.78}
  #allocation0 [shape = 'u32[]', space=smem, size = 0x4, offset = 0x4, fixed_abs, tag = 'smem constant byte address 0x4 - core index']
  #allocation1 [shape = 'u32[144,128]{1,0:T(1,128)}', space=vmem, size = 0x12000, scoped, tag = 'internal scratch']
  %s0 = inlined_call_operand.vmem [shape: f32[128,4], index: 0, kind: input, shape index: {}]
  %s1 = inlined_call_operand.vmem [shape: f32[128,4], index: 1, kind: input, shape index: {}]
  %s2 = inlined_call_operand.vmem [shape: f32[128,4], index: 2, kind: input, shape index: {}]
  %s3 = inlined_call_operand.vmem [shape: f32[128,4], index: 3, kind: input, shape index: {}]
  %s4 = inlined_call_operand.vmem [shape: f32[1,4], index: 4, kind: input, shape index: {}]
  %s5 = inlined_call_operand.vmem [shape: f32[1,4], index: 5, kind: input, shape index: {}]
  %s6 = inlined_call_operand.vmem [shape: f32[128,4], index: 6, kind: output, shape index: {}]
  %s7 = sld [smem:[#allocation0]]
  $region34: #{_lambda_.78} parent=0
    _
  %s9 = ssub.s32 1, %s7
  %s10 = scalar_select 0, %s9, %s7
  // Predicated region
  $region2: #{_lambda_.78} parent=0 // pred_check
    _
  $region3: #{_lambda_.78} parent=0 // pred_check_branch
    %12 = sbr.rel (0) target = $region5
  $region4: #{_lambda_.78} parent=0 // pred_region
    _
  $region5: #{_lambda_.78} parent=0 // pred_fallthru
    _
  // Predicated region
  $region6: #{_lambda_.78} parent=0 // pred_check
    _
  $region7: #{_lambda_.78} parent=0 // pred_check_branch
    %14 = sbr.rel (0) target = $region9
  $region8: #{_lambda_.78} parent=0 // pred_region
    _
  $region9: #{_lambda_.78} parent=0 // pred_fallthru
    _
  // Predicated region
  $region10: #{_lambda_.78} parent=0 // pred_check
    _
  $region11: #{_lambda_.78} parent=0 // pred_check_branch
    %16 = sbr.rel (0) target = $region13
  $region12: #{_lambda_.78} parent=0 // pred_region
    _
  $region13: #{_lambda_.78} parent=0 // pred_fallthru
    _
  // Predicated region
  $region14: #{_lambda_.78} parent=0 // pred_check
    _
  $region15: #{_lambda_.78} parent=0 // pred_check_branch
    %18 = sbr.rel (0) target = $region17
  $region16: #{_lambda_.78} parent=0 // pred_region
    _
  $region17: #{_lambda_.78} parent=0 // pred_fallthru
    _
  // Predicated region
  $region18: #{_lambda_.78} parent=0 // pred_check
    _
  $region19: #{_lambda_.78} parent=0 // pred_check_branch
    %20 = sbr.rel (0) target = $region21
  $region20: #{_lambda_.78} parent=0 // pred_region
    _
  $region21: #{_lambda_.78} parent=0 // pred_fallthru
    _
  // Predicated region
  $region22: #{_lambda_.78} parent=0 // pred_check
    _
  $region23: #{_lambda_.78} parent=0 // pred_check_branch
    %22 = sbr.rel (0) target = $region25
  $region24: #{_lambda_.78} parent=0 // pred_region
    _
  $region25: #{_lambda_.78} parent=0 // pred_fallthru
    _
  %v23 = vld [vmem:[%s0] sm:$0xff]
  %v24 = vld [vmem:[%s0 + $0x8] sm:$0xff]
  %v25 = vld [vmem:[%s0 + $0x10] sm:$0xff]
  %v26 = vld [vmem:[%s0 + $0x18] sm:$0xff]
  %v27 = vld [vmem:[%s0 + $0x20] sm:$0xff]
  %v28 = vld [vmem:[%s0 + $0x28] sm:$0xff]
  %v29 = vld [vmem:[%s0 + $0x30] sm:$0xff]
  %v30 = vld [vmem:[%s0 + $0x38] sm:$0xff]
  %v31 = vld [vmem:[%s0 + $0x40] sm:$0xff]
  %v32 = vld [vmem:[%s0 + $0x48] sm:$0xff]
  %v33 = vld [vmem:[%s0 + $0x50] sm:$0xff]
  %v34 = vld [vmem:[%s0 + $0x58] sm:$0xff]
  %v35 = vld [vmem:[%s0 + $0x60] sm:$0xff]
  %v36 = vld [vmem:[%s0 + $0x68] sm:$0xff]
  %v37 = vld [vmem:[%s0 + $0x70] sm:$0xff]
  %v38 = vld [vmem:[%s0 + $0x78] sm:$0xff]
  %v39 = vld [vmem:[%s1] sm:$0xff]
  %v40 = vld [vmem:[%s1 + $0x8] sm:$0xff]
  %v41 = vld [vmem:[%s1 + $0x10] sm:$0xff]
  %v42 = vld [vmem:[%s1 + $0x18] sm:$0xff]
  %v43 = vld [vmem:[%s1 + $0x20] sm:$0xff]
  %v44 = vld [vmem:[%s1 + $0x28] sm:$0xff]
  %v45 = vld [vmem:[%s1 + $0x30] sm:$0xff]
  %v46 = vld [vmem:[%s1 + $0x38] sm:$0xff]
  %v47 = vld [vmem:[%s1 + $0x40] sm:$0xff]
  %v48 = vld [vmem:[%s1 + $0x48] sm:$0xff]
  %v49 = vld [vmem:[%s1 + $0x50] sm:$0xff]
  %v50 = vld [vmem:[%s1 + $0x58] sm:$0xff]
  %v51 = vld [vmem:[%s1 + $0x60] sm:$0xff]
  %v52 = vld [vmem:[%s1 + $0x68] sm:$0xff]
  %v53 = vld [vmem:[%s1 + $0x70] sm:$0xff]
  %v54 = vld [vmem:[%s1 + $0x78] sm:$0xff]
  %v55 = vmax.f32 %v23, %v39
  %v56 = vmax.f32 %v24, %v40
  %v57 = vmax.f32 %v25, %v41
  %v58 = vmax.f32 %v26, %v42
  %v59 = vmax.f32 %v27, %v43
  %v60 = vmax.f32 %v28, %v44
  %v61 = vmax.f32 %v29, %v45
  %v62 = vmax.f32 %v30, %v46
  %v63 = vmax.f32 %v31, %v47
  %v64 = vmax.f32 %v32, %v48
  %v65 = vmax.f32 %v33, %v49
  %v66 = vmax.f32 %v34, %v50
  %v67 = vmax.f32 %v35, %v51
  %v68 = vmax.f32 %v36, %v52
  %v69 = vmax.f32 %v37, %v53
  %v70 = vmax.f32 %v38, %v54
  %v71 = vld [vmem:[%s2] sm:$0xff]
  %v72 = vld [vmem:[%s2 + $0x8] sm:$0xff]
  %v73 = vld [vmem:[%s2 + $0x10] sm:$0xff]
  %v74 = vld [vmem:[%s2 + $0x18] sm:$0xff]
  %v75 = vld [vmem:[%s2 + $0x20] sm:$0xff]
  %v76 = vld [vmem:[%s2 + $0x28] sm:$0xff]
  %v77 = vld [vmem:[%s2 + $0x30] sm:$0xff]
  %v78 = vld [vmem:[%s2 + $0x38] sm:$0xff]
  %v79 = vld [vmem:[%s2 + $0x40] sm:$0xff]
  %v80 = vld [vmem:[%s2 + $0x48] sm:$0xff]
  %v81 = vld [vmem:[%s2 + $0x50] sm:$0xff]
  %v82 = vld [vmem:[%s2 + $0x58] sm:$0xff]
  %v83 = vld [vmem:[%s2 + $0x60] sm:$0xff]
  %v84 = vld [vmem:[%s2 + $0x68] sm:$0xff]
  %v85 = vld [vmem:[%s2 + $0x70] sm:$0xff]
  %v86 = vld [vmem:[%s2 + $0x78] sm:$0xff]
  %v87 = vld [vmem:[%s3] sm:$0xff]
  %v88 = vld [vmem:[%s3 + $0x8] sm:$0xff]
  %v89 = vld [vmem:[%s3 + $0x10] sm:$0xff]
  %v90 = vld [vmem:[%s3 + $0x18] sm:$0xff]
  %v91 = vld [vmem:[%s3 + $0x20] sm:$0xff]
  %v92 = vld [vmem:[%s3 + $0x28] sm:$0xff]
  %v93 = vld [vmem:[%s3 + $0x30] sm:$0xff]
  %v94 = vld [vmem:[%s3 + $0x38] sm:$0xff]
  %v95 = vld [vmem:[%s3 + $0x40] sm:$0xff]
  %v96 = vld [vmem:[%s3 + $0x48] sm:$0xff]
  %v97 = vld [vmem:[%s3 + $0x50] sm:$0xff]
  %v98 = vld [vmem:[%s3 + $0x58] sm:$0xff]
  %v99 = vld [vmem:[%s3 + $0x60] sm:$0xff]
  %v100 = vld [vmem:[%s3 + $0x68] sm:$0xff]
  %v101 = vld [vmem:[%s3 + $0x70] sm:$0xff]
  %v102 = vld [vmem:[%s3 + $0x78] sm:$0xff]
  %v103 = vmax.f32 %v71, %v87
  %v104 = vmax.f32 %v72, %v88
  %v105 = vmax.f32 %v73, %v89
  %v106 = vmax.f32 %v74, %v90
  %v107 = vmax.f32 %v75, %v91
  %v108 = vmax.f32 %v76, %v92
  %v109 = vmax.f32 %v77, %v93
  %v110 = vmax.f32 %v78, %v94
  %v111 = vmax.f32 %v79, %v95
  %v112 = vmax.f32 %v80, %v96
  %v113 = vmax.f32 %v81, %v97
  %v114 = vmax.f32 %v82, %v98
  %v115 = vmax.f32 %v83, %v99
  %v116 = vmax.f32 %v84, %v100
  %v117 = vmax.f32 %v85, %v101
  %v118 = vmax.f32 %v86, %v102
  %v119 = vmax.f32 %v55, %v103
  %v120 = vmax.f32 %v56, %v104
  %v121 = vmax.f32 %v57, %v105
  %v122 = vmax.f32 %v58, %v106
  %v123 = vmax.f32 %v59, %v107
  %v124 = vmax.f32 %v60, %v108
  %v125 = vmax.f32 %v61, %v109
  %v126 = vmax.f32 %v62, %v110
  %v127 = vmax.f32 %v63, %v111
  %v128 = vmax.f32 %v64, %v112
  %v129 = vmax.f32 %v65, %v113
  %v130 = vmax.f32 %v66, %v114
  %v131 = vmax.f32 %v67, %v115
  %v132 = vmax.f32 %v68, %v116
  %v133 = vmax.f32 %v69, %v117
  %v134 = vmax.f32 %v70, %v118
  %v135 = vld [vmem:[%s4] sm:$0x1]
  %v137 = vlaneseq
  %v138 = vshrl.u32 %v137, 7
  %v139 = vsub.s32 0, %v138
  %v140 = vrot.slane %v135, %v139
  %v142 = vmul.f32 %v119, %v140
  %v143 = vmul.f32 %v120, %v140
  %v144 = vmul.f32 %v121, %v140
  %v145 = vmul.f32 %v122, %v140
  %v146 = vmul.f32 %v123, %v140
  %v147 = vmul.f32 %v124, %v140
  %v148 = vmul.f32 %v125, %v140
  %v149 = vmul.f32 %v126, %v140
  %v150 = vmul.f32 %v127, %v140
  %v151 = vmul.f32 %v128, %v140
  %v152 = vmul.f32 %v129, %v140
  %v153 = vmul.f32 %v130, %v140
  %v154 = vmul.f32 %v131, %v140
  %v155 = vmul.f32 %v132, %v140
  %v156 = vmul.f32 %v133, %v140
  %v157 = vmul.f32 %v134, %v140
  %v158 = vld [vmem:[%s5] sm:$0x1]
  %v160 = vlaneseq
  %v161 = vshrl.u32 %v160, 7
  %v162 = vsub.s32 0, %v161
  %v163 = vrot.slane %v158, %v162
  %v165 = vadd.f32 %v142, %v163
  %v166 = vadd.f32 %v143, %v163
  %v167 = vadd.f32 %v144, %v163
  %v168 = vadd.f32 %v145, %v163
  %v169 = vadd.f32 %v146, %v163
  %v170 = vadd.f32 %v147, %v163
  %v171 = vadd.f32 %v148, %v163
  %v172 = vadd.f32 %v149, %v163
  %v173 = vadd.f32 %v150, %v163
  %v174 = vadd.f32 %v151, %v163
  %v175 = vadd.f32 %v152, %v163
  %v176 = vadd.f32 %v153, %v163
  %v177 = vadd.f32 %v154, %v163
  %v178 = vadd.f32 %v155, %v163
  %v179 = vadd.f32 %v156, %v163
  %v180 = vadd.f32 %v157, %v163
  %v181 = vmax.f32 %v165, 0.0
  %v182 = vmax.f32 %v166, 0.0
  %v183 = vmax.f32 %v167, 0.0
  %v184 = vmax.f32 %v168, 0.0
  %v185 = vmax.f32 %v169, 0.0
  %v186 = vmax.f32 %v170, 0.0
  %v187 = vmax.f32 %v171, 0.0
  %v188 = vmax.f32 %v172, 0.0
  %v189 = vmax.f32 %v173, 0.0
  %v190 = vmax.f32 %v174, 0.0
  %v191 = vmax.f32 %v175, 0.0
  %v192 = vmax.f32 %v176, 0.0
  %v193 = vmax.f32 %v177, 0.0
  %v194 = vmax.f32 %v178, 0.0
  %v195 = vmax.f32 %v179, 0.0
  %v196 = vmax.f32 %v180, 0.0
  %vm197 = vcmask 31744
  %198 = vst.msk [vmem:[%s6] sm:$0xff] %vm197, %v181
  %199 = vst.msk [vmem:[%s6 + $0x8] sm:$0xff] %vm197, %v182
  %200 = vst.msk [vmem:[%s6 + $0x10] sm:$0xff] %vm197, %v183
  %201 = vst.msk [vmem:[%s6 + $0x18] sm:$0xff] %vm197, %v184
  %202 = vst.msk [vmem:[%s6 + $0x20] sm:$0xff] %vm197, %v185
  %203 = vst.msk [vmem:[%s6 + $0x28] sm:$0xff] %vm197, %v186
  %204 = vst.msk [vmem:[%s6 + $0x30] sm:$0xff] %vm197, %v187
  %205 = vst.msk [vmem:[%s6 + $0x38] sm:$0xff] %vm197, %v188
  %206 = vst.msk [vmem:[%s6 + $0x40] sm:$0xff] %vm197, %v189
  %207 = vst.msk [vmem:[%s6 + $0x48] sm:$0xff] %vm197, %v190
  %208 = vst.msk [vmem:[%s6 + $0x50] sm:$0xff] %vm197, %v191
  %209 = vst.msk [vmem:[%s6 + $0x58] sm:$0xff] %vm197, %v192
  %210 = vst.msk [vmem:[%s6 + $0x60] sm:$0xff] %vm197, %v193
  %211 = vst.msk [vmem:[%s6 + $0x68] sm:$0xff] %vm197, %v194
  %212 = vst.msk [vmem:[%s6 + $0x70] sm:$0xff] %vm197, %v195
  %213 = vst.msk [vmem:[%s6 + $0x78] sm:$0xff] %vm197, %v196
  // Predicated region
  $region26: #{_lambda_.78} parent=0 // pred_check
    _
  $region27: #{_lambda_.78} parent=0 // pred_check_branch
    %215 = sbr.rel (0) target = $region29
  $region28: #{_lambda_.78} parent=0 // pred_region
    _
  $region29: #{_lambda_.78} parent=0 // pred_fallthru
    _
  // Predicated region
  $region30: #{_lambda_.78} parent=0 // pred_check
    _
  $region31: #{_lambda_.78} parent=0 // pred_check_branch
    %217 = sbr.rel (0) target = $region33
  $region32: #{_lambda_.78} parent=0 // pred_region
    _
  $region33: #{_lambda_.78} parent=0 // pred_fallthru
    _

// kernel: _lambda_.79
$region0: #{_lambda_.79}
  #allocation0 [shape = 'u32[]', space=smem, size = 0x4, offset = 0x4, fixed_abs, tag = 'smem constant byte address 0x4 - core index']
  #allocation1 [shape = 'u32[144,128]{1,0:T(1,128)}', space=vmem, size = 0x12000, scoped, tag = 'internal scratch']
  #allocation2 [shape = 'f32[32,128]{1,0:T(8,128)}', space=vmem, size = 0x4000, scoped, tag = 'scratch operand']
  %s0 = inlined_call_operand.vmem [shape: bf16[32,144], index: 0, kind: input, shape index: {}]
  %s1 = inlined_call_operand.vmem [shape: bf16[144,128], index: 1, kind: input, shape index: {}]
  %s2 = inlined_call_operand.vmem [shape: f32[1,128], index: 2, kind: input, shape index: {}]
  %s3 = inlined_call_operand.vmem [shape: f32[1,128], index: 3, kind: input, shape index: {}]
  %s4 = inlined_call_operand.vmem [shape: f32[32,128], index: 4, kind: output, shape index: {}]
  %s5 = sld [smem:[#allocation0]]
  $region34: #{_lambda_.79} parent=0
    _
  %s7 = ssub.s32 1, %s5
  %s8 = scalar_select 0, %s7, %s5
  // Predicated region
  $region2: #{_lambda_.79} parent=0 // pred_check
    _
  $region3: #{_lambda_.79} parent=0 // pred_check_branch
    %10 = sbr.rel (0) target = $region5
  $region4: #{_lambda_.79} parent=0 // pred_region
    _
  $region5: #{_lambda_.79} parent=0 // pred_fallthru
    _
  // Predicated region
  $region6: #{_lambda_.79} parent=0 // pred_check
    _
  $region7: #{_lambda_.79} parent=0 // pred_check_branch
    %12 = sbr.rel (0) target = $region9
  $region8: #{_lambda_.79} parent=0 // pred_region
    _
  $region9: #{_lambda_.79} parent=0 // pred_fallthru
    _
  // Predicated region
  $region10: #{_lambda_.79} parent=0 // pred_check
    _
  $region11: #{_lambda_.79} parent=0 // pred_check_branch
    %14 = sbr.rel (0) target = $region13
  $region12: #{_lambda_.79} parent=0 // pred_region
    _
  $region13: #{_lambda_.79} parent=0 // pred_fallthru
    _
  // Predicated region
  $region14: #{_lambda_.79} parent=0 // pred_check
    _
  $region15: #{_lambda_.79} parent=0 // pred_check_branch
    %16 = sbr.rel (0) target = $region17
  $region16: #{_lambda_.79} parent=0 // pred_region
    _
  $region17: #{_lambda_.79} parent=0 // pred_fallthru
    _
  %p18 = scmp.eq.s32.totalorder 0, 0
  // Predicated region
  $region18: #{_lambda_.79} parent=0 // pred_check
    %p19 = pneg %p18
  $region19: #{_lambda_.79} parent=0 // pred_check_branch
    %21 = sbr.rel (%p19) target = $region21
  $region20: #{_lambda_.79} parent=0 // pred_region
    %22 = vst [vmem:[#allocation2] sm:$0xff] 0.0
    %23 = vst [vmem:[#allocation2 + $0x8] sm:$0xff] 0.0
    %24 = vst [vmem:[#allocation2 + $0x10] sm:$0xff] 0.0
    %25 = vst [vmem:[#allocation2 + $0x18] sm:$0xff] 0.0
  $region21: #{_lambda_.79} parent=0 // pred_fallthru
    _
  %v26 = vld [vmem:[#allocation2] sm:$0xff]
  %v27 = vld [vmem:[#allocation2 + $0x8] sm:$0xff]
  %v28 = vld [vmem:[#allocation2 + $0x10] sm:$0xff]
  %v29 = vld [vmem:[#allocation2 + $0x18] sm:$0xff]
  %v30 = vld [vmem:[%s0] sm:$0xff]
  %v31 = vld [vmem:[%s0 + $0x8] sm:$0xff]
  %v32 = vld [vmem:[%s0 + $0x10] sm:$0xff]
  %v33 = vld [vmem:[%s0 + $0x18] sm:$0xff]
  %v34 = vld [vmem:[%s1] sm:$0xf]
  %v35 = vld [vmem:[%s1 + $0x4] sm:$0xf]
  %v36 = vld [vmem:[%s1 + $0x8] sm:$0xf]
  %v37 = vld [vmem:[%s1 + $0xc] sm:$0xf]
  %v38 = vld [vmem:[%s1 + $0x10] sm:$0xf]
  %v39 = vld [vmem:[%s1 + $0x14] sm:$0xf]
  %v40 = vld [vmem:[%s1 + $0x18] sm:$0xf]
  %v41 = vld [vmem:[%s1 + $0x1c] sm:$0xf]
  %v42 = vld [vmem:[%s1 + $0x20] sm:$0xf]
  %v43 = vld [vmem:[%s1 + $0x24] sm:$0xf]
  %v44 = vld [vmem:[%s1 + $0x28] sm:$0xf]
  %v45 = vld [vmem:[%s1 + $0x2c] sm:$0xf]
  %v46 = vld [vmem:[%s1 + $0x30] sm:$0xf]
  %v47 = vld [vmem:[%s1 + $0x34] sm:$0xf]
  %v48 = vld [vmem:[%s1 + $0x38] sm:$0xf]
  %v49 = vld [vmem:[%s1 + $0x3c] sm:$0xf]
  %v50 = vld [vmem:[%s1 + $0x40] sm:$0xf]
  %v51 = vld [vmem:[%s1 + $0x44] sm:$0xf]
  %v56 = vunpack.c.l.b16 %v30
  %v57 = vunpack.c.h.b16 %v30
  %v58 = vunpack.c.l.b16 %v31
  %v59 = vunpack.c.h.b16 %v31
  %v60 = vunpack.c.l.b16 %v32
  %v61 = vunpack.c.h.b16 %v32
  %v62 = vunpack.c.l.b16 %v33
  %v63 = vunpack.c.h.b16 %v33
  %v64 = vpack.c.b16 %v58, %v56
  %v65 = vpack.c.b16 %v59, %v57
  %v66 = vpack.c.b16 %v62, %v60
  %v67 = vpack.c.b16 %v63, %v61
  %v88 = vunpack.c.l.b16 %v34
  %v89 = vunpack.c.l.b16 %v35
  %v90 = vunpack.c.l.b16 %v36
  %v91 = vunpack.c.l.b16 %v37
  %v92 = vunpack.c.l.b16 %v38
  %v93 = vunpack.c.l.b16 %v39
  %v94 = vunpack.c.l.b16 %v40
  %v95 = vunpack.c.l.b16 %v41
  %v96 = vunpack.c.l.b16 %v42
  %v97 = vunpack.c.l.b16 %v43
  %v98 = vunpack.c.l.b16 %v44
  %v99 = vunpack.c.l.b16 %v45
  %v100 = vunpack.c.l.b16 %v46
  %v101 = vunpack.c.l.b16 %v47
  %v102 = vunpack.c.l.b16 %v48
  %v103 = vunpack.c.l.b16 %v49
  %v104 = vunpack.c.l.b16 %v50
  %v105 = vunpack.c.l.b16 %v51
  %v106 = vpack.c.b16 %v89, %v88
  %v107 = vpack.c.b16 %v91, %v90
  %v108 = vpack.c.b16 %v93, %v92
  %v109 = vpack.c.b16 %v95, %v94
  %v110 = vpack.c.b16 %v97, %v96
  %v111 = vpack.c.b16 %v99, %v98
  %v112 = vpack.c.b16 %v101, %v100
  %v113 = vpack.c.b16 %v103, %v102
  %v114 = vpack.c.b16 %v105, %v104
  %vm124 = vcmask 130048
  %v126 = vsel %vm124, %v65, 0
  %v129 = vsel %vm124, %v67, 0
  %131 = vmatprep.subr.bf16.mxu0 0
  %132 = vmatpush1.bf16.msra.mxu0 %v106
  %133 = vmatprep.subr.bf16.mxu0 0
  %134 = vmatpush1.bf16.msra.mxu0 %v107
  %135 = vmatprep.subr.bf16.mxu0 0
  %136 = vmatpush1.bf16.msra.mxu0 %v108
  %137 = vmatprep.subr.bf16.mxu0 0
  %138 = vmatpush1.bf16.msra.mxu0 %v109
  %139 = vmatprep.subr.bf16.mxu0 0
  %140 = vmatpush1.bf16.msra.mxu0 %v110
  %141 = vmatprep.subr.bf16.mxu0 0
  %142 = vmatpush1.bf16.msra.mxu0 %v111
  %143 = vmatprep.subr.bf16.mxu0 0
  %144 = vmatpush1.bf16.msra.mxu0 %v112
  %145 = vmatprep.subr.bf16.mxu0 0
  %146 = vmatpush1.bf16.msra.mxu0 %v113
  %147 = vmatprep.subr.bf16.mxu0 0
  %148 = vmatpush1.bf16.msra.mxu0 %v114
  %149 = vmatprep.subr.bf16.mxu0 0
  %150 = vmatpush1.bf16.msra.mxu0 0
  %151 = vmatprep.subr.bf16.mxu0 0
  %152 = vmatpush1.bf16.msra.mxu0 0
  %153 = vmatprep.subr.bf16.mxu0 0
  %154 = vmatpush1.bf16.msra.mxu0 0
  %155 = vmatprep.subr.bf16.mxu0 0
  %156 = vmatpush1.bf16.msra.mxu0 0
  %157 = vmatprep.subr.bf16.mxu0 0
  %158 = vmatpush1.bf16.msra.mxu0 0
  %159 = vmatprep.subr.bf16.mxu0 0
  %160 = vmatpush1.bf16.msra.mxu0 0
  %161 = vmatprep.subr.bf16.mxu0 0
  %162 = vmatpush1.bf16.msra.mxu0 0
  %163 = vmatprep.mubr.bf16.mxu0 %v126
  %164 = vmatmul.mubr.bf16.gmra.mrb[0].mxu0 %v64
  %v165 = vpop.f32.mrb[0].mxu0
  %v166 = vadd.f32 0.0, %v165
  %v167 = vpop.f32.mrb[0].mxu0
  %v168 = vpop.f32.mrb[0].mxu0
  %v169 = vadd.f32 0.0, %v168
  %v170 = vpop.f32.mrb[0].mxu0
  %171 = vmatprep.mubr.bf16.mxu0 %v129
  %172 = vmatmul.mubr.bf16.gmra.mrb[0].mxu0 %v66
  %v173 = vpop.f32.mrb[0].mxu0
  %v174 = vadd.f32 0.0, %v173
  %v175 = vpop.f32.mrb[0].mxu0
  %v176 = vpop.f32.mrb[0].mxu0
  %v177 = vadd.f32 0.0, %v176
  %v178 = vpop.f32.mrb[0].mxu0
  %179 = vdwg.mxu0
  %v180 = vadd.f32 %v26, %v166
  %v181 = vadd.f32 %v27, %v169
  %v182 = vadd.f32 %v28, %v174
  %v183 = vadd.f32 %v29, %v177
  %184 = vst [vmem:[#allocation2] sm:$0xff] %v180
  %185 = vst [vmem:[#allocation2 + $0x8] sm:$0xff] %v181
  %186 = vst [vmem:[#allocation2 + $0x10] sm:$0xff] %v182
  %187 = vst [vmem:[#allocation2 + $0x18] sm:$0xff] %v183
  // Predicated region
  $region22: #{_lambda_.79} parent=0 // pred_check
    %p188 = pneg %p18
  $region23: #{_lambda_.79} parent=0 // pred_check_branch
    %190 = sbr.rel (%p188) target = $region25
  $region24: #{_lambda_.79} parent=0 // pred_region
    %v191 = vld [vmem:[#allocation2] sm:$0xff]
    %v192 = vld [vmem:[#allocation2 + $0x8] sm:$0xff]
    %v193 = vld [vmem:[#allocation2 + $0x10] sm:$0xff]
    %v194 = vld [vmem:[#allocation2 + $0x18] sm:$0xff]
    %v195 = vld [vmem:[%s2] sm:$0x1]
    %v197 = vlaneseq
    %v198 = vshrl.u32 %v197, 7
    %v199 = vsub.s32 0, %v198
    %v200 = vrot.slane %v195, %v199
    %v202 = vmul.f32 %v191, %v200
    %v203 = vmul.f32 %v192, %v200
    %v204 = vmul.f32 %v193, %v200
    %v205 = vmul.f32 %v194, %v200
    %v206 = vld [vmem:[%s3] sm:$0x1]
    %v208 = vlaneseq
    %v209 = vshrl.u32 %v208, 7
    %v210 = vsub.s32 0, %v209
    %v211 = vrot.slane %v206, %v210
    %v213 = vadd.f32 %v202, %v211
    %v214 = vadd.f32 %v203, %v211
    %v215 = vadd.f32 %v204, %v211
    %v216 = vadd.f32 %v205, %v211
    %v217 = vmax.f32 %v213, 0.0
    %v218 = vmax.f32 %v214, 0.0
    %v219 = vmax.f32 %v215, 0.0
    %v220 = vmax.f32 %v216, 0.0
    %221 = vst [vmem:[%s4] sm:$0xff] %v217
    %222 = vst [vmem:[%s4 + $0x8] sm:$0xff] %v218
    %223 = vst [vmem:[%s4 + $0x10] sm:$0xff] %v219
    %224 = vst [vmem:[%s4 + $0x18] sm:$0xff] %v220
  $region25: #{_lambda_.79} parent=0 // pred_fallthru
    _
  // Predicated region
  $region26: #{_lambda_.79} parent=0 // pred_check
    _
  $region27: #{_lambda_.79} parent=0 // pred_check_branch
    %226 = sbr.rel (0) target = $region29
  $region28: #{_lambda_.79} parent=0 // pred_region
    _
  $region29: #{_lambda_.79} parent=0 // pred_fallthru
    _
  // Predicated region
  $region30: #{_lambda_.79} parent=0 // pred_check
    _
  $region31: #{_lambda_.79} parent=0 // pred_check_branch
    %228 = sbr.rel (0) target = $region33
  $region32: #{_lambda_.79} parent=0 // pred_region
    _
  $region33: #{_lambda_.79} parent=0 // pred_fallthru
    _

// kernel: _lambda_.80
$region0: #{_lambda_.80}
  #allocation0 [shape = 'u32[]', space=smem, size = 0x4, offset = 0x4, fixed_abs, tag = 'smem constant byte address 0x4 - core index']
  #allocation1 [shape = 'u32[144,128]{1,0:T(1,128)}', space=vmem, size = 0x12000, scoped, tag = 'internal scratch']
  %s0 = inlined_call_operand.vmem [shape: f32[32,16], index: 0, kind: input, shape index: {}]
  %s1 = inlined_call_operand.vmem [shape: f32[32,16], index: 1, kind: input, shape index: {}]
  %s2 = inlined_call_operand.vmem [shape: f32[32,16], index: 2, kind: input, shape index: {}]
  %s3 = inlined_call_operand.vmem [shape: f32[32,16], index: 3, kind: input, shape index: {}]
  %s4 = inlined_call_operand.vmem [shape: f32[1,16], index: 4, kind: input, shape index: {}]
  %s5 = inlined_call_operand.vmem [shape: f32[1,16], index: 5, kind: input, shape index: {}]
  %s6 = inlined_call_operand.vmem [shape: f32[32,16], index: 6, kind: output, shape index: {}]
  %s7 = sld [smem:[#allocation0]]
  $region34: #{_lambda_.80} parent=0
    _
  %s9 = ssub.s32 1, %s7
  %s10 = scalar_select 0, %s9, %s7
  // Predicated region
  $region2: #{_lambda_.80} parent=0 // pred_check
    _
  $region3: #{_lambda_.80} parent=0 // pred_check_branch
    %12 = sbr.rel (0) target = $region5
  $region4: #{_lambda_.80} parent=0 // pred_region
    _
  $region5: #{_lambda_.80} parent=0 // pred_fallthru
    _
  // Predicated region
  $region6: #{_lambda_.80} parent=0 // pred_check
    _
  $region7: #{_lambda_.80} parent=0 // pred_check_branch
    %14 = sbr.rel (0) target = $region9
  $region8: #{_lambda_.80} parent=0 // pred_region
    _
  $region9: #{_lambda_.80} parent=0 // pred_fallthru
    _
  // Predicated region
  $region10: #{_lambda_.80} parent=0 // pred_check
    _
  $region11: #{_lambda_.80} parent=0 // pred_check_branch
    %16 = sbr.rel (0) target = $region13
  $region12: #{_lambda_.80} parent=0 // pred_region
    _
  $region13: #{_lambda_.80} parent=0 // pred_fallthru
    _
  // Predicated region
  $region14: #{_lambda_.80} parent=0 // pred_check
    _
  $region15: #{_lambda_.80} parent=0 // pred_check_branch
    %18 = sbr.rel (0) target = $region17
  $region16: #{_lambda_.80} parent=0 // pred_region
    _
  $region17: #{_lambda_.80} parent=0 // pred_fallthru
    _
  // Predicated region
  $region18: #{_lambda_.80} parent=0 // pred_check
    _
  $region19: #{_lambda_.80} parent=0 // pred_check_branch
    %20 = sbr.rel (0) target = $region21
  $region20: #{_lambda_.80} parent=0 // pred_region
    _
  $region21: #{_lambda_.80} parent=0 // pred_fallthru
    _
  // Predicated region
  $region22: #{_lambda_.80} parent=0 // pred_check
    _
  $region23: #{_lambda_.80} parent=0 // pred_check_branch
    %22 = sbr.rel (0) target = $region25
  $region24: #{_lambda_.80} parent=0 // pred_region
    _
  $region25: #{_lambda_.80} parent=0 // pred_fallthru
    _
  %v23 = vld [vmem:[%s0] sm:$0xff]
  %v24 = vld [vmem:[%s0 + $0x8] sm:$0xff]
  %v25 = vld [vmem:[%s0 + $0x10] sm:$0xff]
  %v26 = vld [vmem:[%s0 + $0x18] sm:$0xff]
  %v27 = vld [vmem:[%s1] sm:$0xff]
  %v28 = vld [vmem:[%s1 + $0x8] sm:$0xff]
  %v29 = vld [vmem:[%s1 + $0x10] sm:$0xff]
  %v30 = vld [vmem:[%s1 + $0x18] sm:$0xff]
  %v31 = vmax.f32 %v23, %v27
  %v32 = vmax.f32 %v24, %v28
  %v33 = vmax.f32 %v25, %v29
  %v34 = vmax.f32 %v26, %v30
  %v35 = vld [vmem:[%s2] sm:$0xff]
  %v36 = vld [vmem:[%s2 + $0x8] sm:$0xff]
  %v37 = vld [vmem:[%s2 + $0x10] sm:$0xff]
  %v38 = vld [vmem:[%s2 + $0x18] sm:$0xff]
  %v39 = vld [vmem:[%s3] sm:$0xff]
  %v40 = vld [vmem:[%s3 + $0x8] sm:$0xff]
  %v41 = vld [vmem:[%s3 + $0x10] sm:$0xff]
  %v42 = vld [vmem:[%s3 + $0x18] sm:$0xff]
  %v43 = vmax.f32 %v35, %v39
  %v44 = vmax.f32 %v36, %v40
  %v45 = vmax.f32 %v37, %v41
  %v46 = vmax.f32 %v38, %v42
  %v47 = vmax.f32 %v31, %v43
  %v48 = vmax.f32 %v32, %v44
  %v49 = vmax.f32 %v33, %v45
  %v50 = vmax.f32 %v34, %v46
  %v51 = vld [vmem:[%s4] sm:$0x1]
  %v53 = vlaneseq
  %v54 = vshrl.u32 %v53, 7
  %v55 = vsub.s32 0, %v54
  %v56 = vrot.slane %v51, %v55
  %v58 = vmul.f32 %v47, %v56
  %v59 = vmul.f32 %v48, %v56
  %v60 = vmul.f32 %v49, %v56
  %v61 = vmul.f32 %v50, %v56
  %v62 = vld [vmem:[%s5] sm:$0x1]
  %v64 = vlaneseq
  %v65 = vshrl.u32 %v64, 7
  %v66 = vsub.s32 0, %v65
  %v67 = vrot.slane %v62, %v66
  %v69 = vadd.f32 %v58, %v67
  %v70 = vadd.f32 %v59, %v67
  %v71 = vadd.f32 %v60, %v67
  %v72 = vadd.f32 %v61, %v67
  %v73 = vmax.f32 %v69, 0.0
  %v74 = vmax.f32 %v70, 0.0
  %v75 = vmax.f32 %v71, 0.0
  %v76 = vmax.f32 %v72, 0.0
  %vm77 = vcmask 130048
  %78 = vst.msk [vmem:[%s6] sm:$0xff] %vm77, %v73
  %79 = vst.msk [vmem:[%s6 + $0x8] sm:$0xff] %vm77, %v74
  %80 = vst.msk [vmem:[%s6 + $0x10] sm:$0xff] %vm77, %v75
  %81 = vst.msk [vmem:[%s6 + $0x18] sm:$0xff] %vm77, %v76
  // Predicated region
  $region26: #{_lambda_.80} parent=0 // pred_check
    _
  $region27: #{_lambda_.80} parent=0 // pred_check_branch
    %83 = sbr.rel (0) target = $region29
  $region28: #{_lambda_.80} parent=0 // pred_region
    _
  $region29: #{_lambda_.80} parent=0 // pred_fallthru
    _
  // Predicated region
  $region30: #{_lambda_.80} parent=0 // pred_check
    _
  $region31: #{_lambda_.80} parent=0 // pred_check_branch
    %85 = sbr.rel (0) target = $region33
  $region32: #{_lambda_.80} parent=0 // pred_region
    _
  $region33: #{_lambda_.80} parent=0 // pred_fallthru
    _

// kernel: _lambda_.84
$region0: #{_lambda_.84}
  #allocation0 [shape = 'u32[]', space=smem, size = 0x4, offset = 0x4, fixed_abs, tag = 'smem constant byte address 0x4 - core index']
  #allocation1 [shape = 'u32[144,128]{1,0:T(1,128)}', space=vmem, size = 0x12000, scoped, tag = 'internal scratch']
  #allocation2 [shape = 'f32[32,128]{1,0:T(8,128)}', space=vmem, size = 0x4000, scoped, tag = 'scratch operand']
  %s0 = inlined_call_operand.vmem [shape: bf16[32,192], index: 0, kind: input, shape index: {}]
  %s1 = inlined_call_operand.vmem [shape: bf16[192,128], index: 1, kind: input, shape index: {}]
  %s2 = inlined_call_operand.vmem [shape: f32[1,128], index: 2, kind: input, shape index: {}]
  %s3 = inlined_call_operand.vmem [shape: f32[1,128], index: 3, kind: input, shape index: {}]
  %s4 = inlined_call_operand.vmem [shape: f32[32,128], index: 4, kind: input, shape index: {}]
  %s5 = inlined_call_operand.vmem [shape: f32[32,128], index: 5, kind: output, shape index: {}]
  %s6 = sld [smem:[#allocation0]]
  $region38: #{_lambda_.84} parent=0
    _
  %s8 = ssub.s32 1, %s6
  %s9 = scalar_select 0, %s8, %s6
  // Predicated region
  $region2: #{_lambda_.84} parent=0 // pred_check
    _
  $region3: #{_lambda_.84} parent=0 // pred_check_branch
    %11 = sbr.rel (0) target = $region5
  $region4: #{_lambda_.84} parent=0 // pred_region
    _
  $region5: #{_lambda_.84} parent=0 // pred_fallthru
    _
  // Predicated region
  $region6: #{_lambda_.84} parent=0 // pred_check
    _
  $region7: #{_lambda_.84} parent=0 // pred_check_branch
    %13 = sbr.rel (0) target = $region9
  $region8: #{_lambda_.84} parent=0 // pred_region
    _
  $region9: #{_lambda_.84} parent=0 // pred_fallthru
    _
  // Predicated region
  $region10: #{_lambda_.84} parent=0 // pred_check
    _
  $region11: #{_lambda_.84} parent=0 // pred_check_branch
    %15 = sbr.rel (0) target = $region13
  $region12: #{_lambda_.84} parent=0 // pred_region
    _
  $region13: #{_lambda_.84} parent=0 // pred_fallthru
    _
  // Predicated region
  $region14: #{_lambda_.84} parent=0 // pred_check
    _
  $region15: #{_lambda_.84} parent=0 // pred_check_branch
    %17 = sbr.rel (0) target = $region17
  $region16: #{_lambda_.84} parent=0 // pred_region
    _
  $region17: #{_lambda_.84} parent=0 // pred_fallthru
    _
  // Predicated region
  $region18: #{_lambda_.84} parent=0 // pred_check
    _
  $region19: #{_lambda_.84} parent=0 // pred_check_branch
    %19 = sbr.rel (0) target = $region21
  $region20: #{_lambda_.84} parent=0 // pred_region
    _
  $region21: #{_lambda_.84} parent=0 // pred_fallthru
    _
  %p21 = scmp.eq.s32.totalorder 0, 0
  // Predicated region
  $region22: #{_lambda_.84} parent=0 // pred_check
    %p22 = pneg %p21
  $region23: #{_lambda_.84} parent=0 // pred_check_branch
    %24 = sbr.rel (%p22) target = $region25
  $region24: #{_lambda_.84} parent=0 // pred_region
    %25 = vst [vmem:[#allocation2] sm:$0xff] 0.0
    %26 = vst [vmem:[#allocation2 + $0x8] sm:$0xff] 0.0
    %27 = vst [vmem:[#allocation2 + $0x10] sm:$0xff] 0.0
    %28 = vst [vmem:[#allocation2 + $0x18] sm:$0xff] 0.0
  $region25: #{_lambda_.84} parent=0 // pred_fallthru
    _
  %v29 = vld [vmem:[#allocation2] sm:$0xff]
  %v30 = vld [vmem:[#allocation2 + $0x8] sm:$0xff]
  %v31 = vld [vmem:[#allocation2 + $0x10] sm:$0xff]
  %v32 = vld [vmem:[#allocation2 + $0x18] sm:$0xff]
  %v33 = vld [vmem:[%s0] sm:$0xff]
  %v34 = vld [vmem:[%s0 + $0x8] sm:$0xff]
  %v35 = vld [vmem:[%s0 + $0x10] sm:$0xff]
  %v36 = vld [vmem:[%s0 + $0x18] sm:$0xff]
  %v37 = vld [vmem:[%s1] sm:$0xf]
  %v38 = vld [vmem:[%s1 + $0x4] sm:$0xf]
  %v39 = vld [vmem:[%s1 + $0x8] sm:$0xf]
  %v40 = vld [vmem:[%s1 + $0xc] sm:$0xf]
  %v41 = vld [vmem:[%s1 + $0x10] sm:$0xf]
  %v42 = vld [vmem:[%s1 + $0x14] sm:$0xf]
  %v43 = vld [vmem:[%s1 + $0x18] sm:$0xf]
  %v44 = vld [vmem:[%s1 + $0x1c] sm:$0xf]
  %v45 = vld [vmem:[%s1 + $0x20] sm:$0xf]
  %v46 = vld [vmem:[%s1 + $0x24] sm:$0xf]
  %v47 = vld [vmem:[%s1 + $0x28] sm:$0xf]
  %v48 = vld [vmem:[%s1 + $0x2c] sm:$0xf]
  %v49 = vld [vmem:[%s1 + $0x30] sm:$0xf]
  %v50 = vld [vmem:[%s1 + $0x34] sm:$0xf]
  %v51 = vld [vmem:[%s1 + $0x38] sm:$0xf]
  %v52 = vld [vmem:[%s1 + $0x3c] sm:$0xf]
  %v53 = vld [vmem:[%s1 + $0x40] sm:$0xf]
  %v54 = vld [vmem:[%s1 + $0x44] sm:$0xf]
  %v55 = vld [vmem:[%s1 + $0x48] sm:$0xf]
  %v56 = vld [vmem:[%s1 + $0x4c] sm:$0xf]
  %v57 = vld [vmem:[%s1 + $0x50] sm:$0xf]
  %v58 = vld [vmem:[%s1 + $0x54] sm:$0xf]
  %v59 = vld [vmem:[%s1 + $0x58] sm:$0xf]
  %v60 = vld [vmem:[%s1 + $0x5c] sm:$0xf]
  %v65 = vunpack.c.l.b16 %v33
  %v66 = vunpack.c.h.b16 %v33
  %v67 = vunpack.c.l.b16 %v34
  %v68 = vunpack.c.h.b16 %v34
  %v69 = vunpack.c.l.b16 %v35
  %v70 = vunpack.c.h.b16 %v35
  %v71 = vunpack.c.l.b16 %v36
  %v72 = vunpack.c.h.b16 %v36
  %v73 = vpack.c.b16 %v67, %v65
  %v74 = vpack.c.b16 %v68, %v66
  %v75 = vpack.c.b16 %v71, %v69
  %v76 = vpack.c.b16 %v72, %v70
  %v103 = vunpack.c.l.b16 %v37
  %v104 = vunpack.c.l.b16 %v38
  %v105 = vunpack.c.l.b16 %v39
  %v106 = vunpack.c.l.b16 %v40
  %v107 = vunpack.c.l.b16 %v41
  %v108 = vunpack.c.l.b16 %v42
  %v109 = vunpack.c.l.b16 %v43
  %v110 = vunpack.c.l.b16 %v44
  %v111 = vunpack.c.l.b16 %v45
  %v112 = vunpack.c.l.b16 %v46
  %v113 = vunpack.c.l.b16 %v47
  %v114 = vunpack.c.l.b16 %v48
  %v115 = vunpack.c.l.b16 %v49
  %v116 = vunpack.c.l.b16 %v50
  %v117 = vunpack.c.l.b16 %v51
  %v118 = vunpack.c.l.b16 %v52
  %v119 = vunpack.c.l.b16 %v53
  %v120 = vunpack.c.l.b16 %v54
  %v121 = vunpack.c.l.b16 %v55
  %v122 = vunpack.c.l.b16 %v56
  %v123 = vunpack.c.l.b16 %v57
  %v124 = vunpack.c.l.b16 %v58
  %v125 = vunpack.c.l.b16 %v59
  %v126 = vunpack.c.l.b16 %v60
  %v127 = vpack.c.b16 %v104, %v103
  %v128 = vpack.c.b16 %v106, %v105
  %v129 = vpack.c.b16 %v108, %v107
  %v130 = vpack.c.b16 %v110, %v109
  %v131 = vpack.c.b16 %v112, %v111
  %v132 = vpack.c.b16 %v114, %v113
  %v133 = vpack.c.b16 %v116, %v115
  %v134 = vpack.c.b16 %v118, %v117
  %v135 = vpack.c.b16 %v120, %v119
  %v136 = vpack.c.b16 %v122, %v121
  %v137 = vpack.c.b16 %v124, %v123
  %v138 = vpack.c.b16 %v126, %v125
  %vm151 = vcmask 523264
  %v153 = vsel %vm151, %v74, 0
  %v156 = vsel %vm151, %v76, 0
  %158 = vmatprep.subr.bf16.mxu0 0
  %159 = vmatpush1.bf16.msra.mxu0 %v127
  %160 = vmatprep.subr.bf16.mxu0 0
  %161 = vmatpush1.bf16.msra.mxu0 %v128
  %162 = vmatprep.subr.bf16.mxu0 0
  %163 = vmatpush1.bf16.msra.mxu0 %v129
  %164 = vmatprep.subr.bf16.mxu0 0
  %165 = vmatpush1.bf16.msra.mxu0 %v130
  %166 = vmatprep.subr.bf16.mxu0 0
  %167 = vmatpush1.bf16.msra.mxu0 %v131
  %168 = vmatprep.subr.bf16.mxu0 0
  %169 = vmatpush1.bf16.msra.mxu0 %v132
  %170 = vmatprep.subr.bf16.mxu0 0
  %171 = vmatpush1.bf16.msra.mxu0 %v133
  %172 = vmatprep.subr.bf16.mxu0 0
  %173 = vmatpush1.bf16.msra.mxu0 %v134
  %174 = vmatprep.subr.bf16.mxu0 0
  %175 = vmatpush1.bf16.msra.mxu0 %v135
  %176 = vmatprep.subr.bf16.mxu0 0
  %177 = vmatpush1.bf16.msra.mxu0 %v136
  %178 = vmatprep.subr.bf16.mxu0 0
  %179 = vmatpush1.bf16.msra.mxu0 %v137
  %180 = vmatprep.subr.bf16.mxu0 0
  %181 = vmatpush1.bf16.msra.mxu0 %v138
  %182 = vmatprep.subr.bf16.mxu0 0
  %183 = vmatpush1.bf16.msra.mxu0 0
  %184 = vmatprep.subr.bf16.mxu0 0
  %185 = vmatpush1.bf16.msra.mxu0 0
  %186 = vmatprep.subr.bf16.mxu0 0
  %187 = vmatpush1.bf16.msra.mxu0 0
  %188 = vmatprep.subr.bf16.mxu0 0
  %189 = vmatpush1.bf16.msra.mxu0 0
  %190 = vmatprep.mubr.bf16.mxu0 %v153
  %191 = vmatmul.mubr.bf16.gmra.mrb[0].mxu0 %v73
  %v192 = vpop.f32.mrb[0].mxu0
  %v193 = vadd.f32 0.0, %v192
  %v194 = vpop.f32.mrb[0].mxu0
  %v195 = vpop.f32.mrb[0].mxu0
  %v196 = vadd.f32 0.0, %v195
  %v197 = vpop.f32.mrb[0].mxu0
  %198 = vmatprep.mubr.bf16.mxu0 %v156
  %199 = vmatmul.mubr.bf16.gmra.mrb[0].mxu0 %v75
  %v200 = vpop.f32.mrb[0].mxu0
  %v201 = vadd.f32 0.0, %v200
  %v202 = vpop.f32.mrb[0].mxu0
  %v203 = vpop.f32.mrb[0].mxu0
  %v204 = vadd.f32 0.0, %v203
  %v205 = vpop.f32.mrb[0].mxu0
  %206 = vdwg.mxu0
  %v207 = vadd.f32 %v29, %v193
  %v208 = vadd.f32 %v30, %v196
  %v209 = vadd.f32 %v31, %v201
  %v210 = vadd.f32 %v32, %v204
  %211 = vst [vmem:[#allocation2] sm:$0xff] %v207
  %212 = vst [vmem:[#allocation2 + $0x8] sm:$0xff] %v208
  %213 = vst [vmem:[#allocation2 + $0x10] sm:$0xff] %v209
  %214 = vst [vmem:[#allocation2 + $0x18] sm:$0xff] %v210
  // Predicated region
  $region26: #{_lambda_.84} parent=0 // pred_check
    %p215 = pneg %p21
  $region27: #{_lambda_.84} parent=0 // pred_check_branch
    %217 = sbr.rel (%p215) target = $region29
  $region28: #{_lambda_.84} parent=0 // pred_region
    %v218 = vld [vmem:[#allocation2] sm:$0xff]
    %v219 = vld [vmem:[#allocation2 + $0x8] sm:$0xff]
    %v220 = vld [vmem:[#allocation2 + $0x10] sm:$0xff]
    %v221 = vld [vmem:[#allocation2 + $0x18] sm:$0xff]
    %v222 = vld [vmem:[%s2] sm:$0x1]
    %v224 = vlaneseq
    %v225 = vshrl.u32 %v224, 7
    %v226 = vsub.s32 0, %v225
    %v227 = vrot.slane %v222, %v226
    %v229 = vmul.f32 %v218, %v227
    %v230 = vmul.f32 %v219, %v227
    %v231 = vmul.f32 %v220, %v227
    %v232 = vmul.f32 %v221, %v227
    %v233 = vld [vmem:[%s3] sm:$0x1]
    %v235 = vlaneseq
    %v236 = vshrl.u32 %v235, 7
    %v237 = vsub.s32 0, %v236
    %v238 = vrot.slane %v233, %v237
    %v240 = vadd.f32 %v229, %v238
    %v241 = vadd.f32 %v230, %v238
    %v242 = vadd.f32 %v231, %v238
    %v243 = vadd.f32 %v232, %v238
    %v244 = vld [vmem:[%s4] sm:$0xff]
    %v245 = vld [vmem:[%s4 + $0x8] sm:$0xff]
    %v246 = vld [vmem:[%s4 + $0x10] sm:$0xff]
    %v247 = vld [vmem:[%s4 + $0x18] sm:$0xff]
    %v248 = vadd.f32 %v240, %v244
    %v249 = vadd.f32 %v241, %v245
    %v250 = vadd.f32 %v242, %v246
    %v251 = vadd.f32 %v243, %v247
    %v252 = vmax.f32 %v248, 0.0
    %v253 = vmax.f32 %v249, 0.0
    %v254 = vmax.f32 %v250, 0.0
    %v255 = vmax.f32 %v251, 0.0
    %256 = vst [vmem:[%s5] sm:$0xff] %v252
    %257 = vst [vmem:[%s5 + $0x8] sm:$0xff] %v253
    %258 = vst [vmem:[%s5 + $0x10] sm:$0xff] %v254
    %259 = vst [vmem:[%s5 + $0x18] sm:$0xff] %v255
  $region29: #{_lambda_.84} parent=0 // pred_fallthru
    _
  // Predicated region
  $region30: #{_lambda_.84} parent=0 // pred_check
    _
  $region31: #{_lambda_.84} parent=0 // pred_check_branch
    %261 = sbr.rel (0) target = $region33
  $region32: #{_lambda_.84} parent=0 // pred_region
    _
  $region33: #{_lambda_.84} parent=0 // pred_fallthru
    _
  // Predicated region
  $region34: #{_lambda_.84} parent=0 // pred_check
    _
  $region35: #{_lambda_.84} parent=0 // pred_check_branch
    %263 = sbr.rel (0) target = $region37
  $region36: #{_lambda_.84} parent=0 // pred_region
    _
  $region37: #{_lambda_.84} parent=0 // pred_fallthru
    _

// kernel: _lambda_.81
$region0: #{_lambda_.81}
  #allocation0 [shape = 'u32[]', space=smem, size = 0x4, offset = 0x4, fixed_abs, tag = 'smem constant byte address 0x4 - core index']
  #allocation1 [shape = 'u32[144,128]{1,0:T(1,128)}', space=vmem, size = 0x12000, scoped, tag = 'internal scratch']
  #allocation2 [shape = 'f32[32,128]{1,0:T(8,128)}', space=vmem, size = 0x4000, scoped, tag = 'scratch operand']
  %s0 = inlined_call_operand.vmem [shape: bf16[32,192], index: 0, kind: input, shape index: {}]
  %s1 = inlined_call_operand.vmem [shape: bf16[192,128], index: 1, kind: input, shape index: {}]
  %s2 = inlined_call_operand.vmem [shape: f32[1,128], index: 2, kind: input, shape index: {}]
  %s3 = inlined_call_operand.vmem [shape: f32[1,128], index: 3, kind: input, shape index: {}]
  %s4 = inlined_call_operand.vmem [shape: f32[32,128], index: 4, kind: output, shape index: {}]
  %s5 = sld [smem:[#allocation0]]
  $region34: #{_lambda_.81} parent=0
    _
  %s7 = ssub.s32 1, %s5
  %s8 = scalar_select 0, %s7, %s5
  // Predicated region
  $region2: #{_lambda_.81} parent=0 // pred_check
    _
  $region3: #{_lambda_.81} parent=0 // pred_check_branch
    %10 = sbr.rel (0) target = $region5
  $region4: #{_lambda_.81} parent=0 // pred_region
    _
  $region5: #{_lambda_.81} parent=0 // pred_fallthru
    _
  // Predicated region
  $region6: #{_lambda_.81} parent=0 // pred_check
    _
  $region7: #{_lambda_.81} parent=0 // pred_check_branch
    %12 = sbr.rel (0) target = $region9
  $region8: #{_lambda_.81} parent=0 // pred_region
    _
  $region9: #{_lambda_.81} parent=0 // pred_fallthru
    _
  // Predicated region
  $region10: #{_lambda_.81} parent=0 // pred_check
    _
  $region11: #{_lambda_.81} parent=0 // pred_check_branch
    %14 = sbr.rel (0) target = $region13
  $region12: #{_lambda_.81} parent=0 // pred_region
    _
  $region13: #{_lambda_.81} parent=0 // pred_fallthru
    _
  // Predicated region
  $region14: #{_lambda_.81} parent=0 // pred_check
    _
  $region15: #{_lambda_.81} parent=0 // pred_check_branch
    %16 = sbr.rel (0) target = $region17
  $region16: #{_lambda_.81} parent=0 // pred_region
    _
  $region17: #{_lambda_.81} parent=0 // pred_fallthru
    _
  %p18 = scmp.eq.s32.totalorder 0, 0
  // Predicated region
  $region18: #{_lambda_.81} parent=0 // pred_check
    %p19 = pneg %p18
  $region19: #{_lambda_.81} parent=0 // pred_check_branch
    %21 = sbr.rel (%p19) target = $region21
  $region20: #{_lambda_.81} parent=0 // pred_region
    %22 = vst [vmem:[#allocation2] sm:$0xff] 0.0
    %23 = vst [vmem:[#allocation2 + $0x8] sm:$0xff] 0.0
    %24 = vst [vmem:[#allocation2 + $0x10] sm:$0xff] 0.0
    %25 = vst [vmem:[#allocation2 + $0x18] sm:$0xff] 0.0
  $region21: #{_lambda_.81} parent=0 // pred_fallthru
    _
  %v26 = vld [vmem:[#allocation2] sm:$0xff]
  %v27 = vld [vmem:[#allocation2 + $0x8] sm:$0xff]
  %v28 = vld [vmem:[#allocation2 + $0x10] sm:$0xff]
  %v29 = vld [vmem:[#allocation2 + $0x18] sm:$0xff]
  %v30 = vld [vmem:[%s0] sm:$0xff]
  %v31 = vld [vmem:[%s0 + $0x8] sm:$0xff]
  %v32 = vld [vmem:[%s0 + $0x10] sm:$0xff]
  %v33 = vld [vmem:[%s0 + $0x18] sm:$0xff]
  %v34 = vld [vmem:[%s1] sm:$0xf]
  %v35 = vld [vmem:[%s1 + $0x4] sm:$0xf]
  %v36 = vld [vmem:[%s1 + $0x8] sm:$0xf]
  %v37 = vld [vmem:[%s1 + $0xc] sm:$0xf]
  %v38 = vld [vmem:[%s1 + $0x10] sm:$0xf]
  %v39 = vld [vmem:[%s1 + $0x14] sm:$0xf]
  %v40 = vld [vmem:[%s1 + $0x18] sm:$0xf]
  %v41 = vld [vmem:[%s1 + $0x1c] sm:$0xf]
  %v42 = vld [vmem:[%s1 + $0x20] sm:$0xf]
  %v43 = vld [vmem:[%s1 + $0x24] sm:$0xf]
  %v44 = vld [vmem:[%s1 + $0x28] sm:$0xf]
  %v45 = vld [vmem:[%s1 + $0x2c] sm:$0xf]
  %v46 = vld [vmem:[%s1 + $0x30] sm:$0xf]
  %v47 = vld [vmem:[%s1 + $0x34] sm:$0xf]
  %v48 = vld [vmem:[%s1 + $0x38] sm:$0xf]
  %v49 = vld [vmem:[%s1 + $0x3c] sm:$0xf]
  %v50 = vld [vmem:[%s1 + $0x40] sm:$0xf]
  %v51 = vld [vmem:[%s1 + $0x44] sm:$0xf]
  %v52 = vld [vmem:[%s1 + $0x48] sm:$0xf]
  %v53 = vld [vmem:[%s1 + $0x4c] sm:$0xf]
  %v54 = vld [vmem:[%s1 + $0x50] sm:$0xf]
  %v55 = vld [vmem:[%s1 + $0x54] sm:$0xf]
  %v56 = vld [vmem:[%s1 + $0x58] sm:$0xf]
  %v57 = vld [vmem:[%s1 + $0x5c] sm:$0xf]
  %v62 = vunpack.c.l.b16 %v30
  %v63 = vunpack.c.h.b16 %v30
  %v64 = vunpack.c.l.b16 %v31
  %v65 = vunpack.c.h.b16 %v31
  %v66 = vunpack.c.l.b16 %v32
  %v67 = vunpack.c.h.b16 %v32
  %v68 = vunpack.c.l.b16 %v33
  %v69 = vunpack.c.h.b16 %v33
  %v70 = vpack.c.b16 %v64, %v62
  %v71 = vpack.c.b16 %v65, %v63
  %v72 = vpack.c.b16 %v68, %v66
  %v73 = vpack.c.b16 %v69, %v67
  %v100 = vunpack.c.l.b16 %v34
  %v101 = vunpack.c.l.b16 %v35
  %v102 = vunpack.c.l.b16 %v36
  %v103 = vunpack.c.l.b16 %v37
  %v104 = vunpack.c.l.b16 %v38
  %v105 = vunpack.c.l.b16 %v39
  %v106 = vunpack.c.l.b16 %v40
  %v107 = vunpack.c.l.b16 %v41
  %v108 = vunpack.c.l.b16 %v42
  %v109 = vunpack.c.l.b16 %v43
  %v110 = vunpack.c.l.b16 %v44
  %v111 = vunpack.c.l.b16 %v45
  %v112 = vunpack.c.l.b16 %v46
  %v113 = vunpack.c.l.b16 %v47
  %v114 = vunpack.c.l.b16 %v48
  %v115 = vunpack.c.l.b16 %v49
  %v116 = vunpack.c.l.b16 %v50
  %v117 = vunpack.c.l.b16 %v51
  %v118 = vunpack.c.l.b16 %v52
  %v119 = vunpack.c.l.b16 %v53
  %v120 = vunpack.c.l.b16 %v54
  %v121 = vunpack.c.l.b16 %v55
  %v122 = vunpack.c.l.b16 %v56
  %v123 = vunpack.c.l.b16 %v57
  %v124 = vpack.c.b16 %v101, %v100
  %v125 = vpack.c.b16 %v103, %v102
  %v126 = vpack.c.b16 %v105, %v104
  %v127 = vpack.c.b16 %v107, %v106
  %v128 = vpack.c.b16 %v109, %v108
  %v129 = vpack.c.b16 %v111, %v110
  %v130 = vpack.c.b16 %v113, %v112
  %v131 = vpack.c.b16 %v115, %v114
  %v132 = vpack.c.b16 %v117, %v116
  %v133 = vpack.c.b16 %v119, %v118
  %v134 = vpack.c.b16 %v121, %v120
  %v135 = vpack.c.b16 %v123, %v122
  %vm148 = vcmask 523264
  %v150 = vsel %vm148, %v71, 0
  %v153 = vsel %vm148, %v73, 0
  %155 = vmatprep.subr.bf16.mxu0 0
  %156 = vmatpush1.bf16.msra.mxu0 %v124
  %157 = vmatprep.subr.bf16.mxu0 0
  %158 = vmatpush1.bf16.msra.mxu0 %v125
  %159 = vmatprep.subr.bf16.mxu0 0
  %160 = vmatpush1.bf16.msra.mxu0 %v126
  %161 = vmatprep.subr.bf16.mxu0 0
  %162 = vmatpush1.bf16.msra.mxu0 %v127
  %163 = vmatprep.subr.bf16.mxu0 0
  %164 = vmatpush1.bf16.msra.mxu0 %v128
  %165 = vmatprep.subr.bf16.mxu0 0
  %166 = vmatpush1.bf16.msra.mxu0 %v129
  %167 = vmatprep.subr.bf16.mxu0 0
  %168 = vmatpush1.bf16.msra.mxu0 %v130
  %169 = vmatprep.subr.bf16.mxu0 0
  %170 = vmatpush1.bf16.msra.mxu0 %v131
  %171 = vmatprep.subr.bf16.mxu0 0
  %172 = vmatpush1.bf16.msra.mxu0 %v132
  %173 = vmatprep.subr.bf16.mxu0 0
  %174 = vmatpush1.bf16.msra.mxu0 %v133
  %175 = vmatprep.subr.bf16.mxu0 0
  %176 = vmatpush1.bf16.msra.mxu0 %v134
  %177 = vmatprep.subr.bf16.mxu0 0
  %178 = vmatpush1.bf16.msra.mxu0 %v135
  %179 = vmatprep.subr.bf16.mxu0 0
  %180 = vmatpush1.bf16.msra.mxu0 0
  %181 = vmatprep.subr.bf16.mxu0 0
  %182 = vmatpush1.bf16.msra.mxu0 0
  %183 = vmatprep.subr.bf16.mxu0 0
  %184 = vmatpush1.bf16.msra.mxu0 0
  %185 = vmatprep.subr.bf16.mxu0 0
  %186 = vmatpush1.bf16.msra.mxu0 0
  %187 = vmatprep.mubr.bf16.mxu0 %v150
  %188 = vmatmul.mubr.bf16.gmra.mrb[0].mxu0 %v70
  %v189 = vpop.f32.mrb[0].mxu0
  %v190 = vadd.f32 0.0, %v189
  %v191 = vpop.f32.mrb[0].mxu0
  %v192 = vpop.f32.mrb[0].mxu0
  %v193 = vadd.f32 0.0, %v192
  %v194 = vpop.f32.mrb[0].mxu0
  %195 = vmatprep.mubr.bf16.mxu0 %v153
  %196 = vmatmul.mubr.bf16.gmra.mrb[0].mxu0 %v72
  %v197 = vpop.f32.mrb[0].mxu0
  %v198 = vadd.f32 0.0, %v197
  %v199 = vpop.f32.mrb[0].mxu0
  %v200 = vpop.f32.mrb[0].mxu0
  %v201 = vadd.f32 0.0, %v200
  %v202 = vpop.f32.mrb[0].mxu0
  %203 = vdwg.mxu0
  %v204 = vadd.f32 %v26, %v190
  %v205 = vadd.f32 %v27, %v193
  %v206 = vadd.f32 %v28, %v198
  %v207 = vadd.f32 %v29, %v201
  %208 = vst [vmem:[#allocation2] sm:$0xff] %v204
  %209 = vst [vmem:[#allocation2 + $0x8] sm:$0xff] %v205
  %210 = vst [vmem:[#allocation2 + $0x10] sm:$0xff] %v206
  %211 = vst [vmem:[#allocation2 + $0x18] sm:$0xff] %v207
  // Predicated region
  $region22: #{_lambda_.81} parent=0 // pred_check
    %p212 = pneg %p18
  $region23: #{_lambda_.81} parent=0 // pred_check_branch
    %214 = sbr.rel (%p212) target = $region25
  $region24: #{_lambda_.81} parent=0 // pred_region
    %v215 = vld [vmem:[#allocation2] sm:$0xff]
    %v216 = vld [vmem:[#allocation2 + $0x8] sm:$0xff]
    %v217 = vld [vmem:[#allocation2 + $0x10] sm:$0xff]
    %v218 = vld [vmem:[#allocation2 + $0x18] sm:$0xff]
    %v219 = vld [vmem:[%s2] sm:$0x1]
    %v221 = vlaneseq
    %v222 = vshrl.u32 %v221, 7
    %v223 = vsub.s32 0, %v222
    %v224 = vrot.slane %v219, %v223
    %v226 = vmul.f32 %v215, %v224
    %v227 = vmul.f32 %v216, %v224
    %v228 = vmul.f32 %v217, %v224
    %v229 = vmul.f32 %v218, %v224
    %v230 = vld [vmem:[%s3] sm:$0x1]
    %v232 = vlaneseq
    %v233 = vshrl.u32 %v232, 7
    %v234 = vsub.s32 0, %v233
    %v235 = vrot.slane %v230, %v234
    %v237 = vadd.f32 %v226, %v235
    %v238 = vadd.f32 %v227, %v235
    %v239 = vadd.f32 %v228, %v235
    %v240 = vadd.f32 %v229, %v235
    %v241 = vmax.f32 %v237, 0.0
    %v242 = vmax.f32 %v238, 0.0
    %v243 = vmax.f32 %v239, 0.0
    %v244 = vmax.f32 %v240, 0.0
    %245 = vst [vmem:[%s4] sm:$0xff] %v241
    %246 = vst [vmem:[%s4 + $0x8] sm:$0xff] %v242
    %247 = vst [vmem:[%s4 + $0x10] sm:$0xff] %v243
    %248 = vst [vmem:[%s4 + $0x18] sm:$0xff] %v244
  $region25: #{_lambda_.81} parent=0 // pred_fallthru
    _
  // Predicated region
  $region26: #{_lambda_.81} parent=0 // pred_check
    _
  $region27: #{_lambda_.81} parent=0 // pred_check_branch
    %250 = sbr.rel (0) target = $region29
  $region28: #{_lambda_.81} parent=0 // pred_region
    _
  $region29: #{_lambda_.81} parent=0 // pred_fallthru
    _
  // Predicated region
  $region30: #{_lambda_.81} parent=0 // pred_check
    _
  $region31: #{_lambda_.81} parent=0 // pred_check_branch
    %252 = sbr.rel (0) target = $region33
  $region32: #{_lambda_.81} parent=0 // pred_region
    _
  $region33: #{_lambda_.81} parent=0 // pred_fallthru
    _

// kernel: _lambda_.102
$region0: #{_lambda_.102}
  #allocation0 [shape = 'u32[]', space=smem, size = 0x4, offset = 0x4, fixed_abs, tag = 'smem constant byte address 0x4 - core index']
  #allocation1 [shape = 'u32[144,128]{1,0:T(1,128)}', space=vmem, size = 0x12000, scoped, tag = 'internal scratch']
  %s0 = inlined_call_operand.vmem [shape: f32[8,64], index: 0, kind: input, shape index: {}]
  %s1 = inlined_call_operand.vmem [shape: f32[8,64], index: 1, kind: input, shape index: {}]
  %s2 = inlined_call_operand.vmem [shape: f32[8,64], index: 2, kind: input, shape index: {}]
  %s3 = inlined_call_operand.vmem [shape: f32[8,64], index: 3, kind: input, shape index: {}]
  %s4 = inlined_call_operand.vmem [shape: f32[1,64], index: 4, kind: input, shape index: {}]
  %s5 = inlined_call_operand.vmem [shape: f32[1,64], index: 5, kind: input, shape index: {}]
  %s6 = inlined_call_operand.vmem [shape: f32[8,64], index: 6, kind: output, shape index: {}]
  %s7 = sld [smem:[#allocation0]]
  $region34: #{_lambda_.102} parent=0
    _
  %s9 = ssub.s32 1, %s7
  %s10 = scalar_select 0, %s9, %s7
  // Predicated region
  $region2: #{_lambda_.102} parent=0 // pred_check
    _
  $region3: #{_lambda_.102} parent=0 // pred_check_branch
    %12 = sbr.rel (0) target = $region5
  $region4: #{_lambda_.102} parent=0 // pred_region
    _
  $region5: #{_lambda_.102} parent=0 // pred_fallthru
    _
  // Predicated region
  $region6: #{_lambda_.102} parent=0 // pred_check
    _
  $region7: #{_lambda_.102} parent=0 // pred_check_branch
    %14 = sbr.rel (0) target = $region9
  $region8: #{_lambda_.102} parent=0 // pred_region
    _
  $region9: #{_lambda_.102} parent=0 // pred_fallthru
    _
  // Predicated region
  $region10: #{_lambda_.102} parent=0 // pred_check
    _
  $region11: #{_lambda_.102} parent=0 // pred_check_branch
    %16 = sbr.rel (0) target = $region13
  $region12: #{_lambda_.102} parent=0 // pred_region
    _
  $region13: #{_lambda_.102} parent=0 // pred_fallthru
    _
  // Predicated region
  $region14: #{_lambda_.102} parent=0 // pred_check
    _
  $region15: #{_lambda_.102} parent=0 // pred_check_branch
    %18 = sbr.rel (0) target = $region17
  $region16: #{_lambda_.102} parent=0 // pred_region
    _
  $region17: #{_lambda_.102} parent=0 // pred_fallthru
    _
  // Predicated region
  $region18: #{_lambda_.102} parent=0 // pred_check
    _
  $region19: #{_lambda_.102} parent=0 // pred_check_branch
    %20 = sbr.rel (0) target = $region21
  $region20: #{_lambda_.102} parent=0 // pred_region
    _
  $region21: #{_lambda_.102} parent=0 // pred_fallthru
    _
  // Predicated region
  $region22: #{_lambda_.102} parent=0 // pred_check
    _
  $region23: #{_lambda_.102} parent=0 // pred_check_branch
    %22 = sbr.rel (0) target = $region25
  $region24: #{_lambda_.102} parent=0 // pred_region
    _
  $region25: #{_lambda_.102} parent=0 // pred_fallthru
    _
  %v23 = vld [vmem:[%s0] sm:$0xff]
  %v24 = vld [vmem:[%s1] sm:$0xff]
  %v25 = vmax.f32 %v23, %v24
  %v26 = vld [vmem:[%s2] sm:$0xff]
  %v27 = vld [vmem:[%s3] sm:$0xff]
  %v28 = vmax.f32 %v26, %v27
  %v29 = vmax.f32 %v25, %v28
  %v30 = vld [vmem:[%s4] sm:$0x1]
  %v32 = vlaneseq
  %v33 = vshrl.u32 %v32, 7
  %v34 = vsub.s32 0, %v33
  %v35 = vrot.slane %v30, %v34
  %v37 = vmul.f32 %v29, %v35
  %v38 = vld [vmem:[%s5] sm:$0x1]
  %v40 = vlaneseq
  %v41 = vshrl.u32 %v40, 7
  %v42 = vsub.s32 0, %v41
  %v43 = vrot.slane %v38, %v42
  %v45 = vadd.f32 %v37, %v43
  %v46 = vmax.f32 %v45, 0.0
  %vm47 = vcmask 523264
  %48 = vst.msk [vmem:[%s6] sm:$0xff] %vm47, %v46
  // Predicated region
  $region26: #{_lambda_.102} parent=0 // pred_check
    _
  $region27: #{_lambda_.102} parent=0 // pred_check_branch
    %50 = sbr.rel (0) target = $region29
  $region28: #{_lambda_.102} parent=0 // pred_region
    _
  $region29: #{_lambda_.102} parent=0 // pred_fallthru
    _
  // Predicated region
  $region30: #{_lambda_.102} parent=0 // pred_check
    _
  $region31: #{_lambda_.102} parent=0 // pred_check_branch
    %52 = sbr.rel (0) target = $region33
  $region32: #{_lambda_.102} parent=0 // pred_region
    _
  $region33: #{_lambda_.102} parent=0 // pred_fallthru
    _

// kernel: _lambda_.101
$region0: #{_lambda_.101}
  #allocation0 [shape = 'u32[]', space=smem, size = 0x4, offset = 0x4, fixed_abs, tag = 'smem constant byte address 0x4 - core index']
  #allocation1 [shape = 'u32[144,128]{1,0:T(1,128)}', space=vmem, size = 0x12000, scoped, tag = 'internal scratch']
  #allocation2 [shape = 'f32[16,128]{1,0:T(8,128)}', space=vmem, size = 0x2000, scoped, tag = 'scratch operand']
  %s0 = inlined_call_operand.vmem [shape: bf16[16,768], index: 0, kind: input, shape index: {}]
  %s1 = inlined_call_operand.vmem [shape: bf16[768,128], index: 1, kind: input, shape index: {}]
  %s2 = inlined_call_operand.vmem [shape: f32[1,128], index: 2, kind: input, shape index: {}]
  %s3 = inlined_call_operand.vmem [shape: f32[1,128], index: 3, kind: input, shape index: {}]
  %s4 = inlined_call_operand.vmem [shape: f32[16,128], index: 4, kind: output, shape index: {}]
  %s5 = sld [smem:[#allocation0]]
  $region95: #{_lambda_.101} parent=0
    _
  %s7 = ssub.s32 1, %s5
  %s8 = scalar_select 0, %s7, %s5
  $region1: #{_lambda_.101} parent=0
    #allocation3 [shape = 'u8[16384]{0}', space=vmem, size = 0x4000, scoped, tag = 'input window, operand 0']
    loop: start=0, step=1, limit=5
    $region2: #{_lambda_.101} parent=1 // loop_pre_header
      _
    $region3: #{_lambda_.101} parent=1 // loop_header
      %s10 = sphi 0, %s14
      %p11 = scmp.ge.s32.totalorder %s10, 5
      %s17 = sphi 0, %s36
      %s18 = sphi 0, %s32
      %s19 = sphi 0, %s28
      %s20 = sphi 0, %s17
      %s21 = sphi 0, %s18
      %s22 = sphi 0, %s19
      %s23 = sphi 0, %s20
      %s24 = sphi 0, %s21
      %s25 = sphi 0, %s22
      %s41 = sphi 0, %s43
      %s44 = sphi 0, %s41
      %s45 = sphi 0, %s44
      %s61 = sphi 0, %s45
      %s69 = sphi 0, %s71
      %s72 = sphi 0, %s69
      %s73 = sphi 0, %s72
      %s89 = sphi 0, %s73
      %s95 = sphi 0, %s97
      %s98 = sphi 0, %s95
      %s99 = sphi 0, %s98
      %s115 = sphi 0, %s99
      %s121 = sphi 0, %s123
      %s124 = sphi 0, %s121
      %s125 = sphi 0, %s124
      %s141 = sphi 0, %s125
      %s149 = sphi 0, %s151
      %s152 = sphi 0, %s149
      %s153 = sphi 0, %s152
      %s169 = sphi 0, %s153
    $region4: #{_lambda_.101} parent=1 // loop_header_branch
      %13 = sbr.rel (%p11) target = $region8
    $region5: #{_lambda_.101} parent=1 // loop_body
      %s15 = ssub.s32 %s10, 1
      %s16 = ssub.s32 %s10, 2
      %s26 = sadd.s32 1, %s19
      %p27 = scmp.ge.s32.totalorder %s26, 3
      %s28 = scalar_select %p27, 0, %s26
      %s29 = sadd.s32 1, %s18
      %s30 = scalar_select %p27, %s29, %s18
      %p31 = scmp.ge.s32.totalorder %s30, 1
      %s32 = scalar_select %p31, 0, %s30
      %s33 = sadd.s32 1, %s17
      %s34 = scalar_select %p31, %s33, %s17
      %p35 = scmp.ge.s32.totalorder %s34, 1
      %s36 = scalar_select %p35, 0, %s34
      %s37 = ssub.s32 %s17, %s36
      %s38 = ssub.s32 %s19, %s28
      %s39 = sor.u32 %s37, %s38
      %p40 = scmp.eq.s32.totalorder %s39, 0
      %s42 = sadd.s32 %s41, 1
      %s43 = scalar_select %p40, %s41, %s42
      %p46 = pneg %p40
      %p47 = scmp.eq.s32.totalorder %s10, 2
      %p48 = por %p46, %p47
      %p49 = scmp.ne.s32.totalorder %s41, %s44
      %p50 = scmp.eq.s32.totalorder %s10, 0
      %p51 = por %p49, %p50
      %p52 = scmp.ne.s32.totalorder %s41, %s44
      %p53 = scmp.eq.s32.totalorder %s15, 2
      %p54 = por %p52, %p53
      %p55 = scmp.ne.s32.totalorder %s44, %s45
      %p56 = scmp.eq.s32.totalorder %s15, 0
      %p57 = por %p55, %p56
      %p58 = scmp.ne.s32.totalorder %s44, %s45
      %p59 = scmp.eq.s32.totalorder %s16, 2
      %p60 = por %p58, %p59
      %p62 = scmp.ne.s32.totalorder %s45, %s61
      %p63 = scmp.eq.s32.totalorder %s16, 0
      %p64 = por %p62, %p63
      %s65 = ssub.s32 %s19, %s28
      %s66 = ssub.s32 %s18, %s32
      %s67 = sor.u32 %s65, %s66
      %p68 = scmp.eq.s32.totalorder %s67, 0
      %s70 = sadd.s32 %s69, 1
      %s71 = scalar_select %p68, %s69, %s70
      %p74 = pneg %p68
      %p75 = scmp.eq.s32.totalorder %s10, 2
      %p76 = por %p74, %p75
      %p77 = scmp.ne.s32.totalorder %s69, %s72
      %p78 = scmp.eq.s32.totalorder %s10, 0
      %p79 = por %p77, %p78
      %p80 = scmp.ne.s32.totalorder %s69, %s72
      %p81 = scmp.eq.s32.totalorder %s15, 2
      %p82 = por %p80, %p81
      %p83 = scmp.ne.s32.totalorder %s72, %s73
      %p84 = scmp.eq.s32.totalorder %s15, 0
      %p85 = por %p83, %p84
      %p86 = scmp.ne.s32.totalorder %s72, %s73
      %p87 = scmp.eq.s32.totalorder %s16, 2
      %p88 = por %p86, %p87
      %p90 = scmp.ne.s32.totalorder %s73, %s89
      %p91 = scmp.eq.s32.totalorder %s16, 0
      %p92 = por %p90, %p91
      %s93 = ssub.s32 %s18, %s32
      %p94 = scmp.eq.s32.totalorder %s93, 0
      %s96 = sadd.s32 %s95, 1
      %s97 = scalar_select %p94, %s95, %s96
      %p100 = pneg %p94
      %p101 = scmp.eq.s32.totalorder %s10, 2
      %p102 = por %p100, %p101
      %p103 = scmp.ne.s32.totalorder %s95, %s98
      %p104 = scmp.eq.s32.totalorder %s10, 0
      %p105 = por %p103, %p104
      %p106 = scmp.ne.s32.totalorder %s95, %s98
      %p107 = scmp.eq.s32.totalorder %s15, 2
      %p108 = por %p106, %p107
      %p109 = scmp.ne.s32.totalorder %s98, %s99
      %p110 = scmp.eq.s32.totalorder %s15, 0
      %p111 = por %p109, %p110
      %p112 = scmp.ne.s32.totalorder %s98, %s99
      %p113 = scmp.eq.s32.totalorder %s16, 2
      %p114 = por %p112, %p113
      %p116 = scmp.ne.s32.totalorder %s99, %s115
      %p117 = scmp.eq.s32.totalorder %s16, 0
      %p118 = por %p116, %p117
      %s119 = ssub.s32 %s18, %s32
      %p120 = scmp.eq.s32.totalorder %s119, 0
      %s122 = sadd.s32 %s121, 1
      %s123 = scalar_select %p120, %s121, %s122
      %p126 = pneg %p120
      %p127 = scmp.eq.s32.totalorder %s10, 2
      %p128 = por %p126, %p127
      %p129 = scmp.ne.s32.totalorder %s121, %s124
      %p130 = scmp.eq.s32.totalorder %s10, 0
      %p131 = por %p129, %p130
      %p132 = scmp.ne.s32.totalorder %s121, %s124
      %p133 = scmp.eq.s32.totalorder %s15, 2
      %p134 = por %p132, %p133
      %p135 = scmp.ne.s32.totalorder %s124, %s125
      %p136 = scmp.eq.s32.totalorder %s15, 0
      %p137 = por %p135, %p136
      %p138 = scmp.ne.s32.totalorder %s124, %s125
      %p139 = scmp.eq.s32.totalorder %s16, 2
      %p140 = por %p138, %p139
      %p142 = scmp.ne.s32.totalorder %s125, %s141
      %p143 = scmp.eq.s32.totalorder %s16, 0
      %p144 = por %p142, %p143
      %s145 = ssub.s32 %s17, %s36
      %s146 = ssub.s32 %s18, %s32
      %s147 = sor.u32 %s145, %s146
      %p148 = scmp.eq.s32.totalorder %s147, 0
      %s150 = sadd.s32 %s149, 1
      %s151 = scalar_select %p148, %s149, %s150
      %p154 = pneg %p148
      %p155 = scmp.eq.s32.totalorder %s10, 2
      %p156 = por %p154, %p155
      %p157 = scmp.ne.s32.totalorder %s149, %s152
      %p158 = scmp.eq.s32.totalorder %s10, 0
      %p159 = por %p157, %p158
      %p160 = scmp.ne.s32.totalorder %s149, %s152
      %p161 = scmp.eq.s32.totalorder %s15, 2
      %p162 = por %p160, %p161
      %p163 = scmp.ne.s32.totalorder %s152, %s153
      %p164 = scmp.eq.s32.totalorder %s15, 0
      %p165 = por %p163, %p164
      %p166 = scmp.ne.s32.totalorder %s152, %s153
      %p167 = scmp.eq.s32.totalorder %s16, 2
      %p168 = por %p166, %p167
      %p170 = scmp.ne.s32.totalorder %s153, %s169
      %p171 = scmp.eq.s32.totalorder %s16, 0
      %p172 = por %p170, %p171
      %p173 = scmp.le.s32.totalorder 1, %s10
      %p174 = scmp.lt.s32.totalorder %s10, 4
      %p175 = pnand %p173, %p174
      %p176 = pneg %p175
      // Predicated region
      $region9: #{_lambda_.101} parent=5 // pred_check
        _
      $region10: #{_lambda_.101} parent=5 // pred_check_branch
        %178 = sbr.rel (%p175) target = $region12
      $region11: #{_lambda_.101} parent=5 // pred_region
        %s179 = ssub.s32 %s10, 1
        // Predicated region
        $region13: #{_lambda_.101} parent=11 // pred_check
          %p180 = pneg %p111
        $region14: #{_lambda_.101} parent=11 // pred_check_branch
          %182 = sbr.rel (%p180) target = $region16
        $region15: #{_lambda_.101} parent=11 // pred_region
          %p183 = scmp.lt.s32.totalorder %s21, 0
          %s184 = scalar_select %p183, %s21, 0
          %s185 = scalar_lea.vmem %s2, %s184
        $region16: #{_lambda_.101} parent=11 // pred_fallthru
          _
        // Predicated region
        $region17: #{_lambda_.101} parent=11 // pred_check
          %p186 = pneg %p137
        $region18: #{_lambda_.101} parent=11 // pred_check_branch
          %188 = sbr.rel (%p186) target = $region20
        $region19: #{_lambda_.101} parent=11 // pred_region
          %p189 = scmp.lt.s32.totalorder %s21, 0
          %s190 = scalar_select %p189, %s21, 0
          %s191 = scalar_lea.vmem %s3, %s190
        $region20: #{_lambda_.101} parent=11 // pred_fallthru
          _
      $region12: #{_lambda_.101} parent=5 // pred_fallthru
        _
      %p192 = scmp.lt.s32.totalorder %s10, 3
      // Predicated region
      $region21: #{_lambda_.101} parent=5 // pred_check
        %p193 = pneg %p192
      $region22: #{_lambda_.101} parent=5 // pred_check_branch
        %195 = sbr.rel (%p193) target = $region24
      $region23: #{_lambda_.101} parent=5 // pred_region
        // Predicated region
        $region25: #{_lambda_.101} parent=23 // pred_check
          %p196 = pneg %p51
        $region26: #{_lambda_.101} parent=23 // pred_check_branch
          %198 = sbr.rel (%p196) target = $region28
        $region27: #{_lambda_.101} parent=23 // pred_region
          %s199 = sand.u32 %s41, 1
          %s200 = sand.u32 %s41, 1
          %s201 = smul.addr %s200, 16
          %s202 = scalar_lea.vmem [#allocation3], %s201
          %s203 = smul.u32 2, %s17
          %s204 = smul.u32 2, %s19
          %s205 = smul.addr %s203, 6
          %s206 = sadd.s32 %s204, %s205
          %s207 = smul.addr %s206, 4
          %s208 = scalar_lea.vmem %s0, %s207
          // Predicated region
          $region29: #{_lambda_.101} parent=27 // pred_check
            _
          $region30: #{_lambda_.101} parent=27 // pred_check_branch
            %210 = sbr.rel (0) target = $region32
          $region31: #{_lambda_.101} parent=27 // pred_region
            // Predicated region
            $region33: #{_lambda_.101} parent=31 // pred_check
              _
            $region34: #{_lambda_.101} parent=31 // pred_check_branch
              %212 = sbr.rel (0) target = $region36
            $region35: #{_lambda_.101} parent=31 // pred_region
              // Predicated region
              $region48: #{_lambda_.101} parent=35 // pred_check
                _
              $region49: #{_lambda_.101} parent=35 // pred_check_branch
                %229 = sbr.rel (0) target = $region51
              $region50: #{_lambda_.101} parent=35 // pred_region
                loop: start=0, step=1, limit=1
                $region52: #{_lambda_.101} parent=50 // loop_pre_header
                  _
                $region53: #{_lambda_.101} parent=50 // loop_header
                  %s231 = sphi 0, %s235
                  %p232 = scmp.ge.s32.totalorder %s231, 1
                  %s236 = sphi %s208, %s208
                  %s237 = sphi %s202, %s202
                $region54: #{_lambda_.101} parent=50 // loop_header_branch
                  %234 = sbr.rel (%p232) target = $region58
                $region55: #{_lambda_.101} parent=50 // loop_body
                  %v238 = vld [vmem:[%s236] sm:$0xff]
                  %239 = vst [vmem:[%s237] sm:$0xff] %v238
                  %v240 = vld [vmem:[%s236 + $0x18] sm:$0xff]
                  %241 = vst [vmem:[%s237 + $0x8] sm:$0xff] %v240
                $region56: #{_lambda_.101} parent=50 // loop_footer
                  %s235 = sadd.s32 1, %s231
                $region57: #{_lambda_.101} parent=50 // loop_footer_branch
                  %230 = sbr.rel target = $region53
                $region58: #{_lambda_.101} parent=50 // loop_exit
                  _
              $region51: #{_lambda_.101} parent=35 // pred_fallthru
                _
              // Predicated region
              $region59: #{_lambda_.101} parent=35 // pred_check
                _
              $region60: #{_lambda_.101} parent=35 // pred_check_branch
                %243 = sbr.rel target = $region62
              $region61: #{_lambda_.101} parent=35 // pred_region
                _
              $region62: #{_lambda_.101} parent=35 // pred_fallthru
                _
            $region36: #{_lambda_.101} parent=31 // pred_fallthru
              _
            // Predicated region
            $region37: #{_lambda_.101} parent=31 // pred_check
              _
            $region38: #{_lambda_.101} parent=31 // pred_check_branch
              %214 = sbr.rel target = $region40
            $region39: #{_lambda_.101} parent=31 // pred_region
              loop: start=0, step=1, limit=1
              $region41: #{_lambda_.101} parent=39 // loop_pre_header
                _
              $region42: #{_lambda_.101} parent=39 // loop_header
                %s217 = sphi 0, %s221
                %p218 = scmp.ge.s32.totalorder %s217, 1
                %s222 = sphi %s208, %s208
                %s223 = sphi %s202, %s202
              $region43: #{_lambda_.101} parent=39 // loop_header_branch
                %220 = sbr.rel (%p218) target = $region47
              $region44: #{_lambda_.101} parent=39 // loop_body
                %v224 = vld [vmem:[%s222] sm:$0xff]
                %225 = vst [vmem:[%s223] sm:$0xff] %v224
                %v226 = vld [vmem:[%s222 + $0x18] sm:$0xff]
                %227 = vst [vmem:[%s223 + $0x8] sm:$0xff] %v226
              $region45: #{_lambda_.101} parent=39 // loop_footer
                %s221 = sadd.s32 1, %s217
              $region46: #{_lambda_.101} parent=39 // loop_footer_branch
                %216 = sbr.rel target = $region42
              $region47: #{_lambda_.101} parent=39 // loop_exit
                _
            $region40: #{_lambda_.101} parent=31 // pred_fallthru
              _
          $region32: #{_lambda_.101} parent=27 // pred_fallthru
            _
          %244 = vnop
        $region28: #{_lambda_.101} parent=23 // pred_fallthru
          _
        // Predicated region
        $region63: #{_lambda_.101} parent=23 // pred_check
          %p245 = pneg %p79
        $region64: #{_lambda_.101} parent=23 // pred_check_branch
          %247 = sbr.rel (%p245) target = $region66
        $region65: #{_lambda_.101} parent=23 // pred_region
          %s248 = smul.u32 32, %s19
          %p249 = scmp.lt.s32.totalorder %s248, 95
          %s250 = scalar_select %p249, %s248, 95
          %p251 = scmp.lt.s32.totalorder %s18, 0
          %s252 = scalar_select %p251, %s18, 0
          %s253 = sadd.s32 %s252, %s250
          %s254 = smul.addr %s253, 4
          %s255 = scalar_lea.vmem %s1, %s254
          %s256 = smul.u32 32, %s19
        $region66: #{_lambda_.101} parent=23 // pred_fallthru
          _
      $region24: #{_lambda_.101} parent=5 // pred_fallthru
        _
      %p257 = scmp.le.s32.totalorder 1, %s10
      %p258 = scmp.lt.s32.totalorder %s10, 4
      %p259 = pnand %p257, %p258
      %p260 = pneg %p259
      // Predicated region
      $region67: #{_lambda_.101} parent=5 // pred_check
        _
      $region68: #{_lambda_.101} parent=5 // pred_check_branch
        %262 = sbr.rel (%p259) target = $region70
      $region69: #{_lambda_.101} parent=5 // pred_region
        %s263 = ssub.s32 %s10, 1
        %s264 = sand.u32 %s44, 1
        %s265 = sand.u32 %s44, 1
        %s266 = smul.addr %s265, 16
        %s267 = scalar_lea.vmem [#allocation3], %s266
        // Predicated region
        $region71: #{_lambda_.101} parent=69 // pred_check
          %p268 = pneg %p57
        $region72: #{_lambda_.101} parent=69 // pred_check_branch
          %270 = sbr.rel (%p268) target = $region74
        $region73: #{_lambda_.101} parent=69 // pred_region
          _
        $region74: #{_lambda_.101} parent=69 // pred_fallthru
          _
        %s271 = sand.u32 %s44, 1
        %s272 = sand.u32 %s44, 1
        %s273 = smul.addr %s272, 16
        %s274 = scalar_lea.vmem [#allocation3], %s273
        %p275 = pneg %p57
        %p276 = pneg %p54
        %s277 = smul.u32 32, %s22
        %p278 = scmp.lt.s32.totalorder %s277, 95
        %s279 = scalar_select %p278, %s277, 95
        %p280 = scmp.lt.s32.totalorder %s21, 0
        %s281 = scalar_select %p280, %s21, 0
        %s282 = sadd.s32 %s281, %s279
        %s283 = smul.addr %s282, 4
        %s284 = scalar_lea.vmem %s1, %s283
        %p285 = pneg %p85
        %p286 = pneg %p82
        %p287 = scmp.lt.s32.totalorder %s21, 0
        %s288 = scalar_select %p287, %s21, 0
        %s289 = scalar_lea.vmem %s2, %s288
        %p290 = pneg %p111
        %p291 = pneg %p108
        %p292 = scmp.lt.s32.totalorder %s21, 0
        %s293 = scalar_select %p292, %s21, 0
        %s294 = scalar_lea.vmem %s3, %s293
        %p295 = pneg %p137
        %p296 = pneg %p134
        %p297 = pneg %p165
        %p298 = pneg %p162
        %s299 = smul.u32 2, %s20
        %p300 = scmp.lt.s32.totalorder %s299, 1
        %s301 = scalar_select %p300, %s299, 1
        %p302 = scmp.lt.s32.totalorder %s21, 0
        %s303 = scalar_select %p302, %s21, 0
        %s304 = sadd.s32 %s303, %s301
        %s305 = smul.addr %s304, 8
        %s306 = scalar_lea.vmem %s4, %s305
        %s307 = smul.u32 2, %s20
        %s308 = smul.u32 2, %s22
        %s309 = smul.u32 32, %s22
        %p310 = scmp.lt.s32.totalorder %s309, 95
        %s311 = scalar_select %p310, %s309, 95
        %p312 = scmp.lt.s32.totalorder %s21, 0
        %s313 = scalar_select %p312, %s21, 0
        %s314 = sadd.s32 %s313, %s311
        %s315 = smul.addr %s314, 4
        %s316 = scalar_lea.vmem %s1, %s315
        %s317 = smul.u32 32, %s22
        %p318 = scmp.lt.s32.totalorder %s21, 0
        %s319 = scalar_select %p318, %s21, 0
        %s320 = scalar_lea.vmem %s2, %s319
        %p321 = scmp.lt.s32.totalorder %s21, 0
        %s322 = scalar_select %p321, %s21, 0
        %s323 = scalar_lea.vmem %s3, %s322
        %s324 = smul.u32 2, %s20
        %p325 = scmp.lt.s32.totalorder %s324, 1
        %s326 = scalar_select %p325, %s324, 1
        %p327 = scmp.lt.s32.totalorder %s21, 0
        %s328 = scalar_select %p327, %s21, 0
        %s329 = sadd.s32 %s328, %s326
        %s330 = smul.addr %s329, 8
        %s331 = scalar_lea.vmem %s4, %s330
        %s332 = smul.u32 2, %s20
        %p334 = scmp.eq.s32.totalorder %s22, 0
        // Predicated region
        $region75: #{_lambda_.101} parent=69 // pred_check
          %p335 = pneg %p334
        $region76: #{_lambda_.101} parent=69 // pred_check_branch
          %337 = sbr.rel (%p335) target = $region78
        $region77: #{_lambda_.101} parent=69 // pred_region
          %338 = vst [vmem:[#allocation2] sm:$0xff] 0.0
          %339 = vst [vmem:[#allocation2 + $0x8] sm:$0xff] 0.0
        $region78: #{_lambda_.101} parent=69 // pred_fallthru
          _
        %v340 = vld [vmem:[#allocation2] sm:$0xff]
        %v341 = vld [vmem:[#allocation2 + $0x8] sm:$0xff]
        %v342 = vld [vmem:[%s267] sm:$0xff]
        %v343 = vld [vmem:[%s267 + $0x8] sm:$0xff]
        %v344 = vld [vmem:[%s316] sm:$0xf]
        %v345 = vld [vmem:[%s316 + $0x4] sm:$0xf]
        %v346 = vld [vmem:[%s316 + $0x8] sm:$0xf]
        %v347 = vld [vmem:[%s316 + $0xc] sm:$0xf]
        %v348 = vld [vmem:[%s316 + $0x10] sm:$0xf]
        %v349 = vld [vmem:[%s316 + $0x14] sm:$0xf]
        %v350 = vld [vmem:[%s316 + $0x18] sm:$0xf]
        %v351 = vld [vmem:[%s316 + $0x1c] sm:$0xf]
        %v352 = vld [vmem:[%s316 + $0x20] sm:$0xf]
        %v353 = vld [vmem:[%s316 + $0x24] sm:$0xf]
        %v354 = vld [vmem:[%s316 + $0x28] sm:$0xf]
        %v355 = vld [vmem:[%s316 + $0x2c] sm:$0xf]
        %v356 = vld [vmem:[%s316 + $0x30] sm:$0xf]
        %v357 = vld [vmem:[%s316 + $0x34] sm:$0xf]
        %v358 = vld [vmem:[%s316 + $0x38] sm:$0xf]
        %v359 = vld [vmem:[%s316 + $0x3c] sm:$0xf]
        %v360 = vld [vmem:[%s316 + $0x40] sm:$0xf]
        %v361 = vld [vmem:[%s316 + $0x44] sm:$0xf]
        %v362 = vld [vmem:[%s316 + $0x48] sm:$0xf]
        %v363 = vld [vmem:[%s316 + $0x4c] sm:$0xf]
        %v364 = vld [vmem:[%s316 + $0x50] sm:$0xf]
        %v365 = vld [vmem:[%s316 + $0x54] sm:$0xf]
        %v366 = vld [vmem:[%s316 + $0x58] sm:$0xf]
        %v367 = vld [vmem:[%s316 + $0x5c] sm:$0xf]
        %v368 = vld [vmem:[%s316 + $0x60] sm:$0xf]
        %v369 = vld [vmem:[%s316 + $0x64] sm:$0xf]
        %v370 = vld [vmem:[%s316 + $0x68] sm:$0xf]
        %v371 = vld [vmem:[%s316 + $0x6c] sm:$0xf]
        %v372 = vld [vmem:[%s316 + $0x70] sm:$0xf]
        %v373 = vld [vmem:[%s316 + $0x74] sm:$0xf]
        %v374 = vld [vmem:[%s316 + $0x78] sm:$0xf]
        %v375 = vld [vmem:[%s316 + $0x7c] sm:$0xf]
        %v378 = vunpack.c.l.b16 %v342
        %v379 = vunpack.c.h.b16 %v342
        %v380 = vunpack.c.l.b16 %v343
        %v381 = vunpack.c.h.b16 %v343
        %v382 = vpack.c.b16 %v380, %v378
        %v383 = vpack.c.b16 %v381, %v379
        %v418 = vunpack.c.l.b16 %v344
        %v419 = vunpack.c.l.b16 %v345
        %v420 = vunpack.c.l.b16 %v346
        %v421 = vunpack.c.l.b16 %v347
        %v422 = vunpack.c.l.b16 %v348
        %v423 = vunpack.c.l.b16 %v349
        %v424 = vunpack.c.l.b16 %v350
        %v425 = vunpack.c.l.b16 %v351
        %v426 = vunpack.c.l.b16 %v352
        %v427 = vunpack.c.l.b16 %v353
        %v428 = vunpack.c.l.b16 %v354
        %v429 = vunpack.c.l.b16 %v355
        %v430 = vunpack.c.l.b16 %v356
        %v431 = vunpack.c.l.b16 %v357
        %v432 = vunpack.c.l.b16 %v358
        %v433 = vunpack.c.l.b16 %v359
        %v434 = vunpack.c.l.b16 %v360
        %v435 = vunpack.c.l.b16 %v361
        %v436 = vunpack.c.l.b16 %v362
        %v437 = vunpack.c.l.b16 %v363
        %v438 = vunpack.c.l.b16 %v364
        %v439 = vunpack.c.l.b16 %v365
        %v440 = vunpack.c.l.b16 %v366
        %v441 = vunpack.c.l.b16 %v367
        %v442 = vunpack.c.l.b16 %v368
        %v443 = vunpack.c.l.b16 %v369
        %v444 = vunpack.c.l.b16 %v370
        %v445 = vunpack.c.l.b16 %v371
        %v446 = vunpack.c.l.b16 %v372
        %v447 = vunpack.c.l.b16 %v373
        %v448 = vunpack.c.l.b16 %v374
        %v449 = vunpack.c.l.b16 %v375
        %v450 = vpack.c.b16 %v419, %v418
        %v451 = vpack.c.b16 %v421, %v420
        %v452 = vpack.c.b16 %v423, %v422
        %v453 = vpack.c.b16 %v425, %v424
        %v454 = vpack.c.b16 %v427, %v426
        %v455 = vpack.c.b16 %v429, %v428
        %v456 = vpack.c.b16 %v431, %v430
        %v457 = vpack.c.b16 %v433, %v432
        %v458 = vpack.c.b16 %v435, %v434
        %v459 = vpack.c.b16 %v437, %v436
        %v460 = vpack.c.b16 %v439, %v438
        %v461 = vpack.c.b16 %v441, %v440
        %v462 = vpack.c.b16 %v443, %v442
        %v463 = vpack.c.b16 %v445, %v444
        %v464 = vpack.c.b16 %v447, %v446
        %v465 = vpack.c.b16 %v449, %v448
        %482 = vmatprep.subr.bf16.mxu0 0
        %483 = vmatpush1.bf16.msra.mxu0 %v450
        %484 = vmatprep.subr.bf16.mxu0 0
        %485 = vmatpush1.bf16.msra.mxu0 %v451
        %486 = vmatprep.subr.bf16.mxu0 0
        %487 = vmatpush1.bf16.msra.mxu0 %v452
        %488 = vmatprep.subr.bf16.mxu0 0
        %489 = vmatpush1.bf16.msra.mxu0 %v453
        %490 = vmatprep.subr.bf16.mxu0 0
        %491 = vmatpush1.bf16.msra.mxu0 %v454
        %492 = vmatprep.subr.bf16.mxu0 0
        %493 = vmatpush1.bf16.msra.mxu0 %v455
        %494 = vmatprep.subr.bf16.mxu0 0
        %495 = vmatpush1.bf16.msra.mxu0 %v456
        %496 = vmatprep.subr.bf16.mxu0 0
        %497 = vmatpush1.bf16.msra.mxu0 %v457
        %498 = vmatprep.subr.bf16.mxu0 0
        %499 = vmatpush1.bf16.msra.mxu0 %v458
        %500 = vmatprep.subr.bf16.mxu0 0
        %501 = vmatpush1.bf16.msra.mxu0 %v459
        %502 = vmatprep.subr.bf16.mxu0 0
        %503 = vmatpush1.bf16.msra.mxu0 %v460
        %504 = vmatprep.subr.bf16.mxu0 0
        %505 = vmatpush1.bf16.msra.mxu0 %v461
        %506 = vmatprep.subr.bf16.mxu0 0
        %507 = vmatpush1.bf16.msra.mxu0 %v462
        %508 = vmatprep.subr.bf16.mxu0 0
        %509 = vmatpush1.bf16.msra.mxu0 %v463
        %510 = vmatprep.subr.bf16.mxu0 0
        %511 = vmatpush1.bf16.msra.mxu0 %v464
        %512 = vmatprep.subr.bf16.mxu0 0
        %513 = vmatpush1.bf16.msra.mxu0 %v465
        %514 = vmatprep.mubr.bf16.mxu0 %v383
        %515 = vmatmul.mubr.bf16.gmra.mrb[0].mxu0 %v382
        %v516 = vpop.f32.mrb[0].mxu0
        %v517 = vadd.f32 0.0, %v516
        %v518 = vpop.f32.mrb[0].mxu0
        %v519 = vpop.f32.mrb[0].mxu0
        %v520 = vadd.f32 0.0, %v519
        %v521 = vpop.f32.mrb[0].mxu0
        %522 = vdwg.mxu0
        %v523 = vadd.f32 %v340, %v517
        %v524 = vadd.f32 %v341, %v520
        %525 = vst [vmem:[#allocation2] sm:$0xff] %v523
        %526 = vst [vmem:[#allocation2 + $0x8] sm:$0xff] %v524
        %p527 = scmp.eq.s32.totalorder %s22, 2
        // Predicated region
        $region79: #{_lambda_.101} parent=69 // pred_check
          %p528 = pneg %p527
        $region80: #{_lambda_.101} parent=69 // pred_check_branch
          %530 = sbr.rel (%p528) target = $region82
        $region81: #{_lambda_.101} parent=69 // pred_region
          %v531 = vld [vmem:[#allocation2] sm:$0xff]
          %v532 = vld [vmem:[#allocation2 + $0x8] sm:$0xff]
          %v533 = vld [vmem:[%s320] sm:$0x1]
          %v535 = vlaneseq
          %v536 = vshrl.u32 %v535, 7
          %v537 = vsub.s32 0, %v536
          %v538 = vrot.slane %v533, %v537
          %v540 = vmul.f32 %v531, %v538
          %v541 = vmul.f32 %v532, %v538
          %v542 = vld [vmem:[%s323] sm:$0x1]
          %v544 = vlaneseq
          %v545 = vshrl.u32 %v544, 7
          %v546 = vsub.s32 0, %v545
          %v547 = vrot.slane %v542, %v546
          %v549 = vadd.f32 %v540, %v547
          %v550 = vadd.f32 %v541, %v547
          %v551 = vmax.f32 %v549, 0.0
          %v552 = vmax.f32 %v550, 0.0
          %553 = vst [vmem:[%s331] sm:$0xff] %v551
          %554 = vst [vmem:[%s331 + $0x8] sm:$0xff] %v552
        $region82: #{_lambda_.101} parent=69 // pred_fallthru
          _
        %s555 = smul.u32 2, %s20
        %p556 = scmp.lt.s32.totalorder %s555, 1
        %s557 = scalar_select %p556, %s555, 1
        %p558 = scmp.lt.s32.totalorder %s21, 0
        %s559 = scalar_select %p558, %s21, 0
        %s560 = sadd.s32 %s559, %s557
        %s561 = smul.addr %s560, 8
        %s562 = scalar_lea.vmem %s4, %s561
        // Predicated region
        $region83: #{_lambda_.101} parent=69 // pred_check
          %p563 = pneg %p162
        $region84: #{_lambda_.101} parent=69 // pred_check_branch
          %565 = sbr.rel (%p563) target = $region86
        $region85: #{_lambda_.101} parent=69 // pred_region
          %s566 = smul.u32 2, %s20
        $region86: #{_lambda_.101} parent=69 // pred_fallthru
          _
        // Predicated region
        $region87: #{_lambda_.101} parent=69 // pred_check
          %p567 = pneg %p162
        $region88: #{_lambda_.101} parent=69 // pred_check_branch
          %569 = sbr.rel (%p567) target = $region90
        $region89: #{_lambda_.101} parent=69 // pred_region
          %s570 = smul.u32 2, %s20
          %p571 = scmp.lt.s32.totalorder %s570, 1
          %s572 = scalar_select %p571, %s570, 1
          %p573 = scmp.lt.s32.totalorder %s21, 0
          %s574 = scalar_select %p573, %s21, 0
          %s575 = sadd.s32 %s574, %s572
          %s576 = smul.addr %s575, 8
          %s577 = scalar_lea.vmem %s4, %s576
        $region90: #{_lambda_.101} parent=69 // pred_fallthru
          _
      $region70: #{_lambda_.101} parent=5 // pred_fallthru
        _
      %p578 = scmp.le.s32.totalorder 2, %s10
      // Predicated region
      $region91: #{_lambda_.101} parent=5 // pred_check
        %p579 = pneg %p578
      $region92: #{_lambda_.101} parent=5 // pred_check_branch
        %581 = sbr.rel (%p579) target = $region94
      $region93: #{_lambda_.101} parent=5 // pred_region
        %s582 = ssub.s32 %s10, 2
      $region94: #{_lambda_.101} parent=5 // pred_fallthru
        _
    $region6: #{_lambda_.101} parent=1 // loop_footer
      %s14 = sadd.s32 1, %s10
    $region7: #{_lambda_.101} parent=1 // loop_footer_branch
      %9 = sbr.rel target = $region3
    $region8: #{_lambda_.101} parent=1 // loop_exit
      _

// kernel: tile.16
$region0: #{tile.16}
  #allocation0 [shape = 's32[1]{0}', space=sflag, size = 0x4, scoped, tag = 'scoped memory for tile.16']
  %s0 = inlined_call_operand.vmem [shape: f32[64], index: 0, kind: input, shape index: {}]
  %s1 = inlined_call_operand.vmem [shape: f32[4,64], index: 1, kind: output, shape index: {}]
  // Predicated region
  $region2: #{tile.16} parent=0 // pred_check
    _
  $region3: #{tile.16} parent=0 // pred_check_branch
    %3 = sbr.rel (0) target = $region5
  $region4: #{tile.16} parent=0 // pred_region
    _
  $region5: #{tile.16} parent=0 // pred_fallthru
    _
  %v4 = vld [vmem:[%s0] ss:$0 sm:$0xff]
  %5 = vst [vmem:[%s1] sm:$0xf] %v4

// kernel: tile.17
$region0: #{tile.17}
  %s0 = inlined_call_operand.vmem [shape: f32[4,64], index: 0, kind: input, shape index: {}]
  %s1 = inlined_call_operand.vmem [shape: f32[1,256], index: 1, kind: output, shape index: {}]
  $region1: #{tile.17} parent=0
    #allocation0 [shape = 'u8[8192]{0}', space=vmem, size = 0x2000, scoped, tag = 'scoped mem for output reshape']
    #allocation1 [shape = 'u8[4096]{0}', space=vmem, size = 0x1000, scoped, tag = 'scoped mem for input reshape']
    %s3 = sshllo.u32 0, 4
    %v4 = vld [vmem:[%s0] sm:%s3]
    %5 = vst [vmem:[#allocation1] sm:%s3] %v4
    %s6 = smov 3
    %v7 = vld [vmem:[#allocation1] ss:$2 sm:%s6]
    %vm8 = vcmask 523264
    %9 = vst.msk [vmem:[#allocation0] ss:$8 sm:$0x3] %vm8, %v7
    %s10 = scalar_lea.vmem [#allocation1], 1
    %s11 = smov 3
    %v12 = vld [vmem:[%s10] ss:$2 sm:%s11]
    %13 = vrot.lane.b32.xlu0 %v12, 64
    %v14 = vpop.permute.xlu0 %13
    %vm15 = vcmask 1048064
    %16 = vst.msk [vmem:[#allocation0] ss:$8 sm:$0x3] %vm15, %v14
    %s18 = sshllo.u32 0, 1
    %v20 = vld [vmem:[#allocation0] sm:%s18]
    %s21 = sshllo.u32 0, 1
    %22 = vst [vmem:[%s1] sm:%s21] %v20
    %s23 = scalar_lea.vmem [#allocation0], 8
    %v24 = vld [vmem:[%s23] sm:%s18]
    %s25 = sshllo.u32 0, 1
    %s26 = scalar_lea.vmem %s1, 1
    %27 = vst [vmem:[%s26] sm:%s25] %v24

// kernel: _lambda_.103
$region0: #{_lambda_.103}
  #allocation0 [shape = 'u32[]', space=smem, size = 0x4, offset = 0x4, fixed_abs, tag = 'smem constant byte address 0x4 - core index']
  #allocation1 [shape = 'u32[144,128]{1,0:T(1,128)}', space=vmem, size = 0x12000, scoped, tag = 'internal scratch']
  #allocation2 [shape = 'f32[16,128]{1,0:T(8,128)}', space=vmem, size = 0x2000, scoped, tag = 'scratch operand']
  %s0 = inlined_call_operand.vmem [shape: bf16[16,384], index: 0, kind: input, shape index: {}]
  %s1 = inlined_call_operand.vmem [shape: bf16[384,128], index: 1, kind: input, shape index: {}]
  %s2 = inlined_call_operand.vmem [shape: f32[1,128], index: 2, kind: input, shape index: {}]
  %s3 = inlined_call_operand.vmem [shape: f32[1,128], index: 3, kind: input, shape index: {}]
  %s4 = inlined_call_operand.vmem [shape: f32[16,128], index: 4, kind: output, shape index: {}]
  %s5 = sld [smem:[#allocation0]]
  $region34: #{_lambda_.103} parent=0
    _
  %s7 = ssub.s32 1, %s5
  %s8 = scalar_select 0, %s7, %s5
  // Predicated region
  $region2: #{_lambda_.103} parent=0 // pred_check
    _
  $region3: #{_lambda_.103} parent=0 // pred_check_branch
    %10 = sbr.rel (0) target = $region5
  $region4: #{_lambda_.103} parent=0 // pred_region
    _
  $region5: #{_lambda_.103} parent=0 // pred_fallthru
    _
  // Predicated region
  $region6: #{_lambda_.103} parent=0 // pred_check
    _
  $region7: #{_lambda_.103} parent=0 // pred_check_branch
    %12 = sbr.rel (0) target = $region9
  $region8: #{_lambda_.103} parent=0 // pred_region
    _
  $region9: #{_lambda_.103} parent=0 // pred_fallthru
    _
  // Predicated region
  $region10: #{_lambda_.103} parent=0 // pred_check
    _
  $region11: #{_lambda_.103} parent=0 // pred_check_branch
    %14 = sbr.rel (0) target = $region13
  $region12: #{_lambda_.103} parent=0 // pred_region
    _
  $region13: #{_lambda_.103} parent=0 // pred_fallthru
    _
  // Predicated region
  $region14: #{_lambda_.103} parent=0 // pred_check
    _
  $region15: #{_lambda_.103} parent=0 // pred_check_branch
    %16 = sbr.rel (0) target = $region17
  $region16: #{_lambda_.103} parent=0 // pred_region
    _
  $region17: #{_lambda_.103} parent=0 // pred_fallthru
    _
  %p18 = scmp.eq.s32.totalorder 0, 0
  // Predicated region
  $region18: #{_lambda_.103} parent=0 // pred_check
    %p19 = pneg %p18
  $region19: #{_lambda_.103} parent=0 // pred_check_branch
    %21 = sbr.rel (%p19) target = $region21
  $region20: #{_lambda_.103} parent=0 // pred_region
    %22 = vst [vmem:[#allocation2] sm:$0xff] 0.0
    %23 = vst [vmem:[#allocation2 + $0x8] sm:$0xff] 0.0
  $region21: #{_lambda_.103} parent=0 // pred_fallthru
    _
  %v24 = vld [vmem:[#allocation2] sm:$0xff]
  %v25 = vld [vmem:[#allocation2 + $0x8] sm:$0xff]
  %v26 = vld [vmem:[%s0] sm:$0xff]
  %v27 = vld [vmem:[%s0 + $0x8] sm:$0xf]
  %v28 = vld [vmem:[%s0 + $0xc] sm:$0xff]
  %v29 = vld [vmem:[%s0 + $0x14] sm:$0xf]
  %v30 = vld [vmem:[%s1] sm:$0xf]
  %v31 = vld [vmem:[%s1 + $0x4] sm:$0xf]
  %v32 = vld [vmem:[%s1 + $0x8] sm:$0xf]
  %v33 = vld [vmem:[%s1 + $0xc] sm:$0xf]
  %v34 = vld [vmem:[%s1 + $0x10] sm:$0xf]
  %v35 = vld [vmem:[%s1 + $0x14] sm:$0xf]
  %v36 = vld [vmem:[%s1 + $0x18] sm:$0xf]
  %v37 = vld [vmem:[%s1 + $0x1c] sm:$0xf]
  %v38 = vld [vmem:[%s1 + $0x20] sm:$0xf]
  %v39 = vld [vmem:[%s1 + $0x24] sm:$0xf]
  %v40 = vld [vmem:[%s1 + $0x28] sm:$0xf]
  %v41 = vld [vmem:[%s1 + $0x2c] sm:$0xf]
  %v42 = vld [vmem:[%s1 + $0x30] sm:$0xf]
  %v43 = vld [vmem:[%s1 + $0x34] sm:$0xf]
  %v44 = vld [vmem:[%s1 + $0x38] sm:$0xf]
  %v45 = vld [vmem:[%s1 + $0x3c] sm:$0xf]
  %v46 = vld [vmem:[%s1 + $0x40] sm:$0xf]
  %v47 = vld [vmem:[%s1 + $0x44] sm:$0xf]
  %v48 = vld [vmem:[%s1 + $0x48] sm:$0xf]
  %v49 = vld [vmem:[%s1 + $0x4c] sm:$0xf]
  %v50 = vld [vmem:[%s1 + $0x50] sm:$0xf]
  %v51 = vld [vmem:[%s1 + $0x54] sm:$0xf]
  %v52 = vld [vmem:[%s1 + $0x58] sm:$0xf]
  %v53 = vld [vmem:[%s1 + $0x5c] sm:$0xf]
  %v54 = vld [vmem:[%s1 + $0x60] sm:$0xf]
  %v55 = vld [vmem:[%s1 + $0x64] sm:$0xf]
  %v56 = vld [vmem:[%s1 + $0x68] sm:$0xf]
  %v57 = vld [vmem:[%s1 + $0x6c] sm:$0xf]
  %v58 = vld [vmem:[%s1 + $0x70] sm:$0xf]
  %v59 = vld [vmem:[%s1 + $0x74] sm:$0xf]
  %v60 = vld [vmem:[%s1 + $0x78] sm:$0xf]
  %v61 = vld [vmem:[%s1 + $0x7c] sm:$0xf]
  %v62 = vld [vmem:[%s1 + $0x80] sm:$0xf]
  %v63 = vld [vmem:[%s1 + $0x84] sm:$0xf]
  %v64 = vld [vmem:[%s1 + $0x88] sm:$0xf]
  %v65 = vld [vmem:[%s1 + $0x8c] sm:$0xf]
  %v66 = vld [vmem:[%s1 + $0x90] sm:$0xf]
  %v67 = vld [vmem:[%s1 + $0x94] sm:$0xf]
  %v68 = vld [vmem:[%s1 + $0x98] sm:$0xf]
  %v69 = vld [vmem:[%s1 + $0x9c] sm:$0xf]
  %v70 = vld [vmem:[%s1 + $0xa0] sm:$0xf]
  %v71 = vld [vmem:[%s1 + $0xa4] sm:$0xf]
  %v72 = vld [vmem:[%s1 + $0xa8] sm:$0xf]
  %v73 = vld [vmem:[%s1 + $0xac] sm:$0xf]
  %v74 = vld [vmem:[%s1 + $0xb0] sm:$0xf]
  %v75 = vld [vmem:[%s1 + $0xb4] sm:$0xf]
  %v76 = vld [vmem:[%s1 + $0xb8] sm:$0xf]
  %v77 = vld [vmem:[%s1 + $0xbc] sm:$0xf]
  %v82 = vunpack.c.l.b16 %v26
  %v83 = vunpack.c.h.b16 %v26
  %v84 = vunpack.c.l.b16 %v27
  %v85 = vunpack.c.l.b16 %v28
  %v86 = vunpack.c.h.b16 %v28
  %v87 = vunpack.c.l.b16 %v29
  %v88 = vpack.c.b16 %v85, %v82
  %v89 = vpack.c.b16 %v86, %v83
  %v90 = vpack.c.b16 %v87, %v84
  %v142 = vunpack.c.l.b16 %v30
  %v143 = vunpack.c.l.b16 %v31
  %v144 = vunpack.c.l.b16 %v32
  %v145 = vunpack.c.l.b16 %v33
  %v146 = vunpack.c.l.b16 %v34
  %v147 = vunpack.c.l.b16 %v35
  %v148 = vunpack.c.l.b16 %v36
  %v149 = vunpack.c.l.b16 %v37
  %v150 = vunpack.c.l.b16 %v38
  %v151 = vunpack.c.l.b16 %v39
  %v152 = vunpack.c.l.b16 %v40
  %v153 = vunpack.c.l.b16 %v41
  %v154 = vunpack.c.l.b16 %v42
  %v155 = vunpack.c.l.b16 %v43
  %v156 = vunpack.c.l.b16 %v44
  %v157 = vunpack.c.l.b16 %v45
  %v158 = vunpack.c.l.b16 %v46
  %v159 = vunpack.c.l.b16 %v47
  %v160 = vunpack.c.l.b16 %v48
  %v161 = vunpack.c.l.b16 %v49
  %v162 = vunpack.c.l.b16 %v50
  %v163 = vunpack.c.l.b16 %v51
  %v164 = vunpack.c.l.b16 %v52
  %v165 = vunpack.c.l.b16 %v53
  %v166 = vunpack.c.l.b16 %v54
  %v167 = vunpack.c.l.b16 %v55
  %v168 = vunpack.c.l.b16 %v56
  %v169 = vunpack.c.l.b16 %v57
  %v170 = vunpack.c.l.b16 %v58
  %v171 = vunpack.c.l.b16 %v59
  %v172 = vunpack.c.l.b16 %v60
  %v173 = vunpack.c.l.b16 %v61
  %v174 = vunpack.c.l.b16 %v62
  %v175 = vunpack.c.l.b16 %v63
  %v176 = vunpack.c.l.b16 %v64
  %v177 = vunpack.c.l.b16 %v65
  %v178 = vunpack.c.l.b16 %v66
  %v179 = vunpack.c.l.b16 %v67
  %v180 = vunpack.c.l.b16 %v68
  %v181 = vunpack.c.l.b16 %v69
  %v182 = vunpack.c.l.b16 %v70
  %v183 = vunpack.c.l.b16 %v71
  %v184 = vunpack.c.l.b16 %v72
  %v185 = vunpack.c.l.b16 %v73
  %v186 = vunpack.c.l.b16 %v74
  %v187 = vunpack.c.l.b16 %v75
  %v188 = vunpack.c.l.b16 %v76
  %v189 = vunpack.c.l.b16 %v77
  %v190 = vpack.c.b16 %v143, %v142
  %v191 = vpack.c.b16 %v145, %v144
  %v192 = vpack.c.b16 %v147, %v146
  %v193 = vpack.c.b16 %v149, %v148
  %v194 = vpack.c.b16 %v151, %v150
  %v195 = vpack.c.b16 %v153, %v152
  %v196 = vpack.c.b16 %v155, %v154
  %v197 = vpack.c.b16 %v157, %v156
  %v198 = vpack.c.b16 %v159, %v158
  %v199 = vpack.c.b16 %v161, %v160
  %v200 = vpack.c.b16 %v163, %v162
  %v201 = vpack.c.b16 %v165, %v164
  %v202 = vpack.c.b16 %v167, %v166
  %v203 = vpack.c.b16 %v169, %v168
  %v204 = vpack.c.b16 %v171, %v170
  %v205 = vpack.c.b16 %v173, %v172
  %v206 = vpack.c.b16 %v175, %v174
  %v207 = vpack.c.b16 %v177, %v176
  %v208 = vpack.c.b16 %v179, %v178
  %v209 = vpack.c.b16 %v181, %v180
  %v210 = vpack.c.b16 %v183, %v182
  %v211 = vpack.c.b16 %v185, %v184
  %v212 = vpack.c.b16 %v187, %v186
  %v213 = vpack.c.b16 %v189, %v188
  %238 = vmatprep.subr.bf16.mxu0 0
  %239 = vmatpush1.bf16.msra.mxu0 %v190
  %240 = vmatprep.subr.bf16.mxu0 0
  %241 = vmatpush1.bf16.msra.mxu0 %v191
  %242 = vmatprep.subr.bf16.mxu0 0
  %243 = vmatpush1.bf16.msra.mxu0 %v192
  %244 = vmatprep.subr.bf16.mxu0 0
  %245 = vmatpush1.bf16.msra.mxu0 %v193
  %246 = vmatprep.subr.bf16.mxu0 0
  %247 = vmatpush1.bf16.msra.mxu0 %v194
  %248 = vmatprep.subr.bf16.mxu0 0
  %249 = vmatpush1.bf16.msra.mxu0 %v195
  %250 = vmatprep.subr.bf16.mxu0 0
  %251 = vmatpush1.bf16.msra.mxu0 %v196
  %252 = vmatprep.subr.bf16.mxu0 0
  %253 = vmatpush1.bf16.msra.mxu0 %v197
  %254 = vmatprep.subr.bf16.mxu0 0
  %255 = vmatpush1.bf16.msra.mxu0 %v198
  %256 = vmatprep.subr.bf16.mxu0 0
  %257 = vmatpush1.bf16.msra.mxu0 %v199
  %258 = vmatprep.subr.bf16.mxu0 0
  %259 = vmatpush1.bf16.msra.mxu0 %v200
  %260 = vmatprep.subr.bf16.mxu0 0
  %261 = vmatpush1.bf16.msra.mxu0 %v201
  %262 = vmatprep.subr.bf16.mxu0 0
  %263 = vmatpush1.bf16.msra.mxu0 %v202
  %264 = vmatprep.subr.bf16.mxu0 0
  %265 = vmatpush1.bf16.msra.mxu0 %v203
  %266 = vmatprep.subr.bf16.mxu0 0
  %267 = vmatpush1.bf16.msra.mxu0 %v204
  %268 = vmatprep.subr.bf16.mxu0 0
  %269 = vmatpush1.bf16.msra.mxu0 %v205
  %270 = vmatprep.mubr.bf16.mxu0 %v89
  %271 = vmatmul.mubr.bf16.gmra.mrb[0].mxu0 %v88
  %v272 = vpop.f32.mrb[0].mxu0
  %v273 = vadd.f32 0.0, %v272
  %v274 = vpop.f32.mrb[0].mxu0
  %v275 = vpop.f32.mrb[0].mxu0
  %v276 = vadd.f32 0.0, %v275
  %v277 = vpop.f32.mrb[0].mxu0
  %278 = vdwg.mxu0
  %279 = vmatprep.subr.bf16.mxu0 0
  %280 = vmatpush1.bf16.msra.mxu0 %v206
  %281 = vmatprep.subr.bf16.mxu0 0
  %282 = vmatpush1.bf16.msra.mxu0 %v207
  %283 = vmatprep.subr.bf16.mxu0 0
  %284 = vmatpush1.bf16.msra.mxu0 %v208
  %285 = vmatprep.subr.bf16.mxu0 0
  %286 = vmatpush1.bf16.msra.mxu0 %v209
  %287 = vmatprep.subr.bf16.mxu0 0
  %288 = vmatpush1.bf16.msra.mxu0 %v210
  %289 = vmatprep.subr.bf16.mxu0 0
  %290 = vmatpush1.bf16.msra.mxu0 %v211
  %291 = vmatprep.subr.bf16.mxu0 0
  %292 = vmatpush1.bf16.msra.mxu0 %v212
  %293 = vmatprep.subr.bf16.mxu0 0
  %294 = vmatpush1.bf16.msra.mxu0 %v213
  %295 = vmatprep.subr.bf16.mxu0 0
  %296 = vmatpush1.bf16.msra.mxu0 0
  %297 = vmatprep.subr.bf16.mxu0 0
  %298 = vmatpush1.bf16.msra.mxu0 0
  %299 = vmatprep.subr.bf16.mxu0 0
  %300 = vmatpush1.bf16.msra.mxu0 0
  %301 = vmatprep.subr.bf16.mxu0 0
  %302 = vmatpush1.bf16.msra.mxu0 0
  %303 = vmatprep.subr.bf16.mxu0 0
  %304 = vmatpush1.bf16.msra.mxu0 0
  %305 = vmatprep.subr.bf16.mxu0 0
  %306 = vmatpush1.bf16.msra.mxu0 0
  %307 = vmatprep.subr.bf16.mxu0 0
  %308 = vmatpush1.bf16.msra.mxu0 0
  %309 = vmatprep.subr.bf16.mxu0 0
  %310 = vmatpush1.bf16.msra.mxu0 0
  %311 = vmatprep.mubr.bf16.mxu0 0
  %312 = vmatmul.mubr.bf16.gmra.mrb[0].mxu0 %v90
  %v313 = vpop.f32.mrb[0].mxu0
  %v314 = vadd.f32 %v273, %v313
  %v315 = vpop.f32.mrb[0].mxu0
  %v316 = vpop.f32.mrb[0].mxu0
  %v317 = vadd.f32 %v276, %v316
  %v318 = vpop.f32.mrb[0].mxu0
  %319 = vdwg.mxu0
  %v320 = vadd.f32 %v24, %v314
  %v321 = vadd.f32 %v25, %v317
  %322 = vst [vmem:[#allocation2] sm:$0xff] %v320
  %323 = vst [vmem:[#allocation2 + $0x8] sm:$0xff] %v321
  // Predicated region
  $region22: #{_lambda_.103} parent=0 // pred_check
    %p324 = pneg %p18
  $region23: #{_lambda_.103} parent=0 // pred_check_branch
    %326 = sbr.rel (%p324) target = $region25
  $region24: #{_lambda_.103} parent=0 // pred_region
    %v327 = vld [vmem:[#allocation2] sm:$0xff]
    %v328 = vld [vmem:[#allocation2 + $0x8] sm:$0xff]
    %v329 = vld [vmem:[%s2] sm:$0x1]
    %v331 = vlaneseq
    %v332 = vshrl.u32 %v331, 7
    %v333 = vsub.s32 0, %v332
    %v334 = vrot.slane %v329, %v333
    %v336 = vmul.f32 %v327, %v334
    %v337 = vmul.f32 %v328, %v334
    %v338 = vld [vmem:[%s3] sm:$0x1]
    %v340 = vlaneseq
    %v341 = vshrl.u32 %v340, 7
    %v342 = vsub.s32 0, %v341
    %v343 = vrot.slane %v338, %v342
    %v345 = vadd.f32 %v336, %v343
    %v346 = vadd.f32 %v337, %v343
    %v347 = vmax.f32 %v345, 0.0
    %v348 = vmax.f32 %v346, 0.0
    %349 = vst [vmem:[%s4] sm:$0xff] %v347
    %350 = vst [vmem:[%s4 + $0x8] sm:$0xff] %v348
  $region25: #{_lambda_.103} parent=0 // pred_fallthru
    _
  // Predicated region
  $region26: #{_lambda_.103} parent=0 // pred_check
    _
  $region27: #{_lambda_.103} parent=0 // pred_check_branch
    %352 = sbr.rel (0) target = $region29
  $region28: #{_lambda_.103} parent=0 // pred_region
    _
  $region29: #{_lambda_.103} parent=0 // pred_fallthru
    _
  // Predicated region
  $region30: #{_lambda_.103} parent=0 // pred_check
    _
  $region31: #{_lambda_.103} parent=0 // pred_check_branch
    %354 = sbr.rel (0) target = $region33
  $region32: #{_lambda_.103} parent=0 // pred_region
    _
  $region33: #{_lambda_.103} parent=0 // pred_fallthru
    _

// kernel: tile.13
$region0: #{tile.13}
  #allocation0 [shape = 's32[1]{0}', space=sflag, size = 0x4, scoped, tag = 'scoped memory for tile.13']
  %s0 = inlined_call_operand.<no memory space> [shape: f32[], index: 0, kind: input, shape index: {}]
  %s1 = inlined_call_operand.vmem [shape: f32[1,256], index: 1, kind: output, shape index: {}]
  %v2 = vstv %s0
  %3 = vst [vmem:[%s1] sm:$0x1] %v2
  %s4 = scalar_lea.vmem %s1, 1
  %5 = vst [vmem:[%s4] sm:$0x1] %v2

// kernel: _lambda_.106
$region0: #{_lambda_.106}
  #allocation0 [shape = 'u32[]', space=smem, size = 0x4, offset = 0x4, fixed_abs, tag = 'smem constant byte address 0x4 - core index']
  #allocation1 [shape = 'u32[144,128]{1,0:T(1,128)}', space=vmem, size = 0x12000, scoped, tag = 'internal scratch']
  #allocation2 [shape = 'f32[16,128]{1,0:T(8,128)}', space=vmem, size = 0x2000, scoped, tag = 'scratch operand']
  %s0 = inlined_call_operand.vmem [shape: bf16[16,384], index: 0, kind: input, shape index: {}]
  %s1 = inlined_call_operand.vmem [shape: bf16[384,128], index: 1, kind: input, shape index: {}]
  %s2 = inlined_call_operand.vmem [shape: f32[1,128], index: 2, kind: input, shape index: {}]
  %s3 = inlined_call_operand.vmem [shape: f32[1,128], index: 3, kind: input, shape index: {}]
  %s4 = inlined_call_operand.vmem [shape: f32[16,128], index: 4, kind: input, shape index: {}]
  %s5 = inlined_call_operand.vmem [shape: f32[16,128], index: 5, kind: output, shape index: {}]
  %s6 = sld [smem:[#allocation0]]
  $region38: #{_lambda_.106} parent=0
    _
  %s8 = ssub.s32 1, %s6
  %s9 = scalar_select 0, %s8, %s6
  // Predicated region
  $region2: #{_lambda_.106} parent=0 // pred_check
    _
  $region3: #{_lambda_.106} parent=0 // pred_check_branch
    %11 = sbr.rel (0) target = $region5
  $region4: #{_lambda_.106} parent=0 // pred_region
    _
  $region5: #{_lambda_.106} parent=0 // pred_fallthru
    _
  // Predicated region
  $region6: #{_lambda_.106} parent=0 // pred_check
    _
  $region7: #{_lambda_.106} parent=0 // pred_check_branch
    %13 = sbr.rel (0) target = $region9
  $region8: #{_lambda_.106} parent=0 // pred_region
    _
  $region9: #{_lambda_.106} parent=0 // pred_fallthru
    _
  // Predicated region
  $region10: #{_lambda_.106} parent=0 // pred_check
    _
  $region11: #{_lambda_.106} parent=0 // pred_check_branch
    %15 = sbr.rel (0) target = $region13
  $region12: #{_lambda_.106} parent=0 // pred_region
    _
  $region13: #{_lambda_.106} parent=0 // pred_fallthru
    _
  // Predicated region
  $region14: #{_lambda_.106} parent=0 // pred_check
    _
  $region15: #{_lambda_.106} parent=0 // pred_check_branch
    %17 = sbr.rel (0) target = $region17
  $region16: #{_lambda_.106} parent=0 // pred_region
    _
  $region17: #{_lambda_.106} parent=0 // pred_fallthru
    _
  // Predicated region
  $region18: #{_lambda_.106} parent=0 // pred_check
    _
  $region19: #{_lambda_.106} parent=0 // pred_check_branch
    %19 = sbr.rel (0) target = $region21
  $region20: #{_lambda_.106} parent=0 // pred_region
    _
  $region21: #{_lambda_.106} parent=0 // pred_fallthru
    _
  %p21 = scmp.eq.s32.totalorder 0, 0
  // Predicated region
  $region22: #{_lambda_.106} parent=0 // pred_check
    %p22 = pneg %p21
  $region23: #{_lambda_.106} parent=0 // pred_check_branch
    %24 = sbr.rel (%p22) target = $region25
  $region24: #{_lambda_.106} parent=0 // pred_region
    %25 = vst [vmem:[#allocation2] sm:$0xff] 0.0
    %26 = vst [vmem:[#allocation2 + $0x8] sm:$0xff] 0.0
  $region25: #{_lambda_.106} parent=0 // pred_fallthru
    _
  %v27 = vld [vmem:[#allocation2] sm:$0xff]
  %v28 = vld [vmem:[#allocation2 + $0x8] sm:$0xff]
  %v29 = vld [vmem:[%s0] sm:$0xff]
  %v30 = vld [vmem:[%s0 + $0x8] sm:$0xf]
  %v31 = vld [vmem:[%s0 + $0xc] sm:$0xff]
  %v32 = vld [vmem:[%s0 + $0x14] sm:$0xf]
  %v33 = vld [vmem:[%s1] sm:$0xf]
  %v34 = vld [vmem:[%s1 + $0x4] sm:$0xf]
  %v35 = vld [vmem:[%s1 + $0x8] sm:$0xf]
  %v36 = vld [vmem:[%s1 + $0xc] sm:$0xf]
  %v37 = vld [vmem:[%s1 + $0x10] sm:$0xf]
  %v38 = vld [vmem:[%s1 + $0x14] sm:$0xf]
  %v39 = vld [vmem:[%s1 + $0x18] sm:$0xf]
  %v40 = vld [vmem:[%s1 + $0x1c] sm:$0xf]
  %v41 = vld [vmem:[%s1 + $0x20] sm:$0xf]
  %v42 = vld [vmem:[%s1 + $0x24] sm:$0xf]
  %v43 = vld [vmem:[%s1 + $0x28] sm:$0xf]
  %v44 = vld [vmem:[%s1 + $0x2c] sm:$0xf]
  %v45 = vld [vmem:[%s1 + $0x30] sm:$0xf]
  %v46 = vld [vmem:[%s1 + $0x34] sm:$0xf]
  %v47 = vld [vmem:[%s1 + $0x38] sm:$0xf]
  %v48 = vld [vmem:[%s1 + $0x3c] sm:$0xf]
  %v49 = vld [vmem:[%s1 + $0x40] sm:$0xf]
  %v50 = vld [vmem:[%s1 + $0x44] sm:$0xf]
  %v51 = vld [vmem:[%s1 + $0x48] sm:$0xf]
  %v52 = vld [vmem:[%s1 + $0x4c] sm:$0xf]
  %v53 = vld [vmem:[%s1 + $0x50] sm:$0xf]
  %v54 = vld [vmem:[%s1 + $0x54] sm:$0xf]
  %v55 = vld [vmem:[%s1 + $0x58] sm:$0xf]
  %v56 = vld [vmem:[%s1 + $0x5c] sm:$0xf]
  %v57 = vld [vmem:[%s1 + $0x60] sm:$0xf]
  %v58 = vld [vmem:[%s1 + $0x64] sm:$0xf]
  %v59 = vld [vmem:[%s1 + $0x68] sm:$0xf]
  %v60 = vld [vmem:[%s1 + $0x6c] sm:$0xf]
  %v61 = vld [vmem:[%s1 + $0x70] sm:$0xf]
  %v62 = vld [vmem:[%s1 + $0x74] sm:$0xf]
  %v63 = vld [vmem:[%s1 + $0x78] sm:$0xf]
  %v64 = vld [vmem:[%s1 + $0x7c] sm:$0xf]
  %v65 = vld [vmem:[%s1 + $0x80] sm:$0xf]
  %v66 = vld [vmem:[%s1 + $0x84] sm:$0xf]
  %v67 = vld [vmem:[%s1 + $0x88] sm:$0xf]
  %v68 = vld [vmem:[%s1 + $0x8c] sm:$0xf]
  %v69 = vld [vmem:[%s1 + $0x90] sm:$0xf]
  %v70 = vld [vmem:[%s1 + $0x94] sm:$0xf]
  %v71 = vld [vmem:[%s1 + $0x98] sm:$0xf]
  %v72 = vld [vmem:[%s1 + $0x9c] sm:$0xf]
  %v73 = vld [vmem:[%s1 + $0xa0] sm:$0xf]
  %v74 = vld [vmem:[%s1 + $0xa4] sm:$0xf]
  %v75 = vld [vmem:[%s1 + $0xa8] sm:$0xf]
  %v76 = vld [vmem:[%s1 + $0xac] sm:$0xf]
  %v77 = vld [vmem:[%s1 + $0xb0] sm:$0xf]
  %v78 = vld [vmem:[%s1 + $0xb4] sm:$0xf]
  %v79 = vld [vmem:[%s1 + $0xb8] sm:$0xf]
  %v80 = vld [vmem:[%s1 + $0xbc] sm:$0xf]
  %v85 = vunpack.c.l.b16 %v29
  %v86 = vunpack.c.h.b16 %v29
  %v87 = vunpack.c.l.b16 %v30
  %v88 = vunpack.c.l.b16 %v31
  %v89 = vunpack.c.h.b16 %v31
  %v90 = vunpack.c.l.b16 %v32
  %v91 = vpack.c.b16 %v88, %v85
  %v92 = vpack.c.b16 %v89, %v86
  %v93 = vpack.c.b16 %v90, %v87
  %v145 = vunpack.c.l.b16 %v33
  %v146 = vunpack.c.l.b16 %v34
  %v147 = vunpack.c.l.b16 %v35
  %v148 = vunpack.c.l.b16 %v36
  %v149 = vunpack.c.l.b16 %v37
  %v150 = vunpack.c.l.b16 %v38
  %v151 = vunpack.c.l.b16 %v39
  %v152 = vunpack.c.l.b16 %v40
  %v153 = vunpack.c.l.b16 %v41
  %v154 = vunpack.c.l.b16 %v42
  %v155 = vunpack.c.l.b16 %v43
  %v156 = vunpack.c.l.b16 %v44
  %v157 = vunpack.c.l.b16 %v45
  %v158 = vunpack.c.l.b16 %v46
  %v159 = vunpack.c.l.b16 %v47
  %v160 = vunpack.c.l.b16 %v48
  %v161 = vunpack.c.l.b16 %v49
  %v162 = vunpack.c.l.b16 %v50
  %v163 = vunpack.c.l.b16 %v51
  %v164 = vunpack.c.l.b16 %v52
  %v165 = vunpack.c.l.b16 %v53
  %v166 = vunpack.c.l.b16 %v54
  %v167 = vunpack.c.l.b16 %v55
  %v168 = vunpack.c.l.b16 %v56
  %v169 = vunpack.c.l.b16 %v57
  %v170 = vunpack.c.l.b16 %v58
  %v171 = vunpack.c.l.b16 %v59
  %v172 = vunpack.c.l.b16 %v60
  %v173 = vunpack.c.l.b16 %v61
  %v174 = vunpack.c.l.b16 %v62
  %v175 = vunpack.c.l.b16 %v63
  %v176 = vunpack.c.l.b16 %v64
  %v177 = vunpack.c.l.b16 %v65
  %v178 = vunpack.c.l.b16 %v66
  %v179 = vunpack.c.l.b16 %v67
  %v180 = vunpack.c.l.b16 %v68
  %v181 = vunpack.c.l.b16 %v69
  %v182 = vunpack.c.l.b16 %v70
  %v183 = vunpack.c.l.b16 %v71
  %v184 = vunpack.c.l.b16 %v72
  %v185 = vunpack.c.l.b16 %v73
  %v186 = vunpack.c.l.b16 %v74
  %v187 = vunpack.c.l.b16 %v75
  %v188 = vunpack.c.l.b16 %v76
  %v189 = vunpack.c.l.b16 %v77
  %v190 = vunpack.c.l.b16 %v78
  %v191 = vunpack.c.l.b16 %v79
  %v192 = vunpack.c.l.b16 %v80
  %v193 = vpack.c.b16 %v146, %v145
  %v194 = vpack.c.b16 %v148, %v147
  %v195 = vpack.c.b16 %v150, %v149
  %v196 = vpack.c.b16 %v152, %v151
  %v197 = vpack.c.b16 %v154, %v153
  %v198 = vpack.c.b16 %v156, %v155
  %v199 = vpack.c.b16 %v158, %v157
  %v200 = vpack.c.b16 %v160, %v159
  %v201 = vpack.c.b16 %v162, %v161
  %v202 = vpack.c.b16 %v164, %v163
  %v203 = vpack.c.b16 %v166, %v165
  %v204 = vpack.c.b16 %v168, %v167
  %v205 = vpack.c.b16 %v170, %v169
  %v206 = vpack.c.b16 %v172, %v171
  %v207 = vpack.c.b16 %v174, %v173
  %v208 = vpack.c.b16 %v176, %v175
  %v209 = vpack.c.b16 %v178, %v177
  %v210 = vpack.c.b16 %v180, %v179
  %v211 = vpack.c.b16 %v182, %v181
  %v212 = vpack.c.b16 %v184, %v183
  %v213 = vpack.c.b16 %v186, %v185
  %v214 = vpack.c.b16 %v188, %v187
  %v215 = vpack.c.b16 %v190, %v189
  %v216 = vpack.c.b16 %v192, %v191
  %241 = vmatprep.subr.bf16.mxu0 0
  %242 = vmatpush1.bf16.msra.mxu0 %v193
  %243 = vmatprep.subr.bf16.mxu0 0
  %244 = vmatpush1.bf16.msra.mxu0 %v194
  %245 = vmatprep.subr.bf16.mxu0 0
  %246 = vmatpush1.bf16.msra.mxu0 %v195
  %247 = vmatprep.subr.bf16.mxu0 0
  %248 = vmatpush1.bf16.msra.mxu0 %v196
  %249 = vmatprep.subr.bf16.mxu0 0
  %250 = vmatpush1.bf16.msra.mxu0 %v197
  %251 = vmatprep.subr.bf16.mxu0 0
  %252 = vmatpush1.bf16.msra.mxu0 %v198
  %253 = vmatprep.subr.bf16.mxu0 0
  %254 = vmatpush1.bf16.msra.mxu0 %v199
  %255 = vmatprep.subr.bf16.mxu0 0
  %256 = vmatpush1.bf16.msra.mxu0 %v200
  %257 = vmatprep.subr.bf16.mxu0 0
  %258 = vmatpush1.bf16.msra.mxu0 %v201
  %259 = vmatprep.subr.bf16.mxu0 0
  %260 = vmatpush1.bf16.msra.mxu0 %v202
  %261 = vmatprep.subr.bf16.mxu0 0
  %262 = vmatpush1.bf16.msra.mxu0 %v203
  %263 = vmatprep.subr.bf16.mxu0 0
  %264 = vmatpush1.bf16.msra.mxu0 %v204
  %265 = vmatprep.subr.bf16.mxu0 0
  %266 = vmatpush1.bf16.msra.mxu0 %v205
  %267 = vmatprep.subr.bf16.mxu0 0
  %268 = vmatpush1.bf16.msra.mxu0 %v206
  %269 = vmatprep.subr.bf16.mxu0 0
  %270 = vmatpush1.bf16.msra.mxu0 %v207
  %271 = vmatprep.subr.bf16.mxu0 0
  %272 = vmatpush1.bf16.msra.mxu0 %v208
  %273 = vmatprep.mubr.bf16.mxu0 %v92
  %274 = vmatmul.mubr.bf16.gmra.mrb[0].mxu0 %v91
  %v275 = vpop.f32.mrb[0].mxu0
  %v276 = vadd.f32 0.0, %v275
  %v277 = vpop.f32.mrb[0].mxu0
  %v278 = vpop.f32.mrb[0].mxu0
  %v279 = vadd.f32 0.0, %v278
  %v280 = vpop.f32.mrb[0].mxu0
  %281 = vdwg.mxu0
  %282 = vmatprep.subr.bf16.mxu0 0
  %283 = vmatpush1.bf16.msra.mxu0 %v209
  %284 = vmatprep.subr.bf16.mxu0 0
  %285 = vmatpush1.bf16.msra.mxu0 %v210
  %286 = vmatprep.subr.bf16.mxu0 0
  %287 = vmatpush1.bf16.msra.mxu0 %v211
  %288 = vmatprep.subr.bf16.mxu0 0
  %289 = vmatpush1.bf16.msra.mxu0 %v212
  %290 = vmatprep.subr.bf16.mxu0 0
  %291 = vmatpush1.bf16.msra.mxu0 %v213
  %292 = vmatprep.subr.bf16.mxu0 0
  %293 = vmatpush1.bf16.msra.mxu0 %v214
  %294 = vmatprep.subr.bf16.mxu0 0
  %295 = vmatpush1.bf16.msra.mxu0 %v215
  %296 = vmatprep.subr.bf16.mxu0 0
  %297 = vmatpush1.bf16.msra.mxu0 %v216
  %298 = vmatprep.subr.bf16.mxu0 0
  %299 = vmatpush1.bf16.msra.mxu0 0
  %300 = vmatprep.subr.bf16.mxu0 0
  %301 = vmatpush1.bf16.msra.mxu0 0
  %302 = vmatprep.subr.bf16.mxu0 0
  %303 = vmatpush1.bf16.msra.mxu0 0
  %304 = vmatprep.subr.bf16.mxu0 0
  %305 = vmatpush1.bf16.msra.mxu0 0
  %306 = vmatprep.subr.bf16.mxu0 0
  %307 = vmatpush1.bf16.msra.mxu0 0
  %308 = vmatprep.subr.bf16.mxu0 0
  %309 = vmatpush1.bf16.msra.mxu0 0
  %310 = vmatprep.subr.bf16.mxu0 0
  %311 = vmatpush1.bf16.msra.mxu0 0
  %312 = vmatprep.subr.bf16.mxu0 0
  %313 = vmatpush1.bf16.msra.mxu0 0
  %314 = vmatprep.mubr.bf16.mxu0 0
  %315 = vmatmul.mubr.bf16.gmra.mrb[0].mxu0 %v93
  %v316 = vpop.f32.mrb[0].mxu0
  %v317 = vadd.f32 %v276, %v316
  %v318 = vpop.f32.mrb[0].mxu0
  %v319 = vpop.f32.mrb[0].mxu0
  %v320 = vadd.f32 %v279, %v319
  %v321 = vpop.f32.mrb[0].mxu0
  %322 = vdwg.mxu0
  %v323 = vadd.f32 %v27, %v317
  %v324 = vadd.f32 %v28, %v320
  %325 = vst [vmem:[#allocation2] sm:$0xff] %v323
  %326 = vst [vmem:[#allocation2 + $0x8] sm:$0xff] %v324
  // Predicated region
  $region26: #{_lambda_.106} parent=0 // pred_check
    %p327 = pneg %p21
  $region27: #{_lambda_.106} parent=0 // pred_check_branch
    %329 = sbr.rel (%p327) target = $region29
  $region28: #{_lambda_.106} parent=0 // pred_region
    %v330 = vld [vmem:[#allocation2] sm:$0xff]
    %v331 = vld [vmem:[#allocation2 + $0x8] sm:$0xff]
    %v332 = vld [vmem:[%s2] sm:$0x1]
    %v334 = vlaneseq
    %v335 = vshrl.u32 %v334, 7
    %v336 = vsub.s32 0, %v335
    %v337 = vrot.slane %v332, %v336
    %v339 = vmul.f32 %v330, %v337
    %v340 = vmul.f32 %v331, %v337
    %v341 = vld [vmem:[%s3] sm:$0x1]
    %v343 = vlaneseq
    %v344 = vshrl.u32 %v343, 7
    %v345 = vsub.s32 0, %v344
    %v346 = vrot.slane %v341, %v345
    %v348 = vadd.f32 %v339, %v346
    %v349 = vadd.f32 %v340, %v346
    %v350 = vld [vmem:[%s4] sm:$0xff]
    %v351 = vld [vmem:[%s4 + $0x8] sm:$0xff]
    %v352 = vadd.f32 %v348, %v350
    %v353 = vadd.f32 %v349, %v351
    %v354 = vmax.f32 %v352, 0.0
    %v355 = vmax.f32 %v353, 0.0
    %356 = vst [vmem:[%s5] sm:$0xff] %v354
    %357 = vst [vmem:[%s5 + $0x8] sm:$0xff] %v355
  $region29: #{_lambda_.106} parent=0 // pred_fallthru
    _
  // Predicated region
  $region30: #{_lambda_.106} parent=0 // pred_check
    _
  $region31: #{_lambda_.106} parent=0 // pred_check_branch
    %359 = sbr.rel (0) target = $region33
  $region32: #{_lambda_.106} parent=0 // pred_region
    _
  $region33: #{_lambda_.106} parent=0 // pred_fallthru
    _
  // Predicated region
  $region34: #{_lambda_.106} parent=0 // pred_check
    _
  $region35: #{_lambda_.106} parent=0 // pred_check_branch
    %361 = sbr.rel (0) target = $region37
  $region36: #{_lambda_.106} parent=0 // pred_region
    _
  $region37: #{_lambda_.106} parent=0 // pred_fallthru
    _

// kernel: tile.20
$region0: #{tile.20}
  #allocation0 [shape = 's32[1]{0}', space=sflag, size = 0x4, scoped, tag = 'scoped memory for tile.20']
  %s0 = inlined_call_operand.vmem [shape: f32[16], index: 0, kind: input, shape index: {}]
  %s1 = inlined_call_operand.vmem [shape: f32[4,16], index: 1, kind: output, shape index: {}]
  // Predicated region
  $region2: #{tile.20} parent=0 // pred_check
    _
  $region3: #{tile.20} parent=0 // pred_check_branch
    %3 = sbr.rel (0) target = $region5
  $region4: #{tile.20} parent=0 // pred_region
    _
  $region5: #{tile.20} parent=0 // pred_fallthru
    _
  %v4 = vld [vmem:[%s0] ss:$0 sm:$0xff]
  %5 = vst [vmem:[%s1] sm:$0xf] %v4

// kernel: tile.21
$region0: #{tile.21}
  %s0 = inlined_call_operand.vmem [shape: f32[4,16], index: 0, kind: input, shape index: {}]
  %s1 = inlined_call_operand.vmem [shape: f32[1,64], index: 1, kind: output, shape index: {}]
  $region1: #{tile.21} parent=0
    #allocation0 [shape = 'u8[4096]{0}', space=vmem, size = 0x1000, scoped, tag = 'scoped mem for output reshape']
    #allocation1 [shape = 'u8[4096]{0}', space=vmem, size = 0x1000, scoped, tag = 'scoped mem for input reshape']
    %s3 = sshllo.u32 0, 4
    %v4 = vld [vmem:[%s0] sm:%s3]
    %5 = vst [vmem:[#allocation1] sm:%s3] %v4
    %v6 = vld [vmem:[#allocation1] sm:$0x1]
    %vm7 = vcmask 130048
    %8 = vst.msk [vmem:[#allocation0] sm:$0x1] %vm7, %v6
    %s9 = scalar_lea.vmem [#allocation1], 3
    %v10 = vld [vmem:[%s9] sm:$0x1]
    %11 = vrot.lane.b32.xlu0 %v10, 48
    %v12 = vpop.permute.xlu0 %11
    %vm13 = vcmask 523648
    %14 = vst.msk [vmem:[#allocation0] sm:$0x1] %vm13, %v12
    %s15 = scalar_lea.vmem [#allocation1], 2
    %v16 = vld [vmem:[%s15] sm:$0x1]
    %17 = vrot.lane.b32.xlu0 %v16, 32
    %v18 = vpop.permute.xlu0 %17
    %vm19 = vcmask 392448
    %20 = vst.msk [vmem:[#allocation0] sm:$0x1] %vm19, %v18
    %s21 = scalar_lea.vmem [#allocation1], 1
    %v22 = vld [vmem:[%s21] sm:$0x1]
    %23 = vrot.lane.b32.xlu0 %v22, 16
    %v24 = vpop.permute.xlu0 %23
    %vm25 = vcmask 261248
    %26 = vst.msk [vmem:[#allocation0] sm:$0x1] %vm25, %v24
    %s28 = sshllo.u32 0, 1
    %v30 = vld [vmem:[#allocation0] sm:%s28]
    %s31 = sshllo.u32 0, 1
    %32 = vst [vmem:[%s1] sm:%s31] %v30

// kernel: _lambda_.144
$region0: #{_lambda_.144}
  #allocation0 [shape = 'u32[]', space=smem, size = 0x4, offset = 0x4, fixed_abs, tag = 'smem constant byte address 0x4 - core index']
  #allocation1 [shape = 'u32[144,128]{1,0:T(1,128)}', space=vmem, size = 0x12000, scoped, tag = 'internal scratch']
  #allocation2 [shape = 'f32[32,128]{1,0:T(8,128)}', space=vmem, size = 0x4000, scoped, tag = 'scratch operand']
  %s0 = inlined_call_operand.vmem [shape: bf16[32,256], index: 0, kind: input, shape index: {}]
  %s1 = inlined_call_operand.vmem [shape: bf16[256,128], index: 1, kind: input, shape index: {}]
  %s2 = inlined_call_operand.vmem [shape: f32[1,128], index: 2, kind: input, shape index: {}]
  %s3 = inlined_call_operand.vmem [shape: f32[1,128], index: 3, kind: input, shape index: {}]
  %s4 = inlined_call_operand.vmem [shape: f32[32,128], index: 4, kind: output, shape index: {}]
  %s5 = sld [smem:[#allocation0]]
  $region34: #{_lambda_.144} parent=0
    _
  %s7 = ssub.s32 1, %s5
  %s8 = scalar_select 0, %s7, %s5
  // Predicated region
  $region2: #{_lambda_.144} parent=0 // pred_check
    _
  $region3: #{_lambda_.144} parent=0 // pred_check_branch
    %10 = sbr.rel (0) target = $region5
  $region4: #{_lambda_.144} parent=0 // pred_region
    _
  $region5: #{_lambda_.144} parent=0 // pred_fallthru
    _
  // Predicated region
  $region6: #{_lambda_.144} parent=0 // pred_check
    _
  $region7: #{_lambda_.144} parent=0 // pred_check_branch
    %12 = sbr.rel (0) target = $region9
  $region8: #{_lambda_.144} parent=0 // pred_region
    _
  $region9: #{_lambda_.144} parent=0 // pred_fallthru
    _
  // Predicated region
  $region10: #{_lambda_.144} parent=0 // pred_check
    _
  $region11: #{_lambda_.144} parent=0 // pred_check_branch
    %14 = sbr.rel (0) target = $region13
  $region12: #{_lambda_.144} parent=0 // pred_region
    _
  $region13: #{_lambda_.144} parent=0 // pred_fallthru
    _
  // Predicated region
  $region14: #{_lambda_.144} parent=0 // pred_check
    _
  $region15: #{_lambda_.144} parent=0 // pred_check_branch
    %16 = sbr.rel (0) target = $region17
  $region16: #{_lambda_.144} parent=0 // pred_region
    _
  $region17: #{_lambda_.144} parent=0 // pred_fallthru
    _
  %p18 = scmp.eq.s32.totalorder 0, 0
  // Predicated region
  $region18: #{_lambda_.144} parent=0 // pred_check
    %p19 = pneg %p18
  $region19: #{_lambda_.144} parent=0 // pred_check_branch
    %21 = sbr.rel (%p19) target = $region21
  $region20: #{_lambda_.144} parent=0 // pred_region
    %22 = vst [vmem:[#allocation2] sm:$0xff] 0.0
    %23 = vst [vmem:[#allocation2 + $0x8] sm:$0xff] 0.0
    %24 = vst [vmem:[#allocation2 + $0x10] sm:$0xff] 0.0
    %25 = vst [vmem:[#allocation2 + $0x18] sm:$0xff] 0.0
  $region21: #{_lambda_.144} parent=0 // pred_fallthru
    _
  %v26 = vld [vmem:[#allocation2] sm:$0xff]
  %v27 = vld [vmem:[#allocation2 + $0x8] sm:$0xff]
  %v28 = vld [vmem:[#allocation2 + $0x10] sm:$0xff]
  %v29 = vld [vmem:[#allocation2 + $0x18] sm:$0xff]
  %v30 = vld [vmem:[%s0] sm:$0xff]
  %v31 = vld [vmem:[%s0 + $0x8] sm:$0xff]
  %v32 = vld [vmem:[%s0 + $0x10] sm:$0xff]
  %v33 = vld [vmem:[%s0 + $0x18] sm:$0xff]
  %v34 = vld [vmem:[%s1] sm:$0xf]
  %v35 = vld [vmem:[%s1 + $0x4] sm:$0xf]
  %v36 = vld [vmem:[%s1 + $0x8] sm:$0xf]
  %v37 = vld [vmem:[%s1 + $0xc] sm:$0xf]
  %v38 = vld [vmem:[%s1 + $0x10] sm:$0xf]
  %v39 = vld [vmem:[%s1 + $0x14] sm:$0xf]
  %v40 = vld [vmem:[%s1 + $0x18] sm:$0xf]
  %v41 = vld [vmem:[%s1 + $0x1c] sm:$0xf]
  %v42 = vld [vmem:[%s1 + $0x20] sm:$0xf]
  %v43 = vld [vmem:[%s1 + $0x24] sm:$0xf]
  %v44 = vld [vmem:[%s1 + $0x28] sm:$0xf]
  %v45 = vld [vmem:[%s1 + $0x2c] sm:$0xf]
  %v46 = vld [vmem:[%s1 + $0x30] sm:$0xf]
  %v47 = vld [vmem:[%s1 + $0x34] sm:$0xf]
  %v48 = vld [vmem:[%s1 + $0x38] sm:$0xf]
  %v49 = vld [vmem:[%s1 + $0x3c] sm:$0xf]
  %v50 = vld [vmem:[%s1 + $0x40] sm:$0xf]
  %v51 = vld [vmem:[%s1 + $0x44] sm:$0xf]
  %v52 = vld [vmem:[%s1 + $0x48] sm:$0xf]
  %v53 = vld [vmem:[%s1 + $0x4c] sm:$0xf]
  %v54 = vld [vmem:[%s1 + $0x50] sm:$0xf]
  %v55 = vld [vmem:[%s1 + $0x54] sm:$0xf]
  %v56 = vld [vmem:[%s1 + $0x58] sm:$0xf]
  %v57 = vld [vmem:[%s1 + $0x5c] sm:$0xf]
  %v58 = vld [vmem:[%s1 + $0x60] sm:$0xf]
  %v59 = vld [vmem:[%s1 + $0x64] sm:$0xf]
  %v60 = vld [vmem:[%s1 + $0x68] sm:$0xf]
  %v61 = vld [vmem:[%s1 + $0x6c] sm:$0xf]
  %v62 = vld [vmem:[%s1 + $0x70] sm:$0xf]
  %v63 = vld [vmem:[%s1 + $0x74] sm:$0xf]
  %v64 = vld [vmem:[%s1 + $0x78] sm:$0xf]
  %v65 = vld [vmem:[%s1 + $0x7c] sm:$0xf]
  %v70 = vunpack.c.l.b16 %v30
  %v71 = vunpack.c.h.b16 %v30
  %v72 = vunpack.c.l.b16 %v31
  %v73 = vunpack.c.h.b16 %v31
  %v74 = vunpack.c.l.b16 %v32
  %v75 = vunpack.c.h.b16 %v32
  %v76 = vunpack.c.l.b16 %v33
  %v77 = vunpack.c.h.b16 %v33
  %v78 = vpack.c.b16 %v72, %v70
  %v79 = vpack.c.b16 %v73, %v71
  %v80 = vpack.c.b16 %v76, %v74
  %v81 = vpack.c.b16 %v77, %v75
  %v118 = vunpack.c.l.b16 %v34
  %v119 = vunpack.c.l.b16 %v35
  %v120 = vunpack.c.l.b16 %v36
  %v121 = vunpack.c.l.b16 %v37
  %v122 = vunpack.c.l.b16 %v38
  %v123 = vunpack.c.l.b16 %v39
  %v124 = vunpack.c.l.b16 %v40
  %v125 = vunpack.c.l.b16 %v41
  %v126 = vunpack.c.l.b16 %v42
  %v127 = vunpack.c.l.b16 %v43
  %v128 = vunpack.c.l.b16 %v44
  %v129 = vunpack.c.l.b16 %v45
  %v130 = vunpack.c.l.b16 %v46
  %v131 = vunpack.c.l.b16 %v47
  %v132 = vunpack.c.l.b16 %v48
  %v133 = vunpack.c.l.b16 %v49
  %v134 = vunpack.c.l.b16 %v50
  %v135 = vunpack.c.l.b16 %v51
  %v136 = vunpack.c.l.b16 %v52
  %v137 = vunpack.c.l.b16 %v53
  %v138 = vunpack.c.l.b16 %v54
  %v139 = vunpack.c.l.b16 %v55
  %v140 = vunpack.c.l.b16 %v56
  %v141 = vunpack.c.l.b16 %v57
  %v142 = vunpack.c.l.b16 %v58
  %v143 = vunpack.c.l.b16 %v59
  %v144 = vunpack.c.l.b16 %v60
  %v145 = vunpack.c.l.b16 %v61
  %v146 = vunpack.c.l.b16 %v62
  %v147 = vunpack.c.l.b16 %v63
  %v148 = vunpack.c.l.b16 %v64
  %v149 = vunpack.c.l.b16 %v65
  %v150 = vpack.c.b16 %v119, %v118
  %v151 = vpack.c.b16 %v121, %v120
  %v152 = vpack.c.b16 %v123, %v122
  %v153 = vpack.c.b16 %v125, %v124
  %v154 = vpack.c.b16 %v127, %v126
  %v155 = vpack.c.b16 %v129, %v128
  %v156 = vpack.c.b16 %v131, %v130
  %v157 = vpack.c.b16 %v133, %v132
  %v158 = vpack.c.b16 %v135, %v134
  %v159 = vpack.c.b16 %v137, %v136
  %v160 = vpack.c.b16 %v139, %v138
  %v161 = vpack.c.b16 %v141, %v140
  %v162 = vpack.c.b16 %v143, %v142
  %v163 = vpack.c.b16 %v145, %v144
  %v164 = vpack.c.b16 %v147, %v146
  %v165 = vpack.c.b16 %v149, %v148
  %182 = vmatprep.subr.bf16.mxu0 0
  %183 = vmatpush1.bf16.msra.mxu0 %v150
  %184 = vmatprep.subr.bf16.mxu0 0
  %185 = vmatpush1.bf16.msra.mxu0 %v151
  %186 = vmatprep.subr.bf16.mxu0 0
  %187 = vmatpush1.bf16.msra.mxu0 %v152
  %188 = vmatprep.subr.bf16.mxu0 0
  %189 = vmatpush1.bf16.msra.mxu0 %v153
  %190 = vmatprep.subr.bf16.mxu0 0
  %191 = vmatpush1.bf16.msra.mxu0 %v154
  %192 = vmatprep.subr.bf16.mxu0 0
  %193 = vmatpush1.bf16.msra.mxu0 %v155
  %194 = vmatprep.subr.bf16.mxu0 0
  %195 = vmatpush1.bf16.msra.mxu0 %v156
  %196 = vmatprep.subr.bf16.mxu0 0
  %197 = vmatpush1.bf16.msra.mxu0 %v157
  %198 = vmatprep.subr.bf16.mxu0 0
  %199 = vmatpush1.bf16.msra.mxu0 %v158
  %200 = vmatprep.subr.bf16.mxu0 0
  %201 = vmatpush1.bf16.msra.mxu0 %v159
  %202 = vmatprep.subr.bf16.mxu0 0
  %203 = vmatpush1.bf16.msra.mxu0 %v160
  %204 = vmatprep.subr.bf16.mxu0 0
  %205 = vmatpush1.bf16.msra.mxu0 %v161
  %206 = vmatprep.subr.bf16.mxu0 0
  %207 = vmatpush1.bf16.msra.mxu0 %v162
  %208 = vmatprep.subr.bf16.mxu0 0
  %209 = vmatpush1.bf16.msra.mxu0 %v163
  %210 = vmatprep.subr.bf16.mxu0 0
  %211 = vmatpush1.bf16.msra.mxu0 %v164
  %212 = vmatprep.subr.bf16.mxu0 0
  %213 = vmatpush1.bf16.msra.mxu0 %v165
  %214 = vmatprep.mubr.bf16.mxu0 %v79
  %215 = vmatmul.mubr.bf16.gmra.mrb[0].mxu0 %v78
  %v216 = vpop.f32.mrb[0].mxu0
  %v217 = vadd.f32 0.0, %v216
  %v218 = vpop.f32.mrb[0].mxu0
  %v219 = vpop.f32.mrb[0].mxu0
  %v220 = vadd.f32 0.0, %v219
  %v221 = vpop.f32.mrb[0].mxu0
  %222 = vmatprep.mubr.bf16.mxu0 %v81
  %223 = vmatmul.mubr.bf16.gmra.mrb[0].mxu0 %v80
  %v224 = vpop.f32.mrb[0].mxu0
  %v225 = vadd.f32 0.0, %v224
  %v226 = vpop.f32.mrb[0].mxu0
  %v227 = vpop.f32.mrb[0].mxu0
  %v228 = vadd.f32 0.0, %v227
  %v229 = vpop.f32.mrb[0].mxu0
  %230 = vdwg.mxu0
  %v231 = vadd.f32 %v26, %v217
  %v232 = vadd.f32 %v27, %v220
  %v233 = vadd.f32 %v28, %v225
  %v234 = vadd.f32 %v29, %v228
  %235 = vst [vmem:[#allocation2] sm:$0xff] %v231
  %236 = vst [vmem:[#allocation2 + $0x8] sm:$0xff] %v232
  %237 = vst [vmem:[#allocation2 + $0x10] sm:$0xff] %v233
  %238 = vst [vmem:[#allocation2 + $0x18] sm:$0xff] %v234
  // Predicated region
  $region22: #{_lambda_.144} parent=0 // pred_check
    %p239 = pneg %p18
  $region23: #{_lambda_.144} parent=0 // pred_check_branch
    %241 = sbr.rel (%p239) target = $region25
  $region24: #{_lambda_.144} parent=0 // pred_region
    %v242 = vld [vmem:[#allocation2] sm:$0xff]
    %v243 = vld [vmem:[#allocation2 + $0x8] sm:$0xff]
    %v244 = vld [vmem:[#allocation2 + $0x10] sm:$0xff]
    %v245 = vld [vmem:[#allocation2 + $0x18] sm:$0xff]
    %v246 = vld [vmem:[%s2] sm:$0x1]
    %v248 = vlaneseq
    %v249 = vshrl.u32 %v248, 7
    %v250 = vsub.s32 0, %v249
    %v251 = vrot.slane %v246, %v250
    %v253 = vmul.f32 %v242, %v251
    %v254 = vmul.f32 %v243, %v251
    %v255 = vmul.f32 %v244, %v251
    %v256 = vmul.f32 %v245, %v251
    %v257 = vld [vmem:[%s3] sm:$0x1]
    %v259 = vlaneseq
    %v260 = vshrl.u32 %v259, 7
    %v261 = vsub.s32 0, %v260
    %v262 = vrot.slane %v257, %v261
    %v264 = vadd.f32 %v253, %v262
    %v265 = vadd.f32 %v254, %v262
    %v266 = vadd.f32 %v255, %v262
    %v267 = vadd.f32 %v256, %v262
    %v268 = vmax.f32 %v264, 0.0
    %v269 = vmax.f32 %v265, 0.0
    %v270 = vmax.f32 %v266, 0.0
    %v271 = vmax.f32 %v267, 0.0
    %272 = vst [vmem:[%s4] sm:$0xff] %v268
    %273 = vst [vmem:[%s4 + $0x8] sm:$0xff] %v269
    %274 = vst [vmem:[%s4 + $0x10] sm:$0xff] %v270
    %275 = vst [vmem:[%s4 + $0x18] sm:$0xff] %v271
  $region25: #{_lambda_.144} parent=0 // pred_fallthru
    _
  // Predicated region
  $region26: #{_lambda_.144} parent=0 // pred_check
    _
  $region27: #{_lambda_.144} parent=0 // pred_check_branch
    %277 = sbr.rel (0) target = $region29
  $region28: #{_lambda_.144} parent=0 // pred_region
    _
  $region29: #{_lambda_.144} parent=0 // pred_fallthru
    _
  // Predicated region
  $region30: #{_lambda_.144} parent=0 // pred_check
    _
  $region31: #{_lambda_.144} parent=0 // pred_check_branch
    %279 = sbr.rel (0) target = $region33
  $region32: #{_lambda_.144} parent=0 // pred_region
    _
  $region33: #{_lambda_.144} parent=0 // pred_fallthru
    _

// kernel: _lambda_.135
$region0: #{_lambda_.135}
  #allocation0 [shape = 'u32[]', space=smem, size = 0x4, offset = 0x4, fixed_abs, tag = 'smem constant byte address 0x4 - core index']
  #allocation1 [shape = 'u32[144,128]{1,0:T(1,128)}', space=vmem, size = 0x12000, scoped, tag = 'internal scratch']
  #allocation2 [shape = 'f32[16,128]{1,0:T(8,128)}', space=vmem, size = 0x2000, scoped, tag = 'scratch operand']
  %s0 = inlined_call_operand.vmem [shape: bf16[16,512], index: 0, kind: input, shape index: {}]
  %s1 = inlined_call_operand.vmem [shape: bf16[512,256], index: 1, kind: input, shape index: {}]
  %s2 = inlined_call_operand.vmem [shape: f32[1,256], index: 2, kind: input, shape index: {}]
  %s3 = inlined_call_operand.vmem [shape: f32[1,256], index: 3, kind: input, shape index: {}]
  %s4 = inlined_call_operand.vmem [shape: f32[16,256], index: 4, kind: output, shape index: {}]
  %s5 = sld [smem:[#allocation0]]
  $region132: #{_lambda_.135} parent=0
    _
  %s7 = ssub.s32 1, %s5
  %s8 = scalar_select 0, %s7, %s5
  $region1: #{_lambda_.135} parent=0
    #allocation3 [shape = 'u8[262144]{0}', space=vmem, size = 0x40000, scoped, tag = 'input window, operand 1']
    #allocation4 [shape = 'u8[16384]{0}', space=vmem, size = 0x4000, scoped, tag = 'output window, operand 0']
    loop: start=0, step=1, limit=4
    $region2: #{_lambda_.135} parent=1 // loop_pre_header
      _
    $region3: #{_lambda_.135} parent=1 // loop_header
      %s10 = sphi 0, %s14
      %p11 = scmp.ge.s32.totalorder %s10, 4
      %s17 = sphi 0, %s36
      %s18 = sphi 0, %s32
      %s19 = sphi 0, %s28
      %s20 = sphi 0, %s17
      %s21 = sphi 0, %s18
      %s22 = sphi 0, %s19
      %s23 = sphi 0, %s20
      %s24 = sphi 0, %s21
      %s25 = sphi 0, %s22
      %s41 = sphi 0, %s43
      %s44 = sphi 0, %s41
      %s45 = sphi 0, %s44
      %s61 = sphi 0, %s45
      %s69 = sphi 0, %s71
      %s72 = sphi 0, %s69
      %s73 = sphi 0, %s72
      %s89 = sphi 0, %s73
      %s95 = sphi 0, %s97
      %s98 = sphi 0, %s95
      %s99 = sphi 0, %s98
      %s115 = sphi 0, %s99
      %s121 = sphi 0, %s123
      %s124 = sphi 0, %s121
      %s125 = sphi 0, %s124
      %s141 = sphi 0, %s125
      %s149 = sphi 0, %s151
      %s152 = sphi 0, %s149
      %s153 = sphi 0, %s152
      %s169 = sphi 0, %s153
    $region4: #{_lambda_.135} parent=1 // loop_header_branch
      %13 = sbr.rel (%p11) target = $region8
    $region5: #{_lambda_.135} parent=1 // loop_body
      %s15 = ssub.s32 %s10, 1
      %s16 = ssub.s32 %s10, 2
      %s26 = sadd.s32 1, %s19
      %p27 = scmp.ge.s32.totalorder %s26, 1
      %s28 = scalar_select %p27, 0, %s26
      %s29 = sadd.s32 1, %s18
      %s30 = scalar_select %p27, %s29, %s18
      %p31 = scmp.ge.s32.totalorder %s30, 2
      %s32 = scalar_select %p31, 0, %s30
      %s33 = sadd.s32 1, %s17
      %s34 = scalar_select %p31, %s33, %s17
      %p35 = scmp.ge.s32.totalorder %s34, 1
      %s36 = scalar_select %p35, 0, %s34
      %s37 = ssub.s32 %s17, %s36
      %s38 = ssub.s32 %s19, %s28
      %s39 = sor.u32 %s37, %s38
      %p40 = scmp.eq.s32.totalorder %s39, 0
      %s42 = sadd.s32 %s41, 1
      %s43 = scalar_select %p40, %s41, %s42
      %p46 = pneg %p40
      %p47 = scmp.eq.s32.totalorder %s10, 1
      %p48 = por %p46, %p47
      %p49 = scmp.ne.s32.totalorder %s41, %s44
      %p50 = scmp.eq.s32.totalorder %s10, 0
      %p51 = por %p49, %p50
      %p52 = scmp.ne.s32.totalorder %s41, %s44
      %p53 = scmp.eq.s32.totalorder %s15, 1
      %p54 = por %p52, %p53
      %p55 = scmp.ne.s32.totalorder %s44, %s45
      %p56 = scmp.eq.s32.totalorder %s15, 0
      %p57 = por %p55, %p56
      %p58 = scmp.ne.s32.totalorder %s44, %s45
      %p59 = scmp.eq.s32.totalorder %s16, 1
      %p60 = por %p58, %p59
      %p62 = scmp.ne.s32.totalorder %s45, %s61
      %p63 = scmp.eq.s32.totalorder %s16, 0
      %p64 = por %p62, %p63
      %s65 = ssub.s32 %s19, %s28
      %s66 = ssub.s32 %s18, %s32
      %s67 = sor.u32 %s65, %s66
      %p68 = scmp.eq.s32.totalorder %s67, 0
      %s70 = sadd.s32 %s69, 1
      %s71 = scalar_select %p68, %s69, %s70
      %p74 = pneg %p68
      %p75 = scmp.eq.s32.totalorder %s10, 1
      %p76 = por %p74, %p75
      %p77 = scmp.ne.s32.totalorder %s69, %s72
      %p78 = scmp.eq.s32.totalorder %s10, 0
      %p79 = por %p77, %p78
      %p80 = scmp.ne.s32.totalorder %s69, %s72
      %p81 = scmp.eq.s32.totalorder %s15, 1
      %p82 = por %p80, %p81
      %p83 = scmp.ne.s32.totalorder %s72, %s73
      %p84 = scmp.eq.s32.totalorder %s15, 0
      %p85 = por %p83, %p84
      %p86 = scmp.ne.s32.totalorder %s72, %s73
      %p87 = scmp.eq.s32.totalorder %s16, 1
      %p88 = por %p86, %p87
      %p90 = scmp.ne.s32.totalorder %s73, %s89
      %p91 = scmp.eq.s32.totalorder %s16, 0
      %p92 = por %p90, %p91
      %s93 = ssub.s32 %s18, %s32
      %p94 = scmp.eq.s32.totalorder %s93, 0
      %s96 = sadd.s32 %s95, 1
      %s97 = scalar_select %p94, %s95, %s96
      %p100 = pneg %p94
      %p101 = scmp.eq.s32.totalorder %s10, 1
      %p102 = por %p100, %p101
      %p103 = scmp.ne.s32.totalorder %s95, %s98
      %p104 = scmp.eq.s32.totalorder %s10, 0
      %p105 = por %p103, %p104
      %p106 = scmp.ne.s32.totalorder %s95, %s98
      %p107 = scmp.eq.s32.totalorder %s15, 1
      %p108 = por %p106, %p107
      %p109 = scmp.ne.s32.totalorder %s98, %s99
      %p110 = scmp.eq.s32.totalorder %s15, 0
      %p111 = por %p109, %p110
      %p112 = scmp.ne.s32.totalorder %s98, %s99
      %p113 = scmp.eq.s32.totalorder %s16, 1
      %p114 = por %p112, %p113
      %p116 = scmp.ne.s32.totalorder %s99, %s115
      %p117 = scmp.eq.s32.totalorder %s16, 0
      %p118 = por %p116, %p117
      %s119 = ssub.s32 %s18, %s32
      %p120 = scmp.eq.s32.totalorder %s119, 0
      %s122 = sadd.s32 %s121, 1
      %s123 = scalar_select %p120, %s121, %s122
      %p126 = pneg %p120
      %p127 = scmp.eq.s32.totalorder %s10, 1
      %p128 = por %p126, %p127
      %p129 = scmp.ne.s32.totalorder %s121, %s124
      %p130 = scmp.eq.s32.totalorder %s10, 0
      %p131 = por %p129, %p130
      %p132 = scmp.ne.s32.totalorder %s121, %s124
      %p133 = scmp.eq.s32.totalorder %s15, 1
      %p134 = por %p132, %p133
      %p135 = scmp.ne.s32.totalorder %s124, %s125
      %p136 = scmp.eq.s32.totalorder %s15, 0
      %p137 = por %p135, %p136
      %p138 = scmp.ne.s32.totalorder %s124, %s125
      %p139 = scmp.eq.s32.totalorder %s16, 1
      %p140 = por %p138, %p139
      %p142 = scmp.ne.s32.totalorder %s125, %s141
      %p143 = scmp.eq.s32.totalorder %s16, 0
      %p144 = por %p142, %p143
      %s145 = ssub.s32 %s17, %s36
      %s146 = ssub.s32 %s18, %s32
      %s147 = sor.u32 %s145, %s146
      %p148 = scmp.eq.s32.totalorder %s147, 0
      %s150 = sadd.s32 %s149, 1
      %s151 = scalar_select %p148, %s149, %s150
      %p154 = pneg %p148
      %p155 = scmp.eq.s32.totalorder %s10, 1
      %p156 = por %p154, %p155
      %p157 = scmp.ne.s32.totalorder %s149, %s152
      %p158 = scmp.eq.s32.totalorder %s10, 0
      %p159 = por %p157, %p158
      %p160 = scmp.ne.s32.totalorder %s149, %s152
      %p161 = scmp.eq.s32.totalorder %s15, 1
      %p162 = por %p160, %p161
      %p163 = scmp.ne.s32.totalorder %s152, %s153
      %p164 = scmp.eq.s32.totalorder %s15, 0
      %p165 = por %p163, %p164
      %p166 = scmp.ne.s32.totalorder %s152, %s153
      %p167 = scmp.eq.s32.totalorder %s16, 1
      %p168 = por %p166, %p167
      %p170 = scmp.ne.s32.totalorder %s153, %s169
      %p171 = scmp.eq.s32.totalorder %s16, 0
      %p172 = por %p170, %p171
      %p173 = scmp.le.s32.totalorder 1, %s10
      %p174 = scmp.lt.s32.totalorder %s10, 3
      %p175 = pnand %p173, %p174
      %p176 = pneg %p175
      // Predicated region
      $region9: #{_lambda_.135} parent=5 // pred_check
        _
      $region10: #{_lambda_.135} parent=5 // pred_check_branch
        %178 = sbr.rel (%p175) target = $region12
      $region11: #{_lambda_.135} parent=5 // pred_region
        %s179 = ssub.s32 %s10, 1
        // Predicated region
        $region13: #{_lambda_.135} parent=11 // pred_check
          %p180 = pneg %p57
        $region14: #{_lambda_.135} parent=11 // pred_check_branch
          %182 = sbr.rel (%p180) target = $region16
        $region15: #{_lambda_.135} parent=11 // pred_region
          %s183 = smul.u32 2, %s20
          %s184 = smul.u32 4, %s22
          %p185 = scmp.lt.s32.totalorder %s183, 1
          %s186 = scalar_select %p185, %s183, 1
          %p187 = scmp.lt.s32.totalorder %s184, 3
          %s188 = scalar_select %p187, %s184, 3
          %s189 = smul.addr %s186, 4
          %s190 = sadd.s32 %s188, %s189
          %s191 = smul.addr %s190, 4
          %s192 = scalar_lea.vmem %s0, %s191
          %s193 = smul.u32 2, %s20
          %s194 = smul.u32 4, %s22
        $region16: #{_lambda_.135} parent=11 // pred_fallthru
          _
      $region12: #{_lambda_.135} parent=5 // pred_fallthru
        _
      %p195 = scmp.lt.s32.totalorder %s10, 2
      // Predicated region
      $region17: #{_lambda_.135} parent=5 // pred_check
        %p196 = pneg %p195
      $region18: #{_lambda_.135} parent=5 // pred_check_branch
        %198 = sbr.rel (%p196) target = $region20
      $region19: #{_lambda_.135} parent=5 // pred_region
        // Predicated region
        $region21: #{_lambda_.135} parent=19 // pred_check
          %p199 = pneg %p79
        $region22: #{_lambda_.135} parent=19 // pred_check_branch
          %201 = sbr.rel (%p199) target = $region24
        $region23: #{_lambda_.135} parent=19 // pred_region
          %s202 = sand.u32 %s69, 1
          %s203 = sand.u32 %s69, 1
          %s204 = smul.addr %s203, 256
          %s205 = scalar_lea.vmem [#allocation3], %s204
          %s206 = smul.u32 64, %s19
          %s207 = smul.addr %s206, 2
          %s208 = sadd.s32 %s18, %s207
          %s209 = smul.addr %s208, 4
          %s210 = scalar_lea.vmem %s1, %s209
          // Predicated region
          $region25: #{_lambda_.135} parent=23 // pred_check
            _
          $region26: #{_lambda_.135} parent=23 // pred_check_branch
            %212 = sbr.rel (0) target = $region28
          $region27: #{_lambda_.135} parent=23 // pred_region
            // Predicated region
            $region29: #{_lambda_.135} parent=27 // pred_check
              _
            $region30: #{_lambda_.135} parent=27 // pred_check_branch
              %214 = sbr.rel target = $region32
            $region31: #{_lambda_.135} parent=27 // pred_region
              // Predicated region
              $region44: #{_lambda_.135} parent=31 // pred_check
                _
              $region45: #{_lambda_.135} parent=31 // pred_check_branch
                %355 = sbr.rel (0) target = $region47
              $region46: #{_lambda_.135} parent=31 // pred_region
                loop: start=0, step=1, limit=1
                $region48: #{_lambda_.135} parent=46 // loop_pre_header
                  _
                $region49: #{_lambda_.135} parent=46 // loop_header
                  %s357 = sphi 0, %s361
                  %p358 = scmp.ge.s32.totalorder %s357, 1
                  %s362 = sphi %s210, %s210
                  %s363 = sphi %s205, %s205
                $region50: #{_lambda_.135} parent=46 // loop_header_branch
                  %360 = sbr.rel (%p358) target = $region54
                $region51: #{_lambda_.135} parent=46 // loop_body
                  _
                $region52: #{_lambda_.135} parent=46 // loop_footer
                  %s361 = sadd.s32 1, %s357
                $region53: #{_lambda_.135} parent=46 // loop_footer_branch
                  %356 = sbr.rel target = $region49
                $region54: #{_lambda_.135} parent=46 // loop_exit
                  _
                loop: start=0, step=1, limit=1
                $region55: #{_lambda_.135} parent=46 // loop_pre_header
                  _
                $region56: #{_lambda_.135} parent=46 // loop_header
                  %s366 = sphi 0, %s370
                  %p367 = scmp.ge.s32.totalorder %s366, 1
                  %s371 = sphi %s210, %s210
                  %s372 = sphi %s205, %s205
                $region57: #{_lambda_.135} parent=46 // loop_header_branch
                  %369 = sbr.rel (%p367) target = $region61
                $region58: #{_lambda_.135} parent=46 // loop_body
                  %v373 = vld [vmem:[%s371] sm:$0xf]
                  %374 = vst [vmem:[%s372] sm:$0xf] %v373
                  %v375 = vld [vmem:[%s371 + $0x8] sm:$0xf]
                  %376 = vst [vmem:[%s372 + $0x4] sm:$0xf] %v375
                  %v377 = vld [vmem:[%s371 + $0x10] sm:$0xf]
                  %378 = vst [vmem:[%s372 + $0x8] sm:$0xf] %v377
                  %v379 = vld [vmem:[%s371 + $0x18] sm:$0xf]
                  %380 = vst [vmem:[%s372 + $0xc] sm:$0xf] %v379
                  %v381 = vld [vmem:[%s371 + $0x20] sm:$0xf]
                  %382 = vst [vmem:[%s372 + $0x10] sm:$0xf] %v381
                  %v383 = vld [vmem:[%s371 + $0x28] sm:$0xf]
                  %384 = vst [vmem:[%s372 + $0x14] sm:$0xf] %v383
                  %v385 = vld [vmem:[%s371 + $0x30] sm:$0xf]
                  %386 = vst [vmem:[%s372 + $0x18] sm:$0xf] %v385
                  %v387 = vld [vmem:[%s371 + $0x38] sm:$0xf]
                  %388 = vst [vmem:[%s372 + $0x1c] sm:$0xf] %v387
                  %v389 = vld [vmem:[%s371 + $0x40] sm:$0xf]
                  %390 = vst [vmem:[%s372 + $0x20] sm:$0xf] %v389
                  %v391 = vld [vmem:[%s371 + $0x48] sm:$0xf]
                  %392 = vst [vmem:[%s372 + $0x24] sm:$0xf] %v391
                  %v393 = vld [vmem:[%s371 + $0x50] sm:$0xf]
                  %394 = vst [vmem:[%s372 + $0x28] sm:$0xf] %v393
                  %v395 = vld [vmem:[%s371 + $0x58] sm:$0xf]
                  %396 = vst [vmem:[%s372 + $0x2c] sm:$0xf] %v395
                  %v397 = vld [vmem:[%s371 + $0x60] sm:$0xf]
                  %398 = vst [vmem:[%s372 + $0x30] sm:$0xf] %v397
                  %v399 = vld [vmem:[%s371 + $0x68] sm:$0xf]
                  %400 = vst [vmem:[%s372 + $0x34] sm:$0xf] %v399
                  %v401 = vld [vmem:[%s371 + $0x70] sm:$0xf]
                  %402 = vst [vmem:[%s372 + $0x38] sm:$0xf] %v401
                  %v403 = vld [vmem:[%s371 + $0x78] sm:$0xf]
                  %404 = vst [vmem:[%s372 + $0x3c] sm:$0xf] %v403
                  %v405 = vld [vmem:[%s371 + $0x80] sm:$0xf]
                  %406 = vst [vmem:[%s372 + $0x40] sm:$0xf] %v405
                  %v407 = vld [vmem:[%s371 + $0x88] sm:$0xf]
                  %408 = vst [vmem:[%s372 + $0x44] sm:$0xf] %v407
                  %v409 = vld [vmem:[%s371 + $0x90] sm:$0xf]
                  %410 = vst [vmem:[%s372 + $0x48] sm:$0xf] %v409
                  %v411 = vld [vmem:[%s371 + $0x98] sm:$0xf]
                  %412 = vst [vmem:[%s372 + $0x4c] sm:$0xf] %v411
                  %v413 = vld [vmem:[%s371 + $0xa0] sm:$0xf]
                  %414 = vst [vmem:[%s372 + $0x50] sm:$0xf] %v413
                  %v415 = vld [vmem:[%s371 + $0xa8] sm:$0xf]
                  %416 = vst [vmem:[%s372 + $0x54] sm:$0xf] %v415
                  %v417 = vld [vmem:[%s371 + $0xb0] sm:$0xf]
                  %418 = vst [vmem:[%s372 + $0x58] sm:$0xf] %v417
                  %v419 = vld [vmem:[%s371 + $0xb8] sm:$0xf]
                  %420 = vst [vmem:[%s372 + $0x5c] sm:$0xf] %v419
                  %v421 = vld [vmem:[%s371 + $0xc0] sm:$0xf]
                  %422 = vst [vmem:[%s372 + $0x60] sm:$0xf] %v421
                  %v423 = vld [vmem:[%s371 + $0xc8] sm:$0xf]
                  %424 = vst [vmem:[%s372 + $0x64] sm:$0xf] %v423
                  %v425 = vld [vmem:[%s371 + $0xd0] sm:$0xf]
                  %426 = vst [vmem:[%s372 + $0x68] sm:$0xf] %v425
                  %v427 = vld [vmem:[%s371 + $0xd8] sm:$0xf]
                  %428 = vst [vmem:[%s372 + $0x6c] sm:$0xf] %v427
                  %v429 = vld [vmem:[%s371 + $0xe0] sm:$0xf]
                  %430 = vst [vmem:[%s372 + $0x70] sm:$0xf] %v429
                  %v431 = vld [vmem:[%s371 + $0xe8] sm:$0xf]
                  %432 = vst [vmem:[%s372 + $0x74] sm:$0xf] %v431
                  %v433 = vld [vmem:[%s371 + $0xf0] sm:$0xf]
                  %434 = vst [vmem:[%s372 + $0x78] sm:$0xf] %v433
                  %v435 = vld [vmem:[%s371 + $0xf8] sm:$0xf]
                  %436 = vst [vmem:[%s372 + $0x7c] sm:$0xf] %v435
                  %v437 = vld [vmem:[%s371 + $0x100] sm:$0xf]
                  %438 = vst [vmem:[%s372 + $0x80] sm:$0xf] %v437
                  %v439 = vld [vmem:[%s371 + $0x108] sm:$0xf]
                  %440 = vst [vmem:[%s372 + $0x84] sm:$0xf] %v439
                  %v441 = vld [vmem:[%s371 + $0x110] sm:$0xf]
                  %442 = vst [vmem:[%s372 + $0x88] sm:$0xf] %v441
                  %v443 = vld [vmem:[%s371 + $0x118] sm:$0xf]
                  %444 = vst [vmem:[%s372 + $0x8c] sm:$0xf] %v443
                  %v445 = vld [vmem:[%s371 + $0x120] sm:$0xf]
                  %446 = vst [vmem:[%s372 + $0x90] sm:$0xf] %v445
                  %v447 = vld [vmem:[%s371 + $0x128] sm:$0xf]
                  %448 = vst [vmem:[%s372 + $0x94] sm:$0xf] %v447
                  %v449 = vld [vmem:[%s371 + $0x130] sm:$0xf]
                  %450 = vst [vmem:[%s372 + $0x98] sm:$0xf] %v449
                  %v451 = vld [vmem:[%s371 + $0x138] sm:$0xf]
                  %452 = vst [vmem:[%s372 + $0x9c] sm:$0xf] %v451
                  %v453 = vld [vmem:[%s371 + $0x140] sm:$0xf]
                  %454 = vst [vmem:[%s372 + $0xa0] sm:$0xf] %v453
                  %v455 = vld [vmem:[%s371 + $0x148] sm:$0xf]
                  %456 = vst [vmem:[%s372 + $0xa4] sm:$0xf] %v455
                  %v457 = vld [vmem:[%s371 + $0x150] sm:$0xf]
                  %458 = vst [vmem:[%s372 + $0xa8] sm:$0xf] %v457
                  %v459 = vld [vmem:[%s371 + $0x158] sm:$0xf]
                  %460 = vst [vmem:[%s372 + $0xac] sm:$0xf] %v459
                  %v461 = vld [vmem:[%s371 + $0x160] sm:$0xf]
                  %462 = vst [vmem:[%s372 + $0xb0] sm:$0xf] %v461
                  %v463 = vld [vmem:[%s371 + $0x168] sm:$0xf]
                  %464 = vst [vmem:[%s372 + $0xb4] sm:$0xf] %v463
                  %v465 = vld [vmem:[%s371 + $0x170] sm:$0xf]
                  %466 = vst [vmem:[%s372 + $0xb8] sm:$0xf] %v465
                  %v467 = vld [vmem:[%s371 + $0x178] sm:$0xf]
                  %468 = vst [vmem:[%s372 + $0xbc] sm:$0xf] %v467
                  %v469 = vld [vmem:[%s371 + $0x180] sm:$0xf]
                  %470 = vst [vmem:[%s372 + $0xc0] sm:$0xf] %v469
                  %v471 = vld [vmem:[%s371 + $0x188] sm:$0xf]
                  %472 = vst [vmem:[%s372 + $0xc4] sm:$0xf] %v471
                  %v473 = vld [vmem:[%s371 + $0x190] sm:$0xf]
                  %474 = vst [vmem:[%s372 + $0xc8] sm:$0xf] %v473
                  %v475 = vld [vmem:[%s371 + $0x198] sm:$0xf]
                  %476 = vst [vmem:[%s372 + $0xcc] sm:$0xf] %v475
                  %v477 = vld [vmem:[%s371 + $0x1a0] sm:$0xf]
                  %478 = vst [vmem:[%s372 + $0xd0] sm:$0xf] %v477
                  %v479 = vld [vmem:[%s371 + $0x1a8] sm:$0xf]
                  %480 = vst [vmem:[%s372 + $0xd4] sm:$0xf] %v479
                  %v481 = vld [vmem:[%s371 + $0x1b0] sm:$0xf]
                  %482 = vst [vmem:[%s372 + $0xd8] sm:$0xf] %v481
                  %v483 = vld [vmem:[%s371 + $0x1b8] sm:$0xf]
                  %484 = vst [vmem:[%s372 + $0xdc] sm:$0xf] %v483
                  %v485 = vld [vmem:[%s371 + $0x1c0] sm:$0xf]
                  %486 = vst [vmem:[%s372 + $0xe0] sm:$0xf] %v485
                  %v487 = vld [vmem:[%s371 + $0x1c8] sm:$0xf]
                  %488 = vst [vmem:[%s372 + $0xe4] sm:$0xf] %v487
                  %v489 = vld [vmem:[%s371 + $0x1d0] sm:$0xf]
                  %490 = vst [vmem:[%s372 + $0xe8] sm:$0xf] %v489
                  %v491 = vld [vmem:[%s371 + $0x1d8] sm:$0xf]
                  %492 = vst [vmem:[%s372 + $0xec] sm:$0xf] %v491
                  %v493 = vld [vmem:[%s371 + $0x1e0] sm:$0xf]
                  %494 = vst [vmem:[%s372 + $0xf0] sm:$0xf] %v493
                  %v495 = vld [vmem:[%s371 + $0x1e8] sm:$0xf]
                  %496 = vst [vmem:[%s372 + $0xf4] sm:$0xf] %v495
                  %v497 = vld [vmem:[%s371 + $0x1f0] sm:$0xf]
                  %498 = vst [vmem:[%s372 + $0xf8] sm:$0xf] %v497
                  %v499 = vld [vmem:[%s371 + $0x1f8] sm:$0xf]
                  %500 = vst [vmem:[%s372 + $0xfc] sm:$0xf] %v499
                $region59: #{_lambda_.135} parent=46 // loop_footer
                  %s370 = sadd.s32 1, %s366
                $region60: #{_lambda_.135} parent=46 // loop_footer_branch
                  %365 = sbr.rel target = $region56
                $region61: #{_lambda_.135} parent=46 // loop_exit
                  _
              $region47: #{_lambda_.135} parent=31 // pred_fallthru
                _
            $region32: #{_lambda_.135} parent=27 // pred_fallthru
              _
            // Predicated region
            $region33: #{_lambda_.135} parent=27 // pred_check
              _
            $region34: #{_lambda_.135} parent=27 // pred_check_branch
              %216 = sbr.rel (0) target = $region36
            $region35: #{_lambda_.135} parent=27 // pred_region
              loop: start=0, step=1, limit=1
              $region37: #{_lambda_.135} parent=35 // loop_pre_header
                _
              $region38: #{_lambda_.135} parent=35 // loop_header
                %s219 = sphi 0, %s223
                %p220 = scmp.ge.s32.totalorder %s219, 1
                %s224 = sphi %s210, %s210
                %s225 = sphi %s205, %s205
              $region39: #{_lambda_.135} parent=35 // loop_header_branch
                %222 = sbr.rel (%p220) target = $region43
              $region40: #{_lambda_.135} parent=35 // loop_body
                %v226 = vld [vmem:[%s224] sm:$0xf]
                %227 = vst [vmem:[%s225] sm:$0xf] %v226
                %v228 = vld [vmem:[%s224 + $0x8] sm:$0xf]
                %229 = vst [vmem:[%s225 + $0x4] sm:$0xf] %v228
                %v230 = vld [vmem:[%s224 + $0x10] sm:$0xf]
                %231 = vst [vmem:[%s225 + $0x8] sm:$0xf] %v230
                %v232 = vld [vmem:[%s224 + $0x18] sm:$0xf]
                %233 = vst [vmem:[%s225 + $0xc] sm:$0xf] %v232
                %v234 = vld [vmem:[%s224 + $0x20] sm:$0xf]
                %235 = vst [vmem:[%s225 + $0x10] sm:$0xf] %v234
                %v236 = vld [vmem:[%s224 + $0x28] sm:$0xf]
                %237 = vst [vmem:[%s225 + $0x14] sm:$0xf] %v236
                %v238 = vld [vmem:[%s224 + $0x30] sm:$0xf]
                %239 = vst [vmem:[%s225 + $0x18] sm:$0xf] %v238
                %v240 = vld [vmem:[%s224 + $0x38] sm:$0xf]
                %241 = vst [vmem:[%s225 + $0x1c] sm:$0xf] %v240
                %v242 = vld [vmem:[%s224 + $0x40] sm:$0xf]
                %243 = vst [vmem:[%s225 + $0x20] sm:$0xf] %v242
                %v244 = vld [vmem:[%s224 + $0x48] sm:$0xf]
                %245 = vst [vmem:[%s225 + $0x24] sm:$0xf] %v244
                %v246 = vld [vmem:[%s224 + $0x50] sm:$0xf]
                %247 = vst [vmem:[%s225 + $0x28] sm:$0xf] %v246
                %v248 = vld [vmem:[%s224 + $0x58] sm:$0xf]
                %249 = vst [vmem:[%s225 + $0x2c] sm:$0xf] %v248
                %v250 = vld [vmem:[%s224 + $0x60] sm:$0xf]
                %251 = vst [vmem:[%s225 + $0x30] sm:$0xf] %v250
                %v252 = vld [vmem:[%s224 + $0x68] sm:$0xf]
                %253 = vst [vmem:[%s225 + $0x34] sm:$0xf] %v252
                %v254 = vld [vmem:[%s224 + $0x70] sm:$0xf]
                %255 = vst [vmem:[%s225 + $0x38] sm:$0xf] %v254
                %v256 = vld [vmem:[%s224 + $0x78] sm:$0xf]
                %257 = vst [vmem:[%s225 + $0x3c] sm:$0xf] %v256
                %v258 = vld [vmem:[%s224 + $0x80] sm:$0xf]
                %259 = vst [vmem:[%s225 + $0x40] sm:$0xf] %v258
                %v260 = vld [vmem:[%s224 + $0x88] sm:$0xf]
                %261 = vst [vmem:[%s225 + $0x44] sm:$0xf] %v260
                %v262 = vld [vmem:[%s224 + $0x90] sm:$0xf]
                %263 = vst [vmem:[%s225 + $0x48] sm:$0xf] %v262
                %v264 = vld [vmem:[%s224 + $0x98] sm:$0xf]
                %265 = vst [vmem:[%s225 + $0x4c] sm:$0xf] %v264
                %v266 = vld [vmem:[%s224 + $0xa0] sm:$0xf]
                %267 = vst [vmem:[%s225 + $0x50] sm:$0xf] %v266
                %v268 = vld [vmem:[%s224 + $0xa8] sm:$0xf]
                %269 = vst [vmem:[%s225 + $0x54] sm:$0xf] %v268
                %v270 = vld [vmem:[%s224 + $0xb0] sm:$0xf]
                %271 = vst [vmem:[%s225 + $0x58] sm:$0xf] %v270
                %v272 = vld [vmem:[%s224 + $0xb8] sm:$0xf]
                %273 = vst [vmem:[%s225 + $0x5c] sm:$0xf] %v272
                %v274 = vld [vmem:[%s224 + $0xc0] sm:$0xf]
                %275 = vst [vmem:[%s225 + $0x60] sm:$0xf] %v274
                %v276 = vld [vmem:[%s224 + $0xc8] sm:$0xf]
                %277 = vst [vmem:[%s225 + $0x64] sm:$0xf] %v276
                %v278 = vld [vmem:[%s224 + $0xd0] sm:$0xf]
                %279 = vst [vmem:[%s225 + $0x68] sm:$0xf] %v278
                %v280 = vld [vmem:[%s224 + $0xd8] sm:$0xf]
                %281 = vst [vmem:[%s225 + $0x6c] sm:$0xf] %v280
                %v282 = vld [vmem:[%s224 + $0xe0] sm:$0xf]
                %283 = vst [vmem:[%s225 + $0x70] sm:$0xf] %v282
                %v284 = vld [vmem:[%s224 + $0xe8] sm:$0xf]
                %285 = vst [vmem:[%s225 + $0x74] sm:$0xf] %v284
                %v286 = vld [vmem:[%s224 + $0xf0] sm:$0xf]
                %287 = vst [vmem:[%s225 + $0x78] sm:$0xf] %v286
                %v288 = vld [vmem:[%s224 + $0xf8] sm:$0xf]
                %289 = vst [vmem:[%s225 + $0x7c] sm:$0xf] %v288
                %v290 = vld [vmem:[%s224 + $0x100] sm:$0xf]
                %291 = vst [vmem:[%s225 + $0x80] sm:$0xf] %v290
                %v292 = vld [vmem:[%s224 + $0x108] sm:$0xf]
                %293 = vst [vmem:[%s225 + $0x84] sm:$0xf] %v292
                %v294 = vld [vmem:[%s224 + $0x110] sm:$0xf]
                %295 = vst [vmem:[%s225 + $0x88] sm:$0xf] %v294
                %v296 = vld [vmem:[%s224 + $0x118] sm:$0xf]
                %297 = vst [vmem:[%s225 + $0x8c] sm:$0xf] %v296
                %v298 = vld [vmem:[%s224 + $0x120] sm:$0xf]
                %299 = vst [vmem:[%s225 + $0x90] sm:$0xf] %v298
                %v300 = vld [vmem:[%s224 + $0x128] sm:$0xf]
                %301 = vst [vmem:[%s225 + $0x94] sm:$0xf] %v300
                %v302 = vld [vmem:[%s224 + $0x130] sm:$0xf]
                %303 = vst [vmem:[%s225 + $0x98] sm:$0xf] %v302
                %v304 = vld [vmem:[%s224 + $0x138] sm:$0xf]
                %305 = vst [vmem:[%s225 + $0x9c] sm:$0xf] %v304
                %v306 = vld [vmem:[%s224 + $0x140] sm:$0xf]
                %307 = vst [vmem:[%s225 + $0xa0] sm:$0xf] %v306
                %v308 = vld [vmem:[%s224 + $0x148] sm:$0xf]
                %309 = vst [vmem:[%s225 + $0xa4] sm:$0xf] %v308
                %v310 = vld [vmem:[%s224 + $0x150] sm:$0xf]
                %311 = vst [vmem:[%s225 + $0xa8] sm:$0xf] %v310
                %v312 = vld [vmem:[%s224 + $0x158] sm:$0xf]
                %313 = vst [vmem:[%s225 + $0xac] sm:$0xf] %v312
                %v314 = vld [vmem:[%s224 + $0x160] sm:$0xf]
                %315 = vst [vmem:[%s225 + $0xb0] sm:$0xf] %v314
                %v316 = vld [vmem:[%s224 + $0x168] sm:$0xf]
                %317 = vst [vmem:[%s225 + $0xb4] sm:$0xf] %v316
                %v318 = vld [vmem:[%s224 + $0x170] sm:$0xf]
                %319 = vst [vmem:[%s225 + $0xb8] sm:$0xf] %v318
                %v320 = vld [vmem:[%s224 + $0x178] sm:$0xf]
                %321 = vst [vmem:[%s225 + $0xbc] sm:$0xf] %v320
                %v322 = vld [vmem:[%s224 + $0x180] sm:$0xf]
                %323 = vst [vmem:[%s225 + $0xc0] sm:$0xf] %v322
                %v324 = vld [vmem:[%s224 + $0x188] sm:$0xf]
                %325 = vst [vmem:[%s225 + $0xc4] sm:$0xf] %v324
                %v326 = vld [vmem:[%s224 + $0x190] sm:$0xf]
                %327 = vst [vmem:[%s225 + $0xc8] sm:$0xf] %v326
                %v328 = vld [vmem:[%s224 + $0x198] sm:$0xf]
                %329 = vst [vmem:[%s225 + $0xcc] sm:$0xf] %v328
                %v330 = vld [vmem:[%s224 + $0x1a0] sm:$0xf]
                %331 = vst [vmem:[%s225 + $0xd0] sm:$0xf] %v330
                %v332 = vld [vmem:[%s224 + $0x1a8] sm:$0xf]
                %333 = vst [vmem:[%s225 + $0xd4] sm:$0xf] %v332
                %v334 = vld [vmem:[%s224 + $0x1b0] sm:$0xf]
                %335 = vst [vmem:[%s225 + $0xd8] sm:$0xf] %v334
                %v336 = vld [vmem:[%s224 + $0x1b8] sm:$0xf]
                %337 = vst [vmem:[%s225 + $0xdc] sm:$0xf] %v336
                %v338 = vld [vmem:[%s224 + $0x1c0] sm:$0xf]
                %339 = vst [vmem:[%s225 + $0xe0] sm:$0xf] %v338
                %v340 = vld [vmem:[%s224 + $0x1c8] sm:$0xf]
                %341 = vst [vmem:[%s225 + $0xe4] sm:$0xf] %v340
                %v342 = vld [vmem:[%s224 + $0x1d0] sm:$0xf]
                %343 = vst [vmem:[%s225 + $0xe8] sm:$0xf] %v342
                %v344 = vld [vmem:[%s224 + $0x1d8] sm:$0xf]
                %345 = vst [vmem:[%s225 + $0xec] sm:$0xf] %v344
                %v346 = vld [vmem:[%s224 + $0x1e0] sm:$0xf]
                %347 = vst [vmem:[%s225 + $0xf0] sm:$0xf] %v346
                %v348 = vld [vmem:[%s224 + $0x1e8] sm:$0xf]
                %349 = vst [vmem:[%s225 + $0xf4] sm:$0xf] %v348
                %v350 = vld [vmem:[%s224 + $0x1f0] sm:$0xf]
                %351 = vst [vmem:[%s225 + $0xf8] sm:$0xf] %v350
                %v352 = vld [vmem:[%s224 + $0x1f8] sm:$0xf]
                %353 = vst [vmem:[%s225 + $0xfc] sm:$0xf] %v352
              $region41: #{_lambda_.135} parent=35 // loop_footer
                %s223 = sadd.s32 1, %s219
              $region42: #{_lambda_.135} parent=35 // loop_footer_branch
                %218 = sbr.rel target = $region38
              $region43: #{_lambda_.135} parent=35 // loop_exit
                _
            $region36: #{_lambda_.135} parent=27 // pred_fallthru
              _
          $region28: #{_lambda_.135} parent=23 // pred_fallthru
            _
          %501 = vnop
        $region24: #{_lambda_.135} parent=19 // pred_fallthru
          _
        // Predicated region
        $region62: #{_lambda_.135} parent=19 // pred_check
          %p502 = pneg %p105
        $region63: #{_lambda_.135} parent=19 // pred_check_branch
          %504 = sbr.rel (%p502) target = $region65
        $region64: #{_lambda_.135} parent=19 // pred_region
          %p505 = scmp.lt.s32.totalorder %s18, 1
          %s506 = scalar_select %p505, %s18, 1
          %s507 = scalar_lea.vmem %s2, %s506
        $region65: #{_lambda_.135} parent=19 // pred_fallthru
          _
        // Predicated region
        $region66: #{_lambda_.135} parent=19 // pred_check
          %p508 = pneg %p131
        $region67: #{_lambda_.135} parent=19 // pred_check_branch
          %510 = sbr.rel (%p508) target = $region69
        $region68: #{_lambda_.135} parent=19 // pred_region
          %p511 = scmp.lt.s32.totalorder %s18, 1
          %s512 = scalar_select %p511, %s18, 1
          %s513 = scalar_lea.vmem %s3, %s512
        $region69: #{_lambda_.135} parent=19 // pred_fallthru
          _
      $region20: #{_lambda_.135} parent=5 // pred_fallthru
        _
      %p514 = scmp.le.s32.totalorder 1, %s10
      %p515 = scmp.lt.s32.totalorder %s10, 3
      %p516 = pnand %p514, %p515
      %p517 = pneg %p516
      // Predicated region
      $region70: #{_lambda_.135} parent=5 // pred_check
        _
      $region71: #{_lambda_.135} parent=5 // pred_check_branch
        %519 = sbr.rel (%p516) target = $region73
      $region72: #{_lambda_.135} parent=5 // pred_region
        %s520 = ssub.s32 %s10, 1
        %s521 = sand.u32 %s72, 1
        %s522 = sand.u32 %s72, 1
        %s523 = smul.addr %s522, 256
        %s524 = scalar_lea.vmem [#allocation3], %s523
        // Predicated region
        $region74: #{_lambda_.135} parent=72 // pred_check
          %p525 = pneg %p85
        $region75: #{_lambda_.135} parent=72 // pred_check_branch
          %527 = sbr.rel (%p525) target = $region77
        $region76: #{_lambda_.135} parent=72 // pred_region
          _
        $region77: #{_lambda_.135} parent=72 // pred_fallthru
          _
        %s528 = smul.u32 2, %s20
        %s529 = smul.u32 4, %s22
        %p530 = scmp.lt.s32.totalorder %s528, 1
        %s531 = scalar_select %p530, %s528, 1
        %p532 = scmp.lt.s32.totalorder %s529, 3
        %s533 = scalar_select %p532, %s529, 3
        %s534 = smul.addr %s531, 4
        %s535 = sadd.s32 %s533, %s534
        %s536 = smul.addr %s535, 4
        %s537 = scalar_lea.vmem %s0, %s536
        %p538 = pneg %p57
        %p539 = pneg %p54
        %s540 = sand.u32 %s72, 1
        %s541 = sand.u32 %s72, 1
        %s542 = smul.addr %s541, 256
        %s543 = scalar_lea.vmem [#allocation3], %s542
        %p544 = pneg %p85
        %p545 = pneg %p82
        %p546 = scmp.lt.s32.totalorder %s21, 1
        %s547 = scalar_select %p546, %s21, 1
        %s548 = scalar_lea.vmem %s2, %s547
        %p549 = pneg %p111
        %p550 = pneg %p108
        %p551 = scmp.lt.s32.totalorder %s21, 1
        %s552 = scalar_select %p551, %s21, 1
        %s553 = scalar_lea.vmem %s3, %s552
        %p554 = pneg %p137
        %p555 = pneg %p134
        %p556 = pneg %p165
        %p557 = pneg %p162
        %s558 = sand.u32 %s152, 1
        %s559 = sand.u32 %s152, 1
        %s560 = smul.addr %s559, 16
        %s561 = scalar_lea.vmem [#allocation4], %s560
        %s562 = smul.u32 2, %s20
        %s563 = smul.u32 4, %s22
        %p564 = scmp.lt.s32.totalorder %s562, 1
        %s565 = scalar_select %p564, %s562, 1
        %p566 = scmp.lt.s32.totalorder %s563, 3
        %s567 = scalar_select %p566, %s563, 3
        %s568 = smul.addr %s565, 4
        %s569 = sadd.s32 %s567, %s568
        %s570 = smul.addr %s569, 4
        %s571 = scalar_lea.vmem %s0, %s570
        %s572 = smul.u32 2, %s20
        %s573 = smul.u32 4, %s22
        %s574 = smul.u32 64, %s22
        %p575 = scmp.lt.s32.totalorder %s21, 1
        %s576 = scalar_select %p575, %s21, 1
        %s577 = scalar_lea.vmem %s2, %s576
        %p578 = scmp.lt.s32.totalorder %s21, 1
        %s579 = scalar_select %p578, %s21, 1
        %s580 = scalar_lea.vmem %s3, %s579
        %s581 = smul.u32 2, %s20
        %p583 = scmp.eq.s32.totalorder %s22, 0
        // Predicated region
        $region78: #{_lambda_.135} parent=72 // pred_check
          %p584 = pneg %p583
        $region79: #{_lambda_.135} parent=72 // pred_check_branch
          %586 = sbr.rel (%p584) target = $region81
        $region80: #{_lambda_.135} parent=72 // pred_region
          %587 = vst [vmem:[#allocation2] sm:$0xff] 0.0
          %588 = vst [vmem:[#allocation2 + $0x8] sm:$0xff] 0.0
        $region81: #{_lambda_.135} parent=72 // pred_fallthru
          _
        %v589 = vld [vmem:[#allocation2] sm:$0xff]
        %v590 = vld [vmem:[#allocation2 + $0x8] sm:$0xff]
        %v591 = vld [vmem:[%s571] sm:$0xff]
        %v592 = vld [vmem:[%s571 + $0x8] sm:$0xff]
        %v593 = vld [vmem:[%s571 + $0x10] sm:$0xff]
        %v594 = vld [vmem:[%s571 + $0x18] sm:$0xff]
        %v595 = vld [vmem:[%s524] sm:$0xf]
        %v596 = vld [vmem:[%s524 + $0x4] sm:$0xf]
        %v597 = vld [vmem:[%s524 + $0x8] sm:$0xf]
        %v598 = vld [vmem:[%s524 + $0xc] sm:$0xf]
        %v599 = vld [vmem:[%s524 + $0x10] sm:$0xf]
        %v600 = vld [vmem:[%s524 + $0x14] sm:$0xf]
        %v601 = vld [vmem:[%s524 + $0x18] sm:$0xf]
        %v602 = vld [vmem:[%s524 + $0x1c] sm:$0xf]
        %v603 = vld [vmem:[%s524 + $0x20] sm:$0xf]
        %v604 = vld [vmem:[%s524 + $0x24] sm:$0xf]
        %v605 = vld [vmem:[%s524 + $0x28] sm:$0xf]
        %v606 = vld [vmem:[%s524 + $0x2c] sm:$0xf]
        %v607 = vld [vmem:[%s524 + $0x30] sm:$0xf]
        %v608 = vld [vmem:[%s524 + $0x34] sm:$0xf]
        %v609 = vld [vmem:[%s524 + $0x38] sm:$0xf]
        %v610 = vld [vmem:[%s524 + $0x3c] sm:$0xf]
        %v611 = vld [vmem:[%s524 + $0x40] sm:$0xf]
        %v612 = vld [vmem:[%s524 + $0x44] sm:$0xf]
        %v613 = vld [vmem:[%s524 + $0x48] sm:$0xf]
        %v614 = vld [vmem:[%s524 + $0x4c] sm:$0xf]
        %v615 = vld [vmem:[%s524 + $0x50] sm:$0xf]
        %v616 = vld [vmem:[%s524 + $0x54] sm:$0xf]
        %v617 = vld [vmem:[%s524 + $0x58] sm:$0xf]
        %v618 = vld [vmem:[%s524 + $0x5c] sm:$0xf]
        %v619 = vld [vmem:[%s524 + $0x60] sm:$0xf]
        %v620 = vld [vmem:[%s524 + $0x64] sm:$0xf]
        %v621 = vld [vmem:[%s524 + $0x68] sm:$0xf]
        %v622 = vld [vmem:[%s524 + $0x6c] sm:$0xf]
        %v623 = vld [vmem:[%s524 + $0x70] sm:$0xf]
        %v624 = vld [vmem:[%s524 + $0x74] sm:$0xf]
        %v625 = vld [vmem:[%s524 + $0x78] sm:$0xf]
        %v626 = vld [vmem:[%s524 + $0x7c] sm:$0xf]
        %v627 = vld [vmem:[%s524 + $0x80] sm:$0xf]
        %v628 = vld [vmem:[%s524 + $0x84] sm:$0xf]
        %v629 = vld [vmem:[%s524 + $0x88] sm:$0xf]
        %v630 = vld [vmem:[%s524 + $0x8c] sm:$0xf]
        %v631 = vld [vmem:[%s524 + $0x90] sm:$0xf]
        %v632 = vld [vmem:[%s524 + $0x94] sm:$0xf]
        %v633 = vld [vmem:[%s524 + $0x98] sm:$0xf]
        %v634 = vld [vmem:[%s524 + $0x9c] sm:$0xf]
        %v635 = vld [vmem:[%s524 + $0xa0] sm:$0xf]
        %v636 = vld [vmem:[%s524 + $0xa4] sm:$0xf]
        %v637 = vld [vmem:[%s524 + $0xa8] sm:$0xf]
        %v638 = vld [vmem:[%s524 + $0xac] sm:$0xf]
        %v639 = vld [vmem:[%s524 + $0xb0] sm:$0xf]
        %v640 = vld [vmem:[%s524 + $0xb4] sm:$0xf]
        %v641 = vld [vmem:[%s524 + $0xb8] sm:$0xf]
        %v642 = vld [vmem:[%s524 + $0xbc] sm:$0xf]
        %v643 = vld [vmem:[%s524 + $0xc0] sm:$0xf]
        %v644 = vld [vmem:[%s524 + $0xc4] sm:$0xf]
        %v645 = vld [vmem:[%s524 + $0xc8] sm:$0xf]
        %v646 = vld [vmem:[%s524 + $0xcc] sm:$0xf]
        %v647 = vld [vmem:[%s524 + $0xd0] sm:$0xf]
        %v648 = vld [vmem:[%s524 + $0xd4] sm:$0xf]
        %v649 = vld [vmem:[%s524 + $0xd8] sm:$0xf]
        %v650 = vld [vmem:[%s524 + $0xdc] sm:$0xf]
        %v651 = vld [vmem:[%s524 + $0xe0] sm:$0xf]
        %v652 = vld [vmem:[%s524 + $0xe4] sm:$0xf]
        %v653 = vld [vmem:[%s524 + $0xe8] sm:$0xf]
        %v654 = vld [vmem:[%s524 + $0xec] sm:$0xf]
        %v655 = vld [vmem:[%s524 + $0xf0] sm:$0xf]
        %v656 = vld [vmem:[%s524 + $0xf4] sm:$0xf]
        %v657 = vld [vmem:[%s524 + $0xf8] sm:$0xf]
        %v658 = vld [vmem:[%s524 + $0xfc] sm:$0xf]
        %v663 = vunpack.c.l.b16 %v591
        %v664 = vunpack.c.h.b16 %v591
        %v665 = vunpack.c.l.b16 %v592
        %v666 = vunpack.c.h.b16 %v592
        %v667 = vunpack.c.l.b16 %v593
        %v668 = vunpack.c.h.b16 %v593
        %v669 = vunpack.c.l.b16 %v594
        %v670 = vunpack.c.h.b16 %v594
        %v671 = vpack.c.b16 %v667, %v663
        %v672 = vpack.c.b16 %v668, %v664
        %v673 = vpack.c.b16 %v669, %v665
        %v674 = vpack.c.b16 %v670, %v666
        %v743 = vunpack.c.l.b16 %v595
        %v744 = vunpack.c.l.b16 %v596
        %v745 = vunpack.c.l.b16 %v597
        %v746 = vunpack.c.l.b16 %v598
        %v747 = vunpack.c.l.b16 %v599
        %v748 = vunpack.c.l.b16 %v600
        %v749 = vunpack.c.l.b16 %v601
        %v750 = vunpack.c.l.b16 %v602
        %v751 = vunpack.c.l.b16 %v603
        %v752 = vunpack.c.l.b16 %v604
        %v753 = vunpack.c.l.b16 %v605
        %v754 = vunpack.c.l.b16 %v606
        %v755 = vunpack.c.l.b16 %v607
        %v756 = vunpack.c.l.b16 %v608
        %v757 = vunpack.c.l.b16 %v609
        %v758 = vunpack.c.l.b16 %v610
        %v759 = vunpack.c.l.b16 %v611
        %v760 = vunpack.c.l.b16 %v612
        %v761 = vunpack.c.l.b16 %v613
        %v762 = vunpack.c.l.b16 %v614
        %v763 = vunpack.c.l.b16 %v615
        %v764 = vunpack.c.l.b16 %v616
        %v765 = vunpack.c.l.b16 %v617
        %v766 = vunpack.c.l.b16 %v618
        %v767 = vunpack.c.l.b16 %v619
        %v768 = vunpack.c.l.b16 %v620
        %v769 = vunpack.c.l.b16 %v621
        %v770 = vunpack.c.l.b16 %v622
        %v771 = vunpack.c.l.b16 %v623
        %v772 = vunpack.c.l.b16 %v624
        %v773 = vunpack.c.l.b16 %v625
        %v774 = vunpack.c.l.b16 %v626
        %v775 = vunpack.c.l.b16 %v627
        %v776 = vunpack.c.l.b16 %v628
        %v777 = vunpack.c.l.b16 %v629
        %v778 = vunpack.c.l.b16 %v630
        %v779 = vunpack.c.l.b16 %v631
        %v780 = vunpack.c.l.b16 %v632
        %v781 = vunpack.c.l.b16 %v633
        %v782 = vunpack.c.l.b16 %v634
        %v783 = vunpack.c.l.b16 %v635
        %v784 = vunpack.c.l.b16 %v636
        %v785 = vunpack.c.l.b16 %v637
        %v786 = vunpack.c.l.b16 %v638
        %v787 = vunpack.c.l.b16 %v639
        %v788 = vunpack.c.l.b16 %v640
        %v789 = vunpack.c.l.b16 %v641
        %v790 = vunpack.c.l.b16 %v642
        %v791 = vunpack.c.l.b16 %v643
        %v792 = vunpack.c.l.b16 %v644
        %v793 = vunpack.c.l.b16 %v645
        %v794 = vunpack.c.l.b16 %v646
        %v795 = vunpack.c.l.b16 %v647
        %v796 = vunpack.c.l.b16 %v648
        %v797 = vunpack.c.l.b16 %v649
        %v798 = vunpack.c.l.b16 %v650
        %v799 = vunpack.c.l.b16 %v651
        %v800 = vunpack.c.l.b16 %v652
        %v801 = vunpack.c.l.b16 %v653
        %v802 = vunpack.c.l.b16 %v654
        %v803 = vunpack.c.l.b16 %v655
        %v804 = vunpack.c.l.b16 %v656
        %v805 = vunpack.c.l.b16 %v657
        %v806 = vunpack.c.l.b16 %v658
        %v807 = vpack.c.b16 %v744, %v743
        %v808 = vpack.c.b16 %v746, %v745
        %v809 = vpack.c.b16 %v748, %v747
        %v810 = vpack.c.b16 %v750, %v749
        %v811 = vpack.c.b16 %v752, %v751
        %v812 = vpack.c.b16 %v754, %v753
        %v813 = vpack.c.b16 %v756, %v755
        %v814 = vpack.c.b16 %v758, %v757
        %v815 = vpack.c.b16 %v760, %v759
        %v816 = vpack.c.b16 %v762, %v761
        %v817 = vpack.c.b16 %v764, %v763
        %v818 = vpack.c.b16 %v766, %v765
        %v819 = vpack.c.b16 %v768, %v767
        %v820 = vpack.c.b16 %v770, %v769
        %v821 = vpack.c.b16 %v772, %v771
        %v822 = vpack.c.b16 %v774, %v773
        %v823 = vpack.c.b16 %v776, %v775
        %v824 = vpack.c.b16 %v778, %v777
        %v825 = vpack.c.b16 %v780, %v779
        %v826 = vpack.c.b16 %v782, %v781
        %v827 = vpack.c.b16 %v784, %v783
        %v828 = vpack.c.b16 %v786, %v785
        %v829 = vpack.c.b16 %v788, %v787
        %v830 = vpack.c.b16 %v790, %v789
        %v831 = vpack.c.b16 %v792, %v791
        %v832 = vpack.c.b16 %v794, %v793
        %v833 = vpack.c.b16 %v796, %v795
        %v834 = vpack.c.b16 %v798, %v797
        %v835 = vpack.c.b16 %v800, %v799
        %v836 = vpack.c.b16 %v802, %v801
        %v837 = vpack.c.b16 %v804, %v803
        %v838 = vpack.c.b16 %v806, %v805
        %871 = vmatprep.subr.bf16.mxu0 0
        %872 = vmatpush1.bf16.msra.mxu0 %v807
        %873 = vmatprep.subr.bf16.mxu0 0
        %874 = vmatpush1.bf16.msra.mxu0 %v808
        %875 = vmatprep.subr.bf16.mxu0 0
        %876 = vmatpush1.bf16.msra.mxu0 %v809
        %877 = vmatprep.subr.bf16.mxu0 0
        %878 = vmatpush1.bf16.msra.mxu0 %v810
        %879 = vmatprep.subr.bf16.mxu0 0
        %880 = vmatpush1.bf16.msra.mxu0 %v811
        %881 = vmatprep.subr.bf16.mxu0 0
        %882 = vmatpush1.bf16.msra.mxu0 %v812
        %883 = vmatprep.subr.bf16.mxu0 0
        %884 = vmatpush1.bf16.msra.mxu0 %v813
        %885 = vmatprep.subr.bf16.mxu0 0
        %886 = vmatpush1.bf16.msra.mxu0 %v814
        %887 = vmatprep.subr.bf16.mxu0 0
        %888 = vmatpush1.bf16.msra.mxu0 %v815
        %889 = vmatprep.subr.bf16.mxu0 0
        %890 = vmatpush1.bf16.msra.mxu0 %v816
        %891 = vmatprep.subr.bf16.mxu0 0
        %892 = vmatpush1.bf16.msra.mxu0 %v817
        %893 = vmatprep.subr.bf16.mxu0 0
        %894 = vmatpush1.bf16.msra.mxu0 %v818
        %895 = vmatprep.subr.bf16.mxu0 0
        %896 = vmatpush1.bf16.msra.mxu0 %v819
        %897 = vmatprep.subr.bf16.mxu0 0
        %898 = vmatpush1.bf16.msra.mxu0 %v820
        %899 = vmatprep.subr.bf16.mxu0 0
        %900 = vmatpush1.bf16.msra.mxu0 %v821
        %901 = vmatprep.subr.bf16.mxu0 0
        %902 = vmatpush1.bf16.msra.mxu0 %v822
        %903 = vmatprep.mubr.bf16.mxu0 %v672
        %904 = vmatmul.mubr.bf16.gmra.mrb[0].mxu0 %v671
        %v905 = vpop.f32.mrb[0].mxu0
        %v906 = vadd.f32 0.0, %v905
        %v907 = vpop.f32.mrb[0].mxu0
        %v908 = vpop.f32.mrb[0].mxu0
        %v909 = vadd.f32 0.0, %v908
        %v910 = vpop.f32.mrb[0].mxu0
        %911 = vdwg.mxu0
        %912 = vmatprep.subr.bf16.mxu0 0
        %913 = vmatpush1.bf16.msra.mxu0 %v823
        %914 = vmatprep.subr.bf16.mxu0 0
        %915 = vmatpush1.bf16.msra.mxu0 %v824
        %916 = vmatprep.subr.bf16.mxu0 0
        %917 = vmatpush1.bf16.msra.mxu0 %v825
        %918 = vmatprep.subr.bf16.mxu0 0
        %919 = vmatpush1.bf16.msra.mxu0 %v826
        %920 = vmatprep.subr.bf16.mxu0 0
        %921 = vmatpush1.bf16.msra.mxu0 %v827
        %922 = vmatprep.subr.bf16.mxu0 0
        %923 = vmatpush1.bf16.msra.mxu0 %v828
        %924 = vmatprep.subr.bf16.mxu0 0
        %925 = vmatpush1.bf16.msra.mxu0 %v829
        %926 = vmatprep.subr.bf16.mxu0 0
        %927 = vmatpush1.bf16.msra.mxu0 %v830
        %928 = vmatprep.subr.bf16.mxu0 0
        %929 = vmatpush1.bf16.msra.mxu0 %v831
        %930 = vmatprep.subr.bf16.mxu0 0
        %931 = vmatpush1.bf16.msra.mxu0 %v832
        %932 = vmatprep.subr.bf16.mxu0 0
        %933 = vmatpush1.bf16.msra.mxu0 %v833
        %934 = vmatprep.subr.bf16.mxu0 0
        %935 = vmatpush1.bf16.msra.mxu0 %v834
        %936 = vmatprep.subr.bf16.mxu0 0
        %937 = vmatpush1.bf16.msra.mxu0 %v835
        %938 = vmatprep.subr.bf16.mxu0 0
        %939 = vmatpush1.bf16.msra.mxu0 %v836
        %940 = vmatprep.subr.bf16.mxu0 0
        %941 = vmatpush1.bf16.msra.mxu0 %v837
        %942 = vmatprep.subr.bf16.mxu0 0
        %943 = vmatpush1.bf16.msra.mxu0 %v838
        %944 = vmatprep.mubr.bf16.mxu0 %v674
        %945 = vmatmul.mubr.bf16.gmra.mrb[0].mxu0 %v673
        %v946 = vpop.f32.mrb[0].mxu0
        %v947 = vadd.f32 %v906, %v946
        %v948 = vpop.f32.mrb[0].mxu0
        %v949 = vpop.f32.mrb[0].mxu0
        %v950 = vadd.f32 %v909, %v949
        %v951 = vpop.f32.mrb[0].mxu0
        %952 = vdwg.mxu0
        %v953 = vadd.f32 %v589, %v947
        %v954 = vadd.f32 %v590, %v950
        %955 = vst [vmem:[#allocation2] sm:$0xff] %v953
        %956 = vst [vmem:[#allocation2 + $0x8] sm:$0xff] %v954
        // Predicated region
        $region82: #{_lambda_.135} parent=72 // pred_check
          %p957 = pneg %p583
        $region83: #{_lambda_.135} parent=72 // pred_check_branch
          %959 = sbr.rel (%p957) target = $region85
        $region84: #{_lambda_.135} parent=72 // pred_region
          %v960 = vld [vmem:[#allocation2] sm:$0xff]
          %v961 = vld [vmem:[#allocation2 + $0x8] sm:$0xff]
          %v962 = vld [vmem:[%s577] sm:$0x1]
          %v964 = vlaneseq
          %v965 = vshrl.u32 %v964, 7
          %v966 = vsub.s32 0, %v965
          %v967 = vrot.slane %v962, %v966
          %v969 = vmul.f32 %v960, %v967
          %v970 = vmul.f32 %v961, %v967
          %v971 = vld [vmem:[%s580] sm:$0x1]
          %v973 = vlaneseq
          %v974 = vshrl.u32 %v973, 7
          %v975 = vsub.s32 0, %v974
          %v976 = vrot.slane %v971, %v975
          %v978 = vadd.f32 %v969, %v976
          %v979 = vadd.f32 %v970, %v976
          %v980 = vmax.f32 %v978, 0.0
          %v981 = vmax.f32 %v979, 0.0
          %982 = vst [vmem:[%s561] sm:$0xff] %v980
          %983 = vst [vmem:[%s561 + $0x8] sm:$0xff] %v981
        $region85: #{_lambda_.135} parent=72 // pred_fallthru
          _
        %s984 = sand.u32 %s152, 1
        %s985 = sand.u32 %s152, 1
        %s986 = smul.addr %s985, 16
        %s987 = scalar_lea.vmem [#allocation4], %s986
        // Predicated region
        $region86: #{_lambda_.135} parent=72 // pred_check
          %p988 = pneg %p162
        $region87: #{_lambda_.135} parent=72 // pred_check_branch
          %990 = sbr.rel (%p988) target = $region89
        $region88: #{_lambda_.135} parent=72 // pred_region
          %s991 = smul.u32 2, %s20
          %s992 = smul.addr %s991, 2
          %s993 = sadd.s32 %s21, %s992
          %s994 = smul.addr %s993, 8
          %s995 = scalar_lea.vmem %s4, %s994
          // Predicated region
          $region90: #{_lambda_.135} parent=88 // pred_check
            _
          $region91: #{_lambda_.135} parent=88 // pred_check_branch
            %997 = sbr.rel (0) target = $region93
          $region92: #{_lambda_.135} parent=88 // pred_region
            // Predicated region
            $region94: #{_lambda_.135} parent=92 // pred_check
              _
            $region95: #{_lambda_.135} parent=92 // pred_check_branch
              %999 = sbr.rel (0) target = $region97
            $region96: #{_lambda_.135} parent=92 // pred_region
              // Predicated region
              $region109: #{_lambda_.135} parent=96 // pred_check
                _
              $region110: #{_lambda_.135} parent=96 // pred_check_branch
                %1016 = sbr.rel (0) target = $region112
              $region111: #{_lambda_.135} parent=96 // pred_region
                loop: start=0, step=1, limit=1
                $region113: #{_lambda_.135} parent=111 // loop_pre_header
                  _
                $region114: #{_lambda_.135} parent=111 // loop_header
                  %s1018 = sphi 0, %s1022
                  %p1019 = scmp.ge.s32.totalorder %s1018, 1
                  %s1023 = sphi %s987, %s987
                  %s1024 = sphi %s995, %s995
                $region115: #{_lambda_.135} parent=111 // loop_header_branch
                  %1021 = sbr.rel (%p1019) target = $region119
                $region116: #{_lambda_.135} parent=111 // loop_body
                  %v1025 = vld [vmem:[%s1023] sm:$0xff]
                  %1026 = vst [vmem:[%s1024] sm:$0xff] %v1025
                  %v1027 = vld [vmem:[%s1023 + $0x8] sm:$0xff]
                  %1028 = vst [vmem:[%s1024 + $0x10] sm:$0xff] %v1027
                $region117: #{_lambda_.135} parent=111 // loop_footer
                  %s1022 = sadd.s32 1, %s1018
                $region118: #{_lambda_.135} parent=111 // loop_footer_branch
                  %1017 = sbr.rel target = $region114
                $region119: #{_lambda_.135} parent=111 // loop_exit
                  _
              $region112: #{_lambda_.135} parent=96 // pred_fallthru
                _
              // Predicated region
              $region120: #{_lambda_.135} parent=96 // pred_check
                _
              $region121: #{_lambda_.135} parent=96 // pred_check_branch
                %1030 = sbr.rel target = $region123
              $region122: #{_lambda_.135} parent=96 // pred_region
                _
              $region123: #{_lambda_.135} parent=96 // pred_fallthru
                _
            $region97: #{_lambda_.135} parent=92 // pred_fallthru
              _
            // Predicated region
            $region98: #{_lambda_.135} parent=92 // pred_check
              _
            $region99: #{_lambda_.135} parent=92 // pred_check_branch
              %1001 = sbr.rel target = $region101
            $region100: #{_lambda_.135} parent=92 // pred_region
              loop: start=0, step=1, limit=1
              $region102: #{_lambda_.135} parent=100 // loop_pre_header
                _
              $region103: #{_lambda_.135} parent=100 // loop_header
                %s1004 = sphi 0, %s1008
                %p1005 = scmp.ge.s32.totalorder %s1004, 1
                %s1009 = sphi %s987, %s987
                %s1010 = sphi %s995, %s995
              $region104: #{_lambda_.135} parent=100 // loop_header_branch
                %1007 = sbr.rel (%p1005) target = $region108
              $region105: #{_lambda_.135} parent=100 // loop_body
                %v1011 = vld [vmem:[%s1009] sm:$0xff]
                %1012 = vst [vmem:[%s1010] sm:$0xff] %v1011
                %v1013 = vld [vmem:[%s1009 + $0x8] sm:$0xff]
                %1014 = vst [vmem:[%s1010 + $0x10] sm:$0xff] %v1013
              $region106: #{_lambda_.135} parent=100 // loop_footer
                %s1008 = sadd.s32 1, %s1004
              $region107: #{_lambda_.135} parent=100 // loop_footer_branch
                %1003 = sbr.rel target = $region103
              $region108: #{_lambda_.135} parent=100 // loop_exit
                _
            $region101: #{_lambda_.135} parent=92 // pred_fallthru
              _
          $region93: #{_lambda_.135} parent=88 // pred_fallthru
            _
          %1031 = vnop
        $region89: #{_lambda_.135} parent=72 // pred_fallthru
          _
      $region73: #{_lambda_.135} parent=5 // pred_fallthru
        _
      %p1032 = scmp.le.s32.totalorder 2, %s10
      // Predicated region
      $region124: #{_lambda_.135} parent=5 // pred_check
        %p1033 = pneg %p1032
      $region125: #{_lambda_.135} parent=5 // pred_check_branch
        %1035 = sbr.rel (%p1033) target = $region127
      $region126: #{_lambda_.135} parent=5 // pred_region
        %s1036 = ssub.s32 %s10, 2
        // Predicated region
        $region128: #{_lambda_.135} parent=126 // pred_check
          %p1037 = pneg %p168
        $region129: #{_lambda_.135} parent=126 // pred_check_branch
          %1039 = sbr.rel (%p1037) target = $region131
        $region130: #{_lambda_.135} parent=126 // pred_region
          %s1040 = sand.u32 %s153, 1
          %s1041 = sand.u32 %s153, 1
          %s1042 = smul.addr %s1041, 16
          %s1043 = scalar_lea.vmem [#allocation4], %s1042
        $region131: #{_lambda_.135} parent=126 // pred_fallthru
          _
      $region127: #{_lambda_.135} parent=5 // pred_fallthru
        _
    $region6: #{_lambda_.135} parent=1 // loop_footer
      %s14 = sadd.s32 1, %s10
    $region7: #{_lambda_.135} parent=1 // loop_footer_branch
      %9 = sbr.rel target = $region3
    $region8: #{_lambda_.135} parent=1 // loop_exit
      _

// kernel: tile.24
$region0: #{tile.24}
  #allocation0 [shape = 's32[1]{0}', space=sflag, size = 0x4, scoped, tag = 'scoped memory for tile.24']
  %s0 = inlined_call_operand.vmem [shape: f32[5], index: 0, kind: input, shape index: {}]
  %s1 = inlined_call_operand.vmem [shape: f32[4,5], index: 1, kind: output, shape index: {}]
  // Predicated region
  $region2: #{tile.24} parent=0 // pred_check
    _
  $region3: #{tile.24} parent=0 // pred_check_branch
    %3 = sbr.rel (0) target = $region5
  $region4: #{tile.24} parent=0 // pred_region
    _
  $region5: #{tile.24} parent=0 // pred_fallthru
    _
  %v4 = vld [vmem:[%s0] ss:$0 sm:$0xff]
  %5 = vst [vmem:[%s1] sm:$0xf] %v4

// kernel: tile.25
$region0: #{tile.25}
  %s0 = inlined_call_operand.vmem [shape: f32[4,5], index: 0, kind: input, shape index: {}]
  %s1 = inlined_call_operand.vmem [shape: f32[1,20], index: 1, kind: output, shape index: {}]
  $region1: #{tile.25} parent=0
    #allocation0 [shape = 'u8[4096]{0}', space=vmem, size = 0x1000, scoped, tag = 'scoped mem for output reshape']
    #allocation1 [shape = 'u8[4096]{0}', space=vmem, size = 0x1000, scoped, tag = 'scoped mem for input reshape']
    %s3 = sshllo.u32 0, 4
    %v4 = vld [vmem:[%s0] sm:%s3]
    %5 = vst [vmem:[#allocation1] sm:%s3] %v4
    %v6 = vld [vmem:[#allocation1] sm:$0x1]
    %vm7 = vcmask 39936
    %8 = vst.msk [vmem:[#allocation0] sm:$0x1] %vm7, %v6
    %s9 = scalar_lea.vmem [#allocation1], 3
    %v10 = vld [vmem:[%s9] sm:$0x1]
    %11 = vrot.lane.b32.xlu0 %v10, 15
    %v12 = vpop.permute.xlu0 %11
    %vm13 = vcmask 162936
    %14 = vst.msk [vmem:[#allocation0] sm:$0x1] %vm13, %v12
    %s15 = scalar_lea.vmem [#allocation1], 2
    %v16 = vld [vmem:[%s15] sm:$0x1]
    %17 = vrot.lane.b32.xlu0 %v16, 10
    %v18 = vpop.permute.xlu0 %17
    %vm19 = vcmask 121936
    %20 = vst.msk [vmem:[#allocation0] sm:$0x1] %vm19, %v18
    %s21 = scalar_lea.vmem [#allocation1], 1
    %v22 = vld [vmem:[%s21] sm:$0x1]
    %23 = vrot.lane.b32.xlu0 %v22, 5
    %v24 = vpop.permute.xlu0 %23
    %vm25 = vcmask 80936
    %26 = vst.msk [vmem:[#allocation0] sm:$0x1] %vm25, %v24
    %s28 = sshllo.u32 0, 1
    %v30 = vld [vmem:[#allocation0] sm:%s28]
    %s31 = sshllo.u32 0, 1
    %32 = vst [vmem:[%s1] sm:%s31] %v30

// kernel: _lambda_.145
$region0: #{_lambda_.145}
  #allocation0 [shape = 'u32[]', space=smem, size = 0x4, offset = 0x4, fixed_abs, tag = 'smem constant byte address 0x4 - core index']
  #allocation1 [shape = 'u32[144,128]{1,0:T(1,128)}', space=vmem, size = 0x12000, scoped, tag = 'internal scratch']
  #allocation2 [shape = 'f32[128,128]{1,0:T(8,128)}', space=vmem, size = 0x10000, scoped, tag = 'scratch operand']
  %s0 = inlined_call_operand.vmem [shape: bf16[128,48], index: 0, kind: input, shape index: {}]
  %s1 = inlined_call_operand.vmem [shape: bf16[48,128], index: 1, kind: input, shape index: {}]
  %s2 = inlined_call_operand.vmem [shape: f32[1,128], index: 2, kind: input, shape index: {}]
  %s3 = inlined_call_operand.vmem [shape: f32[1,128], index: 3, kind: input, shape index: {}]
  %s4 = inlined_call_operand.vmem [shape: f32[128,128], index: 4, kind: output, shape index: {}]
  %s5 = sld [smem:[#allocation0]]
  $region34: #{_lambda_.145} parent=0
    _
  %s7 = ssub.s32 1, %s5
  %s8 = scalar_select 0, %s7, %s5
  // Predicated region
  $region2: #{_lambda_.145} parent=0 // pred_check
    _
  $region3: #{_lambda_.145} parent=0 // pred_check_branch
    %10 = sbr.rel (0) target = $region5
  $region4: #{_lambda_.145} parent=0 // pred_region
    _
  $region5: #{_lambda_.145} parent=0 // pred_fallthru
    _
  // Predicated region
  $region6: #{_lambda_.145} parent=0 // pred_check
    _
  $region7: #{_lambda_.145} parent=0 // pred_check_branch
    %12 = sbr.rel (0) target = $region9
  $region8: #{_lambda_.145} parent=0 // pred_region
    _
  $region9: #{_lambda_.145} parent=0 // pred_fallthru
    _
  // Predicated region
  $region10: #{_lambda_.145} parent=0 // pred_check
    _
  $region11: #{_lambda_.145} parent=0 // pred_check_branch
    %14 = sbr.rel (0) target = $region13
  $region12: #{_lambda_.145} parent=0 // pred_region
    _
  $region13: #{_lambda_.145} parent=0 // pred_fallthru
    _
  // Predicated region
  $region14: #{_lambda_.145} parent=0 // pred_check
    _
  $region15: #{_lambda_.145} parent=0 // pred_check_branch
    %16 = sbr.rel (0) target = $region17
  $region16: #{_lambda_.145} parent=0 // pred_region
    _
  $region17: #{_lambda_.145} parent=0 // pred_fallthru
    _
  %p18 = scmp.eq.s32.totalorder 0, 0
  // Predicated region
  $region18: #{_lambda_.145} parent=0 // pred_check
    %p19 = pneg %p18
  $region19: #{_lambda_.145} parent=0 // pred_check_branch
    %21 = sbr.rel (%p19) target = $region21
  $region20: #{_lambda_.145} parent=0 // pred_region
    %22 = vst [vmem:[#allocation2] sm:$0xff] 0.0
    %23 = vst [vmem:[#allocation2 + $0x8] sm:$0xff] 0.0
    %24 = vst [vmem:[#allocation2 + $0x10] sm:$0xff] 0.0
    %25 = vst [vmem:[#allocation2 + $0x18] sm:$0xff] 0.0
    %26 = vst [vmem:[#allocation2 + $0x20] sm:$0xff] 0.0
    %27 = vst [vmem:[#allocation2 + $0x28] sm:$0xff] 0.0
    %28 = vst [vmem:[#allocation2 + $0x30] sm:$0xff] 0.0
    %29 = vst [vmem:[#allocation2 + $0x38] sm:$0xff] 0.0
    %30 = vst [vmem:[#allocation2 + $0x40] sm:$0xff] 0.0
    %31 = vst [vmem:[#allocation2 + $0x48] sm:$0xff] 0.0
    %32 = vst [vmem:[#allocation2 + $0x50] sm:$0xff] 0.0
    %33 = vst [vmem:[#allocation2 + $0x58] sm:$0xff] 0.0
    %34 = vst [vmem:[#allocation2 + $0x60] sm:$0xff] 0.0
    %35 = vst [vmem:[#allocation2 + $0x68] sm:$0xff] 0.0
    %36 = vst [vmem:[#allocation2 + $0x70] sm:$0xff] 0.0
    %37 = vst [vmem:[#allocation2 + $0x78] sm:$0xff] 0.0
  $region21: #{_lambda_.145} parent=0 // pred_fallthru
    _
  %v38 = vld [vmem:[#allocation2] sm:$0xff]
  %v39 = vld [vmem:[#allocation2 + $0x8] sm:$0xff]
  %v40 = vld [vmem:[#allocation2 + $0x10] sm:$0xff]
  %v41 = vld [vmem:[#allocation2 + $0x18] sm:$0xff]
  %v42 = vld [vmem:[#allocation2 + $0x20] sm:$0xff]
  %v43 = vld [vmem:[#allocation2 + $0x28] sm:$0xff]
  %v44 = vld [vmem:[#allocation2 + $0x30] sm:$0xff]
  %v45 = vld [vmem:[#allocation2 + $0x38] sm:$0xff]
  %v46 = vld [vmem:[#allocation2 + $0x40] sm:$0xff]
  %v47 = vld [vmem:[#allocation2 + $0x48] sm:$0xff]
  %v48 = vld [vmem:[#allocation2 + $0x50] sm:$0xff]
  %v49 = vld [vmem:[#allocation2 + $0x58] sm:$0xff]
  %v50 = vld [vmem:[#allocation2 + $0x60] sm:$0xff]
  %v51 = vld [vmem:[#allocation2 + $0x68] sm:$0xff]
  %v52 = vld [vmem:[#allocation2 + $0x70] sm:$0xff]
  %v53 = vld [vmem:[#allocation2 + $0x78] sm:$0xff]
  %v54 = vld [vmem:[%s0] sm:$0xf]
  %v55 = vld [vmem:[%s0 + $0x4] sm:$0xf]
  %v56 = vld [vmem:[%s0 + $0x8] sm:$0xf]
  %v57 = vld [vmem:[%s0 + $0xc] sm:$0xf]
  %v58 = vld [vmem:[%s0 + $0x10] sm:$0xf]
  %v59 = vld [vmem:[%s0 + $0x14] sm:$0xf]
  %v60 = vld [vmem:[%s0 + $0x18] sm:$0xf]
  %v61 = vld [vmem:[%s0 + $0x1c] sm:$0xf]
  %v62 = vld [vmem:[%s0 + $0x20] sm:$0xf]
  %v63 = vld [vmem:[%s0 + $0x24] sm:$0xf]
  %v64 = vld [vmem:[%s0 + $0x28] sm:$0xf]
  %v65 = vld [vmem:[%s0 + $0x2c] sm:$0xf]
  %v66 = vld [vmem:[%s0 + $0x30] sm:$0xf]
  %v67 = vld [vmem:[%s0 + $0x34] sm:$0xf]
  %v68 = vld [vmem:[%s0 + $0x38] sm:$0xf]
  %v69 = vld [vmem:[%s0 + $0x3c] sm:$0xf]
  %v70 = vld [vmem:[%s1] sm:$0xf]
  %v71 = vld [vmem:[%s1 + $0x4] sm:$0xf]
  %v72 = vld [vmem:[%s1 + $0x8] sm:$0xf]
  %v73 = vld [vmem:[%s1 + $0xc] sm:$0xf]
  %v74 = vld [vmem:[%s1 + $0x10] sm:$0xf]
  %v75 = vld [vmem:[%s1 + $0x14] sm:$0xf]
  %v92 = vunpack.c.l.b16 %v54
  %v93 = vunpack.c.l.b16 %v55
  %v94 = vunpack.c.l.b16 %v56
  %v95 = vunpack.c.l.b16 %v57
  %v96 = vunpack.c.l.b16 %v58
  %v97 = vunpack.c.l.b16 %v59
  %v98 = vunpack.c.l.b16 %v60
  %v99 = vunpack.c.l.b16 %v61
  %v100 = vunpack.c.l.b16 %v62
  %v101 = vunpack.c.l.b16 %v63
  %v102 = vunpack.c.l.b16 %v64
  %v103 = vunpack.c.l.b16 %v65
  %v104 = vunpack.c.l.b16 %v66
  %v105 = vunpack.c.l.b16 %v67
  %v106 = vunpack.c.l.b16 %v68
  %v107 = vunpack.c.l.b16 %v69
  %v108 = vpack.c.b16 %v93, %v92
  %v109 = vpack.c.b16 %v95, %v94
  %v110 = vpack.c.b16 %v97, %v96
  %v111 = vpack.c.b16 %v99, %v98
  %v112 = vpack.c.b16 %v101, %v100
  %v113 = vpack.c.b16 %v103, %v102
  %v114 = vpack.c.b16 %v105, %v104
  %v115 = vpack.c.b16 %v107, %v106
  %v122 = vunpack.c.l.b16 %v70
  %v123 = vunpack.c.l.b16 %v71
  %v124 = vunpack.c.l.b16 %v72
  %v125 = vunpack.c.l.b16 %v73
  %v126 = vunpack.c.l.b16 %v74
  %v127 = vunpack.c.l.b16 %v75
  %v128 = vpack.c.b16 %v123, %v122
  %v129 = vpack.c.b16 %v125, %v124
  %v130 = vpack.c.b16 %v127, %v126
  %vm134 = vcmask 392192
  %v136 = vsel %vm134, %v108, 0
  %v139 = vsel %vm134, %v109, 0
  %v142 = vsel %vm134, %v110, 0
  %v145 = vsel %vm134, %v111, 0
  %v148 = vsel %vm134, %v112, 0
  %v151 = vsel %vm134, %v113, 0
  %v154 = vsel %vm134, %v114, 0
  %v157 = vsel %vm134, %v115, 0
  %159 = vmatprep.subr.bf16.mxu0 0
  %160 = vmatpush1.bf16.msra.mxu0 %v128
  %161 = vmatprep.subr.bf16.mxu0 0
  %162 = vmatpush1.bf16.msra.mxu0 %v129
  %163 = vmatprep.subr.bf16.mxu0 0
  %164 = vmatpush1.bf16.msra.mxu0 %v130
  %165 = vmatprep.subr.bf16.mxu0 0
  %166 = vmatpush1.bf16.msra.mxu0 0
  %167 = vmatprep.subr.bf16.mxu0 0
  %168 = vmatpush1.bf16.msra.mxu0 0
  %169 = vmatprep.subr.bf16.mxu0 0
  %170 = vmatpush1.bf16.msra.mxu0 0
  %171 = vmatprep.subr.bf16.mxu0 0
  %172 = vmatpush1.bf16.msra.mxu0 0
  %173 = vmatprep.subr.bf16.mxu0 0
  %174 = vmatpush1.bf16.msra.mxu0 0
  %175 = vmatprep.subr.bf16.mxu0 0
  %176 = vmatpush1.bf16.msra.mxu0 0
  %177 = vmatprep.subr.bf16.mxu0 0
  %178 = vmatpush1.bf16.msra.mxu0 0
  %179 = vmatprep.subr.bf16.mxu0 0
  %180 = vmatpush1.bf16.msra.mxu0 0
  %181 = vmatprep.subr.bf16.mxu0 0
  %182 = vmatpush1.bf16.msra.mxu0 0
  %183 = vmatprep.subr.bf16.mxu0 0
  %184 = vmatpush1.bf16.msra.mxu0 0
  %185 = vmatprep.subr.bf16.mxu0 0
  %186 = vmatpush1.bf16.msra.mxu0 0
  %187 = vmatprep.subr.bf16.mxu0 0
  %188 = vmatpush1.bf16.msra.mxu0 0
  %189 = vmatprep.subr.bf16.mxu0 0
  %190 = vmatpush1.bf16.msra.mxu0 0
  %191 = vmatprep.mubr.bf16.mxu0 0
  %192 = vmatmul.mubr.bf16.gmra.mrb[0].mxu0 %v136
  %v193 = vpop.f32.mrb[0].mxu0
  %v194 = vadd.f32 0.0, %v193
  %v195 = vpop.f32.mrb[0].mxu0
  %v196 = vpop.f32.mrb[0].mxu0
  %v197 = vadd.f32 0.0, %v196
  %v198 = vpop.f32.mrb[0].mxu0
  %199 = vmatprep.mubr.bf16.mxu0 0
  %200 = vmatmul.mubr.bf16.gmra.mrb[0].mxu0 %v139
  %v201 = vpop.f32.mrb[0].mxu0
  %v202 = vadd.f32 0.0, %v201
  %v203 = vpop.f32.mrb[0].mxu0
  %v204 = vpop.f32.mrb[0].mxu0
  %v205 = vadd.f32 0.0, %v204
  %v206 = vpop.f32.mrb[0].mxu0
  %207 = vmatprep.mubr.bf16.mxu0 0
  %208 = vmatmul.mubr.bf16.gmra.mrb[0].mxu0 %v142
  %v209 = vpop.f32.mrb[0].mxu0
  %v210 = vadd.f32 0.0, %v209
  %v211 = vpop.f32.mrb[0].mxu0
  %v212 = vpop.f32.mrb[0].mxu0
  %v213 = vadd.f32 0.0, %v212
  %v214 = vpop.f32.mrb[0].mxu0
  %215 = vmatprep.mubr.bf16.mxu0 0
  %216 = vmatmul.mubr.bf16.gmra.mrb[0].mxu0 %v145
  %v217 = vpop.f32.mrb[0].mxu0
  %v218 = vadd.f32 0.0, %v217
  %v219 = vpop.f32.mrb[0].mxu0
  %v220 = vpop.f32.mrb[0].mxu0
  %v221 = vadd.f32 0.0, %v220
  %v222 = vpop.f32.mrb[0].mxu0
  %223 = vmatprep.mubr.bf16.mxu0 0
  %224 = vmatmul.mubr.bf16.gmra.mrb[0].mxu0 %v148
  %v225 = vpop.f32.mrb[0].mxu0
  %v226 = vadd.f32 0.0, %v225
  %v227 = vpop.f32.mrb[0].mxu0
  %v228 = vpop.f32.mrb[0].mxu0
  %v229 = vadd.f32 0.0, %v228
  %v230 = vpop.f32.mrb[0].mxu0
  %231 = vmatprep.mubr.bf16.mxu0 0
  %232 = vmatmul.mubr.bf16.gmra.mrb[0].mxu0 %v151
  %v233 = vpop.f32.mrb[0].mxu0
  %v234 = vadd.f32 0.0, %v233
  %v235 = vpop.f32.mrb[0].mxu0
  %v236 = vpop.f32.mrb[0].mxu0
  %v237 = vadd.f32 0.0, %v236
  %v238 = vpop.f32.mrb[0].mxu0
  %239 = vmatprep.mubr.bf16.mxu0 0
  %240 = vmatmul.mubr.bf16.gmra.mrb[0].mxu0 %v154
  %v241 = vpop.f32.mrb[0].mxu0
  %v242 = vadd.f32 0.0, %v241
  %v243 = vpop.f32.mrb[0].mxu0
  %v244 = vpop.f32.mrb[0].mxu0
  %v245 = vadd.f32 0.0, %v244
  %v246 = vpop.f32.mrb[0].mxu0
  %247 = vmatprep.mubr.bf16.mxu0 0
  %248 = vmatmul.mubr.bf16.gmra.mrb[0].mxu0 %v157
  %v249 = vpop.f32.mrb[0].mxu0
  %v250 = vadd.f32 0.0, %v249
  %v251 = vpop.f32.mrb[0].mxu0
  %v252 = vpop.f32.mrb[0].mxu0
  %v253 = vadd.f32 0.0, %v252
  %v254 = vpop.f32.mrb[0].mxu0
  %255 = vdwg.mxu0
  %v256 = vadd.f32 %v38, %v194
  %v257 = vadd.f32 %v39, %v197
  %v258 = vadd.f32 %v40, %v202
  %v259 = vadd.f32 %v41, %v205
  %v260 = vadd.f32 %v42, %v210
  %v261 = vadd.f32 %v43, %v213
  %v262 = vadd.f32 %v44, %v218
  %v263 = vadd.f32 %v45, %v221
  %v264 = vadd.f32 %v46, %v226
  %v265 = vadd.f32 %v47, %v229
  %v266 = vadd.f32 %v48, %v234
  %v267 = vadd.f32 %v49, %v237
  %v268 = vadd.f32 %v50, %v242
  %v269 = vadd.f32 %v51, %v245
  %v270 = vadd.f32 %v52, %v250
  %v271 = vadd.f32 %v53, %v253
  %272 = vst [vmem:[#allocation2] sm:$0xff] %v256
  %273 = vst [vmem:[#allocation2 + $0x8] sm:$0xff] %v257
  %274 = vst [vmem:[#allocation2 + $0x10] sm:$0xff] %v258
  %275 = vst [vmem:[#allocation2 + $0x18] sm:$0xff] %v259
  %276 = vst [vmem:[#allocation2 + $0x20] sm:$0xff] %v260
  %277 = vst [vmem:[#allocation2 + $0x28] sm:$0xff] %v261
  %278 = vst [vmem:[#allocation2 + $0x30] sm:$0xff] %v262
  %279 = vst [vmem:[#allocation2 + $0x38] sm:$0xff] %v263
  %280 = vst [vmem:[#allocation2 + $0x40] sm:$0xff] %v264
  %281 = vst [vmem:[#allocation2 + $0x48] sm:$0xff] %v265
  %282 = vst [vmem:[#allocation2 + $0x50] sm:$0xff] %v266
  %283 = vst [vmem:[#allocation2 + $0x58] sm:$0xff] %v267
  %284 = vst [vmem:[#allocation2 + $0x60] sm:$0xff] %v268
  %285 = vst [vmem:[#allocation2 + $0x68] sm:$0xff] %v269
  %286 = vst [vmem:[#allocation2 + $0x70] sm:$0xff] %v270
  %287 = vst [vmem:[#allocation2 + $0x78] sm:$0xff] %v271
  // Predicated region
  $region22: #{_lambda_.145} parent=0 // pred_check
    %p288 = pneg %p18
  $region23: #{_lambda_.145} parent=0 // pred_check_branch
    %290 = sbr.rel (%p288) target = $region25
  $region24: #{_lambda_.145} parent=0 // pred_region
    %v291 = vld [vmem:[#allocation2] sm:$0xff]
    %v292 = vld [vmem:[#allocation2 + $0x8] sm:$0xff]
    %v293 = vld [vmem:[#allocation2 + $0x10] sm:$0xff]
    %v294 = vld [vmem:[#allocation2 + $0x18] sm:$0xff]
    %v295 = vld [vmem:[#allocation2 + $0x20] sm:$0xff]
    %v296 = vld [vmem:[#allocation2 + $0x28] sm:$0xff]
    %v297 = vld [vmem:[#allocation2 + $0x30] sm:$0xff]
    %v298 = vld [vmem:[#allocation2 + $0x38] sm:$0xff]
    %v299 = vld [vmem:[#allocation2 + $0x40] sm:$0xff]
    %v300 = vld [vmem:[#allocation2 + $0x48] sm:$0xff]
    %v301 = vld [vmem:[#allocation2 + $0x50] sm:$0xff]
    %v302 = vld [vmem:[#allocation2 + $0x58] sm:$0xff]
    %v303 = vld [vmem:[#allocation2 + $0x60] sm:$0xff]
    %v304 = vld [vmem:[#allocation2 + $0x68] sm:$0xff]
    %v305 = vld [vmem:[#allocation2 + $0x70] sm:$0xff]
    %v306 = vld [vmem:[#allocation2 + $0x78] sm:$0xff]
    %v307 = vld [vmem:[%s2] sm:$0x1]
    %v309 = vlaneseq
    %v310 = vshrl.u32 %v309, 7
    %v311 = vsub.s32 0, %v310
    %v312 = vrot.slane %v307, %v311
    %v314 = vmul.f32 %v291, %v312
    %v315 = vmul.f32 %v292, %v312
    %v316 = vmul.f32 %v293, %v312
    %v317 = vmul.f32 %v294, %v312
    %v318 = vmul.f32 %v295, %v312
    %v319 = vmul.f32 %v296, %v312
    %v320 = vmul.f32 %v297, %v312
    %v321 = vmul.f32 %v298, %v312
    %v322 = vmul.f32 %v299, %v312
    %v323 = vmul.f32 %v300, %v312
    %v324 = vmul.f32 %v301, %v312
    %v325 = vmul.f32 %v302, %v312
    %v326 = vmul.f32 %v303, %v312
    %v327 = vmul.f32 %v304, %v312
    %v328 = vmul.f32 %v305, %v312
    %v329 = vmul.f32 %v306, %v312
    %v330 = vld [vmem:[%s3] sm:$0x1]
    %v332 = vlaneseq
    %v333 = vshrl.u32 %v332, 7
    %v334 = vsub.s32 0, %v333
    %v335 = vrot.slane %v330, %v334
    %v337 = vadd.f32 %v314, %v335
    %v338 = vadd.f32 %v315, %v335
    %v339 = vadd.f32 %v316, %v335
    %v340 = vadd.f32 %v317, %v335
    %v341 = vadd.f32 %v318, %v335
    %v342 = vadd.f32 %v319, %v335
    %v343 = vadd.f32 %v320, %v335
    %v344 = vadd.f32 %v321, %v335
    %v345 = vadd.f32 %v322, %v335
    %v346 = vadd.f32 %v323, %v335
    %v347 = vadd.f32 %v324, %v335
    %v348 = vadd.f32 %v325, %v335
    %v349 = vadd.f32 %v326, %v335
    %v350 = vadd.f32 %v327, %v335
    %v351 = vadd.f32 %v328, %v335
    %v352 = vadd.f32 %v329, %v335
    %v353 = vmax.f32 %v337, 0.0
    %v354 = vmax.f32 %v338, 0.0
    %v355 = vmax.f32 %v339, 0.0
    %v356 = vmax.f32 %v340, 0.0
    %v357 = vmax.f32 %v341, 0.0
    %v358 = vmax.f32 %v342, 0.0
    %v359 = vmax.f32 %v343, 0.0
    %v360 = vmax.f32 %v344, 0.0
    %v361 = vmax.f32 %v345, 0.0
    %v362 = vmax.f32 %v346, 0.0
    %v363 = vmax.f32 %v347, 0.0
    %v364 = vmax.f32 %v348, 0.0
    %v365 = vmax.f32 %v349, 0.0
    %v366 = vmax.f32 %v350, 0.0
    %v367 = vmax.f32 %v351, 0.0
    %v368 = vmax.f32 %v352, 0.0
    %369 = vst [vmem:[%s4] sm:$0xff] %v353
    %370 = vst [vmem:[%s4 + $0x8] sm:$0xff] %v354
    %371 = vst [vmem:[%s4 + $0x10] sm:$0xff] %v355
    %372 = vst [vmem:[%s4 + $0x18] sm:$0xff] %v356
    %373 = vst [vmem:[%s4 + $0x20] sm:$0xff] %v357
    %374 = vst [vmem:[%s4 + $0x28] sm:$0xff] %v358
    %375 = vst [vmem:[%s4 + $0x30] sm:$0xff] %v359
    %376 = vst [vmem:[%s4 + $0x38] sm:$0xff] %v360
    %377 = vst [vmem:[%s4 + $0x40] sm:$0xff] %v361
    %378 = vst [vmem:[%s4 + $0x48] sm:$0xff] %v362
    %379 = vst [vmem:[%s4 + $0x50] sm:$0xff] %v363
    %380 = vst [vmem:[%s4 + $0x58] sm:$0xff] %v364
    %381 = vst [vmem:[%s4 + $0x60] sm:$0xff] %v365
    %382 = vst [vmem:[%s4 + $0x68] sm:$0xff] %v366
    %383 = vst [vmem:[%s4 + $0x70] sm:$0xff] %v367
    %384 = vst [vmem:[%s4 + $0x78] sm:$0xff] %v368
  $region25: #{_lambda_.145} parent=0 // pred_fallthru
    _
  // Predicated region
  $region26: #{_lambda_.145} parent=0 // pred_check
    _
  $region27: #{_lambda_.145} parent=0 // pred_check_branch
    %386 = sbr.rel (0) target = $region29
  $region28: #{_lambda_.145} parent=0 // pred_region
    _
  $region29: #{_lambda_.145} parent=0 // pred_fallthru
    _
  // Predicated region
  $region30: #{_lambda_.145} parent=0 // pred_check
    _
  $region31: #{_lambda_.145} parent=0 // pred_check_branch
    %388 = sbr.rel (0) target = $region33
  $region32: #{_lambda_.145} parent=0 // pred_region
    _
  $region33: #{_lambda_.145} parent=0 // pred_fallthru
    _

// kernel: _lambda_.148
$region0: #{_lambda_.148}
  #allocation0 [shape = 'u32[]', space=smem, size = 0x4, offset = 0x4, fixed_abs, tag = 'smem constant byte address 0x4 - core index']
  #allocation1 [shape = 'u32[144,128]{1,0:T(1,128)}', space=vmem, size = 0x12000, scoped, tag = 'internal scratch']
  #allocation2 [shape = 'f32[128,128]{1,0:T(8,128)}', space=vmem, size = 0x10000, scoped, tag = 'scratch operand']
  %s0 = inlined_call_operand.vmem [shape: bf16[128,48], index: 0, kind: input, shape index: {}]
  %s1 = inlined_call_operand.vmem [shape: bf16[48,128], index: 1, kind: input, shape index: {}]
  %s2 = inlined_call_operand.vmem [shape: f32[1,128], index: 2, kind: input, shape index: {}]
  %s3 = inlined_call_operand.vmem [shape: f32[1,128], index: 3, kind: input, shape index: {}]
  %s4 = inlined_call_operand.vmem [shape: f32[128,128], index: 4, kind: input, shape index: {}]
  %s5 = inlined_call_operand.vmem [shape: f32[128,128], index: 5, kind: output, shape index: {}]
  %s6 = sld [smem:[#allocation0]]
  $region38: #{_lambda_.148} parent=0
    _
  %s8 = ssub.s32 1, %s6
  %s9 = scalar_select 0, %s8, %s6
  // Predicated region
  $region2: #{_lambda_.148} parent=0 // pred_check
    _
  $region3: #{_lambda_.148} parent=0 // pred_check_branch
    %11 = sbr.rel (0) target = $region5
  $region4: #{_lambda_.148} parent=0 // pred_region
    _
  $region5: #{_lambda_.148} parent=0 // pred_fallthru
    _
  // Predicated region
  $region6: #{_lambda_.148} parent=0 // pred_check
    _
  $region7: #{_lambda_.148} parent=0 // pred_check_branch
    %13 = sbr.rel (0) target = $region9
  $region8: #{_lambda_.148} parent=0 // pred_region
    _
  $region9: #{_lambda_.148} parent=0 // pred_fallthru
    _
  // Predicated region
  $region10: #{_lambda_.148} parent=0 // pred_check
    _
  $region11: #{_lambda_.148} parent=0 // pred_check_branch
    %15 = sbr.rel (0) target = $region13
  $region12: #{_lambda_.148} parent=0 // pred_region
    _
  $region13: #{_lambda_.148} parent=0 // pred_fallthru
    _
  // Predicated region
  $region14: #{_lambda_.148} parent=0 // pred_check
    _
  $region15: #{_lambda_.148} parent=0 // pred_check_branch
    %17 = sbr.rel (0) target = $region17
  $region16: #{_lambda_.148} parent=0 // pred_region
    _
  $region17: #{_lambda_.148} parent=0 // pred_fallthru
    _
  // Predicated region
  $region18: #{_lambda_.148} parent=0 // pred_check
    _
  $region19: #{_lambda_.148} parent=0 // pred_check_branch
    %19 = sbr.rel (0) target = $region21
  $region20: #{_lambda_.148} parent=0 // pred_region
    _
  $region21: #{_lambda_.148} parent=0 // pred_fallthru
    _
  %p21 = scmp.eq.s32.totalorder 0, 0
  // Predicated region
  $region22: #{_lambda_.148} parent=0 // pred_check
    %p22 = pneg %p21
  $region23: #{_lambda_.148} parent=0 // pred_check_branch
    %24 = sbr.rel (%p22) target = $region25
  $region24: #{_lambda_.148} parent=0 // pred_region
    %25 = vst [vmem:[#allocation2] sm:$0xff] 0.0
    %26 = vst [vmem:[#allocation2 + $0x8] sm:$0xff] 0.0
    %27 = vst [vmem:[#allocation2 + $0x10] sm:$0xff] 0.0
    %28 = vst [vmem:[#allocation2 + $0x18] sm:$0xff] 0.0
    %29 = vst [vmem:[#allocation2 + $0x20] sm:$0xff] 0.0
    %30 = vst [vmem:[#allocation2 + $0x28] sm:$0xff] 0.0
    %31 = vst [vmem:[#allocation2 + $0x30] sm:$0xff] 0.0
    %32 = vst [vmem:[#allocation2 + $0x38] sm:$0xff] 0.0
    %33 = vst [vmem:[#allocation2 + $0x40] sm:$0xff] 0.0
    %34 = vst [vmem:[#allocation2 + $0x48] sm:$0xff] 0.0
    %35 = vst [vmem:[#allocation2 + $0x50] sm:$0xff] 0.0
    %36 = vst [vmem:[#allocation2 + $0x58] sm:$0xff] 0.0
    %37 = vst [vmem:[#allocation2 + $0x60] sm:$0xff] 0.0
    %38 = vst [vmem:[#allocation2 + $0x68] sm:$0xff] 0.0
    %39 = vst [vmem:[#allocation2 + $0x70] sm:$0xff] 0.0
    %40 = vst [vmem:[#allocation2 + $0x78] sm:$0xff] 0.0
  $region25: #{_lambda_.148} parent=0 // pred_fallthru
    _
  %v41 = vld [vmem:[#allocation2] sm:$0xff]
  %v42 = vld [vmem:[#allocation2 + $0x8] sm:$0xff]
  %v43 = vld [vmem:[#allocation2 + $0x10] sm:$0xff]
  %v44 = vld [vmem:[#allocation2 + $0x18] sm:$0xff]
  %v45 = vld [vmem:[#allocation2 + $0x20] sm:$0xff]
  %v46 = vld [vmem:[#allocation2 + $0x28] sm:$0xff]
  %v47 = vld [vmem:[#allocation2 + $0x30] sm:$0xff]
  %v48 = vld [vmem:[#allocation2 + $0x38] sm:$0xff]
  %v49 = vld [vmem:[#allocation2 + $0x40] sm:$0xff]
  %v50 = vld [vmem:[#allocation2 + $0x48] sm:$0xff]
  %v51 = vld [vmem:[#allocation2 + $0x50] sm:$0xff]
  %v52 = vld [vmem:[#allocation2 + $0x58] sm:$0xff]
  %v53 = vld [vmem:[#allocation2 + $0x60] sm:$0xff]
  %v54 = vld [vmem:[#allocation2 + $0x68] sm:$0xff]
  %v55 = vld [vmem:[#allocation2 + $0x70] sm:$0xff]
  %v56 = vld [vmem:[#allocation2 + $0x78] sm:$0xff]
  %v57 = vld [vmem:[%s0] sm:$0xf]
  %v58 = vld [vmem:[%s0 + $0x4] sm:$0xf]
  %v59 = vld [vmem:[%s0 + $0x8] sm:$0xf]
  %v60 = vld [vmem:[%s0 + $0xc] sm:$0xf]
  %v61 = vld [vmem:[%s0 + $0x10] sm:$0xf]
  %v62 = vld [vmem:[%s0 + $0x14] sm:$0xf]
  %v63 = vld [vmem:[%s0 + $0x18] sm:$0xf]
  %v64 = vld [vmem:[%s0 + $0x1c] sm:$0xf]
  %v65 = vld [vmem:[%s0 + $0x20] sm:$0xf]
  %v66 = vld [vmem:[%s0 + $0x24] sm:$0xf]
  %v67 = vld [vmem:[%s0 + $0x28] sm:$0xf]
  %v68 = vld [vmem:[%s0 + $0x2c] sm:$0xf]
  %v69 = vld [vmem:[%s0 + $0x30] sm:$0xf]
  %v70 = vld [vmem:[%s0 + $0x34] sm:$0xf]
  %v71 = vld [vmem:[%s0 + $0x38] sm:$0xf]
  %v72 = vld [vmem:[%s0 + $0x3c] sm:$0xf]
  %v73 = vld [vmem:[%s1] sm:$0xf]
  %v74 = vld [vmem:[%s1 + $0x4] sm:$0xf]
  %v75 = vld [vmem:[%s1 + $0x8] sm:$0xf]
  %v76 = vld [vmem:[%s1 + $0xc] sm:$0xf]
  %v77 = vld [vmem:[%s1 + $0x10] sm:$0xf]
  %v78 = vld [vmem:[%s1 + $0x14] sm:$0xf]
  %v95 = vunpack.c.l.b16 %v57
  %v96 = vunpack.c.l.b16 %v58
  %v97 = vunpack.c.l.b16 %v59
  %v98 = vunpack.c.l.b16 %v60
  %v99 = vunpack.c.l.b16 %v61
  %v100 = vunpack.c.l.b16 %v62
  %v101 = vunpack.c.l.b16 %v63
  %v102 = vunpack.c.l.b16 %v64
  %v103 = vunpack.c.l.b16 %v65
  %v104 = vunpack.c.l.b16 %v66
  %v105 = vunpack.c.l.b16 %v67
  %v106 = vunpack.c.l.b16 %v68
  %v107 = vunpack.c.l.b16 %v69
  %v108 = vunpack.c.l.b16 %v70
  %v109 = vunpack.c.l.b16 %v71
  %v110 = vunpack.c.l.b16 %v72
  %v111 = vpack.c.b16 %v96, %v95
  %v112 = vpack.c.b16 %v98, %v97
  %v113 = vpack.c.b16 %v100, %v99
  %v114 = vpack.c.b16 %v102, %v101
  %v115 = vpack.c.b16 %v104, %v103
  %v116 = vpack.c.b16 %v106, %v105
  %v117 = vpack.c.b16 %v108, %v107
  %v118 = vpack.c.b16 %v110, %v109
  %v125 = vunpack.c.l.b16 %v73
  %v126 = vunpack.c.l.b16 %v74
  %v127 = vunpack.c.l.b16 %v75
  %v128 = vunpack.c.l.b16 %v76
  %v129 = vunpack.c.l.b16 %v77
  %v130 = vunpack.c.l.b16 %v78
  %v131 = vpack.c.b16 %v126, %v125
  %v132 = vpack.c.b16 %v128, %v127
  %v133 = vpack.c.b16 %v130, %v129
  %vm137 = vcmask 392192
  %v139 = vsel %vm137, %v111, 0
  %v142 = vsel %vm137, %v112, 0
  %v145 = vsel %vm137, %v113, 0
  %v148 = vsel %vm137, %v114, 0
  %v151 = vsel %vm137, %v115, 0
  %v154 = vsel %vm137, %v116, 0
  %v157 = vsel %vm137, %v117, 0
  %v160 = vsel %vm137, %v118, 0
  %162 = vmatprep.subr.bf16.mxu0 0
  %163 = vmatpush1.bf16.msra.mxu0 %v131
  %164 = vmatprep.subr.bf16.mxu0 0
  %165 = vmatpush1.bf16.msra.mxu0 %v132
  %166 = vmatprep.subr.bf16.mxu0 0
  %167 = vmatpush1.bf16.msra.mxu0 %v133
  %168 = vmatprep.subr.bf16.mxu0 0
  %169 = vmatpush1.bf16.msra.mxu0 0
  %170 = vmatprep.subr.bf16.mxu0 0
  %171 = vmatpush1.bf16.msra.mxu0 0
  %172 = vmatprep.subr.bf16.mxu0 0
  %173 = vmatpush1.bf16.msra.mxu0 0
  %174 = vmatprep.subr.bf16.mxu0 0
  %175 = vmatpush1.bf16.msra.mxu0 0
  %176 = vmatprep.subr.bf16.mxu0 0
  %177 = vmatpush1.bf16.msra.mxu0 0
  %178 = vmatprep.subr.bf16.mxu0 0
  %179 = vmatpush1.bf16.msra.mxu0 0
  %180 = vmatprep.subr.bf16.mxu0 0
  %181 = vmatpush1.bf16.msra.mxu0 0
  %182 = vmatprep.subr.bf16.mxu0 0
  %183 = vmatpush1.bf16.msra.mxu0 0
  %184 = vmatprep.subr.bf16.mxu0 0
  %185 = vmatpush1.bf16.msra.mxu0 0
  %186 = vmatprep.subr.bf16.mxu0 0
  %187 = vmatpush1.bf16.msra.mxu0 0
  %188 = vmatprep.subr.bf16.mxu0 0
  %189 = vmatpush1.bf16.msra.mxu0 0
  %190 = vmatprep.subr.bf16.mxu0 0
  %191 = vmatpush1.bf16.msra.mxu0 0
  %192 = vmatprep.subr.bf16.mxu0 0
  %193 = vmatpush1.bf16.msra.mxu0 0
  %194 = vmatprep.mubr.bf16.mxu0 0
  %195 = vmatmul.mubr.bf16.gmra.mrb[0].mxu0 %v139
  %v196 = vpop.f32.mrb[0].mxu0
  %v197 = vadd.f32 0.0, %v196
  %v198 = vpop.f32.mrb[0].mxu0
  %v199 = vpop.f32.mrb[0].mxu0
  %v200 = vadd.f32 0.0, %v199
  %v201 = vpop.f32.mrb[0].mxu0
  %202 = vmatprep.mubr.bf16.mxu0 0
  %203 = vmatmul.mubr.bf16.gmra.mrb[0].mxu0 %v142
  %v204 = vpop.f32.mrb[0].mxu0
  %v205 = vadd.f32 0.0, %v204
  %v206 = vpop.f32.mrb[0].mxu0
  %v207 = vpop.f32.mrb[0].mxu0
  %v208 = vadd.f32 0.0, %v207
  %v209 = vpop.f32.mrb[0].mxu0
  %210 = vmatprep.mubr.bf16.mxu0 0
  %211 = vmatmul.mubr.bf16.gmra.mrb[0].mxu0 %v145
  %v212 = vpop.f32.mrb[0].mxu0
  %v213 = vadd.f32 0.0, %v212
  %v214 = vpop.f32.mrb[0].mxu0
  %v215 = vpop.f32.mrb[0].mxu0
  %v216 = vadd.f32 0.0, %v215
  %v217 = vpop.f32.mrb[0].mxu0
  %218 = vmatprep.mubr.bf16.mxu0 0
  %219 = vmatmul.mubr.bf16.gmra.mrb[0].mxu0 %v148
  %v220 = vpop.f32.mrb[0].mxu0
  %v221 = vadd.f32 0.0, %v220
  %v222 = vpop.f32.mrb[0].mxu0
  %v223 = vpop.f32.mrb[0].mxu0
  %v224 = vadd.f32 0.0, %v223
  %v225 = vpop.f32.mrb[0].mxu0
  %226 = vmatprep.mubr.bf16.mxu0 0
  %227 = vmatmul.mubr.bf16.gmra.mrb[0].mxu0 %v151
  %v228 = vpop.f32.mrb[0].mxu0
  %v229 = vadd.f32 0.0, %v228
  %v230 = vpop.f32.mrb[0].mxu0
  %v231 = vpop.f32.mrb[0].mxu0
  %v232 = vadd.f32 0.0, %v231
  %v233 = vpop.f32.mrb[0].mxu0
  %234 = vmatprep.mubr.bf16.mxu0 0
  %235 = vmatmul.mubr.bf16.gmra.mrb[0].mxu0 %v154
  %v236 = vpop.f32.mrb[0].mxu0
  %v237 = vadd.f32 0.0, %v236
  %v238 = vpop.f32.mrb[0].mxu0
  %v239 = vpop.f32.mrb[0].mxu0
  %v240 = vadd.f32 0.0, %v239
  %v241 = vpop.f32.mrb[0].mxu0
  %242 = vmatprep.mubr.bf16.mxu0 0
  %243 = vmatmul.mubr.bf16.gmra.mrb[0].mxu0 %v157
  %v244 = vpop.f32.mrb[0].mxu0
  %v245 = vadd.f32 0.0, %v244
  %v246 = vpop.f32.mrb[0].mxu0
  %v247 = vpop.f32.mrb[0].mxu0
  %v248 = vadd.f32 0.0, %v247
  %v249 = vpop.f32.mrb[0].mxu0
  %250 = vmatprep.mubr.bf16.mxu0 0
  %251 = vmatmul.mubr.bf16.gmra.mrb[0].mxu0 %v160
  %v252 = vpop.f32.mrb[0].mxu0
  %v253 = vadd.f32 0.0, %v252
  %v254 = vpop.f32.mrb[0].mxu0
  %v255 = vpop.f32.mrb[0].mxu0
  %v256 = vadd.f32 0.0, %v255
  %v257 = vpop.f32.mrb[0].mxu0
  %258 = vdwg.mxu0
  %v259 = vadd.f32 %v41, %v197
  %v260 = vadd.f32 %v42, %v200
  %v261 = vadd.f32 %v43, %v205
  %v262 = vadd.f32 %v44, %v208
  %v263 = vadd.f32 %v45, %v213
  %v264 = vadd.f32 %v46, %v216
  %v265 = vadd.f32 %v47, %v221
  %v266 = vadd.f32 %v48, %v224
  %v267 = vadd.f32 %v49, %v229
  %v268 = vadd.f32 %v50, %v232
  %v269 = vadd.f32 %v51, %v237
  %v270 = vadd.f32 %v52, %v240
  %v271 = vadd.f32 %v53, %v245
  %v272 = vadd.f32 %v54, %v248
  %v273 = vadd.f32 %v55, %v253
  %v274 = vadd.f32 %v56, %v256
  %275 = vst [vmem:[#allocation2] sm:$0xff] %v259
  %276 = vst [vmem:[#allocation2 + $0x8] sm:$0xff] %v260
  %277 = vst [vmem:[#allocation2 + $0x10] sm:$0xff] %v261
  %278 = vst [vmem:[#allocation2 + $0x18] sm:$0xff] %v262
  %279 = vst [vmem:[#allocation2 + $0x20] sm:$0xff] %v263
  %280 = vst [vmem:[#allocation2 + $0x28] sm:$0xff] %v264
  %281 = vst [vmem:[#allocation2 + $0x30] sm:$0xff] %v265
  %282 = vst [vmem:[#allocation2 + $0x38] sm:$0xff] %v266
  %283 = vst [vmem:[#allocation2 + $0x40] sm:$0xff] %v267
  %284 = vst [vmem:[#allocation2 + $0x48] sm:$0xff] %v268
  %285 = vst [vmem:[#allocation2 + $0x50] sm:$0xff] %v269
  %286 = vst [vmem:[#allocation2 + $0x58] sm:$0xff] %v270
  %287 = vst [vmem:[#allocation2 + $0x60] sm:$0xff] %v271
  %288 = vst [vmem:[#allocation2 + $0x68] sm:$0xff] %v272
  %289 = vst [vmem:[#allocation2 + $0x70] sm:$0xff] %v273
  %290 = vst [vmem:[#allocation2 + $0x78] sm:$0xff] %v274
  // Predicated region
  $region26: #{_lambda_.148} parent=0 // pred_check
    %p291 = pneg %p21
  $region27: #{_lambda_.148} parent=0 // pred_check_branch
    %293 = sbr.rel (%p291) target = $region29
  $region28: #{_lambda_.148} parent=0 // pred_region
    %v294 = vld [vmem:[#allocation2] sm:$0xff]
    %v295 = vld [vmem:[#allocation2 + $0x8] sm:$0xff]
    %v296 = vld [vmem:[#allocation2 + $0x10] sm:$0xff]
    %v297 = vld [vmem:[#allocation2 + $0x18] sm:$0xff]
    %v298 = vld [vmem:[#allocation2 + $0x20] sm:$0xff]
    %v299 = vld [vmem:[#allocation2 + $0x28] sm:$0xff]
    %v300 = vld [vmem:[#allocation2 + $0x30] sm:$0xff]
    %v301 = vld [vmem:[#allocation2 + $0x38] sm:$0xff]
    %v302 = vld [vmem:[#allocation2 + $0x40] sm:$0xff]
    %v303 = vld [vmem:[#allocation2 + $0x48] sm:$0xff]
    %v304 = vld [vmem:[#allocation2 + $0x50] sm:$0xff]
    %v305 = vld [vmem:[#allocation2 + $0x58] sm:$0xff]
    %v306 = vld [vmem:[#allocation2 + $0x60] sm:$0xff]
    %v307 = vld [vmem:[#allocation2 + $0x68] sm:$0xff]
    %v308 = vld [vmem:[#allocation2 + $0x70] sm:$0xff]
    %v309 = vld [vmem:[#allocation2 + $0x78] sm:$0xff]
    %v310 = vld [vmem:[%s2] sm:$0x1]
    %v312 = vlaneseq
    %v313 = vshrl.u32 %v312, 7
    %v314 = vsub.s32 0, %v313
    %v315 = vrot.slane %v310, %v314
    %v317 = vmul.f32 %v294, %v315
    %v318 = vmul.f32 %v295, %v315
    %v319 = vmul.f32 %v296, %v315
    %v320 = vmul.f32 %v297, %v315
    %v321 = vmul.f32 %v298, %v315
    %v322 = vmul.f32 %v299, %v315
    %v323 = vmul.f32 %v300, %v315
    %v324 = vmul.f32 %v301, %v315
    %v325 = vmul.f32 %v302, %v315
    %v326 = vmul.f32 %v303, %v315
    %v327 = vmul.f32 %v304, %v315
    %v328 = vmul.f32 %v305, %v315
    %v329 = vmul.f32 %v306, %v315
    %v330 = vmul.f32 %v307, %v315
    %v331 = vmul.f32 %v308, %v315
    %v332 = vmul.f32 %v309, %v315
    %v333 = vld [vmem:[%s3] sm:$0x1]
    %v335 = vlaneseq
    %v336 = vshrl.u32 %v335, 7
    %v337 = vsub.s32 0, %v336
    %v338 = vrot.slane %v333, %v337
    %v340 = vadd.f32 %v317, %v338
    %v341 = vadd.f32 %v318, %v338
    %v342 = vadd.f32 %v319, %v338
    %v343 = vadd.f32 %v320, %v338
    %v344 = vadd.f32 %v321, %v338
    %v345 = vadd.f32 %v322, %v338
    %v346 = vadd.f32 %v323, %v338
    %v347 = vadd.f32 %v324, %v338
    %v348 = vadd.f32 %v325, %v338
    %v349 = vadd.f32 %v326, %v338
    %v350 = vadd.f32 %v327, %v338
    %v351 = vadd.f32 %v328, %v338
    %v352 = vadd.f32 %v329, %v338
    %v353 = vadd.f32 %v330, %v338
    %v354 = vadd.f32 %v331, %v338
    %v355 = vadd.f32 %v332, %v338
    %v356 = vld [vmem:[%s4] sm:$0xff]
    %v357 = vld [vmem:[%s4 + $0x8] sm:$0xff]
    %v358 = vld [vmem:[%s4 + $0x10] sm:$0xff]
    %v359 = vld [vmem:[%s4 + $0x18] sm:$0xff]
    %v360 = vld [vmem:[%s4 + $0x20] sm:$0xff]
    %v361 = vld [vmem:[%s4 + $0x28] sm:$0xff]
    %v362 = vld [vmem:[%s4 + $0x30] sm:$0xff]
    %v363 = vld [vmem:[%s4 + $0x38] sm:$0xff]
    %v364 = vld [vmem:[%s4 + $0x40] sm:$0xff]
    %v365 = vld [vmem:[%s4 + $0x48] sm:$0xff]
    %v366 = vld [vmem:[%s4 + $0x50] sm:$0xff]
    %v367 = vld [vmem:[%s4 + $0x58] sm:$0xff]
    %v368 = vld [vmem:[%s4 + $0x60] sm:$0xff]
    %v369 = vld [vmem:[%s4 + $0x68] sm:$0xff]
    %v370 = vld [vmem:[%s4 + $0x70] sm:$0xff]
    %v371 = vld [vmem:[%s4 + $0x78] sm:$0xff]
    %v372 = vadd.f32 %v340, %v356
    %v373 = vadd.f32 %v341, %v357
    %v374 = vadd.f32 %v342, %v358
    %v375 = vadd.f32 %v343, %v359
    %v376 = vadd.f32 %v344, %v360
    %v377 = vadd.f32 %v345, %v361
    %v378 = vadd.f32 %v346, %v362
    %v379 = vadd.f32 %v347, %v363
    %v380 = vadd.f32 %v348, %v364
    %v381 = vadd.f32 %v349, %v365
    %v382 = vadd.f32 %v350, %v366
    %v383 = vadd.f32 %v351, %v367
    %v384 = vadd.f32 %v352, %v368
    %v385 = vadd.f32 %v353, %v369
    %v386 = vadd.f32 %v354, %v370
    %v387 = vadd.f32 %v355, %v371
    %v388 = vmax.f32 %v372, 0.0
    %v389 = vmax.f32 %v373, 0.0
    %v390 = vmax.f32 %v374, 0.0
    %v391 = vmax.f32 %v375, 0.0
    %v392 = vmax.f32 %v376, 0.0
    %v393 = vmax.f32 %v377, 0.0
    %v394 = vmax.f32 %v378, 0.0
    %v395 = vmax.f32 %v379, 0.0
    %v396 = vmax.f32 %v380, 0.0
    %v397 = vmax.f32 %v381, 0.0
    %v398 = vmax.f32 %v382, 0.0
    %v399 = vmax.f32 %v383, 0.0
    %v400 = vmax.f32 %v384, 0.0
    %v401 = vmax.f32 %v385, 0.0
    %v402 = vmax.f32 %v386, 0.0
    %v403 = vmax.f32 %v387, 0.0
    %404 = vst [vmem:[%s5] sm:$0xff] %v388
    %405 = vst [vmem:[%s5 + $0x8] sm:$0xff] %v389
    %406 = vst [vmem:[%s5 + $0x10] sm:$0xff] %v390
    %407 = vst [vmem:[%s5 + $0x18] sm:$0xff] %v391
    %408 = vst [vmem:[%s5 + $0x20] sm:$0xff] %v392
    %409 = vst [vmem:[%s5 + $0x28] sm:$0xff] %v393
    %410 = vst [vmem:[%s5 + $0x30] sm:$0xff] %v394
    %411 = vst [vmem:[%s5 + $0x38] sm:$0xff] %v395
    %412 = vst [vmem:[%s5 + $0x40] sm:$0xff] %v396
    %413 = vst [vmem:[%s5 + $0x48] sm:$0xff] %v397
    %414 = vst [vmem:[%s5 + $0x50] sm:$0xff] %v398
    %415 = vst [vmem:[%s5 + $0x58] sm:$0xff] %v399
    %416 = vst [vmem:[%s5 + $0x60] sm:$0xff] %v400
    %417 = vst [vmem:[%s5 + $0x68] sm:$0xff] %v401
    %418 = vst [vmem:[%s5 + $0x70] sm:$0xff] %v402
    %419 = vst [vmem:[%s5 + $0x78] sm:$0xff] %v403
  $region29: #{_lambda_.148} parent=0 // pred_fallthru
    _
  // Predicated region
  $region30: #{_lambda_.148} parent=0 // pred_check
    _
  $region31: #{_lambda_.148} parent=0 // pred_check_branch
    %421 = sbr.rel (0) target = $region33
  $region32: #{_lambda_.148} parent=0 // pred_region
    _
  $region33: #{_lambda_.148} parent=0 // pred_fallthru
    _
  // Predicated region
  $region34: #{_lambda_.148} parent=0 // pred_check
    _
  $region35: #{_lambda_.148} parent=0 // pred_check_branch
    %423 = sbr.rel (0) target = $region37
  $region36: #{_lambda_.148} parent=0 // pred_region
    _
  $region37: #{_lambda_.148} parent=0 // pred_fallthru
    _

// kernel: _lambda_.153
$region0: #{_lambda_.153}
  #allocation0 [shape = 'u32[]', space=smem, size = 0x4, offset = 0x4, fixed_abs, tag = 'smem constant byte address 0x4 - core index']
  #allocation1 [shape = 'u32[144,128]{1,0:T(1,128)}', space=vmem, size = 0x12000, scoped, tag = 'internal scratch']
  #allocation2 [shape = 'f32[128,128]{1,0:T(8,128)}', space=vmem, size = 0x10000, scoped, tag = 'scratch operand']
  %s0 = inlined_call_operand.vmem [shape: bf16[128,16], index: 0, kind: input, shape index: {}]
  %s1 = inlined_call_operand.vmem [shape: bf16[16,128], index: 1, kind: input, shape index: {}]
  %s2 = inlined_call_operand.vmem [shape: f32[1,128], index: 2, kind: input, shape index: {}]
  %s3 = inlined_call_operand.vmem [shape: f32[1,128], index: 3, kind: input, shape index: {}]
  %s4 = inlined_call_operand.vmem [shape: f32[128,128], index: 4, kind: output, shape index: {}]
  %s5 = sld [smem:[#allocation0]]
  $region34: #{_lambda_.153} parent=0
    _
  %s7 = ssub.s32 1, %s5
  %s8 = scalar_select 0, %s7, %s5
  // Predicated region
  $region2: #{_lambda_.153} parent=0 // pred_check
    _
  $region3: #{_lambda_.153} parent=0 // pred_check_branch
    %10 = sbr.rel (0) target = $region5
  $region4: #{_lambda_.153} parent=0 // pred_region
    _
  $region5: #{_lambda_.153} parent=0 // pred_fallthru
    _
  // Predicated region
  $region6: #{_lambda_.153} parent=0 // pred_check
    _
  $region7: #{_lambda_.153} parent=0 // pred_check_branch
    %12 = sbr.rel (0) target = $region9
  $region8: #{_lambda_.153} parent=0 // pred_region
    _
  $region9: #{_lambda_.153} parent=0 // pred_fallthru
    _
  // Predicated region
  $region10: #{_lambda_.153} parent=0 // pred_check
    _
  $region11: #{_lambda_.153} parent=0 // pred_check_branch
    %14 = sbr.rel (0) target = $region13
  $region12: #{_lambda_.153} parent=0 // pred_region
    _
  $region13: #{_lambda_.153} parent=0 // pred_fallthru
    _
  // Predicated region
  $region14: #{_lambda_.153} parent=0 // pred_check
    _
  $region15: #{_lambda_.153} parent=0 // pred_check_branch
    %16 = sbr.rel (0) target = $region17
  $region16: #{_lambda_.153} parent=0 // pred_region
    _
  $region17: #{_lambda_.153} parent=0 // pred_fallthru
    _
  %p18 = scmp.eq.s32.totalorder 0, 0
  // Predicated region
  $region18: #{_lambda_.153} parent=0 // pred_check
    %p19 = pneg %p18
  $region19: #{_lambda_.153} parent=0 // pred_check_branch
    %21 = sbr.rel (%p19) target = $region21
  $region20: #{_lambda_.153} parent=0 // pred_region
    %22 = vst [vmem:[#allocation2] sm:$0xff] 0.0
    %23 = vst [vmem:[#allocation2 + $0x8] sm:$0xff] 0.0
    %24 = vst [vmem:[#allocation2 + $0x10] sm:$0xff] 0.0
    %25 = vst [vmem:[#allocation2 + $0x18] sm:$0xff] 0.0
    %26 = vst [vmem:[#allocation2 + $0x20] sm:$0xff] 0.0
    %27 = vst [vmem:[#allocation2 + $0x28] sm:$0xff] 0.0
    %28 = vst [vmem:[#allocation2 + $0x30] sm:$0xff] 0.0
    %29 = vst [vmem:[#allocation2 + $0x38] sm:$0xff] 0.0
    %30 = vst [vmem:[#allocation2 + $0x40] sm:$0xff] 0.0
    %31 = vst [vmem:[#allocation2 + $0x48] sm:$0xff] 0.0
    %32 = vst [vmem:[#allocation2 + $0x50] sm:$0xff] 0.0
    %33 = vst [vmem:[#allocation2 + $0x58] sm:$0xff] 0.0
    %34 = vst [vmem:[#allocation2 + $0x60] sm:$0xff] 0.0
    %35 = vst [vmem:[#allocation2 + $0x68] sm:$0xff] 0.0
    %36 = vst [vmem:[#allocation2 + $0x70] sm:$0xff] 0.0
    %37 = vst [vmem:[#allocation2 + $0x78] sm:$0xff] 0.0
  $region21: #{_lambda_.153} parent=0 // pred_fallthru
    _
  %v38 = vld [vmem:[#allocation2] sm:$0xff]
  %v39 = vld [vmem:[#allocation2 + $0x8] sm:$0xff]
  %v40 = vld [vmem:[#allocation2 + $0x10] sm:$0xff]
  %v41 = vld [vmem:[#allocation2 + $0x18] sm:$0xff]
  %v42 = vld [vmem:[#allocation2 + $0x20] sm:$0xff]
  %v43 = vld [vmem:[#allocation2 + $0x28] sm:$0xff]
  %v44 = vld [vmem:[#allocation2 + $0x30] sm:$0xff]
  %v45 = vld [vmem:[#allocation2 + $0x38] sm:$0xff]
  %v46 = vld [vmem:[#allocation2 + $0x40] sm:$0xff]
  %v47 = vld [vmem:[#allocation2 + $0x48] sm:$0xff]
  %v48 = vld [vmem:[#allocation2 + $0x50] sm:$0xff]
  %v49 = vld [vmem:[#allocation2 + $0x58] sm:$0xff]
  %v50 = vld [vmem:[#allocation2 + $0x60] sm:$0xff]
  %v51 = vld [vmem:[#allocation2 + $0x68] sm:$0xff]
  %v52 = vld [vmem:[#allocation2 + $0x70] sm:$0xff]
  %v53 = vld [vmem:[#allocation2 + $0x78] sm:$0xff]
  %v54 = vld [vmem:[%s0] sm:$0xf]
  %v55 = vld [vmem:[%s0 + $0x4] sm:$0xf]
  %v56 = vld [vmem:[%s0 + $0x8] sm:$0xf]
  %v57 = vld [vmem:[%s0 + $0xc] sm:$0xf]
  %v58 = vld [vmem:[%s0 + $0x10] sm:$0xf]
  %v59 = vld [vmem:[%s0 + $0x14] sm:$0xf]
  %v60 = vld [vmem:[%s0 + $0x18] sm:$0xf]
  %v61 = vld [vmem:[%s0 + $0x1c] sm:$0xf]
  %v62 = vld [vmem:[%s0 + $0x20] sm:$0xf]
  %v63 = vld [vmem:[%s0 + $0x24] sm:$0xf]
  %v64 = vld [vmem:[%s0 + $0x28] sm:$0xf]
  %v65 = vld [vmem:[%s0 + $0x2c] sm:$0xf]
  %v66 = vld [vmem:[%s0 + $0x30] sm:$0xf]
  %v67 = vld [vmem:[%s0 + $0x34] sm:$0xf]
  %v68 = vld [vmem:[%s0 + $0x38] sm:$0xf]
  %v69 = vld [vmem:[%s0 + $0x3c] sm:$0xf]
  %v70 = vld [vmem:[%s1] sm:$0xf]
  %v71 = vld [vmem:[%s1 + $0x4] sm:$0xf]
  %v88 = vunpack.c.l.b16 %v54
  %v89 = vunpack.c.l.b16 %v55
  %v90 = vunpack.c.l.b16 %v56
  %v91 = vunpack.c.l.b16 %v57
  %v92 = vunpack.c.l.b16 %v58
  %v93 = vunpack.c.l.b16 %v59
  %v94 = vunpack.c.l.b16 %v60
  %v95 = vunpack.c.l.b16 %v61
  %v96 = vunpack.c.l.b16 %v62
  %v97 = vunpack.c.l.b16 %v63
  %v98 = vunpack.c.l.b16 %v64
  %v99 = vunpack.c.l.b16 %v65
  %v100 = vunpack.c.l.b16 %v66
  %v101 = vunpack.c.l.b16 %v67
  %v102 = vunpack.c.l.b16 %v68
  %v103 = vunpack.c.l.b16 %v69
  %v104 = vpack.c.b16 %v89, %v88
  %v105 = vpack.c.b16 %v91, %v90
  %v106 = vpack.c.b16 %v93, %v92
  %v107 = vpack.c.b16 %v95, %v94
  %v108 = vpack.c.b16 %v97, %v96
  %v109 = vpack.c.b16 %v99, %v98
  %v110 = vpack.c.b16 %v101, %v100
  %v111 = vpack.c.b16 %v103, %v102
  %v114 = vunpack.c.l.b16 %v70
  %v115 = vunpack.c.l.b16 %v71
  %v116 = vpack.c.b16 %v115, %v114
  %vm118 = vcmask 130048
  %v120 = vsel %vm118, %v104, 0
  %v123 = vsel %vm118, %v105, 0
  %v126 = vsel %vm118, %v106, 0
  %v129 = vsel %vm118, %v107, 0
  %v132 = vsel %vm118, %v108, 0
  %v135 = vsel %vm118, %v109, 0
  %v138 = vsel %vm118, %v110, 0
  %v141 = vsel %vm118, %v111, 0
  %143 = vmatprep.subr.bf16.mxu0 0
  %144 = vmatpush1.bf16.msra.mxu0 %v116
  %145 = vmatprep.subr.bf16.mxu0 0
  %146 = vmatpush1.bf16.msra.mxu0 0
  %147 = vmatprep.subr.bf16.mxu0 0
  %148 = vmatpush1.bf16.msra.mxu0 0
  %149 = vmatprep.subr.bf16.mxu0 0
  %150 = vmatpush1.bf16.msra.mxu0 0
  %151 = vmatprep.subr.bf16.mxu0 0
  %152 = vmatpush1.bf16.msra.mxu0 0
  %153 = vmatprep.subr.bf16.mxu0 0
  %154 = vmatpush1.bf16.msra.mxu0 0
  %155 = vmatprep.subr.bf16.mxu0 0
  %156 = vmatpush1.bf16.msra.mxu0 0
  %157 = vmatprep.subr.bf16.mxu0 0
  %158 = vmatpush1.bf16.msra.mxu0 0
  %159 = vmatprep.subr.bf16.mxu0 0
  %160 = vmatpush1.bf16.msra.mxu0 0
  %161 = vmatprep.subr.bf16.mxu0 0
  %162 = vmatpush1.bf16.msra.mxu0 0
  %163 = vmatprep.subr.bf16.mxu0 0
  %164 = vmatpush1.bf16.msra.mxu0 0
  %165 = vmatprep.subr.bf16.mxu0 0
  %166 = vmatpush1.bf16.msra.mxu0 0
  %167 = vmatprep.subr.bf16.mxu0 0
  %168 = vmatpush1.bf16.msra.mxu0 0
  %169 = vmatprep.subr.bf16.mxu0 0
  %170 = vmatpush1.bf16.msra.mxu0 0
  %171 = vmatprep.subr.bf16.mxu0 0
  %172 = vmatpush1.bf16.msra.mxu0 0
  %173 = vmatprep.subr.bf16.mxu0 0
  %174 = vmatpush1.bf16.msra.mxu0 0
  %175 = vmatprep.mubr.bf16.mxu0 0
  %176 = vmatmul.mubr.bf16.gmra.mrb[0].mxu0 %v120
  %v177 = vpop.f32.mrb[0].mxu0
  %v178 = vadd.f32 0.0, %v177
  %v179 = vpop.f32.mrb[0].mxu0
  %v180 = vpop.f32.mrb[0].mxu0
  %v181 = vadd.f32 0.0, %v180
  %v182 = vpop.f32.mrb[0].mxu0
  %183 = vmatprep.mubr.bf16.mxu0 0
  %184 = vmatmul.mubr.bf16.gmra.mrb[0].mxu0 %v123
  %v185 = vpop.f32.mrb[0].mxu0
  %v186 = vadd.f32 0.0, %v185
  %v187 = vpop.f32.mrb[0].mxu0
  %v188 = vpop.f32.mrb[0].mxu0
  %v189 = vadd.f32 0.0, %v188
  %v190 = vpop.f32.mrb[0].mxu0
  %191 = vmatprep.mubr.bf16.mxu0 0
  %192 = vmatmul.mubr.bf16.gmra.mrb[0].mxu0 %v126
  %v193 = vpop.f32.mrb[0].mxu0
  %v194 = vadd.f32 0.0, %v193
  %v195 = vpop.f32.mrb[0].mxu0
  %v196 = vpop.f32.mrb[0].mxu0
  %v197 = vadd.f32 0.0, %v196
  %v198 = vpop.f32.mrb[0].mxu0
  %199 = vmatprep.mubr.bf16.mxu0 0
  %200 = vmatmul.mubr.bf16.gmra.mrb[0].mxu0 %v129
  %v201 = vpop.f32.mrb[0].mxu0
  %v202 = vadd.f32 0.0, %v201
  %v203 = vpop.f32.mrb[0].mxu0
  %v204 = vpop.f32.mrb[0].mxu0
  %v205 = vadd.f32 0.0, %v204
  %v206 = vpop.f32.mrb[0].mxu0
  %207 = vmatprep.mubr.bf16.mxu0 0
  %208 = vmatmul.mubr.bf16.gmra.mrb[0].mxu0 %v132
  %v209 = vpop.f32.mrb[0].mxu0
  %v210 = vadd.f32 0.0, %v209
  %v211 = vpop.f32.mrb[0].mxu0
  %v212 = vpop.f32.mrb[0].mxu0
  %v213 = vadd.f32 0.0, %v212
  %v214 = vpop.f32.mrb[0].mxu0
  %215 = vmatprep.mubr.bf16.mxu0 0
  %216 = vmatmul.mubr.bf16.gmra.mrb[0].mxu0 %v135
  %v217 = vpop.f32.mrb[0].mxu0
  %v218 = vadd.f32 0.0, %v217
  %v219 = vpop.f32.mrb[0].mxu0
  %v220 = vpop.f32.mrb[0].mxu0
  %v221 = vadd.f32 0.0, %v220
  %v222 = vpop.f32.mrb[0].mxu0
  %223 = vmatprep.mubr.bf16.mxu0 0
  %224 = vmatmul.mubr.bf16.gmra.mrb[0].mxu0 %v138
  %v225 = vpop.f32.mrb[0].mxu0
  %v226 = vadd.f32 0.0, %v225
  %v227 = vpop.f32.mrb[0].mxu0
  %v228 = vpop.f32.mrb[0].mxu0
  %v229 = vadd.f32 0.0, %v228
  %v230 = vpop.f32.mrb[0].mxu0
  %231 = vmatprep.mubr.bf16.mxu0 0
  %232 = vmatmul.mubr.bf16.gmra.mrb[0].mxu0 %v141
  %v233 = vpop.f32.mrb[0].mxu0
  %v234 = vadd.f32 0.0, %v233
  %v235 = vpop.f32.mrb[0].mxu0
  %v236 = vpop.f32.mrb[0].mxu0
  %v237 = vadd.f32 0.0, %v236
  %v238 = vpop.f32.mrb[0].mxu0
  %239 = vdwg.mxu0
  %v240 = vadd.f32 %v38, %v178
  %v241 = vadd.f32 %v39, %v181
  %v242 = vadd.f32 %v40, %v186
  %v243 = vadd.f32 %v41, %v189
  %v244 = vadd.f32 %v42, %v194
  %v245 = vadd.f32 %v43, %v197
  %v246 = vadd.f32 %v44, %v202
  %v247 = vadd.f32 %v45, %v205
  %v248 = vadd.f32 %v46, %v210
  %v249 = vadd.f32 %v47, %v213
  %v250 = vadd.f32 %v48, %v218
  %v251 = vadd.f32 %v49, %v221
  %v252 = vadd.f32 %v50, %v226
  %v253 = vadd.f32 %v51, %v229
  %v254 = vadd.f32 %v52, %v234
  %v255 = vadd.f32 %v53, %v237
  %256 = vst [vmem:[#allocation2] sm:$0xff] %v240
  %257 = vst [vmem:[#allocation2 + $0x8] sm:$0xff] %v241
  %258 = vst [vmem:[#allocation2 + $0x10] sm:$0xff] %v242
  %259 = vst [vmem:[#allocation2 + $0x18] sm:$0xff] %v243
  %260 = vst [vmem:[#allocation2 + $0x20] sm:$0xff] %v244
  %261 = vst [vmem:[#allocation2 + $0x28] sm:$0xff] %v245
  %262 = vst [vmem:[#allocation2 + $0x30] sm:$0xff] %v246
  %263 = vst [vmem:[#allocation2 + $0x38] sm:$0xff] %v247
  %264 = vst [vmem:[#allocation2 + $0x40] sm:$0xff] %v248
  %265 = vst [vmem:[#allocation2 + $0x48] sm:$0xff] %v249
  %266 = vst [vmem:[#allocation2 + $0x50] sm:$0xff] %v250
  %267 = vst [vmem:[#allocation2 + $0x58] sm:$0xff] %v251
  %268 = vst [vmem:[#allocation2 + $0x60] sm:$0xff] %v252
  %269 = vst [vmem:[#allocation2 + $0x68] sm:$0xff] %v253
  %270 = vst [vmem:[#allocation2 + $0x70] sm:$0xff] %v254
  %271 = vst [vmem:[#allocation2 + $0x78] sm:$0xff] %v255
  // Predicated region
  $region22: #{_lambda_.153} parent=0 // pred_check
    %p272 = pneg %p18
  $region23: #{_lambda_.153} parent=0 // pred_check_branch
    %274 = sbr.rel (%p272) target = $region25
  $region24: #{_lambda_.153} parent=0 // pred_region
    %v275 = vld [vmem:[#allocation2] sm:$0xff]
    %v276 = vld [vmem:[#allocation2 + $0x8] sm:$0xff]
    %v277 = vld [vmem:[#allocation2 + $0x10] sm:$0xff]
    %v278 = vld [vmem:[#allocation2 + $0x18] sm:$0xff]
    %v279 = vld [vmem:[#allocation2 + $0x20] sm:$0xff]
    %v280 = vld [vmem:[#allocation2 + $0x28] sm:$0xff]
    %v281 = vld [vmem:[#allocation2 + $0x30] sm:$0xff]
    %v282 = vld [vmem:[#allocation2 + $0x38] sm:$0xff]
    %v283 = vld [vmem:[#allocation2 + $0x40] sm:$0xff]
    %v284 = vld [vmem:[#allocation2 + $0x48] sm:$0xff]
    %v285 = vld [vmem:[#allocation2 + $0x50] sm:$0xff]
    %v286 = vld [vmem:[#allocation2 + $0x58] sm:$0xff]
    %v287 = vld [vmem:[#allocation2 + $0x60] sm:$0xff]
    %v288 = vld [vmem:[#allocation2 + $0x68] sm:$0xff]
    %v289 = vld [vmem:[#allocation2 + $0x70] sm:$0xff]
    %v290 = vld [vmem:[#allocation2 + $0x78] sm:$0xff]
    %v291 = vld [vmem:[%s2] sm:$0x1]
    %v293 = vlaneseq
    %v294 = vshrl.u32 %v293, 7
    %v295 = vsub.s32 0, %v294
    %v296 = vrot.slane %v291, %v295
    %v298 = vmul.f32 %v275, %v296
    %v299 = vmul.f32 %v276, %v296
    %v300 = vmul.f32 %v277, %v296
    %v301 = vmul.f32 %v278, %v296
    %v302 = vmul.f32 %v279, %v296
    %v303 = vmul.f32 %v280, %v296
    %v304 = vmul.f32 %v281, %v296
    %v305 = vmul.f32 %v282, %v296
    %v306 = vmul.f32 %v283, %v296
    %v307 = vmul.f32 %v284, %v296
    %v308 = vmul.f32 %v285, %v296
    %v309 = vmul.f32 %v286, %v296
    %v310 = vmul.f32 %v287, %v296
    %v311 = vmul.f32 %v288, %v296
    %v312 = vmul.f32 %v289, %v296
    %v313 = vmul.f32 %v290, %v296
    %v314 = vld [vmem:[%s3] sm:$0x1]
    %v316 = vlaneseq
    %v317 = vshrl.u32 %v316, 7
    %v318 = vsub.s32 0, %v317
    %v319 = vrot.slane %v314, %v318
    %v321 = vadd.f32 %v298, %v319
    %v322 = vadd.f32 %v299, %v319
    %v323 = vadd.f32 %v300, %v319
    %v324 = vadd.f32 %v301, %v319
    %v325 = vadd.f32 %v302, %v319
    %v326 = vadd.f32 %v303, %v319
    %v327 = vadd.f32 %v304, %v319
    %v328 = vadd.f32 %v305, %v319
    %v329 = vadd.f32 %v306, %v319
    %v330 = vadd.f32 %v307, %v319
    %v331 = vadd.f32 %v308, %v319
    %v332 = vadd.f32 %v309, %v319
    %v333 = vadd.f32 %v310, %v319
    %v334 = vadd.f32 %v311, %v319
    %v335 = vadd.f32 %v312, %v319
    %v336 = vadd.f32 %v313, %v319
    %337 = vst [vmem:[%s4] sm:$0xff] %v321
    %338 = vst [vmem:[%s4 + $0x8] sm:$0xff] %v322
    %339 = vst [vmem:[%s4 + $0x10] sm:$0xff] %v323
    %340 = vst [vmem:[%s4 + $0x18] sm:$0xff] %v324
    %341 = vst [vmem:[%s4 + $0x20] sm:$0xff] %v325
    %342 = vst [vmem:[%s4 + $0x28] sm:$0xff] %v326
    %343 = vst [vmem:[%s4 + $0x30] sm:$0xff] %v327
    %344 = vst [vmem:[%s4 + $0x38] sm:$0xff] %v328
    %345 = vst [vmem:[%s4 + $0x40] sm:$0xff] %v329
    %346 = vst [vmem:[%s4 + $0x48] sm:$0xff] %v330
    %347 = vst [vmem:[%s4 + $0x50] sm:$0xff] %v331
    %348 = vst [vmem:[%s4 + $0x58] sm:$0xff] %v332
    %349 = vst [vmem:[%s4 + $0x60] sm:$0xff] %v333
    %350 = vst [vmem:[%s4 + $0x68] sm:$0xff] %v334
    %351 = vst [vmem:[%s4 + $0x70] sm:$0xff] %v335
    %352 = vst [vmem:[%s4 + $0x78] sm:$0xff] %v336
  $region25: #{_lambda_.153} parent=0 // pred_fallthru
    _
  // Predicated region
  $region26: #{_lambda_.153} parent=0 // pred_check
    _
  $region27: #{_lambda_.153} parent=0 // pred_check_branch
    %354 = sbr.rel (0) target = $region29
  $region28: #{_lambda_.153} parent=0 // pred_region
    _
  $region29: #{_lambda_.153} parent=0 // pred_fallthru
    _
  // Predicated region
  $region30: #{_lambda_.153} parent=0 // pred_check
    _
  $region31: #{_lambda_.153} parent=0 // pred_check_branch
    %356 = sbr.rel (0) target = $region33
  $region32: #{_lambda_.153} parent=0 // pred_region
    _
  $region33: #{_lambda_.153} parent=0 // pred_fallthru
    _

</llo_original>
